<compile_context>
chip_gen: v6e
topology: v6e:2x2x1
jax: 0.10.0
libtpu: 0.0.40
codegen_flags: <defaults>
</compile_context>

<pallas_src>
import functools

import jax
import jax.numpy as jnp
from jax.experimental import pallas as pl
from jax.experimental.pallas import tpu as pltpu

VMEM_SPEC = pl.BlockSpec(memory_space=pltpu.MemorySpace.VMEM)


def _leaky(x):
    return jnp.where(x > 0, x, 0.01 * x)


def _round_up(v, m):
    return (v + m - 1) // m * m


# ----------------------------------------------------------------------------
# Single fused kernel: l0 + multi-scale GCN + gated attention + tail.
# ----------------------------------------------------------------------------
def _mil_kernel(x_ref, w0_ref, b0_ref, adj_ref, adjd_ref,
                gwr_ref, gwn_ref, gb_ref, gg_ref, gbt_ref,
                dwr_ref, dwn_ref, db_ref, dg_ref, dbt_ref,
                wl1_ref, bl1_ref, w1_ref, b1_ref, w2_ref, b2_ref,
                w3_ref, b3_ref, wlast_ref, blast_ref, wcla_ref, bcla_ref,
                xv_ref, attn_ref,
                *, number_scale, gcn_layers, n):
    # ---- l0: Linear -> LeakyReLU (Dropout = identity in eval mode) ----------
    h0 = jnp.dot(x_ref[...], w0_ref[...],
                 preferred_element_type=jnp.float32) + b0_ref[...]
    h0 = _leaky(h0)

    def conv_ln_act(xx, adj, wr, wn, b, g, beta):
        # MaskAddGraphConv (mask ignored) -> LayerNorm -> LeakyReLU
        agg = jnp.dot(adj, xx, preferred_element_type=jnp.float32)
        h = (jnp.dot(xx, wr, preferred_element_type=jnp.float32)
             + jnp.dot(agg, wn, preferred_element_type=jnp.float32) + b)
        mu = jnp.mean(h, axis=-1, keepdims=True)
        var = jnp.mean((h - mu) ** 2, axis=-1, keepdims=True)
        hn = (h - mu) * jax.lax.rsqrt(var + 1e-5) * g + beta
        return _leaky(hn)

    # ---- multi-scale GCN phase (values stay resident; no HBM round trips) ---
    blocks = [h0[i * n:(i + 1) * n, :] for i in range(number_scale)]
    feat_lists = []
    for i in range(number_scale):                       # static: unrolled
        xx = blocks[i]
        feats = [xx]                                    # pre-conv block
        for j in range(gcn_layers):
            li = i * gcn_layers + j
            xx = conv_ln_act(xx, adj_ref[i], gwr_ref[li], gwn_ref[li],
                             gb_ref[li], gg_ref[li], gbt_ref[li])
            feats.append(xx)
        feat_lists.append(feats)
        blocks[i] = xx
        if i != number_scale - 1:
            # cross-scale ("diff") conv over the [scale i, scale i+1] pair;
            # scale i+1's pre-conv block is taken AFTER this mixing, matching
            # the PyTorch forward ordering.
            pair = jnp.concatenate([blocks[i], blocks[i + 1]], axis=0)
            pair = conv_ln_act(pair, adjd_ref[i], dwr_ref[i], dwn_ref[i],
                               db_ref[i], dg_ref[i], dbt_ref[i])
            blocks[i] = pair[:n, :]
            blocks[i + 1] = pair[n:, :]

    # ---- per-scale gated attention + pooled accumulation into l_last --------
    d_all = blast_ref.shape[1]
    h_acc = jnp.zeros((1, d_all), jnp.float32)
    for i in range(number_scale):
        # att_l1 as a chunked matmul over the per-layer (n, d) feature blocks
        # (equivalent to cat(feats) @ W_l1 + b), output already padded to Dp.
        xs = bl1_ref[i]
        for j in range(gcn_layers + 1):
            xs = xs + jnp.dot(feat_lists[i][j], wl1_ref[i, j],
                              preferred_element_type=jnp.float32)
        xs = _leaky(xs)                                                 # (n, Dp)

        at1 = jnp.tanh(jnp.dot(xs, w1_ref[i],
                               preferred_element_type=jnp.float32) + b1_ref[i])
        at2 = jax.nn.sigmoid(jnp.dot(xs, w2_ref[i],
                                     preferred_element_type=jnp.float32) + b2_ref[i])
        prod = at1 * at2
        # att3 weight kept in (1, Dp) layout -> lane-dense (1, n) score row.
        a = jax.lax.dot_general(w3_ref[i], prod, (((1,), (1,)), ((), ())),
                                preferred_element_type=jnp.float32) + b3_ref[i]
        m = jnp.max(a, axis=-1, keepdims=True)
        e = jnp.exp(a - m)
        aw = e / jnp.sum(e, axis=-1, keepdims=True)     # exact softmax
        attn_ref[i] = aw                                # (1, n)

        # pooled = a @ x_sub (att_l1 output), then its contribution to the
        # l_last pre-activation (fuses the torch.cat over scales).
        # TODO(synk): at large N compute pooled as a streamed VPU
        # broadcast-multiply + reduce over x tiles instead of a 1-row matmul.
        pooled = jnp.dot(aw, xs, preferred_element_type=jnp.float32)   # (1, Dp)
        h_acc = h_acc + jnp.dot(pooled, wlast_ref[i],
                                preferred_element_type=jnp.float32)

    # ---- tail: l_last -> l_cla ----------------------------------------------
    hl = _leaky(h_acc + blast_ref[...])
    out = jnp.dot(hl, wcla_ref[...],
                  preferred_element_type=jnp.float32) + bcla_ref[...]
    xv_ref[...] = jax.nn.sigmoid(out)


# ----------------------------------------------------------------------------
# Forward glue (mirrors the PyTorch control flow; using_Swin == 0 path).
# ----------------------------------------------------------------------------
def mil_forward(params, x, adjs, adjs_diff, pssz, number_scale, gcn_layers):
    n = int(pssz[0])
    assert all(int(p) == n for p in pssz[:number_scale]), \
        "fused kernel assumes equal per-scale node counts"
    if number_scale == 1:
        adjs_diff = jnp.zeros((1, 2 * n, 2 * n), jnp.float32)

    out_classes = params["l_cla_w"].shape[1]
    kernel = functools.partial(_mil_kernel, number_scale=number_scale,
                               gcn_layers=gcn_layers, n=n)
    x_v, attn = pl.pallas_call(
        kernel,
        out_shape=(jax.ShapeDtypeStruct((1, out_classes), jnp.float32),
                   jax.ShapeDtypeStruct((number_scale, 1, n), jnp.float32)),
        in_specs=[VMEM_SPEC] * 27,
        out_specs=(VMEM_SPEC, VMEM_SPEC),
        compiler_params=pltpu.CompilerParams(
            vmem_limit_bytes=32 * 1024 * 1024),
    )(x, params["l0_w"], params["l0_b"], adjs, adjs_diff,
      params["gcn_wr"], params["gcn_wn"], params["gcn_b"],
      params["gcn_g"], params["gcn_beta"],
      params["diff_wr"], params["diff_wn"], params["diff_b"],
      params["diff_g"], params["diff_beta"],
      params["att_l1_w"], params["att_l1_b"],
      params["att1_w"], params["att1_b"],
      params["att2_w"], params["att2_b"],
      params["att3_w"], params["att3_b"],
      params["l_last_w"], params["l_last_b"],
      params["l_cla_w"], params["l_cla_b"])

    at_ = [attn[i] for i in range(number_scale)]        # each (1, n_i)
    return x_v, at_


# ----------------------------------------------------------------------------
# Parameter init (deterministic, PyTorch-Linear-like uniform init).  Attention
# weights are drawn at their logical (D, D)/(1, D) shapes and then zero-padded
# to Dp = round_up(D, 128); the padding is exactly numerically neutral.
# ----------------------------------------------------------------------------
def init_params(key, in_classes, out_classes, number_scale, gcn_layers):
    d = in_classes // 2
    L1 = gcn_layers + 1
    D = d * L1
    Dp = _round_up(D, 128)
    d_all = D * number_scale
    ngl = number_scale * gcn_layers
    nd = max(number_scale - 1, 1)

    ks = iter(jax.random.split(key, 32))

    def u(shape, bound):
        return jax.random.uniform(next(ks), shape, jnp.float32, -bound, bound)

    def pad_last(a, target):
        return jnp.pad(a, [(0, 0)] * (a.ndim - 1) + [(0, target - a.shape[-1])])

    bi = 1.0 / (in_classes ** 0.5)
    bd = 1.0 / (d ** 0.5)
    bD = 1.0 / (D ** 0.5)
    ba = 1.0 / (d_all ** 0.5)

    # att_l1: (ns, D, D) -> chunked & padded (ns, L1, d, Dp)
    att_l1_w = pad_last(u((number_scale, D, D), bD), Dp)
    att_l1_w = att_l1_w.reshape(number_scale, L1, d, Dp)
    att_l1_b = pad_last(u((number_scale, 1, D), bD), Dp)

    def pad_sq(a):                       # (ns, D, D) -> (ns, Dp, Dp)
        a = pad_last(a, Dp)
        return jnp.pad(a, ((0, 0), (0, Dp - D), (0, 0)))

    att1_w = pad_sq(u((number_scale, D, D), bD))
    att1_b = pad_last(u((number_scale, 1, D), bD), Dp)
    att2_w = pad_sq(u((number_scale, D, D), bD))
    att2_b = pad_last(u((number_scale, 1, D), bD), Dp)
    att3_w = pad_last(u((number_scale, 1, D), bD), Dp)   # (ns, 1, Dp), lane-dense scores
    att3_b = u((number_scale, 1, 1), bD)

    # l_last: (d_all, d_all) -> per-scale row blocks padded D -> Dp
    l_last_w = u((d_all, d_all), ba).reshape(number_scale, D, d_all)
    l_last_w = jnp.pad(l_last_w, ((0, 0), (0, Dp - D), (0, 0)))  # (ns, Dp, d_all)

    return {
        "l0_w": u((in_classes, d), bi), "l0_b": u((1, d), bi),
        "gcn_wr": u((ngl, d, d), bd), "gcn_wn": u((ngl, d, d), bd),
        "gcn_b": u((ngl, 1, d), bd),
        "gcn_g": jnp.ones((ngl, 1, d), jnp.float32),
        "gcn_beta": jnp.zeros((ngl, 1, d), jnp.float32),
        "diff_wr": u((nd, d, d), bd), "diff_wn": u((nd, d, d), bd),
        "diff_b": u((nd, 1, d), bd),
        "diff_g": jnp.ones((nd, 1, d), jnp.float32),
        "diff_beta": jnp.zeros((nd, 1, d), jnp.float32),
        "att_l1_w": att_l1_w, "att_l1_b": att_l1_b,
        "att1_w": att1_w, "att1_b": att1_b,
        "att2_w": att2_w, "att2_b": att2_b,
        "att3_w": att3_w, "att3_b": att3_b,
        "l_last_w": l_last_w, "l_last_b": u((1, d_all), ba),
        "l_cla_w": u((d_all, out_classes), ba), "l_cla_b": u((1, out_classes), ba),
    }


def edges_to_adj(src, dst, n):
    a = jnp.zeros((n, n), jnp.float32)
    return a.at[dst, src].add(1.0)   # agg[i] = sum over in-neighbors j of x[j]


# ----------------------------------------------------------------------------
if __name__ == "__main__":
    IN_CLASSES = 64
    OUT_CLASSES = 4
    NUMBER_SCALE = 3
    GCN_LAYERS = 2
    PSSZ = [16, 16, 16]          # feats_size_list (using_Swin = 0 path)

    key = jax.random.PRNGKey(0)
    key, kx = jax.random.split(key)
    params = init_params(key, IN_CLASSES, OUT_CLASSES, NUMBER_SCALE, GCN_LAYERS)
    x = jax.random.normal(kx, (sum(PSSZ), IN_CLASSES), jnp.float32)

    n = PSSZ[0]
    # per-scale bidirectional ring graphs, densified and stacked
    adj_list = []
    for i in range(NUMBER_SCALE):
        s = jnp.arange(n)
        d = (s + 1) % n
        adj_list.append(edges_to_adj(jnp.concatenate([s, d]),
                                     jnp.concatenate([d, s]), n))
    adjs = jnp.stack(adj_list)                               # (ns, n, n)

    # cross-scale ("diff") graphs: node j of scale i <-> node j of scale i+1
    diff_list = []
    for i in range(NUMBER_SCALE - 1):
        s = jnp.arange(n)
        d = s + n
        diff_list.append(edges_to_adj(jnp.concatenate([s, d]),
                                      jnp.concatenate([d, s]), 2 * n))
    adjs_diff = jnp.stack(diff_list)                         # (ns-1, 2n, 2n)

    x_v, at_ = mil_forward(params, x, adjs, adjs_diff, PSSZ,
                           NUMBER_SCALE, GCN_LAYERS)
    jax.block_until_ready(x_v)
    for a in at_:
        jax.block_until_ready(a)

    assert x_v.shape == (1, OUT_CLASSES)
    assert all(a.shape == (1, PSSZ[i]) for i, a in enumerate(at_))
    print("KERNEL_OK")
</pallas_src>

<mosaic_0001>
module attributes {stable_mosaic.version = 11 : i64} {
  func.func @_mil_kernel(%arg0: memref<48x64xf32, #tpu.memory_space<vmem>>, %arg1: memref<64x32xf32, #tpu.memory_space<vmem>>, %arg2: memref<1x32xf32, #tpu.memory_space<vmem>>, %arg3: memref<3x16x16xf32, #tpu.memory_space<vmem>>, %arg4: memref<2x32x32xf32, #tpu.memory_space<vmem>>, %arg5: memref<6x32x32xf32, #tpu.memory_space<vmem>>, %arg6: memref<6x32x32xf32, #tpu.memory_space<vmem>>, %arg7: memref<6x1x32xf32, #tpu.memory_space<vmem>>, %arg8: memref<6x1x32xf32, #tpu.memory_space<vmem>>, %arg9: memref<6x1x32xf32, #tpu.memory_space<vmem>>, %arg10: memref<2x32x32xf32, #tpu.memory_space<vmem>>, %arg11: memref<2x32x32xf32, #tpu.memory_space<vmem>>, %arg12: memref<2x1x32xf32, #tpu.memory_space<vmem>>, %arg13: memref<2x1x32xf32, #tpu.memory_space<vmem>>, %arg14: memref<2x1x32xf32, #tpu.memory_space<vmem>>, %arg15: memref<3x3x32x128xf32, #tpu.memory_space<vmem>>, %arg16: memref<3x1x128xf32, #tpu.memory_space<vmem>>, %arg17: memref<3x128x128xf32, #tpu.memory_space<vmem>>, %arg18: memref<3x1x128xf32, #tpu.memory_space<vmem>>, %arg19: memref<3x128x128xf32, #tpu.memory_space<vmem>>, %arg20: memref<3x1x128xf32, #tpu.memory_space<vmem>>, %arg21: memref<3x1x128xf32, #tpu.memory_space<vmem>>, %arg22: memref<3x1x1xf32, #tpu.memory_space<vmem>>, %arg23: memref<3x128x288xf32, #tpu.memory_space<vmem>>, %arg24: memref<1x288xf32, #tpu.memory_space<vmem>>, %arg25: memref<288x4xf32, #tpu.memory_space<vmem>>, %arg26: memref<1x4xf32, #tpu.memory_space<vmem>>, %arg27: memref<1x4xf32, #tpu.memory_space<vmem>>, %arg28: memref<3x1x16xf32, #tpu.memory_space<vmem>>) attributes {dimension_semantics = [], scalar_prefetch = 0 : i64, scratch_operands = 0 : i64, tpu.core_type = #tpu.core_type<tc>} {
    %c0 = arith.constant 0 : index
    %c0_0 = arith.constant 0 : index
    %0 = vector.load %arg0[%c0, %c0_0] : memref<48x64xf32, #tpu.memory_space<vmem>>, vector<48x64xf32>
    %c0_1 = arith.constant 0 : index
    %c0_2 = arith.constant 0 : index
    %1 = vector.load %arg1[%c0_1, %c0_2] : memref<64x32xf32, #tpu.memory_space<vmem>>, vector<64x32xf32>
    %cst = arith.constant dense<0.000000e+00> : vector<48x32xf32>
    %2 = tpu.matmul %0, %1, %cst {dimension_numbers = #tpu.dot_dimension_numbers<[1], [0], [0], [1], [0, 0, 1, 1], [], []>} : vector<48x64xf32>, vector<64x32xf32>, vector<48x32xf32> -> vector<48x32xf32>
    %c0_3 = arith.constant 0 : index
    %c0_4 = arith.constant 0 : index
    %3 = vector.load %arg2[%c0_3, %c0_4] : memref<1x32xf32, #tpu.memory_space<vmem>>, vector<1x32xf32>
    %4 = vector.broadcast %3 : vector<1x32xf32> to vector<48x32xf32>
    %5 = arith.addf %2, %4 : vector<48x32xf32>
    %cst_5 = arith.constant 0.000000e+00 : f32
    %6 = vector.broadcast %cst_5 : f32 to vector<48x32xf32>
    %7 = arith.cmpf ogt, %5, %6 : vector<48x32xf32>
    %cst_6 = arith.constant 0.00999999977 : f32
    %8 = vector.broadcast %cst_6 : f32 to vector<48x32xf32>
    %9 = arith.mulf %8, %5 : vector<48x32xf32>
    %10 = arith.select %7, %5, %9 : vector<48x32xi1>, vector<48x32xf32>
    %11 = vector.extract_strided_slice %10 {offsets = [0, 0], sizes = [16, 32], strides = [1, 1]} : vector<48x32xf32> to vector<16x32xf32>
    %12 = vector.extract_strided_slice %10 {offsets = [16, 0], sizes = [16, 32], strides = [1, 1]} : vector<48x32xf32> to vector<16x32xf32>
    %13 = vector.extract_strided_slice %10 {offsets = [32, 0], sizes = [16, 32], strides = [1, 1]} : vector<48x32xf32> to vector<16x32xf32>
    %c0_7 = arith.constant 0 : index
    %c0_8 = arith.constant 0 : index
    %c0_9 = arith.constant 0 : index
    %14 = vector.load %arg3[%c0_7, %c0_8, %c0_9] : memref<3x16x16xf32, #tpu.memory_space<vmem>>, vector<1x16x16xf32>
    %15 = vector.shape_cast %14 : vector<1x16x16xf32> to vector<16x16xf32>
    %c0_10 = arith.constant 0 : index
    %c0_11 = arith.constant 0 : index
    %c0_12 = arith.constant 0 : index
    %16 = vector.load %arg5[%c0_10, %c0_11, %c0_12] : memref<6x32x32xf32, #tpu.memory_space<vmem>>, vector<1x32x32xf32>
    %17 = vector.shape_cast %16 : vector<1x32x32xf32> to vector<32x32xf32>
    %c0_13 = arith.constant 0 : index
    %c0_14 = arith.constant 0 : index
    %c0_15 = arith.constant 0 : index
    %18 = vector.load %arg6[%c0_13, %c0_14, %c0_15] : memref<6x32x32xf32, #tpu.memory_space<vmem>>, vector<1x32x32xf32>
    %19 = vector.shape_cast %18 : vector<1x32x32xf32> to vector<32x32xf32>
    %c0_16 = arith.constant 0 : index
    %c0_17 = arith.constant 0 : index
    %c0_18 = arith.constant 0 : index
    %20 = vector.load %arg7[%c0_16, %c0_17, %c0_18] : memref<6x1x32xf32, #tpu.memory_space<vmem>>, vector<1x1x32xf32>
    %21 = vector.shape_cast %20 : vector<1x1x32xf32> to vector<1x32xf32>
    %c0_19 = arith.constant 0 : index
    %c0_20 = arith.constant 0 : index
    %c0_21 = arith.constant 0 : index
    %22 = vector.load %arg8[%c0_19, %c0_20, %c0_21] : memref<6x1x32xf32, #tpu.memory_space<vmem>>, vector<1x1x32xf32>
    %23 = vector.shape_cast %22 : vector<1x1x32xf32> to vector<1x32xf32>
    %c0_22 = arith.constant 0 : index
    %c0_23 = arith.constant 0 : index
    %c0_24 = arith.constant 0 : index
    %24 = vector.load %arg9[%c0_22, %c0_23, %c0_24] : memref<6x1x32xf32, #tpu.memory_space<vmem>>, vector<1x1x32xf32>
    %25 = vector.shape_cast %24 : vector<1x1x32xf32> to vector<1x32xf32>
    %cst_25 = arith.constant dense<0.000000e+00> : vector<16x32xf32>
    %26 = tpu.matmul %15, %11, %cst_25 {dimension_numbers = #tpu.dot_dimension_numbers<[1], [0], [0], [1], [0, 0, 1, 1], [], []>} : vector<16x16xf32>, vector<16x32xf32>, vector<16x32xf32> -> vector<16x32xf32>
    %cst_26 = arith.constant dense<0.000000e+00> : vector<16x32xf32>
    %27 = tpu.matmul %11, %17, %cst_26 {dimension_numbers = #tpu.dot_dimension_numbers<[1], [0], [0], [1], [0, 0, 1, 1], [], []>} : vector<16x32xf32>, vector<32x32xf32>, vector<16x32xf32> -> vector<16x32xf32>
    %cst_27 = arith.constant dense<0.000000e+00> : vector<16x32xf32>
    %28 = tpu.matmul %26, %19, %cst_27 {dimension_numbers = #tpu.dot_dimension_numbers<[1], [0], [0], [1], [0, 0, 1, 1], [], []>} : vector<16x32xf32>, vector<32x32xf32>, vector<16x32xf32> -> vector<16x32xf32>
    %29 = arith.addf %27, %28 : vector<16x32xf32>
    %30 = vector.broadcast %21 : vector<1x32xf32> to vector<16x32xf32>
    %31 = arith.addf %29, %30 : vector<16x32xf32>
    %cst_28 = arith.constant dense<0.000000e+00> : vector<16xf32>
    %32 = vector.multi_reduction <add>, %31, %cst_28 [1] : vector<16x32xf32> to vector<16xf32>
    %33 = vector.shape_cast %32 : vector<16xf32> to vector<16x1xf32>
    %cst_29 = arith.constant 3.200000e+01 : f32
    %34 = vector.broadcast %cst_29 : f32 to vector<16x1xf32>
    %35 = arith.divf %33, %34 : vector<16x1xf32>
    %36 = vector.broadcast %35 : vector<16x1xf32> to vector<16x32xf32>
    %37 = arith.subf %31, %36 : vector<16x32xf32>
    %38 = arith.mulf %37, %37 : vector<16x32xf32>
    %cst_30 = arith.constant dense<0.000000e+00> : vector<16xf32>
    %39 = vector.multi_reduction <add>, %38, %cst_30 [1] : vector<16x32xf32> to vector<16xf32>
    %40 = vector.shape_cast %39 : vector<16xf32> to vector<16x1xf32>
    %cst_31 = arith.constant 3.200000e+01 : f32
    %41 = vector.broadcast %cst_31 : f32 to vector<16x1xf32>
    %42 = arith.divf %40, %41 : vector<16x1xf32>
    %43 = vector.broadcast %35 : vector<16x1xf32> to vector<16x32xf32>
    %44 = arith.subf %31, %43 : vector<16x32xf32>
    %cst_32 = arith.constant 9.99999974E-6 : f32
    %45 = vector.broadcast %cst_32 : f32 to vector<16x1xf32>
    %46 = arith.addf %42, %45 : vector<16x1xf32>
    %47 = math.rsqrt %46 : vector<16x1xf32>
    %48 = vector.broadcast %47 : vector<16x1xf32> to vector<16x32xf32>
    %49 = arith.mulf %44, %48 : vector<16x32xf32>
    %50 = vector.broadcast %23 : vector<1x32xf32> to vector<16x32xf32>
    %51 = arith.mulf %49, %50 : vector<16x32xf32>
    %52 = vector.broadcast %25 : vector<1x32xf32> to vector<16x32xf32>
    %53 = arith.addf %51, %52 : vector<16x32xf32>
    %cst_33 = arith.constant 0.000000e+00 : f32
    %54 = vector.broadcast %cst_33 : f32 to vector<16x32xf32>
    %55 = arith.cmpf ogt, %53, %54 : vector<16x32xf32>
    %cst_34 = arith.constant 0.00999999977 : f32
    %56 = vector.broadcast %cst_34 : f32 to vector<16x32xf32>
    %57 = arith.mulf %56, %53 : vector<16x32xf32>
    %58 = arith.select %55, %53, %57 : vector<16x32xi1>, vector<16x32xf32>
    %c0_35 = arith.constant 0 : index
    %c0_36 = arith.constant 0 : index
    %c0_37 = arith.constant 0 : index
    %59 = vector.load %arg3[%c0_35, %c0_36, %c0_37] : memref<3x16x16xf32, #tpu.memory_space<vmem>>, vector<1x16x16xf32>
    %60 = vector.shape_cast %59 : vector<1x16x16xf32> to vector<16x16xf32>
    %c1 = arith.constant 1 : index
    %c0_38 = arith.constant 0 : index
    %c0_39 = arith.constant 0 : index
    %61 = vector.load %arg5[%c1, %c0_38, %c0_39] : memref<6x32x32xf32, #tpu.memory_space<vmem>>, vector<1x32x32xf32>
    %62 = vector.shape_cast %61 : vector<1x32x32xf32> to vector<32x32xf32>
    %c1_40 = arith.constant 1 : index
    %c0_41 = arith.constant 0 : index
    %c0_42 = arith.constant 0 : index
    %63 = vector.load %arg6[%c1_40, %c0_41, %c0_42] : memref<6x32x32xf32, #tpu.memory_space<vmem>>, vector<1x32x32xf32>
    %64 = vector.shape_cast %63 : vector<1x32x32xf32> to vector<32x32xf32>
    %c1_43 = arith.constant 1 : index
    %c0_44 = arith.constant 0 : index
    %c0_45 = arith.constant 0 : index
    %65 = vector.load %arg7[%c1_43, %c0_44, %c0_45] : memref<6x1x32xf32, #tpu.memory_space<vmem>>, vector<1x1x32xf32>
    %66 = vector.shape_cast %65 : vector<1x1x32xf32> to vector<1x32xf32>
    %c1_46 = arith.constant 1 : index
    %c0_47 = arith.constant 0 : index
    %c0_48 = arith.constant 0 : index
    %67 = vector.load %arg8[%c1_46, %c0_47, %c0_48] : memref<6x1x32xf32, #tpu.memory_space<vmem>>, vector<1x1x32xf32>
    %68 = vector.shape_cast %67 : vector<1x1x32xf32> to vector<1x32xf32>
    %c1_49 = arith.constant 1 : index
    %c0_50 = arith.constant 0 : index
    %c0_51 = arith.constant 0 : index
    %69 = vector.load %arg9[%c1_49, %c0_50, %c0_51] : memref<6x1x32xf32, #tpu.memory_space<vmem>>, vector<1x1x32xf32>
    %70 = vector.shape_cast %69 : vector<1x1x32xf32> to vector<1x32xf32>
    %cst_52 = arith.constant dense<0.000000e+00> : vector<16x32xf32>
    %71 = tpu.matmul %60, %58, %cst_52 {dimension_numbers = #tpu.dot_dimension_numbers<[1], [0], [0], [1], [0, 0, 1, 1], [], []>} : vector<16x16xf32>, vector<16x32xf32>, vector<16x32xf32> -> vector<16x32xf32>
    %cst_53 = arith.constant dense<0.000000e+00> : vector<16x32xf32>
    %72 = tpu.matmul %58, %62, %cst_53 {dimension_numbers = #tpu.dot_dimension_numbers<[1], [0], [0], [1], [0, 0, 1, 1], [], []>} : vector<16x32xf32>, vector<32x32xf32>, vector<16x32xf32> -> vector<16x32xf32>
    %cst_54 = arith.constant dense<0.000000e+00> : vector<16x32xf32>
    %73 = tpu.matmul %71, %64, %cst_54 {dimension_numbers = #tpu.dot_dimension_numbers<[1], [0], [0], [1], [0, 0, 1, 1], [], []>} : vector<16x32xf32>, vector<32x32xf32>, vector<16x32xf32> -> vector<16x32xf32>
    %74 = arith.addf %72, %73 : vector<16x32xf32>
    %75 = vector.broadcast %66 : vector<1x32xf32> to vector<16x32xf32>
    %76 = arith.addf %74, %75 : vector<16x32xf32>
    %cst_55 = arith.constant dense<0.000000e+00> : vector<16xf32>
    %77 = vector.multi_reduction <add>, %76, %cst_55 [1] : vector<16x32xf32> to vector<16xf32>
    %78 = vector.shape_cast %77 : vector<16xf32> to vector<16x1xf32>
    %cst_56 = arith.constant 3.200000e+01 : f32
    %79 = vector.broadcast %cst_56 : f32 to vector<16x1xf32>
    %80 = arith.divf %78, %79 : vector<16x1xf32>
    %81 = vector.broadcast %80 : vector<16x1xf32> to vector<16x32xf32>
    %82 = arith.subf %76, %81 : vector<16x32xf32>
    %83 = arith.mulf %82, %82 : vector<16x32xf32>
    %cst_57 = arith.constant dense<0.000000e+00> : vector<16xf32>
    %84 = vector.multi_reduction <add>, %83, %cst_57 [1] : vector<16x32xf32> to vector<16xf32>
    %85 = vector.shape_cast %84 : vector<16xf32> to vector<16x1xf32>
    %cst_58 = arith.constant 3.200000e+01 : f32
    %86 = vector.broadcast %cst_58 : f32 to vector<16x1xf32>
    %87 = arith.divf %85, %86 : vector<16x1xf32>
    %88 = vector.broadcast %80 : vector<16x1xf32> to vector<16x32xf32>
    %89 = arith.subf %76, %88 : vector<16x32xf32>
    %cst_59 = arith.constant 9.99999974E-6 : f32
    %90 = vector.broadcast %cst_59 : f32 to vector<16x1xf32>
    %91 = arith.addf %87, %90 : vector<16x1xf32>
    %92 = math.rsqrt %91 : vector<16x1xf32>
    %93 = vector.broadcast %92 : vector<16x1xf32> to vector<16x32xf32>
    %94 = arith.mulf %89, %93 : vector<16x32xf32>
    %95 = vector.broadcast %68 : vector<1x32xf32> to vector<16x32xf32>
    %96 = arith.mulf %94, %95 : vector<16x32xf32>
    %97 = vector.broadcast %70 : vector<1x32xf32> to vector<16x32xf32>
    %98 = arith.addf %96, %97 : vector<16x32xf32>
    %cst_60 = arith.constant 0.000000e+00 : f32
    %99 = vector.broadcast %cst_60 : f32 to vector<16x32xf32>
    %100 = arith.cmpf ogt, %98, %99 : vector<16x32xf32>
    %cst_61 = arith.constant 0.00999999977 : f32
    %101 = vector.broadcast %cst_61 : f32 to vector<16x32xf32>
    %102 = arith.mulf %101, %98 : vector<16x32xf32>
    %103 = arith.select %100, %98, %102 : vector<16x32xi1>, vector<16x32xf32>
    %104 = tpu.concatenate %103, %12 in 0 : vector<16x32xf32>, vector<16x32xf32> -> vector<32x32xf32>
    %c0_62 = arith.constant 0 : index
    %c0_63 = arith.constant 0 : index
    %c0_64 = arith.constant 0 : index
    %105 = vector.load %arg4[%c0_62, %c0_63, %c0_64] : memref<2x32x32xf32, #tpu.memory_space<vmem>>, vector<1x32x32xf32>
    %106 = vector.shape_cast %105 : vector<1x32x32xf32> to vector<32x32xf32>
    %c0_65 = arith.constant 0 : index
    %c0_66 = arith.constant 0 : index
    %c0_67 = arith.constant 0 : index
    %107 = vector.load %arg10[%c0_65, %c0_66, %c0_67] : memref<2x32x32xf32, #tpu.memory_space<vmem>>, vector<1x32x32xf32>
    %108 = vector.shape_cast %107 : vector<1x32x32xf32> to vector<32x32xf32>
    %c0_68 = arith.constant 0 : index
    %c0_69 = arith.constant 0 : index
    %c0_70 = arith.constant 0 : index
    %109 = vector.load %arg11[%c0_68, %c0_69, %c0_70] : memref<2x32x32xf32, #tpu.memory_space<vmem>>, vector<1x32x32xf32>
    %110 = vector.shape_cast %109 : vector<1x32x32xf32> to vector<32x32xf32>
    %c0_71 = arith.constant 0 : index
    %c0_72 = arith.constant 0 : index
    %c0_73 = arith.constant 0 : index
    %111 = vector.load %arg12[%c0_71, %c0_72, %c0_73] : memref<2x1x32xf32, #tpu.memory_space<vmem>>, vector<1x1x32xf32>
    %112 = vector.shape_cast %111 : vector<1x1x32xf32> to vector<1x32xf32>
    %c0_74 = arith.constant 0 : index
    %c0_75 = arith.constant 0 : index
    %c0_76 = arith.constant 0 : index
    %113 = vector.load %arg13[%c0_74, %c0_75, %c0_76] : memref<2x1x32xf32, #tpu.memory_space<vmem>>, vector<1x1x32xf32>
    %114 = vector.shape_cast %113 : vector<1x1x32xf32> to vector<1x32xf32>
    %c0_77 = arith.constant 0 : index
    %c0_78 = arith.constant 0 : index
    %c0_79 = arith.constant 0 : index
    %115 = vector.load %arg14[%c0_77, %c0_78, %c0_79] : memref<2x1x32xf32, #tpu.memory_space<vmem>>, vector<1x1x32xf32>
    %116 = vector.shape_cast %115 : vector<1x1x32xf32> to vector<1x32xf32>
    %cst_80 = arith.constant dense<0.000000e+00> : vector<32x32xf32>
    %117 = tpu.matmul %106, %104, %cst_80 {dimension_numbers = #tpu.dot_dimension_numbers<[1], [0], [0], [1], [0, 0, 1, 1], [], []>} : vector<32x32xf32>, vector<32x32xf32>, vector<32x32xf32> -> vector<32x32xf32>
    %cst_81 = arith.constant dense<0.000000e+00> : vector<32x32xf32>
    %118 = tpu.matmul %104, %108, %cst_81 {dimension_numbers = #tpu.dot_dimension_numbers<[1], [0], [0], [1], [0, 0, 1, 1], [], []>} : vector<32x32xf32>, vector<32x32xf32>, vector<32x32xf32> -> vector<32x32xf32>
    %cst_82 = arith.constant dense<0.000000e+00> : vector<32x32xf32>
    %119 = tpu.matmul %117, %110, %cst_82 {dimension_numbers = #tpu.dot_dimension_numbers<[1], [0], [0], [1], [0, 0, 1, 1], [], []>} : vector<32x32xf32>, vector<32x32xf32>, vector<32x32xf32> -> vector<32x32xf32>
    %120 = arith.addf %118, %119 : vector<32x32xf32>
    %121 = vector.broadcast %112 : vector<1x32xf32> to vector<32x32xf32>
    %122 = arith.addf %120, %121 : vector<32x32xf32>
    %cst_83 = arith.constant dense<0.000000e+00> : vector<32xf32>
    %123 = vector.multi_reduction <add>, %122, %cst_83 [1] : vector<32x32xf32> to vector<32xf32>
    %124 = vector.shape_cast %123 : vector<32xf32> to vector<32x1xf32>
    %cst_84 = arith.constant 3.200000e+01 : f32
    %125 = vector.broadcast %cst_84 : f32 to vector<32x1xf32>
    %126 = arith.divf %124, %125 : vector<32x1xf32>
    %127 = vector.broadcast %126 : vector<32x1xf32> to vector<32x32xf32>
    %128 = arith.subf %122, %127 : vector<32x32xf32>
    %129 = arith.mulf %128, %128 : vector<32x32xf32>
    %cst_85 = arith.constant dense<0.000000e+00> : vector<32xf32>
    %130 = vector.multi_reduction <add>, %129, %cst_85 [1] : vector<32x32xf32> to vector<32xf32>
    %131 = vector.shape_cast %130 : vector<32xf32> to vector<32x1xf32>
    %cst_86 = arith.constant 3.200000e+01 : f32
    %132 = vector.broadcast %cst_86 : f32 to vector<32x1xf32>
    %133 = arith.divf %131, %132 : vector<32x1xf32>
    %134 = vector.broadcast %126 : vector<32x1xf32> to vector<32x32xf32>
    %135 = arith.subf %122, %134 : vector<32x32xf32>
    %cst_87 = arith.constant 9.99999974E-6 : f32
    %136 = vector.broadcast %cst_87 : f32 to vector<32x1xf32>
    %137 = arith.addf %133, %136 : vector<32x1xf32>
    %138 = math.rsqrt %137 : vector<32x1xf32>
    %139 = vector.broadcast %138 : vector<32x1xf32> to vector<32x32xf32>
    %140 = arith.mulf %135, %139 : vector<32x32xf32>
    %141 = vector.broadcast %114 : vector<1x32xf32> to vector<32x32xf32>
    %142 = arith.mulf %140, %141 : vector<32x32xf32>
    %143 = vector.broadcast %116 : vector<1x32xf32> to vector<32x32xf32>
    %144 = arith.addf %142, %143 : vector<32x32xf32>
    %cst_88 = arith.constant 0.000000e+00 : f32
    %145 = vector.broadcast %cst_88 : f32 to vector<32x32xf32>
    %146 = arith.cmpf ogt, %144, %145 : vector<32x32xf32>
    %cst_89 = arith.constant 0.00999999977 : f32
    %147 = vector.broadcast %cst_89 : f32 to vector<32x32xf32>
    %148 = arith.mulf %147, %144 : vector<32x32xf32>
    %149 = arith.select %146, %144, %148 : vector<32x32xi1>, vector<32x32xf32>
    %150 = vector.extract_strided_slice %149 {offsets = [16, 0], sizes = [16, 32], strides = [1, 1]} : vector<32x32xf32> to vector<16x32xf32>
    %c1_90 = arith.constant 1 : index
    %c0_91 = arith.constant 0 : index
    %c0_92 = arith.constant 0 : index
    %151 = vector.load %arg3[%c1_90, %c0_91, %c0_92] : memref<3x16x16xf32, #tpu.memory_space<vmem>>, vector<1x16x16xf32>
    %152 = vector.shape_cast %151 : vector<1x16x16xf32> to vector<16x16xf32>
    %c2 = arith.constant 2 : index
    %c0_93 = arith.constant 0 : index
    %c0_94 = arith.constant 0 : index
    %153 = vector.load %arg5[%c2, %c0_93, %c0_94] : memref<6x32x32xf32, #tpu.memory_space<vmem>>, vector<1x32x32xf32>
    %154 = vector.shape_cast %153 : vector<1x32x32xf32> to vector<32x32xf32>
    %c2_95 = arith.constant 2 : index
    %c0_96 = arith.constant 0 : index
    %c0_97 = arith.constant 0 : index
    %155 = vector.load %arg6[%c2_95, %c0_96, %c0_97] : memref<6x32x32xf32, #tpu.memory_space<vmem>>, vector<1x32x32xf32>
    %156 = vector.shape_cast %155 : vector<1x32x32xf32> to vector<32x32xf32>
    %c2_98 = arith.constant 2 : index
    %c0_99 = arith.constant 0 : index
    %c0_100 = arith.constant 0 : index
    %157 = vector.load %arg7[%c2_98, %c0_99, %c0_100] : memref<6x1x32xf32, #tpu.memory_space<vmem>>, vector<1x1x32xf32>
    %158 = vector.shape_cast %157 : vector<1x1x32xf32> to vector<1x32xf32>
    %c2_101 = arith.constant 2 : index
    %c0_102 = arith.constant 0 : index
    %c0_103 = arith.constant 0 : index
    %159 = vector.load %arg8[%c2_101, %c0_102, %c0_103] : memref<6x1x32xf32, #tpu.memory_space<vmem>>, vector<1x1x32xf32>
    %160 = vector.shape_cast %159 : vector<1x1x32xf32> to vector<1x32xf32>
    %c2_104 = arith.constant 2 : index
    %c0_105 = arith.constant 0 : index
    %c0_106 = arith.constant 0 : index
    %161 = vector.load %arg9[%c2_104, %c0_105, %c0_106] : memref<6x1x32xf32, #tpu.memory_space<vmem>>, vector<1x1x32xf32>
    %162 = vector.shape_cast %161 : vector<1x1x32xf32> to vector<1x32xf32>
    %cst_107 = arith.constant dense<0.000000e+00> : vector<16x32xf32>
    %163 = tpu.matmul %152, %150, %cst_107 {dimension_numbers = #tpu.dot_dimension_numbers<[1], [0], [0], [1], [0, 0, 1, 1], [], []>} : vector<16x16xf32>, vector<16x32xf32>, vector<16x32xf32> -> vector<16x32xf32>
    %cst_108 = arith.constant dense<0.000000e+00> : vector<16x32xf32>
    %164 = tpu.matmul %150, %154, %cst_108 {dimension_numbers = #tpu.dot_dimension_numbers<[1], [0], [0], [1], [0, 0, 1, 1], [], []>} : vector<16x32xf32>, vector<32x32xf32>, vector<16x32xf32> -> vector<16x32xf32>
    %cst_109 = arith.constant dense<0.000000e+00> : vector<16x32xf32>
    %165 = tpu.matmul %163, %156, %cst_109 {dimension_numbers = #tpu.dot_dimension_numbers<[1], [0], [0], [1], [0, 0, 1, 1], [], []>} : vector<16x32xf32>, vector<32x32xf32>, vector<16x32xf32> -> vector<16x32xf32>
    %166 = arith.addf %164, %165 : vector<16x32xf32>
    %167 = vector.broadcast %158 : vector<1x32xf32> to vector<16x32xf32>
    %168 = arith.addf %166, %167 : vector<16x32xf32>
    %cst_110 = arith.constant dense<0.000000e+00> : vector<16xf32>
    %169 = vector.multi_reduction <add>, %168, %cst_110 [1] : vector<16x32xf32> to vector<16xf32>
    %170 = vector.shape_cast %169 : vector<16xf32> to vector<16x1xf32>
    %cst_111 = arith.constant 3.200000e+01 : f32
    %171 = vector.broadcast %cst_111 : f32 to vector<16x1xf32>
    %172 = arith.divf %170, %171 : vector<16x1xf32>
    %173 = vector.broadcast %172 : vector<16x1xf32> to vector<16x32xf32>
    %174 = arith.subf %168, %173 : vector<16x32xf32>
    %175 = arith.mulf %174, %174 : vector<16x32xf32>
    %cst_112 = arith.constant dense<0.000000e+00> : vector<16xf32>
    %176 = vector.multi_reduction <add>, %175, %cst_112 [1] : vector<16x32xf32> to vector<16xf32>
    %177 = vector.shape_cast %176 : vector<16xf32> to vector<16x1xf32>
    %cst_113 = arith.constant 3.200000e+01 : f32
    %178 = vector.broadcast %cst_113 : f32 to vector<16x1xf32>
    %179 = arith.divf %177, %178 : vector<16x1xf32>
    %180 = vector.broadcast %172 : vector<16x1xf32> to vector<16x32xf32>
    %181 = arith.subf %168, %180 : vector<16x32xf32>
    %cst_114 = arith.constant 9.99999974E-6 : f32
    %182 = vector.broadcast %cst_114 : f32 to vector<16x1xf32>
    %183 = arith.addf %179, %182 : vector<16x1xf32>
    %184 = math.rsqrt %183 : vector<16x1xf32>
    %185 = vector.broadcast %184 : vector<16x1xf32> to vector<16x32xf32>
    %186 = arith.mulf %181, %185 : vector<16x32xf32>
    %187 = vector.broadcast %160 : vector<1x32xf32> to vector<16x32xf32>
    %188 = arith.mulf %186, %187 : vector<16x32xf32>
    %189 = vector.broadcast %162 : vector<1x32xf32> to vector<16x32xf32>
    %190 = arith.addf %188, %189 : vector<16x32xf32>
    %cst_115 = arith.constant 0.000000e+00 : f32
    %191 = vector.broadcast %cst_115 : f32 to vector<16x32xf32>
    %192 = arith.cmpf ogt, %190, %191 : vector<16x32xf32>
    %cst_116 = arith.constant 0.00999999977 : f32
    %193 = vector.broadcast %cst_116 : f32 to vector<16x32xf32>
    %194 = arith.mulf %193, %190 : vector<16x32xf32>
    %195 = arith.select %192, %190, %194 : vector<16x32xi1>, vector<16x32xf32>
    %c1_117 = arith.constant 1 : index
    %c0_118 = arith.constant 0 : index
    %c0_119 = arith.constant 0 : index
    %196 = vector.load %arg3[%c1_117, %c0_118, %c0_119] : memref<3x16x16xf32, #tpu.memory_space<vmem>>, vector<1x16x16xf32>
    %197 = vector.shape_cast %196 : vector<1x16x16xf32> to vector<16x16xf32>
    %c3 = arith.constant 3 : index
    %c0_120 = arith.constant 0 : index
    %c0_121 = arith.constant 0 : index
    %198 = vector.load %arg5[%c3, %c0_120, %c0_121] : memref<6x32x32xf32, #tpu.memory_space<vmem>>, vector<1x32x32xf32>
    %199 = vector.shape_cast %198 : vector<1x32x32xf32> to vector<32x32xf32>
    %c3_122 = arith.constant 3 : index
    %c0_123 = arith.constant 0 : index
    %c0_124 = arith.constant 0 : index
    %200 = vector.load %arg6[%c3_122, %c0_123, %c0_124] : memref<6x32x32xf32, #tpu.memory_space<vmem>>, vector<1x32x32xf32>
    %201 = vector.shape_cast %200 : vector<1x32x32xf32> to vector<32x32xf32>
    %c3_125 = arith.constant 3 : index
    %c0_126 = arith.constant 0 : index
    %c0_127 = arith.constant 0 : index
    %202 = vector.load %arg7[%c3_125, %c0_126, %c0_127] : memref<6x1x32xf32, #tpu.memory_space<vmem>>, vector<1x1x32xf32>
    %203 = vector.shape_cast %202 : vector<1x1x32xf32> to vector<1x32xf32>
    %c3_128 = arith.constant 3 : index
    %c0_129 = arith.constant 0 : index
    %c0_130 = arith.constant 0 : index
    %204 = vector.load %arg8[%c3_128, %c0_129, %c0_130] : memref<6x1x32xf32, #tpu.memory_space<vmem>>, vector<1x1x32xf32>
    %205 = vector.shape_cast %204 : vector<1x1x32xf32> to vector<1x32xf32>
    %c3_131 = arith.constant 3 : index
    %c0_132 = arith.constant 0 : index
    %c0_133 = arith.constant 0 : index
    %206 = vector.load %arg9[%c3_131, %c0_132, %c0_133] : memref<6x1x32xf32, #tpu.memory_space<vmem>>, vector<1x1x32xf32>
    %207 = vector.shape_cast %206 : vector<1x1x32xf32> to vector<1x32xf32>
    %cst_134 = arith.constant dense<0.000000e+00> : vector<16x32xf32>
    %208 = tpu.matmul %197, %195, %cst_134 {dimension_numbers = #tpu.dot_dimension_numbers<[1], [0], [0], [1], [0, 0, 1, 1], [], []>} : vector<16x16xf32>, vector<16x32xf32>, vector<16x32xf32> -> vector<16x32xf32>
    %cst_135 = arith.constant dense<0.000000e+00> : vector<16x32xf32>
    %209 = tpu.matmul %195, %199, %cst_135 {dimension_numbers = #tpu.dot_dimension_numbers<[1], [0], [0], [1], [0, 0, 1, 1], [], []>} : vector<16x32xf32>, vector<32x32xf32>, vector<16x32xf32> -> vector<16x32xf32>
    %cst_136 = arith.constant dense<0.000000e+00> : vector<16x32xf32>
    %210 = tpu.matmul %208, %201, %cst_136 {dimension_numbers = #tpu.dot_dimension_numbers<[1], [0], [0], [1], [0, 0, 1, 1], [], []>} : vector<16x32xf32>, vector<32x32xf32>, vector<16x32xf32> -> vector<16x32xf32>
    %211 = arith.addf %209, %210 : vector<16x32xf32>
    %212 = vector.broadcast %203 : vector<1x32xf32> to vector<16x32xf32>
    %213 = arith.addf %211, %212 : vector<16x32xf32>
    %cst_137 = arith.constant dense<0.000000e+00> : vector<16xf32>
    %214 = vector.multi_reduction <add>, %213, %cst_137 [1] : vector<16x32xf32> to vector<16xf32>
    %215 = vector.shape_cast %214 : vector<16xf32> to vector<16x1xf32>
    %cst_138 = arith.constant 3.200000e+01 : f32
    %216 = vector.broadcast %cst_138 : f32 to vector<16x1xf32>
    %217 = arith.divf %215, %216 : vector<16x1xf32>
    %218 = vector.broadcast %217 : vector<16x1xf32> to vector<16x32xf32>
    %219 = arith.subf %213, %218 : vector<16x32xf32>
    %220 = arith.mulf %219, %219 : vector<16x32xf32>
    %cst_139 = arith.constant dense<0.000000e+00> : vector<16xf32>
    %221 = vector.multi_reduction <add>, %220, %cst_139 [1] : vector<16x32xf32> to vector<16xf32>
    %222 = vector.shape_cast %221 : vector<16xf32> to vector<16x1xf32>
    %cst_140 = arith.constant 3.200000e+01 : f32
    %223 = vector.broadcast %cst_140 : f32 to vector<16x1xf32>
    %224 = arith.divf %222, %223 : vector<16x1xf32>
    %225 = vector.broadcast %217 : vector<16x1xf32> to vector<16x32xf32>
    %226 = arith.subf %213, %225 : vector<16x32xf32>
    %cst_141 = arith.constant 9.99999974E-6 : f32
    %227 = vector.broadcast %cst_141 : f32 to vector<16x1xf32>
    %228 = arith.addf %224, %227 : vector<16x1xf32>
    %229 = math.rsqrt %228 : vector<16x1xf32>
    %230 = vector.broadcast %229 : vector<16x1xf32> to vector<16x32xf32>
    %231 = arith.mulf %226, %230 : vector<16x32xf32>
    %232 = vector.broadcast %205 : vector<1x32xf32> to vector<16x32xf32>
    %233 = arith.mulf %231, %232 : vector<16x32xf32>
    %234 = vector.broadcast %207 : vector<1x32xf32> to vector<16x32xf32>
    %235 = arith.addf %233, %234 : vector<16x32xf32>
    %cst_142 = arith.constant 0.000000e+00 : f32
    %236 = vector.broadcast %cst_142 : f32 to vector<16x32xf32>
    %237 = arith.cmpf ogt, %235, %236 : vector<16x32xf32>
    %cst_143 = arith.constant 0.00999999977 : f32
    %238 = vector.broadcast %cst_143 : f32 to vector<16x32xf32>
    %239 = arith.mulf %238, %235 : vector<16x32xf32>
    %240 = arith.select %237, %235, %239 : vector<16x32xi1>, vector<16x32xf32>
    %241 = tpu.concatenate %240, %13 in 0 : vector<16x32xf32>, vector<16x32xf32> -> vector<32x32xf32>
    %c1_144 = arith.constant 1 : index
    %c0_145 = arith.constant 0 : index
    %c0_146 = arith.constant 0 : index
    %242 = vector.load %arg4[%c1_144, %c0_145, %c0_146] : memref<2x32x32xf32, #tpu.memory_space<vmem>>, vector<1x32x32xf32>
    %243 = vector.shape_cast %242 : vector<1x32x32xf32> to vector<32x32xf32>
    %c1_147 = arith.constant 1 : index
    %c0_148 = arith.constant 0 : index
    %c0_149 = arith.constant 0 : index
    %244 = vector.load %arg10[%c1_147, %c0_148, %c0_149] : memref<2x32x32xf32, #tpu.memory_space<vmem>>, vector<1x32x32xf32>
    %245 = vector.shape_cast %244 : vector<1x32x32xf32> to vector<32x32xf32>
    %c1_150 = arith.constant 1 : index
    %c0_151 = arith.constant 0 : index
    %c0_152 = arith.constant 0 : index
    %246 = vector.load %arg11[%c1_150, %c0_151, %c0_152] : memref<2x32x32xf32, #tpu.memory_space<vmem>>, vector<1x32x32xf32>
    %247 = vector.shape_cast %246 : vector<1x32x32xf32> to vector<32x32xf32>
    %c1_153 = arith.constant 1 : index
    %c0_154 = arith.constant 0 : index
    %c0_155 = arith.constant 0 : index
    %248 = vector.load %arg12[%c1_153, %c0_154, %c0_155] : memref<2x1x32xf32, #tpu.memory_space<vmem>>, vector<1x1x32xf32>
    %249 = vector.shape_cast %248 : vector<1x1x32xf32> to vector<1x32xf32>
    %c1_156 = arith.constant 1 : index
    %c0_157 = arith.constant 0 : index
    %c0_158 = arith.constant 0 : index
    %250 = vector.load %arg13[%c1_156, %c0_157, %c0_158] : memref<2x1x32xf32, #tpu.memory_space<vmem>>, vector<1x1x32xf32>
    %251 = vector.shape_cast %250 : vector<1x1x32xf32> to vector<1x32xf32>
    %c1_159 = arith.constant 1 : index
    %c0_160 = arith.constant 0 : index
    %c0_161 = arith.constant 0 : index
    %252 = vector.load %arg14[%c1_159, %c0_160, %c0_161] : memref<2x1x32xf32, #tpu.memory_space<vmem>>, vector<1x1x32xf32>
    %253 = vector.shape_cast %252 : vector<1x1x32xf32> to vector<1x32xf32>
    %cst_162 = arith.constant dense<0.000000e+00> : vector<32x32xf32>
    %254 = tpu.matmul %243, %241, %cst_162 {dimension_numbers = #tpu.dot_dimension_numbers<[1], [0], [0], [1], [0, 0, 1, 1], [], []>} : vector<32x32xf32>, vector<32x32xf32>, vector<32x32xf32> -> vector<32x32xf32>
    %cst_163 = arith.constant dense<0.000000e+00> : vector<32x32xf32>
    %255 = tpu.matmul %241, %245, %cst_163 {dimension_numbers = #tpu.dot_dimension_numbers<[1], [0], [0], [1], [0, 0, 1, 1], [], []>} : vector<32x32xf32>, vector<32x32xf32>, vector<32x32xf32> -> vector<32x32xf32>
    %cst_164 = arith.constant dense<0.000000e+00> : vector<32x32xf32>
    %256 = tpu.matmul %254, %247, %cst_164 {dimension_numbers = #tpu.dot_dimension_numbers<[1], [0], [0], [1], [0, 0, 1, 1], [], []>} : vector<32x32xf32>, vector<32x32xf32>, vector<32x32xf32> -> vector<32x32xf32>
    %257 = arith.addf %255, %256 : vector<32x32xf32>
    %258 = vector.broadcast %249 : vector<1x32xf32> to vector<32x32xf32>
    %259 = arith.addf %257, %258 : vector<32x32xf32>
    %cst_165 = arith.constant dense<0.000000e+00> : vector<32xf32>
    %260 = vector.multi_reduction <add>, %259, %cst_165 [1] : vector<32x32xf32> to vector<32xf32>
    %261 = vector.shape_cast %260 : vector<32xf32> to vector<32x1xf32>
    %cst_166 = arith.constant 3.200000e+01 : f32
    %262 = vector.broadcast %cst_166 : f32 to vector<32x1xf32>
    %263 = arith.divf %261, %262 : vector<32x1xf32>
    %264 = vector.broadcast %263 : vector<32x1xf32> to vector<32x32xf32>
    %265 = arith.subf %259, %264 : vector<32x32xf32>
    %266 = arith.mulf %265, %265 : vector<32x32xf32>
    %cst_167 = arith.constant dense<0.000000e+00> : vector<32xf32>
    %267 = vector.multi_reduction <add>, %266, %cst_167 [1] : vector<32x32xf32> to vector<32xf32>
    %268 = vector.shape_cast %267 : vector<32xf32> to vector<32x1xf32>
    %cst_168 = arith.constant 3.200000e+01 : f32
    %269 = vector.broadcast %cst_168 : f32 to vector<32x1xf32>
    %270 = arith.divf %268, %269 : vector<32x1xf32>
    %271 = vector.broadcast %263 : vector<32x1xf32> to vector<32x32xf32>
    %272 = arith.subf %259, %271 : vector<32x32xf32>
    %cst_169 = arith.constant 9.99999974E-6 : f32
    %273 = vector.broadcast %cst_169 : f32 to vector<32x1xf32>
    %274 = arith.addf %270, %273 : vector<32x1xf32>
    %275 = math.rsqrt %274 : vector<32x1xf32>
    %276 = vector.broadcast %275 : vector<32x1xf32> to vector<32x32xf32>
    %277 = arith.mulf %272, %276 : vector<32x32xf32>
    %278 = vector.broadcast %251 : vector<1x32xf32> to vector<32x32xf32>
    %279 = arith.mulf %277, %278 : vector<32x32xf32>
    %280 = vector.broadcast %253 : vector<1x32xf32> to vector<32x32xf32>
    %281 = arith.addf %279, %280 : vector<32x32xf32>
    %cst_170 = arith.constant 0.000000e+00 : f32
    %282 = vector.broadcast %cst_170 : f32 to vector<32x32xf32>
    %283 = arith.cmpf ogt, %281, %282 : vector<32x32xf32>
    %cst_171 = arith.constant 0.00999999977 : f32
    %284 = vector.broadcast %cst_171 : f32 to vector<32x32xf32>
    %285 = arith.mulf %284, %281 : vector<32x32xf32>
    %286 = arith.select %283, %281, %285 : vector<32x32xi1>, vector<32x32xf32>
    %287 = vector.extract_strided_slice %286 {offsets = [16, 0], sizes = [16, 32], strides = [1, 1]} : vector<32x32xf32> to vector<16x32xf32>
    %c2_172 = arith.constant 2 : index
    %c0_173 = arith.constant 0 : index
    %c0_174 = arith.constant 0 : index
    %288 = vector.load %arg3[%c2_172, %c0_173, %c0_174] : memref<3x16x16xf32, #tpu.memory_space<vmem>>, vector<1x16x16xf32>
    %289 = vector.shape_cast %288 : vector<1x16x16xf32> to vector<16x16xf32>
    %c4 = arith.constant 4 : index
    %c0_175 = arith.constant 0 : index
    %c0_176 = arith.constant 0 : index
    %290 = vector.load %arg5[%c4, %c0_175, %c0_176] : memref<6x32x32xf32, #tpu.memory_space<vmem>>, vector<1x32x32xf32>
    %291 = vector.shape_cast %290 : vector<1x32x32xf32> to vector<32x32xf32>
    %c4_177 = arith.constant 4 : index
    %c0_178 = arith.constant 0 : index
    %c0_179 = arith.constant 0 : index
    %292 = vector.load %arg6[%c4_177, %c0_178, %c0_179] : memref<6x32x32xf32, #tpu.memory_space<vmem>>, vector<1x32x32xf32>
    %293 = vector.shape_cast %292 : vector<1x32x32xf32> to vector<32x32xf32>
    %c4_180 = arith.constant 4 : index
    %c0_181 = arith.constant 0 : index
    %c0_182 = arith.constant 0 : index
    %294 = vector.load %arg7[%c4_180, %c0_181, %c0_182] : memref<6x1x32xf32, #tpu.memory_space<vmem>>, vector<1x1x32xf32>
    %295 = vector.shape_cast %294 : vector<1x1x32xf32> to vector<1x32xf32>
    %c4_183 = arith.constant 4 : index
    %c0_184 = arith.constant 0 : index
    %c0_185 = arith.constant 0 : index
    %296 = vector.load %arg8[%c4_183, %c0_184, %c0_185] : memref<6x1x32xf32, #tpu.memory_space<vmem>>, vector<1x1x32xf32>
    %297 = vector.shape_cast %296 : vector<1x1x32xf32> to vector<1x32xf32>
    %c4_186 = arith.constant 4 : index
    %c0_187 = arith.constant 0 : index
    %c0_188 = arith.constant 0 : index
    %298 = vector.load %arg9[%c4_186, %c0_187, %c0_188] : memref<6x1x32xf32, #tpu.memory_space<vmem>>, vector<1x1x32xf32>
    %299 = vector.shape_cast %298 : vector<1x1x32xf32> to vector<1x32xf32>
    %cst_189 = arith.constant dense<0.000000e+00> : vector<16x32xf32>
    %300 = tpu.matmul %289, %287, %cst_189 {dimension_numbers = #tpu.dot_dimension_numbers<[1], [0], [0], [1], [0, 0, 1, 1], [], []>} : vector<16x16xf32>, vector<16x32xf32>, vector<16x32xf32> -> vector<16x32xf32>
    %cst_190 = arith.constant dense<0.000000e+00> : vector<16x32xf32>
    %301 = tpu.matmul %287, %291, %cst_190 {dimension_numbers = #tpu.dot_dimension_numbers<[1], [0], [0], [1], [0, 0, 1, 1], [], []>} : vector<16x32xf32>, vector<32x32xf32>, vector<16x32xf32> -> vector<16x32xf32>
    %cst_191 = arith.constant dense<0.000000e+00> : vector<16x32xf32>
    %302 = tpu.matmul %300, %293, %cst_191 {dimension_numbers = #tpu.dot_dimension_numbers<[1], [0], [0], [1], [0, 0, 1, 1], [], []>} : vector<16x32xf32>, vector<32x32xf32>, vector<16x32xf32> -> vector<16x32xf32>
    %303 = arith.addf %301, %302 : vector<16x32xf32>
    %304 = vector.broadcast %295 : vector<1x32xf32> to vector<16x32xf32>
    %305 = arith.addf %303, %304 : vector<16x32xf32>
    %cst_192 = arith.constant dense<0.000000e+00> : vector<16xf32>
    %306 = vector.multi_reduction <add>, %305, %cst_192 [1] : vector<16x32xf32> to vector<16xf32>
    %307 = vector.shape_cast %306 : vector<16xf32> to vector<16x1xf32>
    %cst_193 = arith.constant 3.200000e+01 : f32
    %308 = vector.broadcast %cst_193 : f32 to vector<16x1xf32>
    %309 = arith.divf %307, %308 : vector<16x1xf32>
    %310 = vector.broadcast %309 : vector<16x1xf32> to vector<16x32xf32>
    %311 = arith.subf %305, %310 : vector<16x32xf32>
    %312 = arith.mulf %311, %311 : vector<16x32xf32>
    %cst_194 = arith.constant dense<0.000000e+00> : vector<16xf32>
    %313 = vector.multi_reduction <add>, %312, %cst_194 [1] : vector<16x32xf32> to vector<16xf32>
    %314 = vector.shape_cast %313 : vector<16xf32> to vector<16x1xf32>
    %cst_195 = arith.constant 3.200000e+01 : f32
    %315 = vector.broadcast %cst_195 : f32 to vector<16x1xf32>
    %316 = arith.divf %314, %315 : vector<16x1xf32>
    %317 = vector.broadcast %309 : vector<16x1xf32> to vector<16x32xf32>
    %318 = arith.subf %305, %317 : vector<16x32xf32>
    %cst_196 = arith.constant 9.99999974E-6 : f32
    %319 = vector.broadcast %cst_196 : f32 to vector<16x1xf32>
    %320 = arith.addf %316, %319 : vector<16x1xf32>
    %321 = math.rsqrt %320 : vector<16x1xf32>
    %322 = vector.broadcast %321 : vector<16x1xf32> to vector<16x32xf32>
    %323 = arith.mulf %318, %322 : vector<16x32xf32>
    %324 = vector.broadcast %297 : vector<1x32xf32> to vector<16x32xf32>
    %325 = arith.mulf %323, %324 : vector<16x32xf32>
    %326 = vector.broadcast %299 : vector<1x32xf32> to vector<16x32xf32>
    %327 = arith.addf %325, %326 : vector<16x32xf32>
    %cst_197 = arith.constant 0.000000e+00 : f32
    %328 = vector.broadcast %cst_197 : f32 to vector<16x32xf32>
    %329 = arith.cmpf ogt, %327, %328 : vector<16x32xf32>
    %cst_198 = arith.constant 0.00999999977 : f32
    %330 = vector.broadcast %cst_198 : f32 to vector<16x32xf32>
    %331 = arith.mulf %330, %327 : vector<16x32xf32>
    %332 = arith.select %329, %327, %331 : vector<16x32xi1>, vector<16x32xf32>
    %c2_199 = arith.constant 2 : index
    %c0_200 = arith.constant 0 : index
    %c0_201 = arith.constant 0 : index
    %333 = vector.load %arg3[%c2_199, %c0_200, %c0_201] : memref<3x16x16xf32, #tpu.memory_space<vmem>>, vector<1x16x16xf32>
    %334 = vector.shape_cast %333 : vector<1x16x16xf32> to vector<16x16xf32>
    %c5 = arith.constant 5 : index
    %c0_202 = arith.constant 0 : index
    %c0_203 = arith.constant 0 : index
    %335 = vector.load %arg5[%c5, %c0_202, %c0_203] : memref<6x32x32xf32, #tpu.memory_space<vmem>>, vector<1x32x32xf32>
    %336 = vector.shape_cast %335 : vector<1x32x32xf32> to vector<32x32xf32>
    %c5_204 = arith.constant 5 : index
    %c0_205 = arith.constant 0 : index
    %c0_206 = arith.constant 0 : index
    %337 = vector.load %arg6[%c5_204, %c0_205, %c0_206] : memref<6x32x32xf32, #tpu.memory_space<vmem>>, vector<1x32x32xf32>
    %338 = vector.shape_cast %337 : vector<1x32x32xf32> to vector<32x32xf32>
    %c5_207 = arith.constant 5 : index
    %c0_208 = arith.constant 0 : index
    %c0_209 = arith.constant 0 : index
    %339 = vector.load %arg7[%c5_207, %c0_208, %c0_209] : memref<6x1x32xf32, #tpu.memory_space<vmem>>, vector<1x1x32xf32>
    %340 = vector.shape_cast %339 : vector<1x1x32xf32> to vector<1x32xf32>
    %c5_210 = arith.constant 5 : index
    %c0_211 = arith.constant 0 : index
    %c0_212 = arith.constant 0 : index
    %341 = vector.load %arg8[%c5_210, %c0_211, %c0_212] : memref<6x1x32xf32, #tpu.memory_space<vmem>>, vector<1x1x32xf32>
    %342 = vector.shape_cast %341 : vector<1x1x32xf32> to vector<1x32xf32>
    %c5_213 = arith.constant 5 : index
    %c0_214 = arith.constant 0 : index
    %c0_215 = arith.constant 0 : index
    %343 = vector.load %arg9[%c5_213, %c0_214, %c0_215] : memref<6x1x32xf32, #tpu.memory_space<vmem>>, vector<1x1x32xf32>
    %344 = vector.shape_cast %343 : vector<1x1x32xf32> to vector<1x32xf32>
    %cst_216 = arith.constant dense<0.000000e+00> : vector<16x32xf32>
    %345 = tpu.matmul %334, %332, %cst_216 {dimension_numbers = #tpu.dot_dimension_numbers<[1], [0], [0], [1], [0, 0, 1, 1], [], []>} : vector<16x16xf32>, vector<16x32xf32>, vector<16x32xf32> -> vector<16x32xf32>
    %cst_217 = arith.constant dense<0.000000e+00> : vector<16x32xf32>
    %346 = tpu.matmul %332, %336, %cst_217 {dimension_numbers = #tpu.dot_dimension_numbers<[1], [0], [0], [1], [0, 0, 1, 1], [], []>} : vector<16x32xf32>, vector<32x32xf32>, vector<16x32xf32> -> vector<16x32xf32>
    %cst_218 = arith.constant dense<0.000000e+00> : vector<16x32xf32>
    %347 = tpu.matmul %345, %338, %cst_218 {dimension_numbers = #tpu.dot_dimension_numbers<[1], [0], [0], [1], [0, 0, 1, 1], [], []>} : vector<16x32xf32>, vector<32x32xf32>, vector<16x32xf32> -> vector<16x32xf32>
    %348 = arith.addf %346, %347 : vector<16x32xf32>
    %349 = vector.broadcast %340 : vector<1x32xf32> to vector<16x32xf32>
    %350 = arith.addf %348, %349 : vector<16x32xf32>
    %cst_219 = arith.constant dense<0.000000e+00> : vector<16xf32>
    %351 = vector.multi_reduction <add>, %350, %cst_219 [1] : vector<16x32xf32> to vector<16xf32>
    %352 = vector.shape_cast %351 : vector<16xf32> to vector<16x1xf32>
    %cst_220 = arith.constant 3.200000e+01 : f32
    %353 = vector.broadcast %cst_220 : f32 to vector<16x1xf32>
    %354 = arith.divf %352, %353 : vector<16x1xf32>
    %355 = vector.broadcast %354 : vector<16x1xf32> to vector<16x32xf32>
    %356 = arith.subf %350, %355 : vector<16x32xf32>
    %357 = arith.mulf %356, %356 : vector<16x32xf32>
    %cst_221 = arith.constant dense<0.000000e+00> : vector<16xf32>
    %358 = vector.multi_reduction <add>, %357, %cst_221 [1] : vector<16x32xf32> to vector<16xf32>
    %359 = vector.shape_cast %358 : vector<16xf32> to vector<16x1xf32>
    %cst_222 = arith.constant 3.200000e+01 : f32
    %360 = vector.broadcast %cst_222 : f32 to vector<16x1xf32>
    %361 = arith.divf %359, %360 : vector<16x1xf32>
    %362 = vector.broadcast %354 : vector<16x1xf32> to vector<16x32xf32>
    %363 = arith.subf %350, %362 : vector<16x32xf32>
    %cst_223 = arith.constant 9.99999974E-6 : f32
    %364 = vector.broadcast %cst_223 : f32 to vector<16x1xf32>
    %365 = arith.addf %361, %364 : vector<16x1xf32>
    %366 = math.rsqrt %365 : vector<16x1xf32>
    %367 = vector.broadcast %366 : vector<16x1xf32> to vector<16x32xf32>
    %368 = arith.mulf %363, %367 : vector<16x32xf32>
    %369 = vector.broadcast %342 : vector<1x32xf32> to vector<16x32xf32>
    %370 = arith.mulf %368, %369 : vector<16x32xf32>
    %371 = vector.broadcast %344 : vector<1x32xf32> to vector<16x32xf32>
    %372 = arith.addf %370, %371 : vector<16x32xf32>
    %cst_224 = arith.constant 0.000000e+00 : f32
    %373 = vector.broadcast %cst_224 : f32 to vector<16x32xf32>
    %374 = arith.cmpf ogt, %372, %373 : vector<16x32xf32>
    %cst_225 = arith.constant 0.00999999977 : f32
    %375 = vector.broadcast %cst_225 : f32 to vector<16x32xf32>
    %376 = arith.mulf %375, %372 : vector<16x32xf32>
    %377 = arith.select %374, %372, %376 : vector<16x32xi1>, vector<16x32xf32>
    %cst_226 = arith.constant 0.000000e+00 : f32
    %378 = vector.broadcast %cst_226 : f32 to vector<1x288xf32>
    %c0_227 = arith.constant 0 : index
    %c0_228 = arith.constant 0 : index
    %c0_229 = arith.constant 0 : index
    %379 = vector.load %arg16[%c0_227, %c0_228, %c0_229] : memref<3x1x128xf32, #tpu.memory_space<vmem>>, vector<1x1x128xf32>
    %380 = vector.shape_cast %379 : vector<1x1x128xf32> to vector<1x128xf32>
    %c0_230 = arith.constant 0 : index
    %c0_231 = arith.constant 0 : index
    %c0_232 = arith.constant 0 : index
    %c0_233 = arith.constant 0 : index
    %381 = vector.load %arg15[%c0_230, %c0_231, %c0_232, %c0_233] : memref<3x3x32x128xf32, #tpu.memory_space<vmem>>, vector<1x1x32x128xf32>
    %382 = vector.shape_cast %381 : vector<1x1x32x128xf32> to vector<32x128xf32>
    %cst_234 = arith.constant dense<0.000000e+00> : vector<16x128xf32>
    %383 = tpu.matmul %11, %382, %cst_234 {dimension_numbers = #tpu.dot_dimension_numbers<[1], [0], [0], [1], [0, 0, 1, 1], [], []>} : vector<16x32xf32>, vector<32x128xf32>, vector<16x128xf32> -> vector<16x128xf32>
    %384 = vector.broadcast %380 : vector<1x128xf32> to vector<16x128xf32>
    %385 = arith.addf %384, %383 : vector<16x128xf32>
    %c0_235 = arith.constant 0 : index
    %c1_236 = arith.constant 1 : index
    %c0_237 = arith.constant 0 : index
    %c0_238 = arith.constant 0 : index
    %386 = vector.load %arg15[%c0_235, %c1_236, %c0_237, %c0_238] : memref<3x3x32x128xf32, #tpu.memory_space<vmem>>, vector<1x1x32x128xf32>
    %387 = vector.shape_cast %386 : vector<1x1x32x128xf32> to vector<32x128xf32>
    %cst_239 = arith.constant dense<0.000000e+00> : vector<16x128xf32>
    %388 = tpu.matmul %58, %387, %cst_239 {dimension_numbers = #tpu.dot_dimension_numbers<[1], [0], [0], [1], [0, 0, 1, 1], [], []>} : vector<16x32xf32>, vector<32x128xf32>, vector<16x128xf32> -> vector<16x128xf32>
    %389 = arith.addf %385, %388 : vector<16x128xf32>
    %c0_240 = arith.constant 0 : index
    %c2_241 = arith.constant 2 : index
    %c0_242 = arith.constant 0 : index
    %c0_243 = arith.constant 0 : index
    %390 = vector.load %arg15[%c0_240, %c2_241, %c0_242, %c0_243] : memref<3x3x32x128xf32, #tpu.memory_space<vmem>>, vector<1x1x32x128xf32>
    %391 = vector.shape_cast %390 : vector<1x1x32x128xf32> to vector<32x128xf32>
    %cst_244 = arith.constant dense<0.000000e+00> : vector<16x128xf32>
    %392 = tpu.matmul %103, %391, %cst_244 {dimension_numbers = #tpu.dot_dimension_numbers<[1], [0], [0], [1], [0, 0, 1, 1], [], []>} : vector<16x32xf32>, vector<32x128xf32>, vector<16x128xf32> -> vector<16x128xf32>
    %393 = arith.addf %389, %392 : vector<16x128xf32>
    %cst_245 = arith.constant 0.000000e+00 : f32
    %394 = vector.broadcast %cst_245 : f32 to vector<16x128xf32>
    %395 = arith.cmpf ogt, %393, %394 : vector<16x128xf32>
    %cst_246 = arith.constant 0.00999999977 : f32
    %396 = vector.broadcast %cst_246 : f32 to vector<16x128xf32>
    %397 = arith.mulf %396, %393 : vector<16x128xf32>
    %398 = arith.select %395, %393, %397 : vector<16x128xi1>, vector<16x128xf32>
    %c0_247 = arith.constant 0 : index
    %c0_248 = arith.constant 0 : index
    %c0_249 = arith.constant 0 : index
    %399 = vector.load %arg17[%c0_247, %c0_248, %c0_249] : memref<3x128x128xf32, #tpu.memory_space<vmem>>, vector<1x128x128xf32>
    %400 = vector.shape_cast %399 : vector<1x128x128xf32> to vector<128x128xf32>
    %cst_250 = arith.constant dense<0.000000e+00> : vector<16x128xf32>
    %401 = tpu.matmul %398, %400, %cst_250 {dimension_numbers = #tpu.dot_dimension_numbers<[1], [0], [0], [1], [0, 0, 1, 1], [], []>} : vector<16x128xf32>, vector<128x128xf32>, vector<16x128xf32> -> vector<16x128xf32>
    %c0_251 = arith.constant 0 : index
    %c0_252 = arith.constant 0 : index
    %c0_253 = arith.constant 0 : index
    %402 = vector.load %arg18[%c0_251, %c0_252, %c0_253] : memref<3x1x128xf32, #tpu.memory_space<vmem>>, vector<1x1x128xf32>
    %403 = vector.shape_cast %402 : vector<1x1x128xf32> to vector<1x128xf32>
    %404 = vector.broadcast %403 : vector<1x128xf32> to vector<16x128xf32>
    %405 = arith.addf %401, %404 : vector<16x128xf32>
    %406 = math.tanh %405 : vector<16x128xf32>
    %c0_254 = arith.constant 0 : index
    %c0_255 = arith.constant 0 : index
    %c0_256 = arith.constant 0 : index
    %407 = vector.load %arg19[%c0_254, %c0_255, %c0_256] : memref<3x128x128xf32, #tpu.memory_space<vmem>>, vector<1x128x128xf32>
    %408 = vector.shape_cast %407 : vector<1x128x128xf32> to vector<128x128xf32>
    %cst_257 = arith.constant dense<0.000000e+00> : vector<16x128xf32>
    %409 = tpu.matmul %398, %408, %cst_257 {dimension_numbers = #tpu.dot_dimension_numbers<[1], [0], [0], [1], [0, 0, 1, 1], [], []>} : vector<16x128xf32>, vector<128x128xf32>, vector<16x128xf32> -> vector<16x128xf32>
    %c0_258 = arith.constant 0 : index
    %c0_259 = arith.constant 0 : index
    %c0_260 = arith.constant 0 : index
    %410 = vector.load %arg20[%c0_258, %c0_259, %c0_260] : memref<3x1x128xf32, #tpu.memory_space<vmem>>, vector<1x1x128xf32>
    %411 = vector.shape_cast %410 : vector<1x1x128xf32> to vector<1x128xf32>
    %412 = vector.broadcast %411 : vector<1x128xf32> to vector<16x128xf32>
    %413 = arith.addf %409, %412 : vector<16x128xf32>
    %414 = arith.negf %413 : vector<16x128xf32>
    %415 = math.exp %414 : vector<16x128xf32>
    %cst_261 = arith.constant 1.000000e+00 : f32
    %416 = vector.broadcast %cst_261 : f32 to vector<16x128xf32>
    %417 = arith.addf %416, %415 : vector<16x128xf32>
    %418 = arith.divf %416, %417 : vector<16x128xf32>
    %419 = arith.mulf %406, %418 : vector<16x128xf32>
    %c0_262 = arith.constant 0 : index
    %c0_263 = arith.constant 0 : index
    %c0_264 = arith.constant 0 : index
    %420 = vector.load %arg21[%c0_262, %c0_263, %c0_264] : memref<3x1x128xf32, #tpu.memory_space<vmem>>, vector<1x1x128xf32>
    %421 = vector.shape_cast %420 : vector<1x1x128xf32> to vector<1x128xf32>
    %cst_265 = arith.constant dense<0.000000e+00> : vector<1x16xf32>
    %422 = tpu.matmul %421, %419, %cst_265 {dimension_numbers = #tpu.dot_dimension_numbers<[1], [1], [0], [0], [0, 0, 1, 0], [], []>} : vector<1x128xf32>, vector<16x128xf32>, vector<1x16xf32> -> vector<1x16xf32>
    %c0_266 = arith.constant 0 : index
    %c0_267 = arith.constant 0 : index
    %c0_268 = arith.constant 0 : index
    %423 = vector.load %arg22[%c0_266, %c0_267, %c0_268] : memref<3x1x1xf32, #tpu.memory_space<vmem>>, vector<1x1x1xf32>
    %424 = vector.shape_cast %423 : vector<1x1x1xf32> to vector<1x1xf32>
    %425 = vector.broadcast %424 : vector<1x1xf32> to vector<1x16xf32>
    %426 = arith.addf %422, %425 : vector<1x16xf32>
    %cst_269 = arith.constant dense<0xFF800000> : vector<1xf32>
    %427 = vector.multi_reduction <maximumf>, %426, %cst_269 [1] : vector<1x16xf32> to vector<1xf32>
    %428 = vector.shape_cast %427 : vector<1xf32> to vector<1x1xf32>
    %429 = vector.broadcast %428 : vector<1x1xf32> to vector<1x16xf32>
    %430 = arith.subf %426, %429 : vector<1x16xf32>
    %431 = math.exp %430 : vector<1x16xf32>
    %cst_270 = arith.constant dense<0.000000e+00> : vector<1xf32>
    %432 = vector.multi_reduction <add>, %431, %cst_270 [1] : vector<1x16xf32> to vector<1xf32>
    %433 = vector.shape_cast %432 : vector<1xf32> to vector<1x1xf32>
    %434 = vector.broadcast %433 : vector<1x1xf32> to vector<1x16xf32>
    %435 = arith.divf %431, %434 : vector<1x16xf32>
    %c0_271 = arith.constant 0 : index
    %c0_272 = arith.constant 0 : index
    %c0_273 = arith.constant 0 : index
    %436 = vector.load %arg28[%c0_271, %c0_272, %c0_273] : memref<3x1x16xf32, #tpu.memory_space<vmem>>, vector<1x1x16xf32>
    %437 = vector.shape_cast %436 : vector<1x1x16xf32> to vector<1x16xf32>
    %438 = vector.shape_cast %435 : vector<1x16xf32> to vector<1x1x16xf32>
    tpu.vector_store %arg28[%c0_271, %c0_272, %c0_273], %438 {strides = array<i32>} : memref<3x1x16xf32, #tpu.memory_space<vmem>>, vector<1x1x16xf32>,
    %cst_274 = arith.constant dense<0.000000e+00> : vector<1x128xf32>
    %439 = tpu.matmul %435, %398, %cst_274 {dimension_numbers = #tpu.dot_dimension_numbers<[1], [0], [0], [1], [0, 0, 1, 1], [], []>} : vector<1x16xf32>, vector<16x128xf32>, vector<1x128xf32> -> vector<1x128xf32>
    %c0_275 = arith.constant 0 : index
    %c0_276 = arith.constant 0 : index
    %c0_277 = arith.constant 0 : index
    %440 = vector.load %arg23[%c0_275, %c0_276, %c0_277] : memref<3x128x288xf32, #tpu.memory_space<vmem>>, vector<1x128x288xf32>
    %441 = vector.shape_cast %440 : vector<1x128x288xf32> to vector<128x288xf32>
    %cst_278 = arith.constant dense<0.000000e+00> : vector<1x288xf32>
    %442 = tpu.matmul %439, %441, %cst_278 {dimension_numbers = #tpu.dot_dimension_numbers<[1], [0], [0], [1], [0, 0, 1, 1], [], []>} : vector<1x128xf32>, vector<128x288xf32>, vector<1x288xf32> -> vector<1x288xf32>
    %443 = arith.addf %378, %442 : vector<1x288xf32>
    %c1_279 = arith.constant 1 : index
    %c0_280 = arith.constant 0 : index
    %c0_281 = arith.constant 0 : index
    %444 = vector.load %arg16[%c1_279, %c0_280, %c0_281] : memref<3x1x128xf32, #tpu.memory_space<vmem>>, vector<1x1x128xf32>
    %445 = vector.shape_cast %444 : vector<1x1x128xf32> to vector<1x128xf32>
    %c1_282 = arith.constant 1 : index
    %c0_283 = arith.constant 0 : index
    %c0_284 = arith.constant 0 : index
    %c0_285 = arith.constant 0 : index
    %446 = vector.load %arg15[%c1_282, %c0_283, %c0_284, %c0_285] : memref<3x3x32x128xf32, #tpu.memory_space<vmem>>, vector<1x1x32x128xf32>
    %447 = vector.shape_cast %446 : vector<1x1x32x128xf32> to vector<32x128xf32>
    %cst_286 = arith.constant dense<0.000000e+00> : vector<16x128xf32>
    %448 = tpu.matmul %150, %447, %cst_286 {dimension_numbers = #tpu.dot_dimension_numbers<[1], [0], [0], [1], [0, 0, 1, 1], [], []>} : vector<16x32xf32>, vector<32x128xf32>, vector<16x128xf32> -> vector<16x128xf32>
    %449 = vector.broadcast %445 : vector<1x128xf32> to vector<16x128xf32>
    %450 = arith.addf %449, %448 : vector<16x128xf32>
    %c1_287 = arith.constant 1 : index
    %c1_288 = arith.constant 1 : index
    %c0_289 = arith.constant 0 : index
    %c0_290 = arith.constant 0 : index
    %451 = vector.load %arg15[%c1_287, %c1_288, %c0_289, %c0_290] : memref<3x3x32x128xf32, #tpu.memory_space<vmem>>, vector<1x1x32x128xf32>
    %452 = vector.shape_cast %451 : vector<1x1x32x128xf32> to vector<32x128xf32>
    %cst_291 = arith.constant dense<0.000000e+00> : vector<16x128xf32>
    %453 = tpu.matmul %195, %452, %cst_291 {dimension_numbers = #tpu.dot_dimension_numbers<[1], [0], [0], [1], [0, 0, 1, 1], [], []>} : vector<16x32xf32>, vector<32x128xf32>, vector<16x128xf32> -> vector<16x128xf32>
    %454 = arith.addf %450, %453 : vector<16x128xf32>
    %c1_292 = arith.constant 1 : index
    %c2_293 = arith.constant 2 : index
    %c0_294 = arith.constant 0 : index
    %c0_295 = arith.constant 0 : index
    %455 = vector.load %arg15[%c1_292, %c2_293, %c0_294, %c0_295] : memref<3x3x32x128xf32, #tpu.memory_space<vmem>>, vector<1x1x32x128xf32>
    %456 = vector.shape_cast %455 : vector<1x1x32x128xf32> to vector<32x128xf32>
    %cst_296 = arith.constant dense<0.000000e+00> : vector<16x128xf32>
    %457 = tpu.matmul %240, %456, %cst_296 {dimension_numbers = #tpu.dot_dimension_numbers<[1], [0], [0], [1], [0, 0, 1, 1], [], []>} : vector<16x32xf32>, vector<32x128xf32>, vector<16x128xf32> -> vector<16x128xf32>
    %458 = arith.addf %454, %457 : vector<16x128xf32>
    %cst_297 = arith.constant 0.000000e+00 : f32
    %459 = vector.broadcast %cst_297 : f32 to vector<16x128xf32>
    %460 = arith.cmpf ogt, %458, %459 : vector<16x128xf32>
    %cst_298 = arith.constant 0.00999999977 : f32
    %461 = vector.broadcast %cst_298 : f32 to vector<16x128xf32>
    %462 = arith.mulf %461, %458 : vector<16x128xf32>
    %463 = arith.select %460, %458, %462 : vector<16x128xi1>, vector<16x128xf32>
    %c1_299 = arith.constant 1 : index
    %c0_300 = arith.constant 0 : index
    %c0_301 = arith.constant 0 : index
    %464 = vector.load %arg17[%c1_299, %c0_300, %c0_301] : memref<3x128x128xf32, #tpu.memory_space<vmem>>, vector<1x128x128xf32>
    %465 = vector.shape_cast %464 : vector<1x128x128xf32> to vector<128x128xf32>
    %cst_302 = arith.constant dense<0.000000e+00> : vector<16x128xf32>
    %466 = tpu.matmul %463, %465, %cst_302 {dimension_numbers = #tpu.dot_dimension_numbers<[1], [0], [0], [1], [0, 0, 1, 1], [], []>} : vector<16x128xf32>, vector<128x128xf32>, vector<16x128xf32> -> vector<16x128xf32>
    %c1_303 = arith.constant 1 : index
    %c0_304 = arith.constant 0 : index
    %c0_305 = arith.constant 0 : index
    %467 = vector.load %arg18[%c1_303, %c0_304, %c0_305] : memref<3x1x128xf32, #tpu.memory_space<vmem>>, vector<1x1x128xf32>
    %468 = vector.shape_cast %467 : vector<1x1x128xf32> to vector<1x128xf32>
    %469 = vector.broadcast %468 : vector<1x128xf32> to vector<16x128xf32>
    %470 = arith.addf %466, %469 : vector<16x128xf32>
    %471 = math.tanh %470 : vector<16x128xf32>
    %c1_306 = arith.constant 1 : index
    %c0_307 = arith.constant 0 : index
    %c0_308 = arith.constant 0 : index
    %472 = vector.load %arg19[%c1_306, %c0_307, %c0_308] : memref<3x128x128xf32, #tpu.memory_space<vmem>>, vector<1x128x128xf32>
    %473 = vector.shape_cast %472 : vector<1x128x128xf32> to vector<128x128xf32>
    %cst_309 = arith.constant dense<0.000000e+00> : vector<16x128xf32>
    %474 = tpu.matmul %463, %473, %cst_309 {dimension_numbers = #tpu.dot_dimension_numbers<[1], [0], [0], [1], [0, 0, 1, 1], [], []>} : vector<16x128xf32>, vector<128x128xf32>, vector<16x128xf32> -> vector<16x128xf32>
    %c1_310 = arith.constant 1 : index
    %c0_311 = arith.constant 0 : index
    %c0_312 = arith.constant 0 : index
    %475 = vector.load %arg20[%c1_310, %c0_311, %c0_312] : memref<3x1x128xf32, #tpu.memory_space<vmem>>, vector<1x1x128xf32>
    %476 = vector.shape_cast %475 : vector<1x1x128xf32> to vector<1x128xf32>
    %477 = vector.broadcast %476 : vector<1x128xf32> to vector<16x128xf32>
    %478 = arith.addf %474, %477 : vector<16x128xf32>
    %479 = arith.negf %478 : vector<16x128xf32>
    %480 = math.exp %479 : vector<16x128xf32>
    %cst_313 = arith.constant 1.000000e+00 : f32
    %481 = vector.broadcast %cst_313 : f32 to vector<16x128xf32>
    %482 = arith.addf %481, %480 : vector<16x128xf32>
    %483 = arith.divf %481, %482 : vector<16x128xf32>
    %484 = arith.mulf %471, %483 : vector<16x128xf32>
    %c1_314 = arith.constant 1 : index
    %c0_315 = arith.constant 0 : index
    %c0_316 = arith.constant 0 : index
    %485 = vector.load %arg21[%c1_314, %c0_315, %c0_316] : memref<3x1x128xf32, #tpu.memory_space<vmem>>, vector<1x1x128xf32>
    %486 = vector.shape_cast %485 : vector<1x1x128xf32> to vector<1x128xf32>
    %cst_317 = arith.constant dense<0.000000e+00> : vector<1x16xf32>
    %487 = tpu.matmul %486, %484, %cst_317 {dimension_numbers = #tpu.dot_dimension_numbers<[1], [1], [0], [0], [0, 0, 1, 0], [], []>} : vector<1x128xf32>, vector<16x128xf32>, vector<1x16xf32> -> vector<1x16xf32>
    %c1_318 = arith.constant 1 : index
    %c0_319 = arith.constant 0 : index
    %c0_320 = arith.constant 0 : index
    %488 = vector.load %arg22[%c1_318, %c0_319, %c0_320] : memref<3x1x1xf32, #tpu.memory_space<vmem>>, vector<1x1x1xf32>
    %489 = vector.shape_cast %488 : vector<1x1x1xf32> to vector<1x1xf32>
    %490 = vector.broadcast %489 : vector<1x1xf32> to vector<1x16xf32>
    %491 = arith.addf %487, %490 : vector<1x16xf32>
    %cst_321 = arith.constant dense<0xFF800000> : vector<1xf32>
    %492 = vector.multi_reduction <maximumf>, %491, %cst_321 [1] : vector<1x16xf32> to vector<1xf32>
    %493 = vector.shape_cast %492 : vector<1xf32> to vector<1x1xf32>
    %494 = vector.broadcast %493 : vector<1x1xf32> to vector<1x16xf32>
    %495 = arith.subf %491, %494 : vector<1x16xf32>
    %496 = math.exp %495 : vector<1x16xf32>
    %cst_322 = arith.constant dense<0.000000e+00> : vector<1xf32>
    %497 = vector.multi_reduction <add>, %496, %cst_322 [1] : vector<1x16xf32> to vector<1xf32>
    %498 = vector.shape_cast %497 : vector<1xf32> to vector<1x1xf32>
    %499 = vector.broadcast %498 : vector<1x1xf32> to vector<1x16xf32>
    %500 = arith.divf %496, %499 : vector<1x16xf32>
    %c1_323 = arith.constant 1 : index
    %c0_324 = arith.constant 0 : index
    %c0_325 = arith.constant 0 : index
    %501 = vector.load %arg28[%c1_323, %c0_324, %c0_325] : memref<3x1x16xf32, #tpu.memory_space<vmem>>, vector<1x1x16xf32>
    %502 = vector.shape_cast %501 : vector<1x1x16xf32> to vector<1x16xf32>
    %503 = vector.shape_cast %500 : vector<1x16xf32> to vector<1x1x16xf32>
    tpu.vector_store %arg28[%c1_323, %c0_324, %c0_325], %503 {strides = array<i32>} : memref<3x1x16xf32, #tpu.memory_space<vmem>>, vector<1x1x16xf32>,
    %cst_326 = arith.constant dense<0.000000e+00> : vector<1x128xf32>
    %504 = tpu.matmul %500, %463, %cst_326 {dimension_numbers = #tpu.dot_dimension_numbers<[1], [0], [0], [1], [0, 0, 1, 1], [], []>} : vector<1x16xf32>, vector<16x128xf32>, vector<1x128xf32> -> vector<1x128xf32>
    %c1_327 = arith.constant 1 : index
    %c0_328 = arith.constant 0 : index
    %c0_329 = arith.constant 0 : index
    %505 = vector.load %arg23[%c1_327, %c0_328, %c0_329] : memref<3x128x288xf32, #tpu.memory_space<vmem>>, vector<1x128x288xf32>
    %506 = vector.shape_cast %505 : vector<1x128x288xf32> to vector<128x288xf32>
    %cst_330 = arith.constant dense<0.000000e+00> : vector<1x288xf32>
    %507 = tpu.matmul %504, %506, %cst_330 {dimension_numbers = #tpu.dot_dimension_numbers<[1], [0], [0], [1], [0, 0, 1, 1], [], []>} : vector<1x128xf32>, vector<128x288xf32>, vector<1x288xf32> -> vector<1x288xf32>
    %508 = arith.addf %443, %507 : vector<1x288xf32>
    %c2_331 = arith.constant 2 : index
    %c0_332 = arith.constant 0 : index
    %c0_333 = arith.constant 0 : index
    %509 = vector.load %arg16[%c2_331, %c0_332, %c0_333] : memref<3x1x128xf32, #tpu.memory_space<vmem>>, vector<1x1x128xf32>
    %510 = vector.shape_cast %509 : vector<1x1x128xf32> to vector<1x128xf32>
    %c2_334 = arith.constant 2 : index
    %c0_335 = arith.constant 0 : index
    %c0_336 = arith.constant 0 : index
    %c0_337 = arith.constant 0 : index
    %511 = vector.load %arg15[%c2_334, %c0_335, %c0_336, %c0_337] : memref<3x3x32x128xf32, #tpu.memory_space<vmem>>, vector<1x1x32x128xf32>
    %512 = vector.shape_cast %511 : vector<1x1x32x128xf32> to vector<32x128xf32>
    %cst_338 = arith.constant dense<0.000000e+00> : vector<16x128xf32>
    %513 = tpu.matmul %287, %512, %cst_338 {dimension_numbers = #tpu.dot_dimension_numbers<[1], [0], [0], [1], [0, 0, 1, 1], [], []>} : vector<16x32xf32>, vector<32x128xf32>, vector<16x128xf32> -> vector<16x128xf32>
    %514 = vector.broadcast %510 : vector<1x128xf32> to vector<16x128xf32>
    %515 = arith.addf %514, %513 : vector<16x128xf32>
    %c2_339 = arith.constant 2 : index
    %c1_340 = arith.constant 1 : index
    %c0_341 = arith.constant 0 : index
    %c0_342 = arith.constant 0 : index
    %516 = vector.load %arg15[%c2_339, %c1_340, %c0_341, %c0_342] : memref<3x3x32x128xf32, #tpu.memory_space<vmem>>, vector<1x1x32x128xf32>
    %517 = vector.shape_cast %516 : vector<1x1x32x128xf32> to vector<32x128xf32>
    %cst_343 = arith.constant dense<0.000000e+00> : vector<16x128xf32>
    %518 = tpu.matmul %332, %517, %cst_343 {dimension_numbers = #tpu.dot_dimension_numbers<[1], [0], [0], [1], [0, 0, 1, 1], [], []>} : vector<16x32xf32>, vector<32x128xf32>, vector<16x128xf32> -> vector<16x128xf32>
    %519 = arith.addf %515, %518 : vector<16x128xf32>
    %c2_344 = arith.constant 2 : index
    %c2_345 = arith.constant 2 : index
    %c0_346 = arith.constant 0 : index
    %c0_347 = arith.constant 0 : index
    %520 = vector.load %arg15[%c2_344, %c2_345, %c0_346, %c0_347] : memref<3x3x32x128xf32, #tpu.memory_space<vmem>>, vector<1x1x32x128xf32>
    %521 = vector.shape_cast %520 : vector<1x1x32x128xf32> to vector<32x128xf32>
    %cst_348 = arith.constant dense<0.000000e+00> : vector<16x128xf32>
    %522 = tpu.matmul %377, %521, %cst_348 {dimension_numbers = #tpu.dot_dimension_numbers<[1], [0], [0], [1], [0, 0, 1, 1], [], []>} : vector<16x32xf32>, vector<32x128xf32>, vector<16x128xf32> -> vector<16x128xf32>
    %523 = arith.addf %519, %522 : vector<16x128xf32>
    %cst_349 = arith.constant 0.000000e+00 : f32
    %524 = vector.broadcast %cst_349 : f32 to vector<16x128xf32>
    %525 = arith.cmpf ogt, %523, %524 : vector<16x128xf32>
    %cst_350 = arith.constant 0.00999999977 : f32
    %526 = vector.broadcast %cst_350 : f32 to vector<16x128xf32>
    %527 = arith.mulf %526, %523 : vector<16x128xf32>
    %528 = arith.select %525, %523, %527 : vector<16x128xi1>, vector<16x128xf32>
    %c2_351 = arith.constant 2 : index
    %c0_352 = arith.constant 0 : index
    %c0_353 = arith.constant 0 : index
    %529 = vector.load %arg17[%c2_351, %c0_352, %c0_353] : memref<3x128x128xf32, #tpu.memory_space<vmem>>, vector<1x128x128xf32>
    %530 = vector.shape_cast %529 : vector<1x128x128xf32> to vector<128x128xf32>
    %cst_354 = arith.constant dense<0.000000e+00> : vector<16x128xf32>
    %531 = tpu.matmul %528, %530, %cst_354 {dimension_numbers = #tpu.dot_dimension_numbers<[1], [0], [0], [1], [0, 0, 1, 1], [], []>} : vector<16x128xf32>, vector<128x128xf32>, vector<16x128xf32> -> vector<16x128xf32>
    %c2_355 = arith.constant 2 : index
    %c0_356 = arith.constant 0 : index
    %c0_357 = arith.constant 0 : index
    %532 = vector.load %arg18[%c2_355, %c0_356, %c0_357] : memref<3x1x128xf32, #tpu.memory_space<vmem>>, vector<1x1x128xf32>
    %533 = vector.shape_cast %532 : vector<1x1x128xf32> to vector<1x128xf32>
    %534 = vector.broadcast %533 : vector<1x128xf32> to vector<16x128xf32>
    %535 = arith.addf %531, %534 : vector<16x128xf32>
    %536 = math.tanh %535 : vector<16x128xf32>
    %c2_358 = arith.constant 2 : index
    %c0_359 = arith.constant 0 : index
    %c0_360 = arith.constant 0 : index
    %537 = vector.load %arg19[%c2_358, %c0_359, %c0_360] : memref<3x128x128xf32, #tpu.memory_space<vmem>>, vector<1x128x128xf32>
    %538 = vector.shape_cast %537 : vector<1x128x128xf32> to vector<128x128xf32>
    %cst_361 = arith.constant dense<0.000000e+00> : vector<16x128xf32>
    %539 = tpu.matmul %528, %538, %cst_361 {dimension_numbers = #tpu.dot_dimension_numbers<[1], [0], [0], [1], [0, 0, 1, 1], [], []>} : vector<16x128xf32>, vector<128x128xf32>, vector<16x128xf32> -> vector<16x128xf32>
    %c2_362 = arith.constant 2 : index
    %c0_363 = arith.constant 0 : index
    %c0_364 = arith.constant 0 : index
    %540 = vector.load %arg20[%c2_362, %c0_363, %c0_364] : memref<3x1x128xf32, #tpu.memory_space<vmem>>, vector<1x1x128xf32>
    %541 = vector.shape_cast %540 : vector<1x1x128xf32> to vector<1x128xf32>
    %542 = vector.broadcast %541 : vector<1x128xf32> to vector<16x128xf32>
    %543 = arith.addf %539, %542 : vector<16x128xf32>
    %544 = arith.negf %543 : vector<16x128xf32>
    %545 = math.exp %544 : vector<16x128xf32>
    %cst_365 = arith.constant 1.000000e+00 : f32
    %546 = vector.broadcast %cst_365 : f32 to vector<16x128xf32>
    %547 = arith.addf %546, %545 : vector<16x128xf32>
    %548 = arith.divf %546, %547 : vector<16x128xf32>
    %549 = arith.mulf %536, %548 : vector<16x128xf32>
    %c2_366 = arith.constant 2 : index
    %c0_367 = arith.constant 0 : index
    %c0_368 = arith.constant 0 : index
    %550 = vector.load %arg21[%c2_366, %c0_367, %c0_368] : memref<3x1x128xf32, #tpu.memory_space<vmem>>, vector<1x1x128xf32>
    %551 = vector.shape_cast %550 : vector<1x1x128xf32> to vector<1x128xf32>
    %cst_369 = arith.constant dense<0.000000e+00> : vector<1x16xf32>
    %552 = tpu.matmul %551, %549, %cst_369 {dimension_numbers = #tpu.dot_dimension_numbers<[1], [1], [0], [0], [0, 0, 1, 0], [], []>} : vector<1x128xf32>, vector<16x128xf32>, vector<1x16xf32> -> vector<1x16xf32>
    %c2_370 = arith.constant 2 : index
    %c0_371 = arith.constant 0 : index
    %c0_372 = arith.constant 0 : index
    %553 = vector.load %arg22[%c2_370, %c0_371, %c0_372] : memref<3x1x1xf32, #tpu.memory_space<vmem>>, vector<1x1x1xf32>
    %554 = vector.shape_cast %553 : vector<1x1x1xf32> to vector<1x1xf32>
    %555 = vector.broadcast %554 : vector<1x1xf32> to vector<1x16xf32>
    %556 = arith.addf %552, %555 : vector<1x16xf32>
    %cst_373 = arith.constant dense<0xFF800000> : vector<1xf32>
    %557 = vector.multi_reduction <maximumf>, %556, %cst_373 [1] : vector<1x16xf32> to vector<1xf32>
    %558 = vector.shape_cast %557 : vector<1xf32> to vector<1x1xf32>
    %559 = vector.broadcast %558 : vector<1x1xf32> to vector<1x16xf32>
    %560 = arith.subf %556, %559 : vector<1x16xf32>
    %561 = math.exp %560 : vector<1x16xf32>
    %cst_374 = arith.constant dense<0.000000e+00> : vector<1xf32>
    %562 = vector.multi_reduction <add>, %561, %cst_374 [1] : vector<1x16xf32> to vector<1xf32>
    %563 = vector.shape_cast %562 : vector<1xf32> to vector<1x1xf32>
    %564 = vector.broadcast %563 : vector<1x1xf32> to vector<1x16xf32>
    %565 = arith.divf %561, %564 : vector<1x16xf32>
    %c2_375 = arith.constant 2 : index
    %c0_376 = arith.constant 0 : index
    %c0_377 = arith.constant 0 : index
    %566 = vector.load %arg28[%c2_375, %c0_376, %c0_377] : memref<3x1x16xf32, #tpu.memory_space<vmem>>, vector<1x1x16xf32>
    %567 = vector.shape_cast %566 : vector<1x1x16xf32> to vector<1x16xf32>
    %568 = vector.shape_cast %565 : vector<1x16xf32> to vector<1x1x16xf32>
    tpu.vector_store %arg28[%c2_375, %c0_376, %c0_377], %568 {strides = array<i32>} : memref<3x1x16xf32, #tpu.memory_space<vmem>>, vector<1x1x16xf32>,
    %cst_378 = arith.constant dense<0.000000e+00> : vector<1x128xf32>
    %569 = tpu.matmul %565, %528, %cst_378 {dimension_numbers = #tpu.dot_dimension_numbers<[1], [0], [0], [1], [0, 0, 1, 1], [], []>} : vector<1x16xf32>, vector<16x128xf32>, vector<1x128xf32> -> vector<1x128xf32>
    %c2_379 = arith.constant 2 : index
    %c0_380 = arith.constant 0 : index
    %c0_381 = arith.constant 0 : index
    %570 = vector.load %arg23[%c2_379, %c0_380, %c0_381] : memref<3x128x288xf32, #tpu.memory_space<vmem>>, vector<1x128x288xf32>
    %571 = vector.shape_cast %570 : vector<1x128x288xf32> to vector<128x288xf32>
    %cst_382 = arith.constant dense<0.000000e+00> : vector<1x288xf32>
    %572 = tpu.matmul %569, %571, %cst_382 {dimension_numbers = #tpu.dot_dimension_numbers<[1], [0], [0], [1], [0, 0, 1, 1], [], []>} : vector<1x128xf32>, vector<128x288xf32>, vector<1x288xf32> -> vector<1x288xf32>
    %573 = arith.addf %508, %572 : vector<1x288xf32>
    %c0_383 = arith.constant 0 : index
    %c0_384 = arith.constant 0 : index
    %574 = vector.load %arg24[%c0_383, %c0_384] : memref<1x288xf32, #tpu.memory_space<vmem>>, vector<1x288xf32>
    %575 = arith.addf %573, %574 : vector<1x288xf32>
    %cst_385 = arith.constant 0.000000e+00 : f32
    %576 = vector.broadcast %cst_385 : f32 to vector<1x288xf32>
    %577 = arith.cmpf ogt, %575, %576 : vector<1x288xf32>
    %cst_386 = arith.constant 0.00999999977 : f32
    %578 = vector.broadcast %cst_386 : f32 to vector<1x288xf32>
    %579 = arith.mulf %578, %575 : vector<1x288xf32>
    %580 = arith.select %577, %575, %579 : vector<1x288xi1>, vector<1x288xf32>
    %c0_387 = arith.constant 0 : index
    %c0_388 = arith.constant 0 : index
    %581 = vector.load %arg25[%c0_387, %c0_388] : memref<288x4xf32, #tpu.memory_space<vmem>>, vector<288x4xf32>
    %cst_389 = arith.constant dense<0.000000e+00> : vector<1x4xf32>
    %582 = tpu.matmul %580, %581, %cst_389 {dimension_numbers = #tpu.dot_dimension_numbers<[1], [0], [0], [1], [0, 0, 1, 1], [], []>} : vector<1x288xf32>, vector<288x4xf32>, vector<1x4xf32> -> vector<1x4xf32>
    %c0_390 = arith.constant 0 : index
    %c0_391 = arith.constant 0 : index
    %583 = vector.load %arg26[%c0_390, %c0_391] : memref<1x4xf32, #tpu.memory_space<vmem>>, vector<1x4xf32>
    %584 = arith.addf %582, %583 : vector<1x4xf32>
    %585 = arith.negf %584 : vector<1x4xf32>
    %586 = math.exp %585 : vector<1x4xf32>
    %cst_392 = arith.constant 1.000000e+00 : f32
    %587 = vector.broadcast %cst_392 : f32 to vector<1x4xf32>
    %588 = arith.addf %587, %586 : vector<1x4xf32>
    %589 = arith.divf %587, %588 : vector<1x4xf32>
    %c0_393 = arith.constant 0 : index
    %c0_394 = arith.constant 0 : index
    %590 = vector.load %arg27[%c0_393, %c0_394] : memref<1x4xf32, #tpu.memory_space<vmem>>, vector<1x4xf32>
    tpu.vector_store %arg27[%c0_393, %c0_394], %589 {strides = array<i32>} : memref<1x4xf32, #tpu.memory_space<vmem>>, vector<1x4xf32>,
    return
  }
}

</mosaic_0001>

<llo_original>
// kernel: tpu_custom_call.1
$region0: #{tpu_custom_call.1}
  #allocation0 [shape = 'u32[]', space=smem, size = 0x4, offset = 0x4, fixed_abs, tag = 'smem constant byte address 0x4 - core index']
  #allocation1 [shape = 'u32[144,128]{1,0:T(1,128)}', space=vmem, size = 0x12000, scoped, tag = 'internal scratch']
  %s0 = inlined_call_operand.vmem [shape: f32[48,64], index: 0, kind: input, shape index: {}]
  %s1 = inlined_call_operand.vmem [shape: f32[64,32], index: 1, kind: input, shape index: {}]
  %s2 = inlined_call_operand.vmem [shape: f32[1,32], index: 2, kind: input, shape index: {}]
  %s3 = inlined_call_operand.vmem [shape: f32[3,16,16], index: 3, kind: input, shape index: {}]
  %s4 = inlined_call_operand.vmem [shape: f32[2,32,32], index: 4, kind: input, shape index: {}]
  %s5 = inlined_call_operand.vmem [shape: f32[6,32,32], index: 5, kind: input, shape index: {}]
  %s6 = inlined_call_operand.vmem [shape: f32[6,32,32], index: 6, kind: input, shape index: {}]
  %s7 = inlined_call_operand.vmem [shape: f32[6,1,32], index: 7, kind: input, shape index: {}]
  %s8 = inlined_call_operand.vmem [shape: f32[6,1,32], index: 8, kind: input, shape index: {}]
  %s9 = inlined_call_operand.vmem [shape: f32[6,1,32], index: 9, kind: input, shape index: {}]
  %s10 = inlined_call_operand.vmem [shape: f32[2,32,32], index: 10, kind: input, shape index: {}]
  %s11 = inlined_call_operand.vmem [shape: f32[2,32,32], index: 11, kind: input, shape index: {}]
  %s12 = inlined_call_operand.vmem [shape: f32[2,1,32], index: 12, kind: input, shape index: {}]
  %s13 = inlined_call_operand.vmem [shape: f32[2,1,32], index: 13, kind: input, shape index: {}]
  %s14 = inlined_call_operand.vmem [shape: f32[2,1,32], index: 14, kind: input, shape index: {}]
  %s15 = inlined_call_operand.vmem [shape: f32[3,3,32,128], index: 15, kind: input, shape index: {}]
  %s16 = inlined_call_operand.vmem [shape: f32[3,1,128], index: 16, kind: input, shape index: {}]
  %s17 = inlined_call_operand.vmem [shape: f32[3,128,128], index: 17, kind: input, shape index: {}]
  %s18 = inlined_call_operand.vmem [shape: f32[3,1,128], index: 18, kind: input, shape index: {}]
  %s19 = inlined_call_operand.vmem [shape: f32[3,128,128], index: 19, kind: input, shape index: {}]
  %s20 = inlined_call_operand.vmem [shape: f32[3,1,128], index: 20, kind: input, shape index: {}]
  %s21 = inlined_call_operand.vmem [shape: f32[3,1,128], index: 21, kind: input, shape index: {}]
  %s22 = inlined_call_operand.vmem [shape: f32[3,1,1], index: 22, kind: input, shape index: {}]
  %s23 = inlined_call_operand.vmem [shape: f32[3,128,288], index: 23, kind: input, shape index: {}]
  %s24 = inlined_call_operand.vmem [shape: f32[1,288], index: 24, kind: input, shape index: {}]
  %s25 = inlined_call_operand.vmem [shape: f32[288,4], index: 25, kind: input, shape index: {}]
  %s26 = inlined_call_operand.vmem [shape: f32[1,4], index: 26, kind: input, shape index: {}]
  %s27 = inlined_call_operand.hbm [shape: f32[1,4], index: 27, kind: output, shape index: {0}]
  %s28 = inlined_call_operand.hbm [shape: f32[3,1,16], index: 28, kind: output, shape index: {1}]
  %29 = xla_tuple %s27, %s28
  %s30 = sld [smem:[#allocation0]]
  $region126: #{tpu_custom_call.1} parent=0
    _
  %s32 = ssub.s32 1, %s30
  %s33 = scalar_select 0, %s32, %s30
  $region1: #{tpu_custom_call.1} parent=0
    #allocation2 [shape = 'u8[512]{0}', space=vmem, size = 0x400, scoped, tag = 'output window, operand 0, single buffered']
    #allocation3 [shape = 's32[1]{0}', space=sflag, size = 0x4, scoped, tag = 'scoped memory for tpu_custom_call.1']
    #allocation4 [shape = 'u8[1536]{0}', space=vmem, size = 0x800, scoped, tag = 'output window, operand 1, single buffered']
    #allocation5 [shape = 's32[1]{0}', space=sflag, size = 0x4, scoped, tag = 'scoped memory for tpu_custom_call.1']
    %34 = vsyncpa [#allocation3], 0
    %35 = vsyncpa [#allocation5], 0
    // Predicated region
    $region2: #{tpu_custom_call.1} parent=1 // pred_check
      _
    $region3: #{tpu_custom_call.1} parent=1 // pred_check_branch
      %37 = sbr.rel (0) target = $region5
    $region4: #{tpu_custom_call.1} parent=1 // pred_region
      _
    $region5: #{tpu_custom_call.1} parent=1 // pred_fallthru
      _
    // Predicated region
    $region6: #{tpu_custom_call.1} parent=1 // pred_check
      _
    $region7: #{tpu_custom_call.1} parent=1 // pred_check_branch
      %39 = sbr.rel (0) target = $region9
    $region8: #{tpu_custom_call.1} parent=1 // pred_region
      _
    $region9: #{tpu_custom_call.1} parent=1 // pred_fallthru
      _
    // Predicated region
    $region10: #{tpu_custom_call.1} parent=1 // pred_check
      _
    $region11: #{tpu_custom_call.1} parent=1 // pred_check_branch
      %41 = sbr.rel (0) target = $region13
    $region12: #{tpu_custom_call.1} parent=1 // pred_region
      _
    $region13: #{tpu_custom_call.1} parent=1 // pred_fallthru
      _
    // Predicated region
    $region14: #{tpu_custom_call.1} parent=1 // pred_check
      _
    $region15: #{tpu_custom_call.1} parent=1 // pred_check_branch
      %43 = sbr.rel (0) target = $region17
    $region16: #{tpu_custom_call.1} parent=1 // pred_region
      _
    $region17: #{tpu_custom_call.1} parent=1 // pred_fallthru
      _
    // Predicated region
    $region18: #{tpu_custom_call.1} parent=1 // pred_check
      _
    $region19: #{tpu_custom_call.1} parent=1 // pred_check_branch
      %45 = sbr.rel (0) target = $region21
    $region20: #{tpu_custom_call.1} parent=1 // pred_region
      _
    $region21: #{tpu_custom_call.1} parent=1 // pred_fallthru
      _
    // Predicated region
    $region22: #{tpu_custom_call.1} parent=1 // pred_check
      _
    $region23: #{tpu_custom_call.1} parent=1 // pred_check_branch
      %47 = sbr.rel (0) target = $region25
    $region24: #{tpu_custom_call.1} parent=1 // pred_region
      _
    $region25: #{tpu_custom_call.1} parent=1 // pred_fallthru
      _
    // Predicated region
    $region26: #{tpu_custom_call.1} parent=1 // pred_check
      _
    $region27: #{tpu_custom_call.1} parent=1 // pred_check_branch
      %49 = sbr.rel (0) target = $region29
    $region28: #{tpu_custom_call.1} parent=1 // pred_region
      _
    $region29: #{tpu_custom_call.1} parent=1 // pred_fallthru
      _
    // Predicated region
    $region30: #{tpu_custom_call.1} parent=1 // pred_check
      _
    $region31: #{tpu_custom_call.1} parent=1 // pred_check_branch
      %51 = sbr.rel (0) target = $region33
    $region32: #{tpu_custom_call.1} parent=1 // pred_region
      _
    $region33: #{tpu_custom_call.1} parent=1 // pred_fallthru
      _
    // Predicated region
    $region34: #{tpu_custom_call.1} parent=1 // pred_check
      _
    $region35: #{tpu_custom_call.1} parent=1 // pred_check_branch
      %53 = sbr.rel (0) target = $region37
    $region36: #{tpu_custom_call.1} parent=1 // pred_region
      _
    $region37: #{tpu_custom_call.1} parent=1 // pred_fallthru
      _
    // Predicated region
    $region38: #{tpu_custom_call.1} parent=1 // pred_check
      _
    $region39: #{tpu_custom_call.1} parent=1 // pred_check_branch
      %55 = sbr.rel (0) target = $region41
    $region40: #{tpu_custom_call.1} parent=1 // pred_region
      _
    $region41: #{tpu_custom_call.1} parent=1 // pred_fallthru
      _
    // Predicated region
    $region42: #{tpu_custom_call.1} parent=1 // pred_check
      _
    $region43: #{tpu_custom_call.1} parent=1 // pred_check_branch
      %57 = sbr.rel (0) target = $region45
    $region44: #{tpu_custom_call.1} parent=1 // pred_region
      _
    $region45: #{tpu_custom_call.1} parent=1 // pred_fallthru
      _
    // Predicated region
    $region46: #{tpu_custom_call.1} parent=1 // pred_check
      _
    $region47: #{tpu_custom_call.1} parent=1 // pred_check_branch
      %59 = sbr.rel (0) target = $region49
    $region48: #{tpu_custom_call.1} parent=1 // pred_region
      _
    $region49: #{tpu_custom_call.1} parent=1 // pred_fallthru
      _
    // Predicated region
    $region50: #{tpu_custom_call.1} parent=1 // pred_check
      _
    $region51: #{tpu_custom_call.1} parent=1 // pred_check_branch
      %61 = sbr.rel (0) target = $region53
    $region52: #{tpu_custom_call.1} parent=1 // pred_region
      _
    $region53: #{tpu_custom_call.1} parent=1 // pred_fallthru
      _
    // Predicated region
    $region54: #{tpu_custom_call.1} parent=1 // pred_check
      _
    $region55: #{tpu_custom_call.1} parent=1 // pred_check_branch
      %63 = sbr.rel (0) target = $region57
    $region56: #{tpu_custom_call.1} parent=1 // pred_region
      _
    $region57: #{tpu_custom_call.1} parent=1 // pred_fallthru
      _
    // Predicated region
    $region58: #{tpu_custom_call.1} parent=1 // pred_check
      _
    $region59: #{tpu_custom_call.1} parent=1 // pred_check_branch
      %65 = sbr.rel (0) target = $region61
    $region60: #{tpu_custom_call.1} parent=1 // pred_region
      _
    $region61: #{tpu_custom_call.1} parent=1 // pred_fallthru
      _
    // Predicated region
    $region62: #{tpu_custom_call.1} parent=1 // pred_check
      _
    $region63: #{tpu_custom_call.1} parent=1 // pred_check_branch
      %67 = sbr.rel (0) target = $region65
    $region64: #{tpu_custom_call.1} parent=1 // pred_region
      _
    $region65: #{tpu_custom_call.1} parent=1 // pred_fallthru
      _
    // Predicated region
    $region66: #{tpu_custom_call.1} parent=1 // pred_check
      _
    $region67: #{tpu_custom_call.1} parent=1 // pred_check_branch
      %69 = sbr.rel (0) target = $region69
    $region68: #{tpu_custom_call.1} parent=1 // pred_region
      _
    $region69: #{tpu_custom_call.1} parent=1 // pred_fallthru
      _
    // Predicated region
    $region70: #{tpu_custom_call.1} parent=1 // pred_check
      _
    $region71: #{tpu_custom_call.1} parent=1 // pred_check_branch
      %71 = sbr.rel (0) target = $region73
    $region72: #{tpu_custom_call.1} parent=1 // pred_region
      _
    $region73: #{tpu_custom_call.1} parent=1 // pred_fallthru
      _
    // Predicated region
    $region74: #{tpu_custom_call.1} parent=1 // pred_check
      _
    $region75: #{tpu_custom_call.1} parent=1 // pred_check_branch
      %73 = sbr.rel (0) target = $region77
    $region76: #{tpu_custom_call.1} parent=1 // pred_region
      _
    $region77: #{tpu_custom_call.1} parent=1 // pred_fallthru
      _
    // Predicated region
    $region78: #{tpu_custom_call.1} parent=1 // pred_check
      _
    $region79: #{tpu_custom_call.1} parent=1 // pred_check_branch
      %75 = sbr.rel (0) target = $region81
    $region80: #{tpu_custom_call.1} parent=1 // pred_region
      _
    $region81: #{tpu_custom_call.1} parent=1 // pred_fallthru
      _
    // Predicated region
    $region82: #{tpu_custom_call.1} parent=1 // pred_check
      _
    $region83: #{tpu_custom_call.1} parent=1 // pred_check_branch
      %77 = sbr.rel (0) target = $region85
    $region84: #{tpu_custom_call.1} parent=1 // pred_region
      _
    $region85: #{tpu_custom_call.1} parent=1 // pred_fallthru
      _
    // Predicated region
    $region86: #{tpu_custom_call.1} parent=1 // pred_check
      _
    $region87: #{tpu_custom_call.1} parent=1 // pred_check_branch
      %79 = sbr.rel (0) target = $region89
    $region88: #{tpu_custom_call.1} parent=1 // pred_region
      _
    $region89: #{tpu_custom_call.1} parent=1 // pred_fallthru
      _
    // Predicated region
    $region90: #{tpu_custom_call.1} parent=1 // pred_check
      _
    $region91: #{tpu_custom_call.1} parent=1 // pred_check_branch
      %81 = sbr.rel (0) target = $region93
    $region92: #{tpu_custom_call.1} parent=1 // pred_region
      _
    $region93: #{tpu_custom_call.1} parent=1 // pred_fallthru
      _
    // Predicated region
    $region94: #{tpu_custom_call.1} parent=1 // pred_check
      _
    $region95: #{tpu_custom_call.1} parent=1 // pred_check_branch
      %83 = sbr.rel (0) target = $region97
    $region96: #{tpu_custom_call.1} parent=1 // pred_region
      _
    $region97: #{tpu_custom_call.1} parent=1 // pred_fallthru
      _
    // Predicated region
    $region98: #{tpu_custom_call.1} parent=1 // pred_check
      _
    $region99: #{tpu_custom_call.1} parent=1 // pred_check_branch
      %85 = sbr.rel (0) target = $region101
    $region100: #{tpu_custom_call.1} parent=1 // pred_region
      _
    $region101: #{tpu_custom_call.1} parent=1 // pred_fallthru
      _
    // Predicated region
    $region102: #{tpu_custom_call.1} parent=1 // pred_check
      _
    $region103: #{tpu_custom_call.1} parent=1 // pred_check_branch
      %87 = sbr.rel (0) target = $region105
    $region104: #{tpu_custom_call.1} parent=1 // pred_region
      _
    $region105: #{tpu_custom_call.1} parent=1 // pred_fallthru
      _
    // Predicated region
    $region106: #{tpu_custom_call.1} parent=1 // pred_check
      _
    $region107: #{tpu_custom_call.1} parent=1 // pred_check_branch
      %89 = sbr.rel (0) target = $region109
    $region108: #{tpu_custom_call.1} parent=1 // pred_region
      _
    $region109: #{tpu_custom_call.1} parent=1 // pred_fallthru
      _
    %v90 = vld [vmem:[%s0] sm:$0xff]
    %v91 = vld [vmem:[%s0 + $0x8] sm:$0xff]
    %v92 = vld [vmem:[%s0 + $0x10] sm:$0xff]
    %v93 = vld [vmem:[%s0 + $0x18] sm:$0xff]
    %v94 = vld [vmem:[%s0 + $0x20] sm:$0xff]
    %v95 = vld [vmem:[%s0 + $0x28] sm:$0xff]
    %v96 = vld [vmem:[%s1] sm:$0xff]
    %v97 = vld [vmem:[%s1 + $0x8] sm:$0xff]
    %v98 = vld [vmem:[%s1 + $0x10] sm:$0xff]
    %v99 = vld [vmem:[%s1 + $0x18] sm:$0xff]
    %v100 = vld [vmem:[%s1 + $0x20] sm:$0xff]
    %v101 = vld [vmem:[%s1 + $0x28] sm:$0xff]
    %v102 = vld [vmem:[%s1 + $0x30] sm:$0xff]
    %v103 = vld [vmem:[%s1 + $0x38] sm:$0xff]
    %v104 = vld [vmem:[%s2] sm:$0x1]
    %v106 = vlaneseq
    %v107 = vshrl.u32 %v106, 7
    %v108 = vsub.s32 0, %v107
    %v109 = vrot.slane %v104, %v108
    %vm111 = vcmask 523264
    %v113 = vsel %vm111, %v90, 0
    %v116 = vsel %vm111, %v91, 0
    %v119 = vsel %vm111, %v92, 0
    %v122 = vsel %vm111, %v93, 0
    %v125 = vsel %vm111, %v94, 0
    %v128 = vsel %vm111, %v95, 0
    %130 = vmatprep.subr.mxu0 0.0
    %131 = vmatpush1.msra.mxu0 0.0
    %132 = vmatprep.subr.mxu0 0.0
    %133 = vmatpush1.msra.mxu0 0.0
    %134 = vmatprep.subr.mxu0 0.0
    %135 = vmatpush1.msra.mxu0 0.0
    %136 = vmatprep.subr.mxu0 0.0
    %137 = vmatpush1.msra.mxu0 0.0
    %138 = vmatprep.subr.mxu0 0.0
    %139 = vmatpush1.msra.mxu0 0.0
    %140 = vmatprep.subr.mxu0 0.0
    %141 = vmatpush1.msra.mxu0 0.0
    %142 = vmatprep.subr.mxu0 0.0
    %143 = vmatpush1.msra.mxu0 0.0
    %144 = vmatprep.subr.mxu0 0.0
    %145 = vmatpush1.msra.mxu0 0.0
    %146 = vmatprep.subr.mxu0 0.0
    %147 = vmatpush1.msra.mxu0 %v103
    %148 = vmatprep.subr.mxu0 0.0
    %149 = vmatpush1.msra.mxu0 %v102
    %150 = vmatprep.subr.mxu0 0.0
    %151 = vmatpush1.msra.mxu0 %v101
    %152 = vmatprep.subr.mxu0 0.0
    %153 = vmatpush1.msra.mxu0 %v100
    %154 = vmatprep.subr.mxu0 0.0
    %155 = vmatpush1.msra.mxu0 %v99
    %156 = vmatprep.subr.mxu0 0.0
    %157 = vmatpush1.msra.mxu0 %v98
    %158 = vmatprep.subr.mxu0 0.0
    %159 = vmatpush1.msra.mxu0 %v97
    %160 = vmatprep.subr.mxu0 0.0
    %161 = vmatpush1.msra.mxu0 %v96
    %162 = vmatprep.subr.mxu0 0.0
    %163 = vmatpush2.msra.mxu0 0.0
    %164 = vmatprep.subr.mxu0 0.0
    %165 = vmatpush2.msra.mxu0 0.0
    %166 = vmatprep.subr.mxu0 0.0
    %167 = vmatpush2.msra.mxu0 0.0
    %168 = vmatprep.subr.mxu0 0.0
    %169 = vmatpush2.msra.mxu0 0.0
    %170 = vmatprep.subr.mxu0 0.0
    %171 = vmatpush2.msra.mxu0 0.0
    %172 = vmatprep.subr.mxu0 0.0
    %173 = vmatpush2.msra.mxu0 0.0
    %174 = vmatprep.subr.mxu0 0.0
    %175 = vmatpush2.msra.mxu0 0.0
    %176 = vmatprep.subr.mxu0 0.0
    %177 = vmatpush2.msra.mxu0 0.0
    %178 = vmatprep.subr.mxu0 0.0
    %179 = vmatpush2.msra.mxu0 0.0
    %180 = vmatprep.subr.mxu0 0.0
    %181 = vmatpush2.msra.mxu0 0.0
    %182 = vmatprep.subr.mxu0 0.0
    %183 = vmatpush2.msra.mxu0 0.0
    %184 = vmatprep.subr.mxu0 0.0
    %185 = vmatpush2.msra.mxu0 0.0
    %186 = vmatprep.subr.mxu0 0.0
    %187 = vmatpush2.msra.mxu0 0.0
    %188 = vmatprep.subr.mxu0 0.0
    %189 = vmatpush2.msra.mxu0 0.0
    %190 = vmatprep.subr.mxu0 0.0
    %191 = vmatpush2.msra.mxu0 0.0
    %192 = vmatprep.subr.mxu0 0.0
    %193 = vmatpush2.msra.mxu0 0.0
    %194 = vmatprep.mubr.f32.mxu0 0.0
    %195 = vmatmul.mubr.f32.gmra.mxu0 %v113
    %v196 = vpop.f32.mrf.mxu0
    %v197 = vadd.f32 %v109, %v196
    %v198 = vpop.f32.mrf.mxu0
    %199 = vmatprep.mubr.f32.mxu0 0.0
    %200 = vmatmul.mubr.f32.gmra.mxu0 %v116
    %v201 = vpop.f32.mrf.mxu0
    %v202 = vadd.f32 %v109, %v201
    %v203 = vpop.f32.mrf.mxu0
    %204 = vmatprep.mubr.f32.mxu0 0.0
    %205 = vmatmul.mubr.f32.gmra.mxu0 %v119
    %v206 = vpop.f32.mrf.mxu0
    %v207 = vadd.f32 %v109, %v206
    %v208 = vpop.f32.mrf.mxu0
    %209 = vmatprep.mubr.f32.mxu0 0.0
    %210 = vmatmul.mubr.f32.gmra.mxu0 %v122
    %v211 = vpop.f32.mrf.mxu0
    %v212 = vadd.f32 %v109, %v211
    %v213 = vpop.f32.mrf.mxu0
    %214 = vmatprep.mubr.f32.mxu0 0.0
    %215 = vmatmul.mubr.f32.gmra.mxu0 %v125
    %v216 = vpop.f32.mrf.mxu0
    %v217 = vadd.f32 %v109, %v216
    %v218 = vpop.f32.mrf.mxu0
    %219 = vmatprep.mubr.f32.mxu0 0.0
    %220 = vmatmul.mubr.f32.gmra.mxu0 %v128
    %v221 = vpop.f32.mrf.mxu0
    %v222 = vadd.f32 %v109, %v221
    %v223 = vpop.f32.mrf.mxu0
    %224 = vdwg.mxu0
    %vm225 = vcmp.gt.f32.partialorder %v197, 0.0
    %vm226 = vcmp.gt.f32.partialorder %v202, 0.0
    %vm227 = vcmp.gt.f32.partialorder %v207, 0.0
    %vm228 = vcmp.gt.f32.partialorder %v212, 0.0
    %vm229 = vcmp.gt.f32.partialorder %v217, 0.0
    %vm230 = vcmp.gt.f32.partialorder %v222, 0.0
    %v231 = vmul.f32 %v197, 0.01
    %v232 = vmul.f32 %v202, 0.01
    %v233 = vmul.f32 %v207, 0.01
    %v234 = vmul.f32 %v212, 0.01
    %v235 = vmul.f32 %v217, 0.01
    %v236 = vmul.f32 %v222, 0.01
    %v237 = vsel %vm225, %v197, %v231
    %v238 = vsel %vm226, %v202, %v232
    %v239 = vsel %vm227, %v207, %v233
    %v240 = vsel %vm228, %v212, %v234
    %v241 = vsel %vm229, %v217, %v235
    %v242 = vsel %vm230, %v222, %v236
    %v243 = vld [vmem:[%s3] sm:$0xff]
    %v244 = vld [vmem:[%s3 + $0x8] sm:$0xff]
    %v245 = vld [vmem:[%s5] sm:$0xff]
    %v246 = vld [vmem:[%s5 + $0x8] sm:$0xff]
    %v247 = vld [vmem:[%s5 + $0x10] sm:$0xff]
    %v248 = vld [vmem:[%s5 + $0x18] sm:$0xff]
    %v249 = vld [vmem:[%s6] sm:$0xff]
    %v250 = vld [vmem:[%s6 + $0x8] sm:$0xff]
    %v251 = vld [vmem:[%s6 + $0x10] sm:$0xff]
    %v252 = vld [vmem:[%s6 + $0x18] sm:$0xff]
    %v253 = vld [vmem:[%s7] sm:$0x1]
    %v254 = vld [vmem:[%s8] sm:$0x1]
    %v255 = vld [vmem:[%s9] sm:$0x1]
    %vm256 = vcmask 130048
    %v258 = vsel %vm256, %v243, 0
    %v261 = vsel %vm256, %v244, 0
    %263 = vmatprep.subr.mxu0 0.0
    %264 = vmatpush1.msra.mxu0 0.0
    %265 = vmatprep.subr.mxu0 0.0
    %266 = vmatpush1.msra.mxu0 0.0
    %267 = vmatprep.subr.mxu0 0.0
    %268 = vmatpush1.msra.mxu0 0.0
    %269 = vmatprep.subr.mxu0 0.0
    %270 = vmatpush1.msra.mxu0 0.0
    %271 = vmatprep.subr.mxu0 0.0
    %272 = vmatpush1.msra.mxu0 0.0
    %273 = vmatprep.subr.mxu0 0.0
    %274 = vmatpush1.msra.mxu0 0.0
    %275 = vmatprep.subr.mxu0 0.0
    %276 = vmatpush1.msra.mxu0 0.0
    %277 = vmatprep.subr.mxu0 0.0
    %278 = vmatpush1.msra.mxu0 0.0
    %279 = vmatprep.subr.mxu0 0.0
    %280 = vmatpush1.msra.mxu0 0.0
    %281 = vmatprep.subr.mxu0 0.0
    %282 = vmatpush1.msra.mxu0 0.0
    %283 = vmatprep.subr.mxu0 0.0
    %284 = vmatpush1.msra.mxu0 0.0
    %285 = vmatprep.subr.mxu0 0.0
    %286 = vmatpush1.msra.mxu0 0.0
    %287 = vmatprep.subr.mxu0 0.0
    %288 = vmatpush1.msra.mxu0 0.0
    %289 = vmatprep.subr.mxu0 0.0
    %290 = vmatpush1.msra.mxu0 0.0
    %291 = vmatprep.subr.mxu0 0.0
    %292 = vmatpush1.msra.mxu0 %v238
    %293 = vmatprep.subr.mxu0 0.0
    %294 = vmatpush1.msra.mxu0 %v237
    %295 = vmatprep.subr.mxu0 0.0
    %296 = vmatpush2.msra.mxu0 0.0
    %297 = vmatprep.subr.mxu0 0.0
    %298 = vmatpush2.msra.mxu0 0.0
    %299 = vmatprep.subr.mxu0 0.0
    %300 = vmatpush2.msra.mxu0 0.0
    %301 = vmatprep.subr.mxu0 0.0
    %302 = vmatpush2.msra.mxu0 0.0
    %303 = vmatprep.subr.mxu0 0.0
    %304 = vmatpush2.msra.mxu0 0.0
    %305 = vmatprep.subr.mxu0 0.0
    %306 = vmatpush2.msra.mxu0 0.0
    %307 = vmatprep.subr.mxu0 0.0
    %308 = vmatpush2.msra.mxu0 0.0
    %309 = vmatprep.subr.mxu0 0.0
    %310 = vmatpush2.msra.mxu0 0.0
    %311 = vmatprep.subr.mxu0 0.0
    %312 = vmatpush2.msra.mxu0 0.0
    %313 = vmatprep.subr.mxu0 0.0
    %314 = vmatpush2.msra.mxu0 0.0
    %315 = vmatprep.subr.mxu0 0.0
    %316 = vmatpush2.msra.mxu0 0.0
    %317 = vmatprep.subr.mxu0 0.0
    %318 = vmatpush2.msra.mxu0 0.0
    %319 = vmatprep.subr.mxu0 0.0
    %320 = vmatpush2.msra.mxu0 0.0
    %321 = vmatprep.subr.mxu0 0.0
    %322 = vmatpush2.msra.mxu0 0.0
    %323 = vmatprep.subr.mxu0 0.0
    %324 = vmatpush2.msra.mxu0 0.0
    %325 = vmatprep.subr.mxu0 0.0
    %326 = vmatpush2.msra.mxu0 0.0
    %327 = vmatprep.mubr.f32.mxu0 0.0
    %328 = vmatmul.mubr.f32.gmra.mxu0 %v258
    %v329 = vpop.f32.mrf.mxu0
    %v330 = vadd.f32 0.0, %v329
    %v331 = vpop.f32.mrf.mxu0
    %332 = vmatprep.mubr.f32.mxu0 0.0
    %333 = vmatmul.mubr.f32.gmra.mxu0 %v261
    %v334 = vpop.f32.mrf.mxu0
    %v335 = vadd.f32 0.0, %v334
    %v336 = vpop.f32.mrf.mxu0
    %337 = vdwg.mxu0
    %vm338 = vcmask 261120
    %v340 = vsel %vm338, %v330, 0
    %v343 = vsel %vm338, %v335, 0
    %345 = vmatprep.subr.mxu0 0.0
    %346 = vmatpush1.msra.mxu0 0.0
    %347 = vmatprep.subr.mxu0 0.0
    %348 = vmatpush1.msra.mxu0 0.0
    %349 = vmatprep.subr.mxu0 0.0
    %350 = vmatpush1.msra.mxu0 0.0
    %351 = vmatprep.subr.mxu0 0.0
    %352 = vmatpush1.msra.mxu0 0.0
    %353 = vmatprep.subr.mxu0 0.0
    %354 = vmatpush1.msra.mxu0 0.0
    %355 = vmatprep.subr.mxu0 0.0
    %356 = vmatpush1.msra.mxu0 0.0
    %357 = vmatprep.subr.mxu0 0.0
    %358 = vmatpush1.msra.mxu0 0.0
    %359 = vmatprep.subr.mxu0 0.0
    %360 = vmatpush1.msra.mxu0 0.0
    %361 = vmatprep.subr.mxu0 0.0
    %362 = vmatpush1.msra.mxu0 0.0
    %363 = vmatprep.subr.mxu0 0.0
    %364 = vmatpush1.msra.mxu0 0.0
    %365 = vmatprep.subr.mxu0 0.0
    %366 = vmatpush1.msra.mxu0 0.0
    %367 = vmatprep.subr.mxu0 0.0
    %368 = vmatpush1.msra.mxu0 0.0
    %369 = vmatprep.subr.mxu0 0.0
    %370 = vmatpush1.msra.mxu0 %v252
    %371 = vmatprep.subr.mxu0 0.0
    %372 = vmatpush1.msra.mxu0 %v251
    %373 = vmatprep.subr.mxu0 0.0
    %374 = vmatpush1.msra.mxu0 %v250
    %375 = vmatprep.subr.mxu0 0.0
    %376 = vmatpush1.msra.mxu0 %v249
    %377 = vmatprep.subr.mxu0 0.0
    %378 = vmatpush2.msra.mxu0 0.0
    %379 = vmatprep.subr.mxu0 0.0
    %380 = vmatpush2.msra.mxu0 0.0
    %381 = vmatprep.subr.mxu0 0.0
    %382 = vmatpush2.msra.mxu0 0.0
    %383 = vmatprep.subr.mxu0 0.0
    %384 = vmatpush2.msra.mxu0 0.0
    %385 = vmatprep.subr.mxu0 0.0
    %386 = vmatpush2.msra.mxu0 0.0
    %387 = vmatprep.subr.mxu0 0.0
    %388 = vmatpush2.msra.mxu0 0.0
    %389 = vmatprep.subr.mxu0 0.0
    %390 = vmatpush2.msra.mxu0 0.0
    %391 = vmatprep.subr.mxu0 0.0
    %392 = vmatpush2.msra.mxu0 0.0
    %393 = vmatprep.subr.mxu0 0.0
    %394 = vmatpush2.msra.mxu0 0.0
    %395 = vmatprep.subr.mxu0 0.0
    %396 = vmatpush2.msra.mxu0 0.0
    %397 = vmatprep.subr.mxu0 0.0
    %398 = vmatpush2.msra.mxu0 0.0
    %399 = vmatprep.subr.mxu0 0.0
    %400 = vmatpush2.msra.mxu0 0.0
    %401 = vmatprep.subr.mxu0 0.0
    %402 = vmatpush2.msra.mxu0 0.0
    %403 = vmatprep.subr.mxu0 0.0
    %404 = vmatpush2.msra.mxu0 0.0
    %405 = vmatprep.subr.mxu0 0.0
    %406 = vmatpush2.msra.mxu0 0.0
    %407 = vmatprep.subr.mxu0 0.0
    %408 = vmatpush2.msra.mxu0 0.0
    %409 = vmatprep.mubr.f32.mxu0 0.0
    %410 = vmatmul.mubr.f32.gmra.mxu0 %v340
    %v411 = vpop.f32.mrf.mxu0
    %v412 = vadd.f32 0.0, %v411
    %v413 = vpop.f32.mrf.mxu0
    %414 = vmatprep.mubr.f32.mxu0 0.0
    %415 = vmatmul.mubr.f32.gmra.mxu0 %v343
    %v416 = vpop.f32.mrf.mxu0
    %v417 = vadd.f32 0.0, %v416
    %v418 = vpop.f32.mrf.mxu0
    %419 = vdwg.mxu0
    %v421 = vsel %vm338, %v237, 0
    %v424 = vsel %vm338, %v238, 0
    %426 = vmatprep.subr.mxu0 0.0
    %427 = vmatpush1.msra.mxu0 0.0
    %428 = vmatprep.subr.mxu0 0.0
    %429 = vmatpush1.msra.mxu0 0.0
    %430 = vmatprep.subr.mxu0 0.0
    %431 = vmatpush1.msra.mxu0 0.0
    %432 = vmatprep.subr.mxu0 0.0
    %433 = vmatpush1.msra.mxu0 0.0
    %434 = vmatprep.subr.mxu0 0.0
    %435 = vmatpush1.msra.mxu0 0.0
    %436 = vmatprep.subr.mxu0 0.0
    %437 = vmatpush1.msra.mxu0 0.0
    %438 = vmatprep.subr.mxu0 0.0
    %439 = vmatpush1.msra.mxu0 0.0
    %440 = vmatprep.subr.mxu0 0.0
    %441 = vmatpush1.msra.mxu0 0.0
    %442 = vmatprep.subr.mxu0 0.0
    %443 = vmatpush1.msra.mxu0 0.0
    %444 = vmatprep.subr.mxu0 0.0
    %445 = vmatpush1.msra.mxu0 0.0
    %446 = vmatprep.subr.mxu0 0.0
    %447 = vmatpush1.msra.mxu0 0.0
    %448 = vmatprep.subr.mxu0 0.0
    %449 = vmatpush1.msra.mxu0 0.0
    %450 = vmatprep.subr.mxu0 0.0
    %451 = vmatpush1.msra.mxu0 %v248
    %452 = vmatprep.subr.mxu0 0.0
    %453 = vmatpush1.msra.mxu0 %v247
    %454 = vmatprep.subr.mxu0 0.0
    %455 = vmatpush1.msra.mxu0 %v246
    %456 = vmatprep.subr.mxu0 0.0
    %457 = vmatpush1.msra.mxu0 %v245
    %458 = vmatprep.subr.mxu0 0.0
    %459 = vmatpush2.msra.mxu0 0.0
    %460 = vmatprep.subr.mxu0 0.0
    %461 = vmatpush2.msra.mxu0 0.0
    %462 = vmatprep.subr.mxu0 0.0
    %463 = vmatpush2.msra.mxu0 0.0
    %464 = vmatprep.subr.mxu0 0.0
    %465 = vmatpush2.msra.mxu0 0.0
    %466 = vmatprep.subr.mxu0 0.0
    %467 = vmatpush2.msra.mxu0 0.0
    %468 = vmatprep.subr.mxu0 0.0
    %469 = vmatpush2.msra.mxu0 0.0
    %470 = vmatprep.subr.mxu0 0.0
    %471 = vmatpush2.msra.mxu0 0.0
    %472 = vmatprep.subr.mxu0 0.0
    %473 = vmatpush2.msra.mxu0 0.0
    %474 = vmatprep.subr.mxu0 0.0
    %475 = vmatpush2.msra.mxu0 0.0
    %476 = vmatprep.subr.mxu0 0.0
    %477 = vmatpush2.msra.mxu0 0.0
    %478 = vmatprep.subr.mxu0 0.0
    %479 = vmatpush2.msra.mxu0 0.0
    %480 = vmatprep.subr.mxu0 0.0
    %481 = vmatpush2.msra.mxu0 0.0
    %482 = vmatprep.subr.mxu0 0.0
    %483 = vmatpush2.msra.mxu0 0.0
    %484 = vmatprep.subr.mxu0 0.0
    %485 = vmatpush2.msra.mxu0 0.0
    %486 = vmatprep.subr.mxu0 0.0
    %487 = vmatpush2.msra.mxu0 0.0
    %488 = vmatprep.subr.mxu0 0.0
    %489 = vmatpush2.msra.mxu0 0.0
    %490 = vmatprep.mubr.f32.mxu0 0.0
    %491 = vmatmul.mubr.f32.gmra.mxu0 %v421
    %v492 = vpop.f32.mrf.mxu0
    %v493 = vadd.f32 %v412, %v492
    %v494 = vpop.f32.mrf.mxu0
    %495 = vmatprep.mubr.f32.mxu0 0.0
    %496 = vmatmul.mubr.f32.gmra.mxu0 %v424
    %v497 = vpop.f32.mrf.mxu0
    %v498 = vadd.f32 %v417, %v497
    %v499 = vpop.f32.mrf.mxu0
    %500 = vdwg.mxu0
    %v502 = vlaneseq
    %v503 = vshrl.u32 %v502, 7
    %v504 = vsub.s32 0, %v503
    %v505 = vrot.slane %v253, %v504
    %v507 = vadd.f32 %v493, %v505
    %v508 = vadd.f32 %v498, %v505
    %v509 = vsel %vm338, %v507, 0.0
    %510 = vadd.xlane.f32.xlu0 %v509
    %v511 = vpop.xlane.xlu0 %510
    %v512 = vsel %vm338, %v508, 0.0
    %513 = vadd.xlane.f32.xlu0 %v512
    %v514 = vpop.xlane.xlu0 %513
    %v515 = vrcp.pop 32.0
    %v516 = vmul.f32 %v511, %v515
    %v517 = vmul.f32 %v514, %v515
    %v518 = vsub.f32 %v507, %v516
    %v519 = vsub.f32 %v508, %v517
    %v520 = vmul.f32 %v518, %v518
    %v521 = vmul.f32 %v519, %v519
    %v522 = vsel %vm338, %v520, 0.0
    %523 = vadd.xlane.f32.xlu0 %v522
    %v524 = vpop.xlane.xlu0 %523
    %v525 = vsel %vm338, %v521, 0.0
    %526 = vadd.xlane.f32.xlu0 %v525
    %v527 = vpop.xlane.xlu0 %526
    %v528 = vmul.f32 %v524, %v515
    %v529 = vmul.f32 %v527, %v515
    %v530 = vadd.f32 %v528, 1e-05
    %v531 = vadd.f32 %v529, 1e-05
    %v532 = vrsqrt.pop %v530
    %v533 = vrsqrt.pop %v531
    %v534 = vmul.f32 %v518, %v532
    %v535 = vmul.f32 %v519, %v533
    %v537 = vlaneseq
    %v538 = vshrl.u32 %v537, 7
    %v539 = vsub.s32 0, %v538
    %v540 = vrot.slane %v254, %v539
    %v542 = vmul.f32 %v534, %v540
    %v543 = vmul.f32 %v535, %v540
    %v545 = vlaneseq
    %v546 = vshrl.u32 %v545, 7
    %v547 = vsub.s32 0, %v546
    %v548 = vrot.slane %v255, %v547
    %v550 = vadd.f32 %v542, %v548
    %v551 = vadd.f32 %v543, %v548
    %vm552 = vcmp.gt.f32.partialorder %v550, 0.0
    %vm553 = vcmp.gt.f32.partialorder %v551, 0.0
    %v554 = vmul.f32 %v550, 0.01
    %v555 = vmul.f32 %v551, 0.01
    %v556 = vsel %vm552, %v550, %v554
    %v557 = vsel %vm553, %v551, %v555
    %s558 = scalar_lea.vmem %s5, 32
    %v559 = vld [vmem:[%s558] sm:$0xff]
    %v560 = vld [vmem:[%s558 + $0x8] sm:$0xff]
    %v561 = vld [vmem:[%s558 + $0x10] sm:$0xff]
    %v562 = vld [vmem:[%s558 + $0x18] sm:$0xff]
    %s563 = scalar_lea.vmem %s6, 32
    %v564 = vld [vmem:[%s563] sm:$0xff]
    %v565 = vld [vmem:[%s563 + $0x8] sm:$0xff]
    %v566 = vld [vmem:[%s563 + $0x10] sm:$0xff]
    %v567 = vld [vmem:[%s563 + $0x18] sm:$0xff]
    %s568 = scalar_lea.vmem %s7, 1
    %v569 = vld [vmem:[%s568] sm:$0x1]
    %s570 = scalar_lea.vmem %s8, 1
    %v571 = vld [vmem:[%s570] sm:$0x1]
    %s572 = scalar_lea.vmem %s9, 1
    %v573 = vld [vmem:[%s572] sm:$0x1]
    %574 = vmatprep.subr.mxu0 0.0
    %575 = vmatpush1.msra.mxu0 0.0
    %576 = vmatprep.subr.mxu0 0.0
    %577 = vmatpush1.msra.mxu0 0.0
    %578 = vmatprep.subr.mxu0 0.0
    %579 = vmatpush1.msra.mxu0 0.0
    %580 = vmatprep.subr.mxu0 0.0
    %581 = vmatpush1.msra.mxu0 0.0
    %582 = vmatprep.subr.mxu0 0.0
    %583 = vmatpush1.msra.mxu0 0.0
    %584 = vmatprep.subr.mxu0 0.0
    %585 = vmatpush1.msra.mxu0 0.0
    %586 = vmatprep.subr.mxu0 0.0
    %587 = vmatpush1.msra.mxu0 0.0
    %588 = vmatprep.subr.mxu0 0.0
    %589 = vmatpush1.msra.mxu0 0.0
    %590 = vmatprep.subr.mxu0 0.0
    %591 = vmatpush1.msra.mxu0 0.0
    %592 = vmatprep.subr.mxu0 0.0
    %593 = vmatpush1.msra.mxu0 0.0
    %594 = vmatprep.subr.mxu0 0.0
    %595 = vmatpush1.msra.mxu0 0.0
    %596 = vmatprep.subr.mxu0 0.0
    %597 = vmatpush1.msra.mxu0 0.0
    %598 = vmatprep.subr.mxu0 0.0
    %599 = vmatpush1.msra.mxu0 0.0
    %600 = vmatprep.subr.mxu0 0.0
    %601 = vmatpush1.msra.mxu0 0.0
    %602 = vmatprep.subr.mxu0 0.0
    %603 = vmatpush1.msra.mxu0 %v557
    %604 = vmatprep.subr.mxu0 0.0
    %605 = vmatpush1.msra.mxu0 %v556
    %606 = vmatprep.subr.mxu0 0.0
    %607 = vmatpush2.msra.mxu0 0.0
    %608 = vmatprep.subr.mxu0 0.0
    %609 = vmatpush2.msra.mxu0 0.0
    %610 = vmatprep.subr.mxu0 0.0
    %611 = vmatpush2.msra.mxu0 0.0
    %612 = vmatprep.subr.mxu0 0.0
    %613 = vmatpush2.msra.mxu0 0.0
    %614 = vmatprep.subr.mxu0 0.0
    %615 = vmatpush2.msra.mxu0 0.0
    %616 = vmatprep.subr.mxu0 0.0
    %617 = vmatpush2.msra.mxu0 0.0
    %618 = vmatprep.subr.mxu0 0.0
    %619 = vmatpush2.msra.mxu0 0.0
    %620 = vmatprep.subr.mxu0 0.0
    %621 = vmatpush2.msra.mxu0 0.0
    %622 = vmatprep.subr.mxu0 0.0
    %623 = vmatpush2.msra.mxu0 0.0
    %624 = vmatprep.subr.mxu0 0.0
    %625 = vmatpush2.msra.mxu0 0.0
    %626 = vmatprep.subr.mxu0 0.0
    %627 = vmatpush2.msra.mxu0 0.0
    %628 = vmatprep.subr.mxu0 0.0
    %629 = vmatpush2.msra.mxu0 0.0
    %630 = vmatprep.subr.mxu0 0.0
    %631 = vmatpush2.msra.mxu0 0.0
    %632 = vmatprep.subr.mxu0 0.0
    %633 = vmatpush2.msra.mxu0 0.0
    %634 = vmatprep.subr.mxu0 0.0
    %635 = vmatpush2.msra.mxu0 0.0
    %636 = vmatprep.subr.mxu0 0.0
    %637 = vmatpush2.msra.mxu0 0.0
    %638 = vmatprep.mubr.f32.mxu0 0.0
    %639 = vmatmul.mubr.f32.gmra.mxu0 %v258
    %v640 = vpop.f32.mrf.mxu0
    %v641 = vadd.f32 0.0, %v640
    %v642 = vpop.f32.mrf.mxu0
    %643 = vmatprep.mubr.f32.mxu0 0.0
    %644 = vmatmul.mubr.f32.gmra.mxu0 %v261
    %v645 = vpop.f32.mrf.mxu0
    %v646 = vadd.f32 0.0, %v645
    %v647 = vpop.f32.mrf.mxu0
    %648 = vdwg.mxu0
    %v650 = vsel %vm338, %v641, 0
    %v653 = vsel %vm338, %v646, 0
    %655 = vmatprep.subr.mxu0 0.0
    %656 = vmatpush1.msra.mxu0 0.0
    %657 = vmatprep.subr.mxu0 0.0
    %658 = vmatpush1.msra.mxu0 0.0
    %659 = vmatprep.subr.mxu0 0.0
    %660 = vmatpush1.msra.mxu0 0.0
    %661 = vmatprep.subr.mxu0 0.0
    %662 = vmatpush1.msra.mxu0 0.0
    %663 = vmatprep.subr.mxu0 0.0
    %664 = vmatpush1.msra.mxu0 0.0
    %665 = vmatprep.subr.mxu0 0.0
    %666 = vmatpush1.msra.mxu0 0.0
    %667 = vmatprep.subr.mxu0 0.0
    %668 = vmatpush1.msra.mxu0 0.0
    %669 = vmatprep.subr.mxu0 0.0
    %670 = vmatpush1.msra.mxu0 0.0
    %671 = vmatprep.subr.mxu0 0.0
    %672 = vmatpush1.msra.mxu0 0.0
    %673 = vmatprep.subr.mxu0 0.0
    %674 = vmatpush1.msra.mxu0 0.0
    %675 = vmatprep.subr.mxu0 0.0
    %676 = vmatpush1.msra.mxu0 0.0
    %677 = vmatprep.subr.mxu0 0.0
    %678 = vmatpush1.msra.mxu0 0.0
    %679 = vmatprep.subr.mxu0 0.0
    %680 = vmatpush1.msra.mxu0 %v567
    %681 = vmatprep.subr.mxu0 0.0
    %682 = vmatpush1.msra.mxu0 %v566
    %683 = vmatprep.subr.mxu0 0.0
    %684 = vmatpush1.msra.mxu0 %v565
    %685 = vmatprep.subr.mxu0 0.0
    %686 = vmatpush1.msra.mxu0 %v564
    %687 = vmatprep.subr.mxu0 0.0
    %688 = vmatpush2.msra.mxu0 0.0
    %689 = vmatprep.subr.mxu0 0.0
    %690 = vmatpush2.msra.mxu0 0.0
    %691 = vmatprep.subr.mxu0 0.0
    %692 = vmatpush2.msra.mxu0 0.0
    %693 = vmatprep.subr.mxu0 0.0
    %694 = vmatpush2.msra.mxu0 0.0
    %695 = vmatprep.subr.mxu0 0.0
    %696 = vmatpush2.msra.mxu0 0.0
    %697 = vmatprep.subr.mxu0 0.0
    %698 = vmatpush2.msra.mxu0 0.0
    %699 = vmatprep.subr.mxu0 0.0
    %700 = vmatpush2.msra.mxu0 0.0
    %701 = vmatprep.subr.mxu0 0.0
    %702 = vmatpush2.msra.mxu0 0.0
    %703 = vmatprep.subr.mxu0 0.0
    %704 = vmatpush2.msra.mxu0 0.0
    %705 = vmatprep.subr.mxu0 0.0
    %706 = vmatpush2.msra.mxu0 0.0
    %707 = vmatprep.subr.mxu0 0.0
    %708 = vmatpush2.msra.mxu0 0.0
    %709 = vmatprep.subr.mxu0 0.0
    %710 = vmatpush2.msra.mxu0 0.0
    %711 = vmatprep.subr.mxu0 0.0
    %712 = vmatpush2.msra.mxu0 0.0
    %713 = vmatprep.subr.mxu0 0.0
    %714 = vmatpush2.msra.mxu0 0.0
    %715 = vmatprep.subr.mxu0 0.0
    %716 = vmatpush2.msra.mxu0 0.0
    %717 = vmatprep.subr.mxu0 0.0
    %718 = vmatpush2.msra.mxu0 0.0
    %719 = vmatprep.mubr.f32.mxu0 0.0
    %720 = vmatmul.mubr.f32.gmra.mxu0 %v650
    %v721 = vpop.f32.mrf.mxu0
    %v722 = vadd.f32 0.0, %v721
    %v723 = vpop.f32.mrf.mxu0
    %724 = vmatprep.mubr.f32.mxu0 0.0
    %725 = vmatmul.mubr.f32.gmra.mxu0 %v653
    %v726 = vpop.f32.mrf.mxu0
    %v727 = vadd.f32 0.0, %v726
    %v728 = vpop.f32.mrf.mxu0
    %729 = vdwg.mxu0
    %v731 = vsel %vm338, %v556, 0
    %v734 = vsel %vm338, %v557, 0
    %736 = vmatprep.subr.mxu0 0.0
    %737 = vmatpush1.msra.mxu0 0.0
    %738 = vmatprep.subr.mxu0 0.0
    %739 = vmatpush1.msra.mxu0 0.0
    %740 = vmatprep.subr.mxu0 0.0
    %741 = vmatpush1.msra.mxu0 0.0
    %742 = vmatprep.subr.mxu0 0.0
    %743 = vmatpush1.msra.mxu0 0.0
    %744 = vmatprep.subr.mxu0 0.0
    %745 = vmatpush1.msra.mxu0 0.0
    %746 = vmatprep.subr.mxu0 0.0
    %747 = vmatpush1.msra.mxu0 0.0
    %748 = vmatprep.subr.mxu0 0.0
    %749 = vmatpush1.msra.mxu0 0.0
    %750 = vmatprep.subr.mxu0 0.0
    %751 = vmatpush1.msra.mxu0 0.0
    %752 = vmatprep.subr.mxu0 0.0
    %753 = vmatpush1.msra.mxu0 0.0
    %754 = vmatprep.subr.mxu0 0.0
    %755 = vmatpush1.msra.mxu0 0.0
    %756 = vmatprep.subr.mxu0 0.0
    %757 = vmatpush1.msra.mxu0 0.0
    %758 = vmatprep.subr.mxu0 0.0
    %759 = vmatpush1.msra.mxu0 0.0
    %760 = vmatprep.subr.mxu0 0.0
    %761 = vmatpush1.msra.mxu0 %v562
    %762 = vmatprep.subr.mxu0 0.0
    %763 = vmatpush1.msra.mxu0 %v561
    %764 = vmatprep.subr.mxu0 0.0
    %765 = vmatpush1.msra.mxu0 %v560
    %766 = vmatprep.subr.mxu0 0.0
    %767 = vmatpush1.msra.mxu0 %v559
    %768 = vmatprep.subr.mxu0 0.0
    %769 = vmatpush2.msra.mxu0 0.0
    %770 = vmatprep.subr.mxu0 0.0
    %771 = vmatpush2.msra.mxu0 0.0
    %772 = vmatprep.subr.mxu0 0.0
    %773 = vmatpush2.msra.mxu0 0.0
    %774 = vmatprep.subr.mxu0 0.0
    %775 = vmatpush2.msra.mxu0 0.0
    %776 = vmatprep.subr.mxu0 0.0
    %777 = vmatpush2.msra.mxu0 0.0
    %778 = vmatprep.subr.mxu0 0.0
    %779 = vmatpush2.msra.mxu0 0.0
    %780 = vmatprep.subr.mxu0 0.0
    %781 = vmatpush2.msra.mxu0 0.0
    %782 = vmatprep.subr.mxu0 0.0
    %783 = vmatpush2.msra.mxu0 0.0
    %784 = vmatprep.subr.mxu0 0.0
    %785 = vmatpush2.msra.mxu0 0.0
    %786 = vmatprep.subr.mxu0 0.0
    %787 = vmatpush2.msra.mxu0 0.0
    %788 = vmatprep.subr.mxu0 0.0
    %789 = vmatpush2.msra.mxu0 0.0
    %790 = vmatprep.subr.mxu0 0.0
    %791 = vmatpush2.msra.mxu0 0.0
    %792 = vmatprep.subr.mxu0 0.0
    %793 = vmatpush2.msra.mxu0 0.0
    %794 = vmatprep.subr.mxu0 0.0
    %795 = vmatpush2.msra.mxu0 0.0
    %796 = vmatprep.subr.mxu0 0.0
    %797 = vmatpush2.msra.mxu0 0.0
    %798 = vmatprep.subr.mxu0 0.0
    %799 = vmatpush2.msra.mxu0 0.0
    %800 = vmatprep.mubr.f32.mxu0 0.0
    %801 = vmatmul.mubr.f32.gmra.mxu0 %v731
    %v802 = vpop.f32.mrf.mxu0
    %v803 = vadd.f32 %v722, %v802
    %v804 = vpop.f32.mrf.mxu0
    %805 = vmatprep.mubr.f32.mxu0 0.0
    %806 = vmatmul.mubr.f32.gmra.mxu0 %v734
    %v807 = vpop.f32.mrf.mxu0
    %v808 = vadd.f32 %v727, %v807
    %v809 = vpop.f32.mrf.mxu0
    %810 = vdwg.mxu0
    %v812 = vlaneseq
    %v813 = vshrl.u32 %v812, 7
    %v814 = vsub.s32 0, %v813
    %v815 = vrot.slane %v569, %v814
    %v817 = vadd.f32 %v803, %v815
    %v818 = vadd.f32 %v808, %v815
    %v819 = vsel %vm338, %v817, 0.0
    %820 = vadd.xlane.f32.xlu0 %v819
    %v821 = vpop.xlane.xlu0 %820
    %v822 = vsel %vm338, %v818, 0.0
    %823 = vadd.xlane.f32.xlu0 %v822
    %v824 = vpop.xlane.xlu0 %823
    %v825 = vmul.f32 %v821, %v515
    %v826 = vmul.f32 %v824, %v515
    %v827 = vsub.f32 %v817, %v825
    %v828 = vsub.f32 %v818, %v826
    %v829 = vmul.f32 %v827, %v827
    %v830 = vmul.f32 %v828, %v828
    %v831 = vsel %vm338, %v829, 0.0
    %832 = vadd.xlane.f32.xlu0 %v831
    %v833 = vpop.xlane.xlu0 %832
    %v834 = vsel %vm338, %v830, 0.0
    %835 = vadd.xlane.f32.xlu0 %v834
    %v836 = vpop.xlane.xlu0 %835
    %v837 = vmul.f32 %v833, %v515
    %v838 = vmul.f32 %v836, %v515
    %v839 = vadd.f32 %v837, 1e-05
    %v840 = vadd.f32 %v838, 1e-05
    %v841 = vrsqrt.pop %v839
    %v842 = vrsqrt.pop %v840
    %v843 = vmul.f32 %v827, %v841
    %v844 = vmul.f32 %v828, %v842
    %v846 = vlaneseq
    %v847 = vshrl.u32 %v846, 7
    %v848 = vsub.s32 0, %v847
    %v849 = vrot.slane %v571, %v848
    %v851 = vmul.f32 %v843, %v849
    %v852 = vmul.f32 %v844, %v849
    %v854 = vlaneseq
    %v855 = vshrl.u32 %v854, 7
    %v856 = vsub.s32 0, %v855
    %v857 = vrot.slane %v573, %v856
    %v859 = vadd.f32 %v851, %v857
    %v860 = vadd.f32 %v852, %v857
    %vm861 = vcmp.gt.f32.partialorder %v859, 0.0
    %vm862 = vcmp.gt.f32.partialorder %v860, 0.0
    %v863 = vmul.f32 %v859, 0.01
    %v864 = vmul.f32 %v860, 0.01
    %v865 = vsel %vm861, %v859, %v863
    %v866 = vsel %vm862, %v860, %v864
    %v867 = vld [vmem:[%s4] sm:$0xff]
    %v868 = vld [vmem:[%s4 + $0x8] sm:$0xff]
    %v869 = vld [vmem:[%s4 + $0x10] sm:$0xff]
    %v870 = vld [vmem:[%s4 + $0x18] sm:$0xff]
    %v871 = vld [vmem:[%s10] sm:$0xff]
    %v872 = vld [vmem:[%s10 + $0x8] sm:$0xff]
    %v873 = vld [vmem:[%s10 + $0x10] sm:$0xff]
    %v874 = vld [vmem:[%s10 + $0x18] sm:$0xff]
    %v875 = vld [vmem:[%s11] sm:$0xff]
    %v876 = vld [vmem:[%s11 + $0x8] sm:$0xff]
    %v877 = vld [vmem:[%s11 + $0x10] sm:$0xff]
    %v878 = vld [vmem:[%s11 + $0x18] sm:$0xff]
    %v879 = vld [vmem:[%s12] sm:$0x1]
    %v880 = vld [vmem:[%s13] sm:$0x1]
    %v881 = vld [vmem:[%s14] sm:$0x1]
    %v883 = vsel %vm338, %v867, 0
    %v886 = vsel %vm338, %v868, 0
    %v889 = vsel %vm338, %v869, 0
    %v892 = vsel %vm338, %v870, 0
    %894 = vmatprep.subr.mxu0 0.0
    %895 = vmatpush1.msra.mxu0 0.0
    %896 = vmatprep.subr.mxu0 0.0
    %897 = vmatpush1.msra.mxu0 0.0
    %898 = vmatprep.subr.mxu0 0.0
    %899 = vmatpush1.msra.mxu0 0.0
    %900 = vmatprep.subr.mxu0 0.0
    %901 = vmatpush1.msra.mxu0 0.0
    %902 = vmatprep.subr.mxu0 0.0
    %903 = vmatpush1.msra.mxu0 0.0
    %904 = vmatprep.subr.mxu0 0.0
    %905 = vmatpush1.msra.mxu0 0.0
    %906 = vmatprep.subr.mxu0 0.0
    %907 = vmatpush1.msra.mxu0 0.0
    %908 = vmatprep.subr.mxu0 0.0
    %909 = vmatpush1.msra.mxu0 0.0
    %910 = vmatprep.subr.mxu0 0.0
    %911 = vmatpush1.msra.mxu0 0.0
    %912 = vmatprep.subr.mxu0 0.0
    %913 = vmatpush1.msra.mxu0 0.0
    %914 = vmatprep.subr.mxu0 0.0
    %915 = vmatpush1.msra.mxu0 0.0
    %916 = vmatprep.subr.mxu0 0.0
    %917 = vmatpush1.msra.mxu0 0.0
    %918 = vmatprep.subr.mxu0 0.0
    %919 = vmatpush1.msra.mxu0 %v240
    %920 = vmatprep.subr.mxu0 0.0
    %921 = vmatpush1.msra.mxu0 %v239
    %922 = vmatprep.subr.mxu0 0.0
    %923 = vmatpush1.msra.mxu0 %v866
    %924 = vmatprep.subr.mxu0 0.0
    %925 = vmatpush1.msra.mxu0 %v865
    %926 = vmatprep.subr.mxu0 0.0
    %927 = vmatpush2.msra.mxu0 0.0
    %928 = vmatprep.subr.mxu0 0.0
    %929 = vmatpush2.msra.mxu0 0.0
    %930 = vmatprep.subr.mxu0 0.0
    %931 = vmatpush2.msra.mxu0 0.0
    %932 = vmatprep.subr.mxu0 0.0
    %933 = vmatpush2.msra.mxu0 0.0
    %934 = vmatprep.subr.mxu0 0.0
    %935 = vmatpush2.msra.mxu0 0.0
    %936 = vmatprep.subr.mxu0 0.0
    %937 = vmatpush2.msra.mxu0 0.0
    %938 = vmatprep.subr.mxu0 0.0
    %939 = vmatpush2.msra.mxu0 0.0
    %940 = vmatprep.subr.mxu0 0.0
    %941 = vmatpush2.msra.mxu0 0.0
    %942 = vmatprep.subr.mxu0 0.0
    %943 = vmatpush2.msra.mxu0 0.0
    %944 = vmatprep.subr.mxu0 0.0
    %945 = vmatpush2.msra.mxu0 0.0
    %946 = vmatprep.subr.mxu0 0.0
    %947 = vmatpush2.msra.mxu0 0.0
    %948 = vmatprep.subr.mxu0 0.0
    %949 = vmatpush2.msra.mxu0 0.0
    %950 = vmatprep.subr.mxu0 0.0
    %951 = vmatpush2.msra.mxu0 0.0
    %952 = vmatprep.subr.mxu0 0.0
    %953 = vmatpush2.msra.mxu0 0.0
    %954 = vmatprep.subr.mxu0 0.0
    %955 = vmatpush2.msra.mxu0 0.0
    %956 = vmatprep.subr.mxu0 0.0
    %957 = vmatpush2.msra.mxu0 0.0
    %958 = vmatprep.mubr.f32.mxu0 0.0
    %959 = vmatmul.mubr.f32.gmra.mxu0 %v883
    %v960 = vpop.f32.mrf.mxu0
    %v961 = vadd.f32 0.0, %v960
    %v962 = vpop.f32.mrf.mxu0
    %963 = vmatprep.mubr.f32.mxu0 0.0
    %964 = vmatmul.mubr.f32.gmra.mxu0 %v886
    %v965 = vpop.f32.mrf.mxu0
    %v966 = vadd.f32 0.0, %v965
    %v967 = vpop.f32.mrf.mxu0
    %968 = vmatprep.mubr.f32.mxu0 0.0
    %969 = vmatmul.mubr.f32.gmra.mxu0 %v889
    %v970 = vpop.f32.mrf.mxu0
    %v971 = vadd.f32 0.0, %v970
    %v972 = vpop.f32.mrf.mxu0
    %973 = vmatprep.mubr.f32.mxu0 0.0
    %974 = vmatmul.mubr.f32.gmra.mxu0 %v892
    %v975 = vpop.f32.mrf.mxu0
    %v976 = vadd.f32 0.0, %v975
    %v977 = vpop.f32.mrf.mxu0
    %978 = vdwg.mxu0
    %v980 = vsel %vm338, %v961, 0
    %v983 = vsel %vm338, %v966, 0
    %v986 = vsel %vm338, %v971, 0
    %v989 = vsel %vm338, %v976, 0
    %991 = vmatprep.subr.mxu0 0.0
    %992 = vmatpush1.msra.mxu0 0.0
    %993 = vmatprep.subr.mxu0 0.0
    %994 = vmatpush1.msra.mxu0 0.0
    %995 = vmatprep.subr.mxu0 0.0
    %996 = vmatpush1.msra.mxu0 0.0
    %997 = vmatprep.subr.mxu0 0.0
    %998 = vmatpush1.msra.mxu0 0.0
    %999 = vmatprep.subr.mxu0 0.0
    %1000 = vmatpush1.msra.mxu0 0.0
    %1001 = vmatprep.subr.mxu0 0.0
    %1002 = vmatpush1.msra.mxu0 0.0
    %1003 = vmatprep.subr.mxu0 0.0
    %1004 = vmatpush1.msra.mxu0 0.0
    %1005 = vmatprep.subr.mxu0 0.0
    %1006 = vmatpush1.msra.mxu0 0.0
    %1007 = vmatprep.subr.mxu0 0.0
    %1008 = vmatpush1.msra.mxu0 0.0
    %1009 = vmatprep.subr.mxu0 0.0
    %1010 = vmatpush1.msra.mxu0 0.0
    %1011 = vmatprep.subr.mxu0 0.0
    %1012 = vmatpush1.msra.mxu0 0.0
    %1013 = vmatprep.subr.mxu0 0.0
    %1014 = vmatpush1.msra.mxu0 0.0
    %1015 = vmatprep.subr.mxu0 0.0
    %1016 = vmatpush1.msra.mxu0 %v878
    %1017 = vmatprep.subr.mxu0 0.0
    %1018 = vmatpush1.msra.mxu0 %v877
    %1019 = vmatprep.subr.mxu0 0.0
    %1020 = vmatpush1.msra.mxu0 %v876
    %1021 = vmatprep.subr.mxu0 0.0
    %1022 = vmatpush1.msra.mxu0 %v875
    %1023 = vmatprep.subr.mxu0 0.0
    %1024 = vmatpush2.msra.mxu0 0.0
    %1025 = vmatprep.subr.mxu0 0.0
    %1026 = vmatpush2.msra.mxu0 0.0
    %1027 = vmatprep.subr.mxu0 0.0
    %1028 = vmatpush2.msra.mxu0 0.0
    %1029 = vmatprep.subr.mxu0 0.0
    %1030 = vmatpush2.msra.mxu0 0.0
    %1031 = vmatprep.subr.mxu0 0.0
    %1032 = vmatpush2.msra.mxu0 0.0
    %1033 = vmatprep.subr.mxu0 0.0
    %1034 = vmatpush2.msra.mxu0 0.0
    %1035 = vmatprep.subr.mxu0 0.0
    %1036 = vmatpush2.msra.mxu0 0.0
    %1037 = vmatprep.subr.mxu0 0.0
    %1038 = vmatpush2.msra.mxu0 0.0
    %1039 = vmatprep.subr.mxu0 0.0
    %1040 = vmatpush2.msra.mxu0 0.0
    %1041 = vmatprep.subr.mxu0 0.0
    %1042 = vmatpush2.msra.mxu0 0.0
    %1043 = vmatprep.subr.mxu0 0.0
    %1044 = vmatpush2.msra.mxu0 0.0
    %1045 = vmatprep.subr.mxu0 0.0
    %1046 = vmatpush2.msra.mxu0 0.0
    %1047 = vmatprep.subr.mxu0 0.0
    %1048 = vmatpush2.msra.mxu0 0.0
    %1049 = vmatprep.subr.mxu0 0.0
    %1050 = vmatpush2.msra.mxu0 0.0
    %1051 = vmatprep.subr.mxu0 0.0
    %1052 = vmatpush2.msra.mxu0 0.0
    %1053 = vmatprep.subr.mxu0 0.0
    %1054 = vmatpush2.msra.mxu0 0.0
    %1055 = vmatprep.mubr.f32.mxu0 0.0
    %1056 = vmatmul.mubr.f32.gmra.mxu0 %v980
    %v1057 = vpop.f32.mrf.mxu0
    %v1058 = vpop.f32.mrf.mxu0
    %1059 = vmatprep.mubr.f32.mxu0 0.0
    %1060 = vmatmul.mubr.f32.gmra.mxu0 %v983
    %v1061 = vpop.f32.mrf.mxu0
    %v1062 = vpop.f32.mrf.mxu0
    %1063 = vmatprep.mubr.f32.mxu0 0.0
    %1064 = vmatmul.mubr.f32.gmra.mxu0 %v986
    %v1065 = vpop.f32.mrf.mxu0
    %v1066 = vadd.f32 0.0, %v1065
    %v1067 = vpop.f32.mrf.mxu0
    %1068 = vmatprep.mubr.f32.mxu0 0.0
    %1069 = vmatmul.mubr.f32.gmra.mxu0 %v989
    %v1070 = vpop.f32.mrf.mxu0
    %v1071 = vadd.f32 0.0, %v1070
    %v1072 = vpop.f32.mrf.mxu0
    %1073 = vdwg.mxu0
    %v1075 = vsel %vm338, %v865, 0
    %v1078 = vsel %vm338, %v866, 0
    %v1081 = vsel %vm338, %v239, 0
    %v1084 = vsel %vm338, %v240, 0
    %1086 = vmatprep.subr.mxu0 0.0
    %1087 = vmatpush1.msra.mxu0 0.0
    %1088 = vmatprep.subr.mxu0 0.0
    %1089 = vmatpush1.msra.mxu0 0.0
    %1090 = vmatprep.subr.mxu0 0.0
    %1091 = vmatpush1.msra.mxu0 0.0
    %1092 = vmatprep.subr.mxu0 0.0
    %1093 = vmatpush1.msra.mxu0 0.0
    %1094 = vmatprep.subr.mxu0 0.0
    %1095 = vmatpush1.msra.mxu0 0.0
    %1096 = vmatprep.subr.mxu0 0.0
    %1097 = vmatpush1.msra.mxu0 0.0
    %1098 = vmatprep.subr.mxu0 0.0
    %1099 = vmatpush1.msra.mxu0 0.0
    %1100 = vmatprep.subr.mxu0 0.0
    %1101 = vmatpush1.msra.mxu0 0.0
    %1102 = vmatprep.subr.mxu0 0.0
    %1103 = vmatpush1.msra.mxu0 0.0
    %1104 = vmatprep.subr.mxu0 0.0
    %1105 = vmatpush1.msra.mxu0 0.0
    %1106 = vmatprep.subr.mxu0 0.0
    %1107 = vmatpush1.msra.mxu0 0.0
    %1108 = vmatprep.subr.mxu0 0.0
    %1109 = vmatpush1.msra.mxu0 0.0
    %1110 = vmatprep.subr.mxu0 0.0
    %1111 = vmatpush1.msra.mxu0 %v874
    %1112 = vmatprep.subr.mxu0 0.0
    %1113 = vmatpush1.msra.mxu0 %v873
    %1114 = vmatprep.subr.mxu0 0.0
    %1115 = vmatpush1.msra.mxu0 %v872
    %1116 = vmatprep.subr.mxu0 0.0
    %1117 = vmatpush1.msra.mxu0 %v871
    %1118 = vmatprep.subr.mxu0 0.0
    %1119 = vmatpush2.msra.mxu0 0.0
    %1120 = vmatprep.subr.mxu0 0.0
    %1121 = vmatpush2.msra.mxu0 0.0
    %1122 = vmatprep.subr.mxu0 0.0
    %1123 = vmatpush2.msra.mxu0 0.0
    %1124 = vmatprep.subr.mxu0 0.0
    %1125 = vmatpush2.msra.mxu0 0.0
    %1126 = vmatprep.subr.mxu0 0.0
    %1127 = vmatpush2.msra.mxu0 0.0
    %1128 = vmatprep.subr.mxu0 0.0
    %1129 = vmatpush2.msra.mxu0 0.0
    %1130 = vmatprep.subr.mxu0 0.0
    %1131 = vmatpush2.msra.mxu0 0.0
    %1132 = vmatprep.subr.mxu0 0.0
    %1133 = vmatpush2.msra.mxu0 0.0
    %1134 = vmatprep.subr.mxu0 0.0
    %1135 = vmatpush2.msra.mxu0 0.0
    %1136 = vmatprep.subr.mxu0 0.0
    %1137 = vmatpush2.msra.mxu0 0.0
    %1138 = vmatprep.subr.mxu0 0.0
    %1139 = vmatpush2.msra.mxu0 0.0
    %1140 = vmatprep.subr.mxu0 0.0
    %1141 = vmatpush2.msra.mxu0 0.0
    %1142 = vmatprep.subr.mxu0 0.0
    %1143 = vmatpush2.msra.mxu0 0.0
    %1144 = vmatprep.subr.mxu0 0.0
    %1145 = vmatpush2.msra.mxu0 0.0
    %1146 = vmatprep.subr.mxu0 0.0
    %1147 = vmatpush2.msra.mxu0 0.0
    %1148 = vmatprep.subr.mxu0 0.0
    %1149 = vmatpush2.msra.mxu0 0.0
    %1150 = vmatprep.mubr.f32.mxu0 0.0
    %1151 = vmatmul.mubr.f32.gmra.mxu0 %v1075
    %v1152 = vpop.f32.mrf.mxu0
    %v1153 = vpop.f32.mrf.mxu0
    %1154 = vmatprep.mubr.f32.mxu0 0.0
    %1155 = vmatmul.mubr.f32.gmra.mxu0 %v1078
    %v1156 = vpop.f32.mrf.mxu0
    %v1157 = vpop.f32.mrf.mxu0
    %1158 = vmatprep.mubr.f32.mxu0 0.0
    %1159 = vmatmul.mubr.f32.gmra.mxu0 %v1081
    %v1160 = vpop.f32.mrf.mxu0
    %v1161 = vadd.f32 %v1066, %v1160
    %v1162 = vpop.f32.mrf.mxu0
    %1163 = vmatprep.mubr.f32.mxu0 0.0
    %1164 = vmatmul.mubr.f32.gmra.mxu0 %v1084
    %v1165 = vpop.f32.mrf.mxu0
    %v1166 = vadd.f32 %v1071, %v1165
    %v1167 = vpop.f32.mrf.mxu0
    %1168 = vdwg.mxu0
    %v1170 = vlaneseq
    %v1171 = vshrl.u32 %v1170, 7
    %v1172 = vsub.s32 0, %v1171
    %v1173 = vrot.slane %v879, %v1172
    %v1175 = vadd.f32 %v1161, %v1173
    %v1176 = vadd.f32 %v1166, %v1173
    %v1177 = vsel %vm338, %v1175, 0.0
    %1178 = vadd.xlane.f32.xlu0 %v1177
    %v1179 = vpop.xlane.xlu0 %1178
    %v1180 = vsel %vm338, %v1176, 0.0
    %1181 = vadd.xlane.f32.xlu0 %v1180
    %v1182 = vpop.xlane.xlu0 %1181
    %v1183 = vmul.f32 %v1179, %v515
    %v1184 = vmul.f32 %v1182, %v515
    %v1185 = vsub.f32 %v1175, %v1183
    %v1186 = vsub.f32 %v1176, %v1184
    %v1187 = vmul.f32 %v1185, %v1185
    %v1188 = vmul.f32 %v1186, %v1186
    %v1189 = vsel %vm338, %v1187, 0.0
    %1190 = vadd.xlane.f32.xlu0 %v1189
    %v1191 = vpop.xlane.xlu0 %1190
    %v1192 = vsel %vm338, %v1188, 0.0
    %1193 = vadd.xlane.f32.xlu0 %v1192
    %v1194 = vpop.xlane.xlu0 %1193
    %v1195 = vmul.f32 %v1191, %v515
    %v1196 = vmul.f32 %v1194, %v515
    %v1197 = vadd.f32 %v1195, 1e-05
    %v1198 = vadd.f32 %v1196, 1e-05
    %v1199 = vrsqrt.pop %v1197
    %v1200 = vrsqrt.pop %v1198
    %v1201 = vmul.f32 %v1185, %v1199
    %v1202 = vmul.f32 %v1186, %v1200
    %v1204 = vlaneseq
    %v1205 = vshrl.u32 %v1204, 7
    %v1206 = vsub.s32 0, %v1205
    %v1207 = vrot.slane %v880, %v1206
    %v1209 = vmul.f32 %v1201, %v1207
    %v1210 = vmul.f32 %v1202, %v1207
    %v1212 = vlaneseq
    %v1213 = vshrl.u32 %v1212, 7
    %v1214 = vsub.s32 0, %v1213
    %v1215 = vrot.slane %v881, %v1214
    %v1217 = vadd.f32 %v1209, %v1215
    %v1218 = vadd.f32 %v1210, %v1215
    %vm1219 = vcmp.gt.f32.partialorder %v1217, 0.0
    %vm1220 = vcmp.gt.f32.partialorder %v1218, 0.0
    %v1221 = vmul.f32 %v1217, 0.01
    %v1222 = vmul.f32 %v1218, 0.01
    %v1223 = vsel %vm1219, %v1217, %v1221
    %v1224 = vsel %vm1220, %v1218, %v1222
    %s1225 = scalar_lea.vmem %s3, 16
    %v1226 = vld [vmem:[%s1225] sm:$0xff]
    %v1227 = vld [vmem:[%s1225 + $0x8] sm:$0xff]
    %s1228 = scalar_lea.vmem %s5, 64
    %v1229 = vld [vmem:[%s1228] sm:$0xff]
    %v1230 = vld [vmem:[%s1228 + $0x8] sm:$0xff]
    %v1231 = vld [vmem:[%s1228 + $0x10] sm:$0xff]
    %v1232 = vld [vmem:[%s1228 + $0x18] sm:$0xff]
    %s1233 = scalar_lea.vmem %s6, 64
    %v1234 = vld [vmem:[%s1233] sm:$0xff]
    %v1235 = vld [vmem:[%s1233 + $0x8] sm:$0xff]
    %v1236 = vld [vmem:[%s1233 + $0x10] sm:$0xff]
    %v1237 = vld [vmem:[%s1233 + $0x18] sm:$0xff]
    %s1238 = scalar_lea.vmem %s7, 2
    %v1239 = vld [vmem:[%s1238] sm:$0x1]
    %s1240 = scalar_lea.vmem %s8, 2
    %v1241 = vld [vmem:[%s1240] sm:$0x1]
    %s1242 = scalar_lea.vmem %s9, 2
    %v1243 = vld [vmem:[%s1242] sm:$0x1]
    %v1245 = vsel %vm256, %v1226, 0
    %v1248 = vsel %vm256, %v1227, 0
    %1250 = vmatprep.subr.mxu0 0.0
    %1251 = vmatpush1.msra.mxu0 0.0
    %1252 = vmatprep.subr.mxu0 0.0
    %1253 = vmatpush1.msra.mxu0 0.0
    %1254 = vmatprep.subr.mxu0 0.0
    %1255 = vmatpush1.msra.mxu0 0.0
    %1256 = vmatprep.subr.mxu0 0.0
    %1257 = vmatpush1.msra.mxu0 0.0
    %1258 = vmatprep.subr.mxu0 0.0
    %1259 = vmatpush1.msra.mxu0 0.0
    %1260 = vmatprep.subr.mxu0 0.0
    %1261 = vmatpush1.msra.mxu0 0.0
    %1262 = vmatprep.subr.mxu0 0.0
    %1263 = vmatpush1.msra.mxu0 0.0
    %1264 = vmatprep.subr.mxu0 0.0
    %1265 = vmatpush1.msra.mxu0 0.0
    %1266 = vmatprep.subr.mxu0 0.0
    %1267 = vmatpush1.msra.mxu0 0.0
    %1268 = vmatprep.subr.mxu0 0.0
    %1269 = vmatpush1.msra.mxu0 0.0
    %1270 = vmatprep.subr.mxu0 0.0
    %1271 = vmatpush1.msra.mxu0 0.0
    %1272 = vmatprep.subr.mxu0 0.0
    %1273 = vmatpush1.msra.mxu0 0.0
    %1274 = vmatprep.subr.mxu0 0.0
    %1275 = vmatpush1.msra.mxu0 0.0
    %1276 = vmatprep.subr.mxu0 0.0
    %1277 = vmatpush1.msra.mxu0 0.0
    %1278 = vmatprep.subr.mxu0 0.0
    %1279 = vmatpush1.msra.mxu0 %v1224
    %1280 = vmatprep.subr.mxu0 0.0
    %1281 = vmatpush1.msra.mxu0 %v1223
    %1282 = vmatprep.subr.mxu0 0.0
    %1283 = vmatpush2.msra.mxu0 0.0
    %1284 = vmatprep.subr.mxu0 0.0
    %1285 = vmatpush2.msra.mxu0 0.0
    %1286 = vmatprep.subr.mxu0 0.0
    %1287 = vmatpush2.msra.mxu0 0.0
    %1288 = vmatprep.subr.mxu0 0.0
    %1289 = vmatpush2.msra.mxu0 0.0
    %1290 = vmatprep.subr.mxu0 0.0
    %1291 = vmatpush2.msra.mxu0 0.0
    %1292 = vmatprep.subr.mxu0 0.0
    %1293 = vmatpush2.msra.mxu0 0.0
    %1294 = vmatprep.subr.mxu0 0.0
    %1295 = vmatpush2.msra.mxu0 0.0
    %1296 = vmatprep.subr.mxu0 0.0
    %1297 = vmatpush2.msra.mxu0 0.0
    %1298 = vmatprep.subr.mxu0 0.0
    %1299 = vmatpush2.msra.mxu0 0.0
    %1300 = vmatprep.subr.mxu0 0.0
    %1301 = vmatpush2.msra.mxu0 0.0
    %1302 = vmatprep.subr.mxu0 0.0
    %1303 = vmatpush2.msra.mxu0 0.0
    %1304 = vmatprep.subr.mxu0 0.0
    %1305 = vmatpush2.msra.mxu0 0.0
    %1306 = vmatprep.subr.mxu0 0.0
    %1307 = vmatpush2.msra.mxu0 0.0
    %1308 = vmatprep.subr.mxu0 0.0
    %1309 = vmatpush2.msra.mxu0 0.0
    %1310 = vmatprep.subr.mxu0 0.0
    %1311 = vmatpush2.msra.mxu0 0.0
    %1312 = vmatprep.subr.mxu0 0.0
    %1313 = vmatpush2.msra.mxu0 0.0
    %1314 = vmatprep.mubr.f32.mxu0 0.0
    %1315 = vmatmul.mubr.f32.gmra.mxu0 %v1245
    %v1316 = vpop.f32.mrf.mxu0
    %v1317 = vadd.f32 0.0, %v1316
    %v1318 = vpop.f32.mrf.mxu0
    %1319 = vmatprep.mubr.f32.mxu0 0.0
    %1320 = vmatmul.mubr.f32.gmra.mxu0 %v1248
    %v1321 = vpop.f32.mrf.mxu0
    %v1322 = vadd.f32 0.0, %v1321
    %v1323 = vpop.f32.mrf.mxu0
    %1324 = vdwg.mxu0
    %v1326 = vsel %vm338, %v1317, 0
    %v1329 = vsel %vm338, %v1322, 0
    %1331 = vmatprep.subr.mxu0 0.0
    %1332 = vmatpush1.msra.mxu0 0.0
    %1333 = vmatprep.subr.mxu0 0.0
    %1334 = vmatpush1.msra.mxu0 0.0
    %1335 = vmatprep.subr.mxu0 0.0
    %1336 = vmatpush1.msra.mxu0 0.0
    %1337 = vmatprep.subr.mxu0 0.0
    %1338 = vmatpush1.msra.mxu0 0.0
    %1339 = vmatprep.subr.mxu0 0.0
    %1340 = vmatpush1.msra.mxu0 0.0
    %1341 = vmatprep.subr.mxu0 0.0
    %1342 = vmatpush1.msra.mxu0 0.0
    %1343 = vmatprep.subr.mxu0 0.0
    %1344 = vmatpush1.msra.mxu0 0.0
    %1345 = vmatprep.subr.mxu0 0.0
    %1346 = vmatpush1.msra.mxu0 0.0
    %1347 = vmatprep.subr.mxu0 0.0
    %1348 = vmatpush1.msra.mxu0 0.0
    %1349 = vmatprep.subr.mxu0 0.0
    %1350 = vmatpush1.msra.mxu0 0.0
    %1351 = vmatprep.subr.mxu0 0.0
    %1352 = vmatpush1.msra.mxu0 0.0
    %1353 = vmatprep.subr.mxu0 0.0
    %1354 = vmatpush1.msra.mxu0 0.0
    %1355 = vmatprep.subr.mxu0 0.0
    %1356 = vmatpush1.msra.mxu0 %v1237
    %1357 = vmatprep.subr.mxu0 0.0
    %1358 = vmatpush1.msra.mxu0 %v1236
    %1359 = vmatprep.subr.mxu0 0.0
    %1360 = vmatpush1.msra.mxu0 %v1235
    %1361 = vmatprep.subr.mxu0 0.0
    %1362 = vmatpush1.msra.mxu0 %v1234
    %1363 = vmatprep.subr.mxu0 0.0
    %1364 = vmatpush2.msra.mxu0 0.0
    %1365 = vmatprep.subr.mxu0 0.0
    %1366 = vmatpush2.msra.mxu0 0.0
    %1367 = vmatprep.subr.mxu0 0.0
    %1368 = vmatpush2.msra.mxu0 0.0
    %1369 = vmatprep.subr.mxu0 0.0
    %1370 = vmatpush2.msra.mxu0 0.0
    %1371 = vmatprep.subr.mxu0 0.0
    %1372 = vmatpush2.msra.mxu0 0.0
    %1373 = vmatprep.subr.mxu0 0.0
    %1374 = vmatpush2.msra.mxu0 0.0
    %1375 = vmatprep.subr.mxu0 0.0
    %1376 = vmatpush2.msra.mxu0 0.0
    %1377 = vmatprep.subr.mxu0 0.0
    %1378 = vmatpush2.msra.mxu0 0.0
    %1379 = vmatprep.subr.mxu0 0.0
    %1380 = vmatpush2.msra.mxu0 0.0
    %1381 = vmatprep.subr.mxu0 0.0
    %1382 = vmatpush2.msra.mxu0 0.0
    %1383 = vmatprep.subr.mxu0 0.0
    %1384 = vmatpush2.msra.mxu0 0.0
    %1385 = vmatprep.subr.mxu0 0.0
    %1386 = vmatpush2.msra.mxu0 0.0
    %1387 = vmatprep.subr.mxu0 0.0
    %1388 = vmatpush2.msra.mxu0 0.0
    %1389 = vmatprep.subr.mxu0 0.0
    %1390 = vmatpush2.msra.mxu0 0.0
    %1391 = vmatprep.subr.mxu0 0.0
    %1392 = vmatpush2.msra.mxu0 0.0
    %1393 = vmatprep.subr.mxu0 0.0
    %1394 = vmatpush2.msra.mxu0 0.0
    %1395 = vmatprep.mubr.f32.mxu0 0.0
    %1396 = vmatmul.mubr.f32.gmra.mxu0 %v1326
    %v1397 = vpop.f32.mrf.mxu0
    %v1398 = vadd.f32 0.0, %v1397
    %v1399 = vpop.f32.mrf.mxu0
    %1400 = vmatprep.mubr.f32.mxu0 0.0
    %1401 = vmatmul.mubr.f32.gmra.mxu0 %v1329
    %v1402 = vpop.f32.mrf.mxu0
    %v1403 = vadd.f32 0.0, %v1402
    %v1404 = vpop.f32.mrf.mxu0
    %1405 = vdwg.mxu0
    %v1407 = vsel %vm338, %v1223, 0
    %v1410 = vsel %vm338, %v1224, 0
    %1412 = vmatprep.subr.mxu0 0.0
    %1413 = vmatpush1.msra.mxu0 0.0
    %1414 = vmatprep.subr.mxu0 0.0
    %1415 = vmatpush1.msra.mxu0 0.0
    %1416 = vmatprep.subr.mxu0 0.0
    %1417 = vmatpush1.msra.mxu0 0.0
    %1418 = vmatprep.subr.mxu0 0.0
    %1419 = vmatpush1.msra.mxu0 0.0
    %1420 = vmatprep.subr.mxu0 0.0
    %1421 = vmatpush1.msra.mxu0 0.0
    %1422 = vmatprep.subr.mxu0 0.0
    %1423 = vmatpush1.msra.mxu0 0.0
    %1424 = vmatprep.subr.mxu0 0.0
    %1425 = vmatpush1.msra.mxu0 0.0
    %1426 = vmatprep.subr.mxu0 0.0
    %1427 = vmatpush1.msra.mxu0 0.0
    %1428 = vmatprep.subr.mxu0 0.0
    %1429 = vmatpush1.msra.mxu0 0.0
    %1430 = vmatprep.subr.mxu0 0.0
    %1431 = vmatpush1.msra.mxu0 0.0
    %1432 = vmatprep.subr.mxu0 0.0
    %1433 = vmatpush1.msra.mxu0 0.0
    %1434 = vmatprep.subr.mxu0 0.0
    %1435 = vmatpush1.msra.mxu0 0.0
    %1436 = vmatprep.subr.mxu0 0.0
    %1437 = vmatpush1.msra.mxu0 %v1232
    %1438 = vmatprep.subr.mxu0 0.0
    %1439 = vmatpush1.msra.mxu0 %v1231
    %1440 = vmatprep.subr.mxu0 0.0
    %1441 = vmatpush1.msra.mxu0 %v1230
    %1442 = vmatprep.subr.mxu0 0.0
    %1443 = vmatpush1.msra.mxu0 %v1229
    %1444 = vmatprep.subr.mxu0 0.0
    %1445 = vmatpush2.msra.mxu0 0.0
    %1446 = vmatprep.subr.mxu0 0.0
    %1447 = vmatpush2.msra.mxu0 0.0
    %1448 = vmatprep.subr.mxu0 0.0
    %1449 = vmatpush2.msra.mxu0 0.0
    %1450 = vmatprep.subr.mxu0 0.0
    %1451 = vmatpush2.msra.mxu0 0.0
    %1452 = vmatprep.subr.mxu0 0.0
    %1453 = vmatpush2.msra.mxu0 0.0
    %1454 = vmatprep.subr.mxu0 0.0
    %1455 = vmatpush2.msra.mxu0 0.0
    %1456 = vmatprep.subr.mxu0 0.0
    %1457 = vmatpush2.msra.mxu0 0.0
    %1458 = vmatprep.subr.mxu0 0.0
    %1459 = vmatpush2.msra.mxu0 0.0
    %1460 = vmatprep.subr.mxu0 0.0
    %1461 = vmatpush2.msra.mxu0 0.0
    %1462 = vmatprep.subr.mxu0 0.0
    %1463 = vmatpush2.msra.mxu0 0.0
    %1464 = vmatprep.subr.mxu0 0.0
    %1465 = vmatpush2.msra.mxu0 0.0
    %1466 = vmatprep.subr.mxu0 0.0
    %1467 = vmatpush2.msra.mxu0 0.0
    %1468 = vmatprep.subr.mxu0 0.0
    %1469 = vmatpush2.msra.mxu0 0.0
    %1470 = vmatprep.subr.mxu0 0.0
    %1471 = vmatpush2.msra.mxu0 0.0
    %1472 = vmatprep.subr.mxu0 0.0
    %1473 = vmatpush2.msra.mxu0 0.0
    %1474 = vmatprep.subr.mxu0 0.0
    %1475 = vmatpush2.msra.mxu0 0.0
    %1476 = vmatprep.mubr.f32.mxu0 0.0
    %1477 = vmatmul.mubr.f32.gmra.mxu0 %v1407
    %v1478 = vpop.f32.mrf.mxu0
    %v1479 = vadd.f32 %v1398, %v1478
    %v1480 = vpop.f32.mrf.mxu0
    %1481 = vmatprep.mubr.f32.mxu0 0.0
    %1482 = vmatmul.mubr.f32.gmra.mxu0 %v1410
    %v1483 = vpop.f32.mrf.mxu0
    %v1484 = vadd.f32 %v1403, %v1483
    %v1485 = vpop.f32.mrf.mxu0
    %1486 = vdwg.mxu0
    %v1488 = vlaneseq
    %v1489 = vshrl.u32 %v1488, 7
    %v1490 = vsub.s32 0, %v1489
    %v1491 = vrot.slane %v1239, %v1490
    %v1493 = vadd.f32 %v1479, %v1491
    %v1494 = vadd.f32 %v1484, %v1491
    %v1495 = vsel %vm338, %v1493, 0.0
    %1496 = vadd.xlane.f32.xlu0 %v1495
    %v1497 = vpop.xlane.xlu0 %1496
    %v1498 = vsel %vm338, %v1494, 0.0
    %1499 = vadd.xlane.f32.xlu0 %v1498
    %v1500 = vpop.xlane.xlu0 %1499
    %v1501 = vmul.f32 %v1497, %v515
    %v1502 = vmul.f32 %v1500, %v515
    %v1503 = vsub.f32 %v1493, %v1501
    %v1504 = vsub.f32 %v1494, %v1502
    %v1505 = vmul.f32 %v1503, %v1503
    %v1506 = vmul.f32 %v1504, %v1504
    %v1507 = vsel %vm338, %v1505, 0.0
    %1508 = vadd.xlane.f32.xlu0 %v1507
    %v1509 = vpop.xlane.xlu0 %1508
    %v1510 = vsel %vm338, %v1506, 0.0
    %1511 = vadd.xlane.f32.xlu0 %v1510
    %v1512 = vpop.xlane.xlu0 %1511
    %v1513 = vmul.f32 %v1509, %v515
    %v1514 = vmul.f32 %v1512, %v515
    %v1515 = vadd.f32 %v1513, 1e-05
    %v1516 = vadd.f32 %v1514, 1e-05
    %v1517 = vrsqrt.pop %v1515
    %v1518 = vrsqrt.pop %v1516
    %v1519 = vmul.f32 %v1503, %v1517
    %v1520 = vmul.f32 %v1504, %v1518
    %v1522 = vlaneseq
    %v1523 = vshrl.u32 %v1522, 7
    %v1524 = vsub.s32 0, %v1523
    %v1525 = vrot.slane %v1241, %v1524
    %v1527 = vmul.f32 %v1519, %v1525
    %v1528 = vmul.f32 %v1520, %v1525
    %v1530 = vlaneseq
    %v1531 = vshrl.u32 %v1530, 7
    %v1532 = vsub.s32 0, %v1531
    %v1533 = vrot.slane %v1243, %v1532
    %v1535 = vadd.f32 %v1527, %v1533
    %v1536 = vadd.f32 %v1528, %v1533
    %vm1537 = vcmp.gt.f32.partialorder %v1535, 0.0
    %vm1538 = vcmp.gt.f32.partialorder %v1536, 0.0
    %v1539 = vmul.f32 %v1535, 0.01
    %v1540 = vmul.f32 %v1536, 0.01
    %v1541 = vsel %vm1537, %v1535, %v1539
    %v1542 = vsel %vm1538, %v1536, %v1540
    %s1543 = scalar_lea.vmem %s5, 96
    %v1544 = vld [vmem:[%s1543] sm:$0xff]
    %v1545 = vld [vmem:[%s1543 + $0x8] sm:$0xff]
    %v1546 = vld [vmem:[%s1543 + $0x10] sm:$0xff]
    %v1547 = vld [vmem:[%s1543 + $0x18] sm:$0xff]
    %s1548 = scalar_lea.vmem %s6, 96
    %v1549 = vld [vmem:[%s1548] sm:$0xff]
    %v1550 = vld [vmem:[%s1548 + $0x8] sm:$0xff]
    %v1551 = vld [vmem:[%s1548 + $0x10] sm:$0xff]
    %v1552 = vld [vmem:[%s1548 + $0x18] sm:$0xff]
    %s1553 = scalar_lea.vmem %s7, 3
    %v1554 = vld [vmem:[%s1553] sm:$0x1]
    %s1555 = scalar_lea.vmem %s8, 3
    %v1556 = vld [vmem:[%s1555] sm:$0x1]
    %s1557 = scalar_lea.vmem %s9, 3
    %v1558 = vld [vmem:[%s1557] sm:$0x1]
    %1559 = vmatprep.subr.mxu0 0.0
    %1560 = vmatpush1.msra.mxu0 0.0
    %1561 = vmatprep.subr.mxu0 0.0
    %1562 = vmatpush1.msra.mxu0 0.0
    %1563 = vmatprep.subr.mxu0 0.0
    %1564 = vmatpush1.msra.mxu0 0.0
    %1565 = vmatprep.subr.mxu0 0.0
    %1566 = vmatpush1.msra.mxu0 0.0
    %1567 = vmatprep.subr.mxu0 0.0
    %1568 = vmatpush1.msra.mxu0 0.0
    %1569 = vmatprep.subr.mxu0 0.0
    %1570 = vmatpush1.msra.mxu0 0.0
    %1571 = vmatprep.subr.mxu0 0.0
    %1572 = vmatpush1.msra.mxu0 0.0
    %1573 = vmatprep.subr.mxu0 0.0
    %1574 = vmatpush1.msra.mxu0 0.0
    %1575 = vmatprep.subr.mxu0 0.0
    %1576 = vmatpush1.msra.mxu0 0.0
    %1577 = vmatprep.subr.mxu0 0.0
    %1578 = vmatpush1.msra.mxu0 0.0
    %1579 = vmatprep.subr.mxu0 0.0
    %1580 = vmatpush1.msra.mxu0 0.0
    %1581 = vmatprep.subr.mxu0 0.0
    %1582 = vmatpush1.msra.mxu0 0.0
    %1583 = vmatprep.subr.mxu0 0.0
    %1584 = vmatpush1.msra.mxu0 0.0
    %1585 = vmatprep.subr.mxu0 0.0
    %1586 = vmatpush1.msra.mxu0 0.0
    %1587 = vmatprep.subr.mxu0 0.0
    %1588 = vmatpush1.msra.mxu0 %v1542
    %1589 = vmatprep.subr.mxu0 0.0
    %1590 = vmatpush1.msra.mxu0 %v1541
    %1591 = vmatprep.subr.mxu0 0.0
    %1592 = vmatpush2.msra.mxu0 0.0
    %1593 = vmatprep.subr.mxu0 0.0
    %1594 = vmatpush2.msra.mxu0 0.0
    %1595 = vmatprep.subr.mxu0 0.0
    %1596 = vmatpush2.msra.mxu0 0.0
    %1597 = vmatprep.subr.mxu0 0.0
    %1598 = vmatpush2.msra.mxu0 0.0
    %1599 = vmatprep.subr.mxu0 0.0
    %1600 = vmatpush2.msra.mxu0 0.0
    %1601 = vmatprep.subr.mxu0 0.0
    %1602 = vmatpush2.msra.mxu0 0.0
    %1603 = vmatprep.subr.mxu0 0.0
    %1604 = vmatpush2.msra.mxu0 0.0
    %1605 = vmatprep.subr.mxu0 0.0
    %1606 = vmatpush2.msra.mxu0 0.0
    %1607 = vmatprep.subr.mxu0 0.0
    %1608 = vmatpush2.msra.mxu0 0.0
    %1609 = vmatprep.subr.mxu0 0.0
    %1610 = vmatpush2.msra.mxu0 0.0
    %1611 = vmatprep.subr.mxu0 0.0
    %1612 = vmatpush2.msra.mxu0 0.0
    %1613 = vmatprep.subr.mxu0 0.0
    %1614 = vmatpush2.msra.mxu0 0.0
    %1615 = vmatprep.subr.mxu0 0.0
    %1616 = vmatpush2.msra.mxu0 0.0
    %1617 = vmatprep.subr.mxu0 0.0
    %1618 = vmatpush2.msra.mxu0 0.0
    %1619 = vmatprep.subr.mxu0 0.0
    %1620 = vmatpush2.msra.mxu0 0.0
    %1621 = vmatprep.subr.mxu0 0.0
    %1622 = vmatpush2.msra.mxu0 0.0
    %1623 = vmatprep.mubr.f32.mxu0 0.0
    %1624 = vmatmul.mubr.f32.gmra.mxu0 %v1245
    %v1625 = vpop.f32.mrf.mxu0
    %v1626 = vadd.f32 0.0, %v1625
    %v1627 = vpop.f32.mrf.mxu0
    %1628 = vmatprep.mubr.f32.mxu0 0.0
    %1629 = vmatmul.mubr.f32.gmra.mxu0 %v1248
    %v1630 = vpop.f32.mrf.mxu0
    %v1631 = vadd.f32 0.0, %v1630
    %v1632 = vpop.f32.mrf.mxu0
    %1633 = vdwg.mxu0
    %v1635 = vsel %vm338, %v1626, 0
    %v1638 = vsel %vm338, %v1631, 0
    %1640 = vmatprep.subr.mxu0 0.0
    %1641 = vmatpush1.msra.mxu0 0.0
    %1642 = vmatprep.subr.mxu0 0.0
    %1643 = vmatpush1.msra.mxu0 0.0
    %1644 = vmatprep.subr.mxu0 0.0
    %1645 = vmatpush1.msra.mxu0 0.0
    %1646 = vmatprep.subr.mxu0 0.0
    %1647 = vmatpush1.msra.mxu0 0.0
    %1648 = vmatprep.subr.mxu0 0.0
    %1649 = vmatpush1.msra.mxu0 0.0
    %1650 = vmatprep.subr.mxu0 0.0
    %1651 = vmatpush1.msra.mxu0 0.0
    %1652 = vmatprep.subr.mxu0 0.0
    %1653 = vmatpush1.msra.mxu0 0.0
    %1654 = vmatprep.subr.mxu0 0.0
    %1655 = vmatpush1.msra.mxu0 0.0
    %1656 = vmatprep.subr.mxu0 0.0
    %1657 = vmatpush1.msra.mxu0 0.0
    %1658 = vmatprep.subr.mxu0 0.0
    %1659 = vmatpush1.msra.mxu0 0.0
    %1660 = vmatprep.subr.mxu0 0.0
    %1661 = vmatpush1.msra.mxu0 0.0
    %1662 = vmatprep.subr.mxu0 0.0
    %1663 = vmatpush1.msra.mxu0 0.0
    %1664 = vmatprep.subr.mxu0 0.0
    %1665 = vmatpush1.msra.mxu0 %v1552
    %1666 = vmatprep.subr.mxu0 0.0
    %1667 = vmatpush1.msra.mxu0 %v1551
    %1668 = vmatprep.subr.mxu0 0.0
    %1669 = vmatpush1.msra.mxu0 %v1550
    %1670 = vmatprep.subr.mxu0 0.0
    %1671 = vmatpush1.msra.mxu0 %v1549
    %1672 = vmatprep.subr.mxu0 0.0
    %1673 = vmatpush2.msra.mxu0 0.0
    %1674 = vmatprep.subr.mxu0 0.0
    %1675 = vmatpush2.msra.mxu0 0.0
    %1676 = vmatprep.subr.mxu0 0.0
    %1677 = vmatpush2.msra.mxu0 0.0
    %1678 = vmatprep.subr.mxu0 0.0
    %1679 = vmatpush2.msra.mxu0 0.0
    %1680 = vmatprep.subr.mxu0 0.0
    %1681 = vmatpush2.msra.mxu0 0.0
    %1682 = vmatprep.subr.mxu0 0.0
    %1683 = vmatpush2.msra.mxu0 0.0
    %1684 = vmatprep.subr.mxu0 0.0
    %1685 = vmatpush2.msra.mxu0 0.0
    %1686 = vmatprep.subr.mxu0 0.0
    %1687 = vmatpush2.msra.mxu0 0.0
    %1688 = vmatprep.subr.mxu0 0.0
    %1689 = vmatpush2.msra.mxu0 0.0
    %1690 = vmatprep.subr.mxu0 0.0
    %1691 = vmatpush2.msra.mxu0 0.0
    %1692 = vmatprep.subr.mxu0 0.0
    %1693 = vmatpush2.msra.mxu0 0.0
    %1694 = vmatprep.subr.mxu0 0.0
    %1695 = vmatpush2.msra.mxu0 0.0
    %1696 = vmatprep.subr.mxu0 0.0
    %1697 = vmatpush2.msra.mxu0 0.0
    %1698 = vmatprep.subr.mxu0 0.0
    %1699 = vmatpush2.msra.mxu0 0.0
    %1700 = vmatprep.subr.mxu0 0.0
    %1701 = vmatpush2.msra.mxu0 0.0
    %1702 = vmatprep.subr.mxu0 0.0
    %1703 = vmatpush2.msra.mxu0 0.0
    %1704 = vmatprep.mubr.f32.mxu0 0.0
    %1705 = vmatmul.mubr.f32.gmra.mxu0 %v1635
    %v1706 = vpop.f32.mrf.mxu0
    %v1707 = vadd.f32 0.0, %v1706
    %v1708 = vpop.f32.mrf.mxu0
    %1709 = vmatprep.mubr.f32.mxu0 0.0
    %1710 = vmatmul.mubr.f32.gmra.mxu0 %v1638
    %v1711 = vpop.f32.mrf.mxu0
    %v1712 = vadd.f32 0.0, %v1711
    %v1713 = vpop.f32.mrf.mxu0
    %1714 = vdwg.mxu0
    %v1716 = vsel %vm338, %v1541, 0
    %v1719 = vsel %vm338, %v1542, 0
    %1721 = vmatprep.subr.mxu0 0.0
    %1722 = vmatpush1.msra.mxu0 0.0
    %1723 = vmatprep.subr.mxu0 0.0
    %1724 = vmatpush1.msra.mxu0 0.0
    %1725 = vmatprep.subr.mxu0 0.0
    %1726 = vmatpush1.msra.mxu0 0.0
    %1727 = vmatprep.subr.mxu0 0.0
    %1728 = vmatpush1.msra.mxu0 0.0
    %1729 = vmatprep.subr.mxu0 0.0
    %1730 = vmatpush1.msra.mxu0 0.0
    %1731 = vmatprep.subr.mxu0 0.0
    %1732 = vmatpush1.msra.mxu0 0.0
    %1733 = vmatprep.subr.mxu0 0.0
    %1734 = vmatpush1.msra.mxu0 0.0
    %1735 = vmatprep.subr.mxu0 0.0
    %1736 = vmatpush1.msra.mxu0 0.0
    %1737 = vmatprep.subr.mxu0 0.0
    %1738 = vmatpush1.msra.mxu0 0.0
    %1739 = vmatprep.subr.mxu0 0.0
    %1740 = vmatpush1.msra.mxu0 0.0
    %1741 = vmatprep.subr.mxu0 0.0
    %1742 = vmatpush1.msra.mxu0 0.0
    %1743 = vmatprep.subr.mxu0 0.0
    %1744 = vmatpush1.msra.mxu0 0.0
    %1745 = vmatprep.subr.mxu0 0.0
    %1746 = vmatpush1.msra.mxu0 %v1547
    %1747 = vmatprep.subr.mxu0 0.0
    %1748 = vmatpush1.msra.mxu0 %v1546
    %1749 = vmatprep.subr.mxu0 0.0
    %1750 = vmatpush1.msra.mxu0 %v1545
    %1751 = vmatprep.subr.mxu0 0.0
    %1752 = vmatpush1.msra.mxu0 %v1544
    %1753 = vmatprep.subr.mxu0 0.0
    %1754 = vmatpush2.msra.mxu0 0.0
    %1755 = vmatprep.subr.mxu0 0.0
    %1756 = vmatpush2.msra.mxu0 0.0
    %1757 = vmatprep.subr.mxu0 0.0
    %1758 = vmatpush2.msra.mxu0 0.0
    %1759 = vmatprep.subr.mxu0 0.0
    %1760 = vmatpush2.msra.mxu0 0.0
    %1761 = vmatprep.subr.mxu0 0.0
    %1762 = vmatpush2.msra.mxu0 0.0
    %1763 = vmatprep.subr.mxu0 0.0
    %1764 = vmatpush2.msra.mxu0 0.0
    %1765 = vmatprep.subr.mxu0 0.0
    %1766 = vmatpush2.msra.mxu0 0.0
    %1767 = vmatprep.subr.mxu0 0.0
    %1768 = vmatpush2.msra.mxu0 0.0
    %1769 = vmatprep.subr.mxu0 0.0
    %1770 = vmatpush2.msra.mxu0 0.0
    %1771 = vmatprep.subr.mxu0 0.0
    %1772 = vmatpush2.msra.mxu0 0.0
    %1773 = vmatprep.subr.mxu0 0.0
    %1774 = vmatpush2.msra.mxu0 0.0
    %1775 = vmatprep.subr.mxu0 0.0
    %1776 = vmatpush2.msra.mxu0 0.0
    %1777 = vmatprep.subr.mxu0 0.0
    %1778 = vmatpush2.msra.mxu0 0.0
    %1779 = vmatprep.subr.mxu0 0.0
    %1780 = vmatpush2.msra.mxu0 0.0
    %1781 = vmatprep.subr.mxu0 0.0
    %1782 = vmatpush2.msra.mxu0 0.0
    %1783 = vmatprep.subr.mxu0 0.0
    %1784 = vmatpush2.msra.mxu0 0.0
    %1785 = vmatprep.mubr.f32.mxu0 0.0
    %1786 = vmatmul.mubr.f32.gmra.mxu0 %v1716
    %v1787 = vpop.f32.mrf.mxu0
    %v1788 = vadd.f32 %v1707, %v1787
    %v1789 = vpop.f32.mrf.mxu0
    %1790 = vmatprep.mubr.f32.mxu0 0.0
    %1791 = vmatmul.mubr.f32.gmra.mxu0 %v1719
    %v1792 = vpop.f32.mrf.mxu0
    %v1793 = vadd.f32 %v1712, %v1792
    %v1794 = vpop.f32.mrf.mxu0
    %1795 = vdwg.mxu0
    %v1797 = vlaneseq
    %v1798 = vshrl.u32 %v1797, 7
    %v1799 = vsub.s32 0, %v1798
    %v1800 = vrot.slane %v1554, %v1799
    %v1802 = vadd.f32 %v1788, %v1800
    %v1803 = vadd.f32 %v1793, %v1800
    %v1804 = vsel %vm338, %v1802, 0.0
    %1805 = vadd.xlane.f32.xlu0 %v1804
    %v1806 = vpop.xlane.xlu0 %1805
    %v1807 = vsel %vm338, %v1803, 0.0
    %1808 = vadd.xlane.f32.xlu0 %v1807
    %v1809 = vpop.xlane.xlu0 %1808
    %v1810 = vmul.f32 %v1806, %v515
    %v1811 = vmul.f32 %v1809, %v515
    %v1812 = vsub.f32 %v1802, %v1810
    %v1813 = vsub.f32 %v1803, %v1811
    %v1814 = vmul.f32 %v1812, %v1812
    %v1815 = vmul.f32 %v1813, %v1813
    %v1816 = vsel %vm338, %v1814, 0.0
    %1817 = vadd.xlane.f32.xlu0 %v1816
    %v1818 = vpop.xlane.xlu0 %1817
    %v1819 = vsel %vm338, %v1815, 0.0
    %1820 = vadd.xlane.f32.xlu0 %v1819
    %v1821 = vpop.xlane.xlu0 %1820
    %v1822 = vmul.f32 %v1818, %v515
    %v1823 = vmul.f32 %v1821, %v515
    %v1824 = vadd.f32 %v1822, 1e-05
    %v1825 = vadd.f32 %v1823, 1e-05
    %v1826 = vrsqrt.pop %v1824
    %v1827 = vrsqrt.pop %v1825
    %v1828 = vmul.f32 %v1812, %v1826
    %v1829 = vmul.f32 %v1813, %v1827
    %v1831 = vlaneseq
    %v1832 = vshrl.u32 %v1831, 7
    %v1833 = vsub.s32 0, %v1832
    %v1834 = vrot.slane %v1556, %v1833
    %v1836 = vmul.f32 %v1828, %v1834
    %v1837 = vmul.f32 %v1829, %v1834
    %v1839 = vlaneseq
    %v1840 = vshrl.u32 %v1839, 7
    %v1841 = vsub.s32 0, %v1840
    %v1842 = vrot.slane %v1558, %v1841
    %v1844 = vadd.f32 %v1836, %v1842
    %v1845 = vadd.f32 %v1837, %v1842
    %vm1846 = vcmp.gt.f32.partialorder %v1844, 0.0
    %vm1847 = vcmp.gt.f32.partialorder %v1845, 0.0
    %v1848 = vmul.f32 %v1844, 0.01
    %v1849 = vmul.f32 %v1845, 0.01
    %v1850 = vsel %vm1846, %v1844, %v1848
    %v1851 = vsel %vm1847, %v1845, %v1849
    %s1852 = scalar_lea.vmem %s4, 32
    %v1853 = vld [vmem:[%s1852] sm:$0xff]
    %v1854 = vld [vmem:[%s1852 + $0x8] sm:$0xff]
    %v1855 = vld [vmem:[%s1852 + $0x10] sm:$0xff]
    %v1856 = vld [vmem:[%s1852 + $0x18] sm:$0xff]
    %s1857 = scalar_lea.vmem %s10, 32
    %v1858 = vld [vmem:[%s1857] sm:$0xff]
    %v1859 = vld [vmem:[%s1857 + $0x8] sm:$0xff]
    %v1860 = vld [vmem:[%s1857 + $0x10] sm:$0xff]
    %v1861 = vld [vmem:[%s1857 + $0x18] sm:$0xff]
    %s1862 = scalar_lea.vmem %s11, 32
    %v1863 = vld [vmem:[%s1862] sm:$0xff]
    %v1864 = vld [vmem:[%s1862 + $0x8] sm:$0xff]
    %v1865 = vld [vmem:[%s1862 + $0x10] sm:$0xff]
    %v1866 = vld [vmem:[%s1862 + $0x18] sm:$0xff]
    %s1867 = scalar_lea.vmem %s12, 1
    %v1868 = vld [vmem:[%s1867] sm:$0x1]
    %s1869 = scalar_lea.vmem %s13, 1
    %v1870 = vld [vmem:[%s1869] sm:$0x1]
    %s1871 = scalar_lea.vmem %s14, 1
    %v1872 = vld [vmem:[%s1871] sm:$0x1]
    %v1874 = vsel %vm338, %v1853, 0
    %v1877 = vsel %vm338, %v1854, 0
    %v1880 = vsel %vm338, %v1855, 0
    %v1883 = vsel %vm338, %v1856, 0
    %1885 = vmatprep.subr.mxu0 0.0
    %1886 = vmatpush1.msra.mxu0 0.0
    %1887 = vmatprep.subr.mxu0 0.0
    %1888 = vmatpush1.msra.mxu0 0.0
    %1889 = vmatprep.subr.mxu0 0.0
    %1890 = vmatpush1.msra.mxu0 0.0
    %1891 = vmatprep.subr.mxu0 0.0
    %1892 = vmatpush1.msra.mxu0 0.0
    %1893 = vmatprep.subr.mxu0 0.0
    %1894 = vmatpush1.msra.mxu0 0.0
    %1895 = vmatprep.subr.mxu0 0.0
    %1896 = vmatpush1.msra.mxu0 0.0
    %1897 = vmatprep.subr.mxu0 0.0
    %1898 = vmatpush1.msra.mxu0 0.0
    %1899 = vmatprep.subr.mxu0 0.0
    %1900 = vmatpush1.msra.mxu0 0.0
    %1901 = vmatprep.subr.mxu0 0.0
    %1902 = vmatpush1.msra.mxu0 0.0
    %1903 = vmatprep.subr.mxu0 0.0
    %1904 = vmatpush1.msra.mxu0 0.0
    %1905 = vmatprep.subr.mxu0 0.0
    %1906 = vmatpush1.msra.mxu0 0.0
    %1907 = vmatprep.subr.mxu0 0.0
    %1908 = vmatpush1.msra.mxu0 0.0
    %1909 = vmatprep.subr.mxu0 0.0
    %1910 = vmatpush1.msra.mxu0 %v242
    %1911 = vmatprep.subr.mxu0 0.0
    %1912 = vmatpush1.msra.mxu0 %v241
    %1913 = vmatprep.subr.mxu0 0.0
    %1914 = vmatpush1.msra.mxu0 %v1851
    %1915 = vmatprep.subr.mxu0 0.0
    %1916 = vmatpush1.msra.mxu0 %v1850
    %1917 = vmatprep.subr.mxu0 0.0
    %1918 = vmatpush2.msra.mxu0 0.0
    %1919 = vmatprep.subr.mxu0 0.0
    %1920 = vmatpush2.msra.mxu0 0.0
    %1921 = vmatprep.subr.mxu0 0.0
    %1922 = vmatpush2.msra.mxu0 0.0
    %1923 = vmatprep.subr.mxu0 0.0
    %1924 = vmatpush2.msra.mxu0 0.0
    %1925 = vmatprep.subr.mxu0 0.0
    %1926 = vmatpush2.msra.mxu0 0.0
    %1927 = vmatprep.subr.mxu0 0.0
    %1928 = vmatpush2.msra.mxu0 0.0
    %1929 = vmatprep.subr.mxu0 0.0
    %1930 = vmatpush2.msra.mxu0 0.0
    %1931 = vmatprep.subr.mxu0 0.0
    %1932 = vmatpush2.msra.mxu0 0.0
    %1933 = vmatprep.subr.mxu0 0.0
    %1934 = vmatpush2.msra.mxu0 0.0
    %1935 = vmatprep.subr.mxu0 0.0
    %1936 = vmatpush2.msra.mxu0 0.0
    %1937 = vmatprep.subr.mxu0 0.0
    %1938 = vmatpush2.msra.mxu0 0.0
    %1939 = vmatprep.subr.mxu0 0.0
    %1940 = vmatpush2.msra.mxu0 0.0
    %1941 = vmatprep.subr.mxu0 0.0
    %1942 = vmatpush2.msra.mxu0 0.0
    %1943 = vmatprep.subr.mxu0 0.0
    %1944 = vmatpush2.msra.mxu0 0.0
    %1945 = vmatprep.subr.mxu0 0.0
    %1946 = vmatpush2.msra.mxu0 0.0
    %1947 = vmatprep.subr.mxu0 0.0
    %1948 = vmatpush2.msra.mxu0 0.0
    %1949 = vmatprep.mubr.f32.mxu0 0.0
    %1950 = vmatmul.mubr.f32.gmra.mxu0 %v1874
    %v1951 = vpop.f32.mrf.mxu0
    %v1952 = vadd.f32 0.0, %v1951
    %v1953 = vpop.f32.mrf.mxu0
    %1954 = vmatprep.mubr.f32.mxu0 0.0
    %1955 = vmatmul.mubr.f32.gmra.mxu0 %v1877
    %v1956 = vpop.f32.mrf.mxu0
    %v1957 = vadd.f32 0.0, %v1956
    %v1958 = vpop.f32.mrf.mxu0
    %1959 = vmatprep.mubr.f32.mxu0 0.0
    %1960 = vmatmul.mubr.f32.gmra.mxu0 %v1880
    %v1961 = vpop.f32.mrf.mxu0
    %v1962 = vadd.f32 0.0, %v1961
    %v1963 = vpop.f32.mrf.mxu0
    %1964 = vmatprep.mubr.f32.mxu0 0.0
    %1965 = vmatmul.mubr.f32.gmra.mxu0 %v1883
    %v1966 = vpop.f32.mrf.mxu0
    %v1967 = vadd.f32 0.0, %v1966
    %v1968 = vpop.f32.mrf.mxu0
    %1969 = vdwg.mxu0
    %v1971 = vsel %vm338, %v1952, 0
    %v1974 = vsel %vm338, %v1957, 0
    %v1977 = vsel %vm338, %v1962, 0
    %v1980 = vsel %vm338, %v1967, 0
    %1982 = vmatprep.subr.mxu0 0.0
    %1983 = vmatpush1.msra.mxu0 0.0
    %1984 = vmatprep.subr.mxu0 0.0
    %1985 = vmatpush1.msra.mxu0 0.0
    %1986 = vmatprep.subr.mxu0 0.0
    %1987 = vmatpush1.msra.mxu0 0.0
    %1988 = vmatprep.subr.mxu0 0.0
    %1989 = vmatpush1.msra.mxu0 0.0
    %1990 = vmatprep.subr.mxu0 0.0
    %1991 = vmatpush1.msra.mxu0 0.0
    %1992 = vmatprep.subr.mxu0 0.0
    %1993 = vmatpush1.msra.mxu0 0.0
    %1994 = vmatprep.subr.mxu0 0.0
    %1995 = vmatpush1.msra.mxu0 0.0
    %1996 = vmatprep.subr.mxu0 0.0
    %1997 = vmatpush1.msra.mxu0 0.0
    %1998 = vmatprep.subr.mxu0 0.0
    %1999 = vmatpush1.msra.mxu0 0.0
    %2000 = vmatprep.subr.mxu0 0.0
    %2001 = vmatpush1.msra.mxu0 0.0
    %2002 = vmatprep.subr.mxu0 0.0
    %2003 = vmatpush1.msra.mxu0 0.0
    %2004 = vmatprep.subr.mxu0 0.0
    %2005 = vmatpush1.msra.mxu0 0.0
    %2006 = vmatprep.subr.mxu0 0.0
    %2007 = vmatpush1.msra.mxu0 %v1866
    %2008 = vmatprep.subr.mxu0 0.0
    %2009 = vmatpush1.msra.mxu0 %v1865
    %2010 = vmatprep.subr.mxu0 0.0
    %2011 = vmatpush1.msra.mxu0 %v1864
    %2012 = vmatprep.subr.mxu0 0.0
    %2013 = vmatpush1.msra.mxu0 %v1863
    %2014 = vmatprep.subr.mxu0 0.0
    %2015 = vmatpush2.msra.mxu0 0.0
    %2016 = vmatprep.subr.mxu0 0.0
    %2017 = vmatpush2.msra.mxu0 0.0
    %2018 = vmatprep.subr.mxu0 0.0
    %2019 = vmatpush2.msra.mxu0 0.0
    %2020 = vmatprep.subr.mxu0 0.0
    %2021 = vmatpush2.msra.mxu0 0.0
    %2022 = vmatprep.subr.mxu0 0.0
    %2023 = vmatpush2.msra.mxu0 0.0
    %2024 = vmatprep.subr.mxu0 0.0
    %2025 = vmatpush2.msra.mxu0 0.0
    %2026 = vmatprep.subr.mxu0 0.0
    %2027 = vmatpush2.msra.mxu0 0.0
    %2028 = vmatprep.subr.mxu0 0.0
    %2029 = vmatpush2.msra.mxu0 0.0
    %2030 = vmatprep.subr.mxu0 0.0
    %2031 = vmatpush2.msra.mxu0 0.0
    %2032 = vmatprep.subr.mxu0 0.0
    %2033 = vmatpush2.msra.mxu0 0.0
    %2034 = vmatprep.subr.mxu0 0.0
    %2035 = vmatpush2.msra.mxu0 0.0
    %2036 = vmatprep.subr.mxu0 0.0
    %2037 = vmatpush2.msra.mxu0 0.0
    %2038 = vmatprep.subr.mxu0 0.0
    %2039 = vmatpush2.msra.mxu0 0.0
    %2040 = vmatprep.subr.mxu0 0.0
    %2041 = vmatpush2.msra.mxu0 0.0
    %2042 = vmatprep.subr.mxu0 0.0
    %2043 = vmatpush2.msra.mxu0 0.0
    %2044 = vmatprep.subr.mxu0 0.0
    %2045 = vmatpush2.msra.mxu0 0.0
    %2046 = vmatprep.mubr.f32.mxu0 0.0
    %2047 = vmatmul.mubr.f32.gmra.mxu0 %v1971
    %v2048 = vpop.f32.mrf.mxu0
    %v2049 = vpop.f32.mrf.mxu0
    %2050 = vmatprep.mubr.f32.mxu0 0.0
    %2051 = vmatmul.mubr.f32.gmra.mxu0 %v1974
    %v2052 = vpop.f32.mrf.mxu0
    %v2053 = vpop.f32.mrf.mxu0
    %2054 = vmatprep.mubr.f32.mxu0 0.0
    %2055 = vmatmul.mubr.f32.gmra.mxu0 %v1977
    %v2056 = vpop.f32.mrf.mxu0
    %v2057 = vadd.f32 0.0, %v2056
    %v2058 = vpop.f32.mrf.mxu0
    %2059 = vmatprep.mubr.f32.mxu0 0.0
    %2060 = vmatmul.mubr.f32.gmra.mxu0 %v1980
    %v2061 = vpop.f32.mrf.mxu0
    %v2062 = vadd.f32 0.0, %v2061
    %v2063 = vpop.f32.mrf.mxu0
    %2064 = vdwg.mxu0
    %v2066 = vsel %vm338, %v1850, 0
    %v2069 = vsel %vm338, %v1851, 0
    %v2072 = vsel %vm338, %v241, 0
    %v2075 = vsel %vm338, %v242, 0
    %2077 = vmatprep.subr.mxu0 0.0
    %2078 = vmatpush1.msra.mxu0 0.0
    %2079 = vmatprep.subr.mxu0 0.0
    %2080 = vmatpush1.msra.mxu0 0.0
    %2081 = vmatprep.subr.mxu0 0.0
    %2082 = vmatpush1.msra.mxu0 0.0
    %2083 = vmatprep.subr.mxu0 0.0
    %2084 = vmatpush1.msra.mxu0 0.0
    %2085 = vmatprep.subr.mxu0 0.0
    %2086 = vmatpush1.msra.mxu0 0.0
    %2087 = vmatprep.subr.mxu0 0.0
    %2088 = vmatpush1.msra.mxu0 0.0
    %2089 = vmatprep.subr.mxu0 0.0
    %2090 = vmatpush1.msra.mxu0 0.0
    %2091 = vmatprep.subr.mxu0 0.0
    %2092 = vmatpush1.msra.mxu0 0.0
    %2093 = vmatprep.subr.mxu0 0.0
    %2094 = vmatpush1.msra.mxu0 0.0
    %2095 = vmatprep.subr.mxu0 0.0
    %2096 = vmatpush1.msra.mxu0 0.0
    %2097 = vmatprep.subr.mxu0 0.0
    %2098 = vmatpush1.msra.mxu0 0.0
    %2099 = vmatprep.subr.mxu0 0.0
    %2100 = vmatpush1.msra.mxu0 0.0
    %2101 = vmatprep.subr.mxu0 0.0
    %2102 = vmatpush1.msra.mxu0 %v1861
    %2103 = vmatprep.subr.mxu0 0.0
    %2104 = vmatpush1.msra.mxu0 %v1860
    %2105 = vmatprep.subr.mxu0 0.0
    %2106 = vmatpush1.msra.mxu0 %v1859
    %2107 = vmatprep.subr.mxu0 0.0
    %2108 = vmatpush1.msra.mxu0 %v1858
    %2109 = vmatprep.subr.mxu0 0.0
    %2110 = vmatpush2.msra.mxu0 0.0
    %2111 = vmatprep.subr.mxu0 0.0
    %2112 = vmatpush2.msra.mxu0 0.0
    %2113 = vmatprep.subr.mxu0 0.0
    %2114 = vmatpush2.msra.mxu0 0.0
    %2115 = vmatprep.subr.mxu0 0.0
    %2116 = vmatpush2.msra.mxu0 0.0
    %2117 = vmatprep.subr.mxu0 0.0
    %2118 = vmatpush2.msra.mxu0 0.0
    %2119 = vmatprep.subr.mxu0 0.0
    %2120 = vmatpush2.msra.mxu0 0.0
    %2121 = vmatprep.subr.mxu0 0.0
    %2122 = vmatpush2.msra.mxu0 0.0
    %2123 = vmatprep.subr.mxu0 0.0
    %2124 = vmatpush2.msra.mxu0 0.0
    %2125 = vmatprep.subr.mxu0 0.0
    %2126 = vmatpush2.msra.mxu0 0.0
    %2127 = vmatprep.subr.mxu0 0.0
    %2128 = vmatpush2.msra.mxu0 0.0
    %2129 = vmatprep.subr.mxu0 0.0
    %2130 = vmatpush2.msra.mxu0 0.0
    %2131 = vmatprep.subr.mxu0 0.0
    %2132 = vmatpush2.msra.mxu0 0.0
    %2133 = vmatprep.subr.mxu0 0.0
    %2134 = vmatpush2.msra.mxu0 0.0
    %2135 = vmatprep.subr.mxu0 0.0
    %2136 = vmatpush2.msra.mxu0 0.0
    %2137 = vmatprep.subr.mxu0 0.0
    %2138 = vmatpush2.msra.mxu0 0.0
    %2139 = vmatprep.subr.mxu0 0.0
    %2140 = vmatpush2.msra.mxu0 0.0
    %2141 = vmatprep.mubr.f32.mxu0 0.0
    %2142 = vmatmul.mubr.f32.gmra.mxu0 %v2066
    %v2143 = vpop.f32.mrf.mxu0
    %v2144 = vpop.f32.mrf.mxu0
    %2145 = vmatprep.mubr.f32.mxu0 0.0
    %2146 = vmatmul.mubr.f32.gmra.mxu0 %v2069
    %v2147 = vpop.f32.mrf.mxu0
    %v2148 = vpop.f32.mrf.mxu0
    %2149 = vmatprep.mubr.f32.mxu0 0.0
    %2150 = vmatmul.mubr.f32.gmra.mxu0 %v2072
    %v2151 = vpop.f32.mrf.mxu0
    %v2152 = vadd.f32 %v2057, %v2151
    %v2153 = vpop.f32.mrf.mxu0
    %2154 = vmatprep.mubr.f32.mxu0 0.0
    %2155 = vmatmul.mubr.f32.gmra.mxu0 %v2075
    %v2156 = vpop.f32.mrf.mxu0
    %v2157 = vadd.f32 %v2062, %v2156
    %v2158 = vpop.f32.mrf.mxu0
    %2159 = vdwg.mxu0
    %v2161 = vlaneseq
    %v2162 = vshrl.u32 %v2161, 7
    %v2163 = vsub.s32 0, %v2162
    %v2164 = vrot.slane %v1868, %v2163
    %v2166 = vadd.f32 %v2152, %v2164
    %v2167 = vadd.f32 %v2157, %v2164
    %v2168 = vsel %vm338, %v2166, 0.0
    %2169 = vadd.xlane.f32.xlu0 %v2168
    %v2170 = vpop.xlane.xlu0 %2169
    %v2171 = vsel %vm338, %v2167, 0.0
    %2172 = vadd.xlane.f32.xlu0 %v2171
    %v2173 = vpop.xlane.xlu0 %2172
    %v2174 = vmul.f32 %v2170, %v515
    %v2175 = vmul.f32 %v2173, %v515
    %v2176 = vsub.f32 %v2166, %v2174
    %v2177 = vsub.f32 %v2167, %v2175
    %v2178 = vmul.f32 %v2176, %v2176
    %v2179 = vmul.f32 %v2177, %v2177
    %v2180 = vsel %vm338, %v2178, 0.0
    %2181 = vadd.xlane.f32.xlu0 %v2180
    %v2182 = vpop.xlane.xlu0 %2181
    %v2183 = vsel %vm338, %v2179, 0.0
    %2184 = vadd.xlane.f32.xlu0 %v2183
    %v2185 = vpop.xlane.xlu0 %2184
    %v2186 = vmul.f32 %v2182, %v515
    %v2187 = vmul.f32 %v2185, %v515
    %v2188 = vadd.f32 %v2186, 1e-05
    %v2189 = vadd.f32 %v2187, 1e-05
    %v2190 = vrsqrt.pop %v2188
    %v2191 = vrsqrt.pop %v2189
    %v2192 = vmul.f32 %v2176, %v2190
    %v2193 = vmul.f32 %v2177, %v2191
    %v2195 = vlaneseq
    %v2196 = vshrl.u32 %v2195, 7
    %v2197 = vsub.s32 0, %v2196
    %v2198 = vrot.slane %v1870, %v2197
    %v2200 = vmul.f32 %v2192, %v2198
    %v2201 = vmul.f32 %v2193, %v2198
    %v2203 = vlaneseq
    %v2204 = vshrl.u32 %v2203, 7
    %v2205 = vsub.s32 0, %v2204
    %v2206 = vrot.slane %v1872, %v2205
    %v2208 = vadd.f32 %v2200, %v2206
    %v2209 = vadd.f32 %v2201, %v2206
    %vm2210 = vcmp.gt.f32.partialorder %v2208, 0.0
    %vm2211 = vcmp.gt.f32.partialorder %v2209, 0.0
    %v2212 = vmul.f32 %v2208, 0.01
    %v2213 = vmul.f32 %v2209, 0.01
    %v2214 = vsel %vm2210, %v2208, %v2212
    %v2215 = vsel %vm2211, %v2209, %v2213
    %s2216 = scalar_lea.vmem %s3, 32
    %v2217 = vld [vmem:[%s2216] sm:$0xff]
    %v2218 = vld [vmem:[%s2216 + $0x8] sm:$0xff]
    %s2219 = scalar_lea.vmem %s5, 128
    %v2220 = vld [vmem:[%s2219] sm:$0xff]
    %v2221 = vld [vmem:[%s2219 + $0x8] sm:$0xff]
    %v2222 = vld [vmem:[%s2219 + $0x10] sm:$0xff]
    %v2223 = vld [vmem:[%s2219 + $0x18] sm:$0xff]
    %s2224 = scalar_lea.vmem %s6, 128
    %v2225 = vld [vmem:[%s2224] sm:$0xff]
    %v2226 = vld [vmem:[%s2224 + $0x8] sm:$0xff]
    %v2227 = vld [vmem:[%s2224 + $0x10] sm:$0xff]
    %v2228 = vld [vmem:[%s2224 + $0x18] sm:$0xff]
    %s2229 = scalar_lea.vmem %s7, 4
    %v2230 = vld [vmem:[%s2229] sm:$0x1]
    %s2231 = scalar_lea.vmem %s8, 4
    %v2232 = vld [vmem:[%s2231] sm:$0x1]
    %s2233 = scalar_lea.vmem %s9, 4
    %v2234 = vld [vmem:[%s2233] sm:$0x1]
    %v2236 = vsel %vm256, %v2217, 0
    %v2239 = vsel %vm256, %v2218, 0
    %2241 = vmatprep.subr.mxu0 0.0
    %2242 = vmatpush1.msra.mxu0 0.0
    %2243 = vmatprep.subr.mxu0 0.0
    %2244 = vmatpush1.msra.mxu0 0.0
    %2245 = vmatprep.subr.mxu0 0.0
    %2246 = vmatpush1.msra.mxu0 0.0
    %2247 = vmatprep.subr.mxu0 0.0
    %2248 = vmatpush1.msra.mxu0 0.0
    %2249 = vmatprep.subr.mxu0 0.0
    %2250 = vmatpush1.msra.mxu0 0.0
    %2251 = vmatprep.subr.mxu0 0.0
    %2252 = vmatpush1.msra.mxu0 0.0
    %2253 = vmatprep.subr.mxu0 0.0
    %2254 = vmatpush1.msra.mxu0 0.0
    %2255 = vmatprep.subr.mxu0 0.0
    %2256 = vmatpush1.msra.mxu0 0.0
    %2257 = vmatprep.subr.mxu0 0.0
    %2258 = vmatpush1.msra.mxu0 0.0
    %2259 = vmatprep.subr.mxu0 0.0
    %2260 = vmatpush1.msra.mxu0 0.0
    %2261 = vmatprep.subr.mxu0 0.0
    %2262 = vmatpush1.msra.mxu0 0.0
    %2263 = vmatprep.subr.mxu0 0.0
    %2264 = vmatpush1.msra.mxu0 0.0
    %2265 = vmatprep.subr.mxu0 0.0
    %2266 = vmatpush1.msra.mxu0 0.0
    %2267 = vmatprep.subr.mxu0 0.0
    %2268 = vmatpush1.msra.mxu0 0.0
    %2269 = vmatprep.subr.mxu0 0.0
    %2270 = vmatpush1.msra.mxu0 %v2215
    %2271 = vmatprep.subr.mxu0 0.0
    %2272 = vmatpush1.msra.mxu0 %v2214
    %2273 = vmatprep.subr.mxu0 0.0
    %2274 = vmatpush2.msra.mxu0 0.0
    %2275 = vmatprep.subr.mxu0 0.0
    %2276 = vmatpush2.msra.mxu0 0.0
    %2277 = vmatprep.subr.mxu0 0.0
    %2278 = vmatpush2.msra.mxu0 0.0
    %2279 = vmatprep.subr.mxu0 0.0
    %2280 = vmatpush2.msra.mxu0 0.0
    %2281 = vmatprep.subr.mxu0 0.0
    %2282 = vmatpush2.msra.mxu0 0.0
    %2283 = vmatprep.subr.mxu0 0.0
    %2284 = vmatpush2.msra.mxu0 0.0
    %2285 = vmatprep.subr.mxu0 0.0
    %2286 = vmatpush2.msra.mxu0 0.0
    %2287 = vmatprep.subr.mxu0 0.0
    %2288 = vmatpush2.msra.mxu0 0.0
    %2289 = vmatprep.subr.mxu0 0.0
    %2290 = vmatpush2.msra.mxu0 0.0
    %2291 = vmatprep.subr.mxu0 0.0
    %2292 = vmatpush2.msra.mxu0 0.0
    %2293 = vmatprep.subr.mxu0 0.0
    %2294 = vmatpush2.msra.mxu0 0.0
    %2295 = vmatprep.subr.mxu0 0.0
    %2296 = vmatpush2.msra.mxu0 0.0
    %2297 = vmatprep.subr.mxu0 0.0
    %2298 = vmatpush2.msra.mxu0 0.0
    %2299 = vmatprep.subr.mxu0 0.0
    %2300 = vmatpush2.msra.mxu0 0.0
    %2301 = vmatprep.subr.mxu0 0.0
    %2302 = vmatpush2.msra.mxu0 0.0
    %2303 = vmatprep.subr.mxu0 0.0
    %2304 = vmatpush2.msra.mxu0 0.0
    %2305 = vmatprep.mubr.f32.mxu0 0.0
    %2306 = vmatmul.mubr.f32.gmra.mxu0 %v2236
    %v2307 = vpop.f32.mrf.mxu0
    %v2308 = vadd.f32 0.0, %v2307
    %v2309 = vpop.f32.mrf.mxu0
    %2310 = vmatprep.mubr.f32.mxu0 0.0
    %2311 = vmatmul.mubr.f32.gmra.mxu0 %v2239
    %v2312 = vpop.f32.mrf.mxu0
    %v2313 = vadd.f32 0.0, %v2312
    %v2314 = vpop.f32.mrf.mxu0
    %2315 = vdwg.mxu0
    %v2317 = vsel %vm338, %v2308, 0
    %v2320 = vsel %vm338, %v2313, 0
    %2322 = vmatprep.subr.mxu0 0.0
    %2323 = vmatpush1.msra.mxu0 0.0
    %2324 = vmatprep.subr.mxu0 0.0
    %2325 = vmatpush1.msra.mxu0 0.0
    %2326 = vmatprep.subr.mxu0 0.0
    %2327 = vmatpush1.msra.mxu0 0.0
    %2328 = vmatprep.subr.mxu0 0.0
    %2329 = vmatpush1.msra.mxu0 0.0
    %2330 = vmatprep.subr.mxu0 0.0
    %2331 = vmatpush1.msra.mxu0 0.0
    %2332 = vmatprep.subr.mxu0 0.0
    %2333 = vmatpush1.msra.mxu0 0.0
    %2334 = vmatprep.subr.mxu0 0.0
    %2335 = vmatpush1.msra.mxu0 0.0
    %2336 = vmatprep.subr.mxu0 0.0
    %2337 = vmatpush1.msra.mxu0 0.0
    %2338 = vmatprep.subr.mxu0 0.0
    %2339 = vmatpush1.msra.mxu0 0.0
    %2340 = vmatprep.subr.mxu0 0.0
    %2341 = vmatpush1.msra.mxu0 0.0
    %2342 = vmatprep.subr.mxu0 0.0
    %2343 = vmatpush1.msra.mxu0 0.0
    %2344 = vmatprep.subr.mxu0 0.0
    %2345 = vmatpush1.msra.mxu0 0.0
    %2346 = vmatprep.subr.mxu0 0.0
    %2347 = vmatpush1.msra.mxu0 %v2228
    %2348 = vmatprep.subr.mxu0 0.0
    %2349 = vmatpush1.msra.mxu0 %v2227
    %2350 = vmatprep.subr.mxu0 0.0
    %2351 = vmatpush1.msra.mxu0 %v2226
    %2352 = vmatprep.subr.mxu0 0.0
    %2353 = vmatpush1.msra.mxu0 %v2225
    %2354 = vmatprep.subr.mxu0 0.0
    %2355 = vmatpush2.msra.mxu0 0.0
    %2356 = vmatprep.subr.mxu0 0.0
    %2357 = vmatpush2.msra.mxu0 0.0
    %2358 = vmatprep.subr.mxu0 0.0
    %2359 = vmatpush2.msra.mxu0 0.0
    %2360 = vmatprep.subr.mxu0 0.0
    %2361 = vmatpush2.msra.mxu0 0.0
    %2362 = vmatprep.subr.mxu0 0.0
    %2363 = vmatpush2.msra.mxu0 0.0
    %2364 = vmatprep.subr.mxu0 0.0
    %2365 = vmatpush2.msra.mxu0 0.0
    %2366 = vmatprep.subr.mxu0 0.0
    %2367 = vmatpush2.msra.mxu0 0.0
    %2368 = vmatprep.subr.mxu0 0.0
    %2369 = vmatpush2.msra.mxu0 0.0
    %2370 = vmatprep.subr.mxu0 0.0
    %2371 = vmatpush2.msra.mxu0 0.0
    %2372 = vmatprep.subr.mxu0 0.0
    %2373 = vmatpush2.msra.mxu0 0.0
    %2374 = vmatprep.subr.mxu0 0.0
    %2375 = vmatpush2.msra.mxu0 0.0
    %2376 = vmatprep.subr.mxu0 0.0
    %2377 = vmatpush2.msra.mxu0 0.0
    %2378 = vmatprep.subr.mxu0 0.0
    %2379 = vmatpush2.msra.mxu0 0.0
    %2380 = vmatprep.subr.mxu0 0.0
    %2381 = vmatpush2.msra.mxu0 0.0
    %2382 = vmatprep.subr.mxu0 0.0
    %2383 = vmatpush2.msra.mxu0 0.0
    %2384 = vmatprep.subr.mxu0 0.0
    %2385 = vmatpush2.msra.mxu0 0.0
    %2386 = vmatprep.mubr.f32.mxu0 0.0
    %2387 = vmatmul.mubr.f32.gmra.mxu0 %v2317
    %v2388 = vpop.f32.mrf.mxu0
    %v2389 = vadd.f32 0.0, %v2388
    %v2390 = vpop.f32.mrf.mxu0
    %2391 = vmatprep.mubr.f32.mxu0 0.0
    %2392 = vmatmul.mubr.f32.gmra.mxu0 %v2320
    %v2393 = vpop.f32.mrf.mxu0
    %v2394 = vadd.f32 0.0, %v2393
    %v2395 = vpop.f32.mrf.mxu0
    %2396 = vdwg.mxu0
    %v2398 = vsel %vm338, %v2214, 0
    %v2401 = vsel %vm338, %v2215, 0
    %2403 = vmatprep.subr.mxu0 0.0
    %2404 = vmatpush1.msra.mxu0 0.0
    %2405 = vmatprep.subr.mxu0 0.0
    %2406 = vmatpush1.msra.mxu0 0.0
    %2407 = vmatprep.subr.mxu0 0.0
    %2408 = vmatpush1.msra.mxu0 0.0
    %2409 = vmatprep.subr.mxu0 0.0
    %2410 = vmatpush1.msra.mxu0 0.0
    %2411 = vmatprep.subr.mxu0 0.0
    %2412 = vmatpush1.msra.mxu0 0.0
    %2413 = vmatprep.subr.mxu0 0.0
    %2414 = vmatpush1.msra.mxu0 0.0
    %2415 = vmatprep.subr.mxu0 0.0
    %2416 = vmatpush1.msra.mxu0 0.0
    %2417 = vmatprep.subr.mxu0 0.0
    %2418 = vmatpush1.msra.mxu0 0.0
    %2419 = vmatprep.subr.mxu0 0.0
    %2420 = vmatpush1.msra.mxu0 0.0
    %2421 = vmatprep.subr.mxu0 0.0
    %2422 = vmatpush1.msra.mxu0 0.0
    %2423 = vmatprep.subr.mxu0 0.0
    %2424 = vmatpush1.msra.mxu0 0.0
    %2425 = vmatprep.subr.mxu0 0.0
    %2426 = vmatpush1.msra.mxu0 0.0
    %2427 = vmatprep.subr.mxu0 0.0
    %2428 = vmatpush1.msra.mxu0 %v2223
    %2429 = vmatprep.subr.mxu0 0.0
    %2430 = vmatpush1.msra.mxu0 %v2222
    %2431 = vmatprep.subr.mxu0 0.0
    %2432 = vmatpush1.msra.mxu0 %v2221
    %2433 = vmatprep.subr.mxu0 0.0
    %2434 = vmatpush1.msra.mxu0 %v2220
    %2435 = vmatprep.subr.mxu0 0.0
    %2436 = vmatpush2.msra.mxu0 0.0
    %2437 = vmatprep.subr.mxu0 0.0
    %2438 = vmatpush2.msra.mxu0 0.0
    %2439 = vmatprep.subr.mxu0 0.0
    %2440 = vmatpush2.msra.mxu0 0.0
    %2441 = vmatprep.subr.mxu0 0.0
    %2442 = vmatpush2.msra.mxu0 0.0
    %2443 = vmatprep.subr.mxu0 0.0
    %2444 = vmatpush2.msra.mxu0 0.0
    %2445 = vmatprep.subr.mxu0 0.0
    %2446 = vmatpush2.msra.mxu0 0.0
    %2447 = vmatprep.subr.mxu0 0.0
    %2448 = vmatpush2.msra.mxu0 0.0
    %2449 = vmatprep.subr.mxu0 0.0
    %2450 = vmatpush2.msra.mxu0 0.0
    %2451 = vmatprep.subr.mxu0 0.0
    %2452 = vmatpush2.msra.mxu0 0.0
    %2453 = vmatprep.subr.mxu0 0.0
    %2454 = vmatpush2.msra.mxu0 0.0
    %2455 = vmatprep.subr.mxu0 0.0
    %2456 = vmatpush2.msra.mxu0 0.0
    %2457 = vmatprep.subr.mxu0 0.0
    %2458 = vmatpush2.msra.mxu0 0.0
    %2459 = vmatprep.subr.mxu0 0.0
    %2460 = vmatpush2.msra.mxu0 0.0
    %2461 = vmatprep.subr.mxu0 0.0
    %2462 = vmatpush2.msra.mxu0 0.0
    %2463 = vmatprep.subr.mxu0 0.0
    %2464 = vmatpush2.msra.mxu0 0.0
    %2465 = vmatprep.subr.mxu0 0.0
    %2466 = vmatpush2.msra.mxu0 0.0
    %2467 = vmatprep.mubr.f32.mxu0 0.0
    %2468 = vmatmul.mubr.f32.gmra.mxu0 %v2398
    %v2469 = vpop.f32.mrf.mxu0
    %v2470 = vadd.f32 %v2389, %v2469
    %v2471 = vpop.f32.mrf.mxu0
    %2472 = vmatprep.mubr.f32.mxu0 0.0
    %2473 = vmatmul.mubr.f32.gmra.mxu0 %v2401
    %v2474 = vpop.f32.mrf.mxu0
    %v2475 = vadd.f32 %v2394, %v2474
    %v2476 = vpop.f32.mrf.mxu0
    %2477 = vdwg.mxu0
    %v2479 = vlaneseq
    %v2480 = vshrl.u32 %v2479, 7
    %v2481 = vsub.s32 0, %v2480
    %v2482 = vrot.slane %v2230, %v2481
    %v2484 = vadd.f32 %v2470, %v2482
    %v2485 = vadd.f32 %v2475, %v2482
    %v2486 = vsel %vm338, %v2484, 0.0
    %2487 = vadd.xlane.f32.xlu0 %v2486
    %v2488 = vpop.xlane.xlu0 %2487
    %v2489 = vsel %vm338, %v2485, 0.0
    %2490 = vadd.xlane.f32.xlu0 %v2489
    %v2491 = vpop.xlane.xlu0 %2490
    %v2492 = vmul.f32 %v2488, %v515
    %v2493 = vmul.f32 %v2491, %v515
    %v2494 = vsub.f32 %v2484, %v2492
    %v2495 = vsub.f32 %v2485, %v2493
    %v2496 = vmul.f32 %v2494, %v2494
    %v2497 = vmul.f32 %v2495, %v2495
    %v2498 = vsel %vm338, %v2496, 0.0
    %2499 = vadd.xlane.f32.xlu0 %v2498
    %v2500 = vpop.xlane.xlu0 %2499
    %v2501 = vsel %vm338, %v2497, 0.0
    %2502 = vadd.xlane.f32.xlu0 %v2501
    %v2503 = vpop.xlane.xlu0 %2502
    %v2504 = vmul.f32 %v2500, %v515
    %v2505 = vmul.f32 %v2503, %v515
    %v2506 = vadd.f32 %v2504, 1e-05
    %v2507 = vadd.f32 %v2505, 1e-05
    %v2508 = vrsqrt.pop %v2506
    %v2509 = vrsqrt.pop %v2507
    %v2510 = vmul.f32 %v2494, %v2508
    %v2511 = vmul.f32 %v2495, %v2509
    %v2513 = vlaneseq
    %v2514 = vshrl.u32 %v2513, 7
    %v2515 = vsub.s32 0, %v2514
    %v2516 = vrot.slane %v2232, %v2515
    %v2518 = vmul.f32 %v2510, %v2516
    %v2519 = vmul.f32 %v2511, %v2516
    %v2521 = vlaneseq
    %v2522 = vshrl.u32 %v2521, 7
    %v2523 = vsub.s32 0, %v2522
    %v2524 = vrot.slane %v2234, %v2523
    %v2526 = vadd.f32 %v2518, %v2524
    %v2527 = vadd.f32 %v2519, %v2524
    %vm2528 = vcmp.gt.f32.partialorder %v2526, 0.0
    %vm2529 = vcmp.gt.f32.partialorder %v2527, 0.0
    %v2530 = vmul.f32 %v2526, 0.01
    %v2531 = vmul.f32 %v2527, 0.01
    %v2532 = vsel %vm2528, %v2526, %v2530
    %v2533 = vsel %vm2529, %v2527, %v2531
    %s2534 = scalar_lea.vmem %s5, 160
    %v2535 = vld [vmem:[%s2534] sm:$0xff]
    %v2536 = vld [vmem:[%s2534 + $0x8] sm:$0xff]
    %v2537 = vld [vmem:[%s2534 + $0x10] sm:$0xff]
    %v2538 = vld [vmem:[%s2534 + $0x18] sm:$0xff]
    %s2539 = scalar_lea.vmem %s6, 160
    %v2540 = vld [vmem:[%s2539] sm:$0xff]
    %v2541 = vld [vmem:[%s2539 + $0x8] sm:$0xff]
    %v2542 = vld [vmem:[%s2539 + $0x10] sm:$0xff]
    %v2543 = vld [vmem:[%s2539 + $0x18] sm:$0xff]
    %s2544 = scalar_lea.vmem %s7, 5
    %v2545 = vld [vmem:[%s2544] sm:$0x1]
    %s2546 = scalar_lea.vmem %s8, 5
    %v2547 = vld [vmem:[%s2546] sm:$0x1]
    %s2548 = scalar_lea.vmem %s9, 5
    %v2549 = vld [vmem:[%s2548] sm:$0x1]
    %2550 = vmatprep.subr.mxu0 0.0
    %2551 = vmatpush1.msra.mxu0 0.0
    %2552 = vmatprep.subr.mxu0 0.0
    %2553 = vmatpush1.msra.mxu0 0.0
    %2554 = vmatprep.subr.mxu0 0.0
    %2555 = vmatpush1.msra.mxu0 0.0
    %2556 = vmatprep.subr.mxu0 0.0
    %2557 = vmatpush1.msra.mxu0 0.0
    %2558 = vmatprep.subr.mxu0 0.0
    %2559 = vmatpush1.msra.mxu0 0.0
    %2560 = vmatprep.subr.mxu0 0.0
    %2561 = vmatpush1.msra.mxu0 0.0
    %2562 = vmatprep.subr.mxu0 0.0
    %2563 = vmatpush1.msra.mxu0 0.0
    %2564 = vmatprep.subr.mxu0 0.0
    %2565 = vmatpush1.msra.mxu0 0.0
    %2566 = vmatprep.subr.mxu0 0.0
    %2567 = vmatpush1.msra.mxu0 0.0
    %2568 = vmatprep.subr.mxu0 0.0
    %2569 = vmatpush1.msra.mxu0 0.0
    %2570 = vmatprep.subr.mxu0 0.0
    %2571 = vmatpush1.msra.mxu0 0.0
    %2572 = vmatprep.subr.mxu0 0.0
    %2573 = vmatpush1.msra.mxu0 0.0
    %2574 = vmatprep.subr.mxu0 0.0
    %2575 = vmatpush1.msra.mxu0 0.0
    %2576 = vmatprep.subr.mxu0 0.0
    %2577 = vmatpush1.msra.mxu0 0.0
    %2578 = vmatprep.subr.mxu0 0.0
    %2579 = vmatpush1.msra.mxu0 %v2533
    %2580 = vmatprep.subr.mxu0 0.0
    %2581 = vmatpush1.msra.mxu0 %v2532
    %2582 = vmatprep.subr.mxu0 0.0
    %2583 = vmatpush2.msra.mxu0 0.0
    %2584 = vmatprep.subr.mxu0 0.0
    %2585 = vmatpush2.msra.mxu0 0.0
    %2586 = vmatprep.subr.mxu0 0.0
    %2587 = vmatpush2.msra.mxu0 0.0
    %2588 = vmatprep.subr.mxu0 0.0
    %2589 = vmatpush2.msra.mxu0 0.0
    %2590 = vmatprep.subr.mxu0 0.0
    %2591 = vmatpush2.msra.mxu0 0.0
    %2592 = vmatprep.subr.mxu0 0.0
    %2593 = vmatpush2.msra.mxu0 0.0
    %2594 = vmatprep.subr.mxu0 0.0
    %2595 = vmatpush2.msra.mxu0 0.0
    %2596 = vmatprep.subr.mxu0 0.0
    %2597 = vmatpush2.msra.mxu0 0.0
    %2598 = vmatprep.subr.mxu0 0.0
    %2599 = vmatpush2.msra.mxu0 0.0
    %2600 = vmatprep.subr.mxu0 0.0
    %2601 = vmatpush2.msra.mxu0 0.0
    %2602 = vmatprep.subr.mxu0 0.0
    %2603 = vmatpush2.msra.mxu0 0.0
    %2604 = vmatprep.subr.mxu0 0.0
    %2605 = vmatpush2.msra.mxu0 0.0
    %2606 = vmatprep.subr.mxu0 0.0
    %2607 = vmatpush2.msra.mxu0 0.0
    %2608 = vmatprep.subr.mxu0 0.0
    %2609 = vmatpush2.msra.mxu0 0.0
    %2610 = vmatprep.subr.mxu0 0.0
    %2611 = vmatpush2.msra.mxu0 0.0
    %2612 = vmatprep.subr.mxu0 0.0
    %2613 = vmatpush2.msra.mxu0 0.0
    %2614 = vmatprep.mubr.f32.mxu0 0.0
    %2615 = vmatmul.mubr.f32.gmra.mxu0 %v2236
    %v2616 = vpop.f32.mrf.mxu0
    %v2617 = vadd.f32 0.0, %v2616
    %v2618 = vpop.f32.mrf.mxu0
    %2619 = vmatprep.mubr.f32.mxu0 0.0
    %2620 = vmatmul.mubr.f32.gmra.mxu0 %v2239
    %v2621 = vpop.f32.mrf.mxu0
    %v2622 = vadd.f32 0.0, %v2621
    %v2623 = vpop.f32.mrf.mxu0
    %2624 = vdwg.mxu0
    %v2626 = vsel %vm338, %v2617, 0
    %v2629 = vsel %vm338, %v2622, 0
    %2631 = vmatprep.subr.mxu0 0.0
    %2632 = vmatpush1.msra.mxu0 0.0
    %2633 = vmatprep.subr.mxu0 0.0
    %2634 = vmatpush1.msra.mxu0 0.0
    %2635 = vmatprep.subr.mxu0 0.0
    %2636 = vmatpush1.msra.mxu0 0.0
    %2637 = vmatprep.subr.mxu0 0.0
    %2638 = vmatpush1.msra.mxu0 0.0
    %2639 = vmatprep.subr.mxu0 0.0
    %2640 = vmatpush1.msra.mxu0 0.0
    %2641 = vmatprep.subr.mxu0 0.0
    %2642 = vmatpush1.msra.mxu0 0.0
    %2643 = vmatprep.subr.mxu0 0.0
    %2644 = vmatpush1.msra.mxu0 0.0
    %2645 = vmatprep.subr.mxu0 0.0
    %2646 = vmatpush1.msra.mxu0 0.0
    %2647 = vmatprep.subr.mxu0 0.0
    %2648 = vmatpush1.msra.mxu0 0.0
    %2649 = vmatprep.subr.mxu0 0.0
    %2650 = vmatpush1.msra.mxu0 0.0
    %2651 = vmatprep.subr.mxu0 0.0
    %2652 = vmatpush1.msra.mxu0 0.0
    %2653 = vmatprep.subr.mxu0 0.0
    %2654 = vmatpush1.msra.mxu0 0.0
    %2655 = vmatprep.subr.mxu0 0.0
    %2656 = vmatpush1.msra.mxu0 %v2543
    %2657 = vmatprep.subr.mxu0 0.0
    %2658 = vmatpush1.msra.mxu0 %v2542
    %2659 = vmatprep.subr.mxu0 0.0
    %2660 = vmatpush1.msra.mxu0 %v2541
    %2661 = vmatprep.subr.mxu0 0.0
    %2662 = vmatpush1.msra.mxu0 %v2540
    %2663 = vmatprep.subr.mxu0 0.0
    %2664 = vmatpush2.msra.mxu0 0.0
    %2665 = vmatprep.subr.mxu0 0.0
    %2666 = vmatpush2.msra.mxu0 0.0
    %2667 = vmatprep.subr.mxu0 0.0
    %2668 = vmatpush2.msra.mxu0 0.0
    %2669 = vmatprep.subr.mxu0 0.0
    %2670 = vmatpush2.msra.mxu0 0.0
    %2671 = vmatprep.subr.mxu0 0.0
    %2672 = vmatpush2.msra.mxu0 0.0
    %2673 = vmatprep.subr.mxu0 0.0
    %2674 = vmatpush2.msra.mxu0 0.0
    %2675 = vmatprep.subr.mxu0 0.0
    %2676 = vmatpush2.msra.mxu0 0.0
    %2677 = vmatprep.subr.mxu0 0.0
    %2678 = vmatpush2.msra.mxu0 0.0
    %2679 = vmatprep.subr.mxu0 0.0
    %2680 = vmatpush2.msra.mxu0 0.0
    %2681 = vmatprep.subr.mxu0 0.0
    %2682 = vmatpush2.msra.mxu0 0.0
    %2683 = vmatprep.subr.mxu0 0.0
    %2684 = vmatpush2.msra.mxu0 0.0
    %2685 = vmatprep.subr.mxu0 0.0
    %2686 = vmatpush2.msra.mxu0 0.0
    %2687 = vmatprep.subr.mxu0 0.0
    %2688 = vmatpush2.msra.mxu0 0.0
    %2689 = vmatprep.subr.mxu0 0.0
    %2690 = vmatpush2.msra.mxu0 0.0
    %2691 = vmatprep.subr.mxu0 0.0
    %2692 = vmatpush2.msra.mxu0 0.0
    %2693 = vmatprep.subr.mxu0 0.0
    %2694 = vmatpush2.msra.mxu0 0.0
    %2695 = vmatprep.mubr.f32.mxu0 0.0
    %2696 = vmatmul.mubr.f32.gmra.mxu0 %v2626
    %v2697 = vpop.f32.mrf.mxu0
    %v2698 = vadd.f32 0.0, %v2697
    %v2699 = vpop.f32.mrf.mxu0
    %2700 = vmatprep.mubr.f32.mxu0 0.0
    %2701 = vmatmul.mubr.f32.gmra.mxu0 %v2629
    %v2702 = vpop.f32.mrf.mxu0
    %v2703 = vadd.f32 0.0, %v2702
    %v2704 = vpop.f32.mrf.mxu0
    %2705 = vdwg.mxu0
    %v2707 = vsel %vm338, %v2532, 0
    %v2710 = vsel %vm338, %v2533, 0
    %2712 = vmatprep.subr.mxu0 0.0
    %2713 = vmatpush1.msra.mxu0 0.0
    %2714 = vmatprep.subr.mxu0 0.0
    %2715 = vmatpush1.msra.mxu0 0.0
    %2716 = vmatprep.subr.mxu0 0.0
    %2717 = vmatpush1.msra.mxu0 0.0
    %2718 = vmatprep.subr.mxu0 0.0
    %2719 = vmatpush1.msra.mxu0 0.0
    %2720 = vmatprep.subr.mxu0 0.0
    %2721 = vmatpush1.msra.mxu0 0.0
    %2722 = vmatprep.subr.mxu0 0.0
    %2723 = vmatpush1.msra.mxu0 0.0
    %2724 = vmatprep.subr.mxu0 0.0
    %2725 = vmatpush1.msra.mxu0 0.0
    %2726 = vmatprep.subr.mxu0 0.0
    %2727 = vmatpush1.msra.mxu0 0.0
    %2728 = vmatprep.subr.mxu0 0.0
    %2729 = vmatpush1.msra.mxu0 0.0
    %2730 = vmatprep.subr.mxu0 0.0
    %2731 = vmatpush1.msra.mxu0 0.0
    %2732 = vmatprep.subr.mxu0 0.0
    %2733 = vmatpush1.msra.mxu0 0.0
    %2734 = vmatprep.subr.mxu0 0.0
    %2735 = vmatpush1.msra.mxu0 0.0
    %2736 = vmatprep.subr.mxu0 0.0
    %2737 = vmatpush1.msra.mxu0 %v2538
    %2738 = vmatprep.subr.mxu0 0.0
    %2739 = vmatpush1.msra.mxu0 %v2537
    %2740 = vmatprep.subr.mxu0 0.0
    %2741 = vmatpush1.msra.mxu0 %v2536
    %2742 = vmatprep.subr.mxu0 0.0
    %2743 = vmatpush1.msra.mxu0 %v2535
    %2744 = vmatprep.subr.mxu0 0.0
    %2745 = vmatpush2.msra.mxu0 0.0
    %2746 = vmatprep.subr.mxu0 0.0
    %2747 = vmatpush2.msra.mxu0 0.0
    %2748 = vmatprep.subr.mxu0 0.0
    %2749 = vmatpush2.msra.mxu0 0.0
    %2750 = vmatprep.subr.mxu0 0.0
    %2751 = vmatpush2.msra.mxu0 0.0
    %2752 = vmatprep.subr.mxu0 0.0
    %2753 = vmatpush2.msra.mxu0 0.0
    %2754 = vmatprep.subr.mxu0 0.0
    %2755 = vmatpush2.msra.mxu0 0.0
    %2756 = vmatprep.subr.mxu0 0.0
    %2757 = vmatpush2.msra.mxu0 0.0
    %2758 = vmatprep.subr.mxu0 0.0
    %2759 = vmatpush2.msra.mxu0 0.0
    %2760 = vmatprep.subr.mxu0 0.0
    %2761 = vmatpush2.msra.mxu0 0.0
    %2762 = vmatprep.subr.mxu0 0.0
    %2763 = vmatpush2.msra.mxu0 0.0
    %2764 = vmatprep.subr.mxu0 0.0
    %2765 = vmatpush2.msra.mxu0 0.0
    %2766 = vmatprep.subr.mxu0 0.0
    %2767 = vmatpush2.msra.mxu0 0.0
    %2768 = vmatprep.subr.mxu0 0.0
    %2769 = vmatpush2.msra.mxu0 0.0
    %2770 = vmatprep.subr.mxu0 0.0
    %2771 = vmatpush2.msra.mxu0 0.0
    %2772 = vmatprep.subr.mxu0 0.0
    %2773 = vmatpush2.msra.mxu0 0.0
    %2774 = vmatprep.subr.mxu0 0.0
    %2775 = vmatpush2.msra.mxu0 0.0
    %2776 = vmatprep.mubr.f32.mxu0 0.0
    %2777 = vmatmul.mubr.f32.gmra.mxu0 %v2707
    %v2778 = vpop.f32.mrf.mxu0
    %v2779 = vadd.f32 %v2698, %v2778
    %v2780 = vpop.f32.mrf.mxu0
    %2781 = vmatprep.mubr.f32.mxu0 0.0
    %2782 = vmatmul.mubr.f32.gmra.mxu0 %v2710
    %v2783 = vpop.f32.mrf.mxu0
    %v2784 = vadd.f32 %v2703, %v2783
    %v2785 = vpop.f32.mrf.mxu0
    %2786 = vdwg.mxu0
    %v2788 = vlaneseq
    %v2789 = vshrl.u32 %v2788, 7
    %v2790 = vsub.s32 0, %v2789
    %v2791 = vrot.slane %v2545, %v2790
    %v2793 = vadd.f32 %v2779, %v2791
    %v2794 = vadd.f32 %v2784, %v2791
    %v2795 = vsel %vm338, %v2793, 0.0
    %2796 = vadd.xlane.f32.xlu0 %v2795
    %v2797 = vpop.xlane.xlu0 %2796
    %v2798 = vsel %vm338, %v2794, 0.0
    %2799 = vadd.xlane.f32.xlu0 %v2798
    %v2800 = vpop.xlane.xlu0 %2799
    %v2801 = vmul.f32 %v2797, %v515
    %v2802 = vmul.f32 %v2800, %v515
    %v2803 = vsub.f32 %v2793, %v2801
    %v2804 = vsub.f32 %v2794, %v2802
    %v2805 = vmul.f32 %v2803, %v2803
    %v2806 = vmul.f32 %v2804, %v2804
    %v2807 = vsel %vm338, %v2805, 0.0
    %2808 = vadd.xlane.f32.xlu0 %v2807
    %v2809 = vpop.xlane.xlu0 %2808
    %v2810 = vsel %vm338, %v2806, 0.0
    %2811 = vadd.xlane.f32.xlu0 %v2810
    %v2812 = vpop.xlane.xlu0 %2811
    %v2813 = vmul.f32 %v2809, %v515
    %v2814 = vmul.f32 %v2812, %v515
    %v2815 = vadd.f32 %v2813, 1e-05
    %v2816 = vadd.f32 %v2814, 1e-05
    %v2817 = vrsqrt.pop %v2815
    %v2818 = vrsqrt.pop %v2816
    %v2819 = vmul.f32 %v2803, %v2817
    %v2820 = vmul.f32 %v2804, %v2818
    %v2822 = vlaneseq
    %v2823 = vshrl.u32 %v2822, 7
    %v2824 = vsub.s32 0, %v2823
    %v2825 = vrot.slane %v2547, %v2824
    %v2827 = vmul.f32 %v2819, %v2825
    %v2828 = vmul.f32 %v2820, %v2825
    %v2830 = vlaneseq
    %v2831 = vshrl.u32 %v2830, 7
    %v2832 = vsub.s32 0, %v2831
    %v2833 = vrot.slane %v2549, %v2832
    %v2835 = vadd.f32 %v2827, %v2833
    %v2836 = vadd.f32 %v2828, %v2833
    %vm2837 = vcmp.gt.f32.partialorder %v2835, 0.0
    %vm2838 = vcmp.gt.f32.partialorder %v2836, 0.0
    %v2839 = vmul.f32 %v2835, 0.01
    %v2840 = vmul.f32 %v2836, 0.01
    %v2841 = vsel %vm2837, %v2835, %v2839
    %v2842 = vsel %vm2838, %v2836, %v2840
    %v2843 = vld [vmem:[%s16] sm:$0x1]
    %v2844 = vld [vmem:[%s15] sm:$0xff]
    %v2845 = vld [vmem:[%s15 + $0x8] sm:$0xff]
    %v2846 = vld [vmem:[%s15 + $0x10] sm:$0xff]
    %v2847 = vld [vmem:[%s15 + $0x18] sm:$0xff]
    %2848 = vmatprep.subr.mxu0 0.0
    %2849 = vmatpush1.msra.mxu0 0.0
    %2850 = vmatprep.subr.mxu0 0.0
    %2851 = vmatpush1.msra.mxu0 0.0
    %2852 = vmatprep.subr.mxu0 0.0
    %2853 = vmatpush1.msra.mxu0 0.0
    %2854 = vmatprep.subr.mxu0 0.0
    %2855 = vmatpush1.msra.mxu0 0.0
    %2856 = vmatprep.subr.mxu0 0.0
    %2857 = vmatpush1.msra.mxu0 0.0
    %2858 = vmatprep.subr.mxu0 0.0
    %2859 = vmatpush1.msra.mxu0 0.0
    %2860 = vmatprep.subr.mxu0 0.0
    %2861 = vmatpush1.msra.mxu0 0.0
    %2862 = vmatprep.subr.mxu0 0.0
    %2863 = vmatpush1.msra.mxu0 0.0
    %2864 = vmatprep.subr.mxu0 0.0
    %2865 = vmatpush1.msra.mxu0 0.0
    %2866 = vmatprep.subr.mxu0 0.0
    %2867 = vmatpush1.msra.mxu0 0.0
    %2868 = vmatprep.subr.mxu0 0.0
    %2869 = vmatpush1.msra.mxu0 0.0
    %2870 = vmatprep.subr.mxu0 0.0
    %2871 = vmatpush1.msra.mxu0 0.0
    %2872 = vmatprep.subr.mxu0 0.0
    %2873 = vmatpush1.msra.mxu0 %v2847
    %2874 = vmatprep.subr.mxu0 0.0
    %2875 = vmatpush1.msra.mxu0 %v2846
    %2876 = vmatprep.subr.mxu0 0.0
    %2877 = vmatpush1.msra.mxu0 %v2845
    %2878 = vmatprep.subr.mxu0 0.0
    %2879 = vmatpush1.msra.mxu0 %v2844
    %2880 = vmatprep.subr.mxu0 0.0
    %2881 = vmatpush2.msra.mxu0 0.0
    %2882 = vmatprep.subr.mxu0 0.0
    %2883 = vmatpush2.msra.mxu0 0.0
    %2884 = vmatprep.subr.mxu0 0.0
    %2885 = vmatpush2.msra.mxu0 0.0
    %2886 = vmatprep.subr.mxu0 0.0
    %2887 = vmatpush2.msra.mxu0 0.0
    %2888 = vmatprep.subr.mxu0 0.0
    %2889 = vmatpush2.msra.mxu0 0.0
    %2890 = vmatprep.subr.mxu0 0.0
    %2891 = vmatpush2.msra.mxu0 0.0
    %2892 = vmatprep.subr.mxu0 0.0
    %2893 = vmatpush2.msra.mxu0 0.0
    %2894 = vmatprep.subr.mxu0 0.0
    %2895 = vmatpush2.msra.mxu0 0.0
    %2896 = vmatprep.subr.mxu0 0.0
    %2897 = vmatpush2.msra.mxu0 0.0
    %2898 = vmatprep.subr.mxu0 0.0
    %2899 = vmatpush2.msra.mxu0 0.0
    %2900 = vmatprep.subr.mxu0 0.0
    %2901 = vmatpush2.msra.mxu0 0.0
    %2902 = vmatprep.subr.mxu0 0.0
    %2903 = vmatpush2.msra.mxu0 0.0
    %2904 = vmatprep.subr.mxu0 0.0
    %2905 = vmatpush2.msra.mxu0 0.0
    %2906 = vmatprep.subr.mxu0 0.0
    %2907 = vmatpush2.msra.mxu0 0.0
    %2908 = vmatprep.subr.mxu0 0.0
    %2909 = vmatpush2.msra.mxu0 0.0
    %2910 = vmatprep.subr.mxu0 0.0
    %2911 = vmatpush2.msra.mxu0 0.0
    %2912 = vmatprep.mubr.f32.mxu0 0.0
    %2913 = vmatmul.mubr.f32.gmra.mxu0 %v421
    %v2914 = vpop.f32.mrf.mxu0
    %v2915 = vadd.f32 0.0, %v2914
    %v2916 = vpop.f32.mrf.mxu0
    %2917 = vmatprep.mubr.f32.mxu0 0.0
    %2918 = vmatmul.mubr.f32.gmra.mxu0 %v424
    %v2919 = vpop.f32.mrf.mxu0
    %v2920 = vadd.f32 0.0, %v2919
    %v2921 = vpop.f32.mrf.mxu0
    %2922 = vdwg.mxu0
    %v2924 = vlaneseq
    %v2925 = vshrl.u32 %v2924, 7
    %v2926 = vsub.s32 0, %v2925
    %v2927 = vrot.slane %v2843, %v2926
    %v2929 = vadd.f32 %v2927, %v2915
    %v2930 = vadd.f32 %v2927, %v2920
    %s2931 = scalar_lea.vmem %s15, 32
    %v2932 = vld [vmem:[%s2931] sm:$0xff]
    %v2933 = vld [vmem:[%s2931 + $0x8] sm:$0xff]
    %v2934 = vld [vmem:[%s2931 + $0x10] sm:$0xff]
    %v2935 = vld [vmem:[%s2931 + $0x18] sm:$0xff]
    %2936 = vmatprep.subr.mxu0 0.0
    %2937 = vmatpush1.msra.mxu0 0.0
    %2938 = vmatprep.subr.mxu0 0.0
    %2939 = vmatpush1.msra.mxu0 0.0
    %2940 = vmatprep.subr.mxu0 0.0
    %2941 = vmatpush1.msra.mxu0 0.0
    %2942 = vmatprep.subr.mxu0 0.0
    %2943 = vmatpush1.msra.mxu0 0.0
    %2944 = vmatprep.subr.mxu0 0.0
    %2945 = vmatpush1.msra.mxu0 0.0
    %2946 = vmatprep.subr.mxu0 0.0
    %2947 = vmatpush1.msra.mxu0 0.0
    %2948 = vmatprep.subr.mxu0 0.0
    %2949 = vmatpush1.msra.mxu0 0.0
    %2950 = vmatprep.subr.mxu0 0.0
    %2951 = vmatpush1.msra.mxu0 0.0
    %2952 = vmatprep.subr.mxu0 0.0
    %2953 = vmatpush1.msra.mxu0 0.0
    %2954 = vmatprep.subr.mxu0 0.0
    %2955 = vmatpush1.msra.mxu0 0.0
    %2956 = vmatprep.subr.mxu0 0.0
    %2957 = vmatpush1.msra.mxu0 0.0
    %2958 = vmatprep.subr.mxu0 0.0
    %2959 = vmatpush1.msra.mxu0 0.0
    %2960 = vmatprep.subr.mxu0 0.0
    %2961 = vmatpush1.msra.mxu0 %v2935
    %2962 = vmatprep.subr.mxu0 0.0
    %2963 = vmatpush1.msra.mxu0 %v2934
    %2964 = vmatprep.subr.mxu0 0.0
    %2965 = vmatpush1.msra.mxu0 %v2933
    %2966 = vmatprep.subr.mxu0 0.0
    %2967 = vmatpush1.msra.mxu0 %v2932
    %2968 = vmatprep.subr.mxu0 0.0
    %2969 = vmatpush2.msra.mxu0 0.0
    %2970 = vmatprep.subr.mxu0 0.0
    %2971 = vmatpush2.msra.mxu0 0.0
    %2972 = vmatprep.subr.mxu0 0.0
    %2973 = vmatpush2.msra.mxu0 0.0
    %2974 = vmatprep.subr.mxu0 0.0
    %2975 = vmatpush2.msra.mxu0 0.0
    %2976 = vmatprep.subr.mxu0 0.0
    %2977 = vmatpush2.msra.mxu0 0.0
    %2978 = vmatprep.subr.mxu0 0.0
    %2979 = vmatpush2.msra.mxu0 0.0
    %2980 = vmatprep.subr.mxu0 0.0
    %2981 = vmatpush2.msra.mxu0 0.0
    %2982 = vmatprep.subr.mxu0 0.0
    %2983 = vmatpush2.msra.mxu0 0.0
    %2984 = vmatprep.subr.mxu0 0.0
    %2985 = vmatpush2.msra.mxu0 0.0
    %2986 = vmatprep.subr.mxu0 0.0
    %2987 = vmatpush2.msra.mxu0 0.0
    %2988 = vmatprep.subr.mxu0 0.0
    %2989 = vmatpush2.msra.mxu0 0.0
    %2990 = vmatprep.subr.mxu0 0.0
    %2991 = vmatpush2.msra.mxu0 0.0
    %2992 = vmatprep.subr.mxu0 0.0
    %2993 = vmatpush2.msra.mxu0 0.0
    %2994 = vmatprep.subr.mxu0 0.0
    %2995 = vmatpush2.msra.mxu0 0.0
    %2996 = vmatprep.subr.mxu0 0.0
    %2997 = vmatpush2.msra.mxu0 0.0
    %2998 = vmatprep.subr.mxu0 0.0
    %2999 = vmatpush2.msra.mxu0 0.0
    %3000 = vmatprep.mubr.f32.mxu0 0.0
    %3001 = vmatmul.mubr.f32.gmra.mxu0 %v731
    %v3002 = vpop.f32.mrf.mxu0
    %v3003 = vadd.f32 0.0, %v3002
    %v3004 = vpop.f32.mrf.mxu0
    %3005 = vmatprep.mubr.f32.mxu0 0.0
    %3006 = vmatmul.mubr.f32.gmra.mxu0 %v734
    %v3007 = vpop.f32.mrf.mxu0
    %v3008 = vadd.f32 0.0, %v3007
    %v3009 = vpop.f32.mrf.mxu0
    %3010 = vdwg.mxu0
    %v3011 = vadd.f32 %v2929, %v3003
    %v3012 = vadd.f32 %v2930, %v3008
    %s3013 = scalar_lea.vmem %s15, 64
    %v3014 = vld [vmem:[%s3013] sm:$0xff]
    %v3015 = vld [vmem:[%s3013 + $0x8] sm:$0xff]
    %v3016 = vld [vmem:[%s3013 + $0x10] sm:$0xff]
    %v3017 = vld [vmem:[%s3013 + $0x18] sm:$0xff]
    %3018 = vmatprep.subr.mxu0 0.0
    %3019 = vmatpush1.msra.mxu0 0.0
    %3020 = vmatprep.subr.mxu0 0.0
    %3021 = vmatpush1.msra.mxu0 0.0
    %3022 = vmatprep.subr.mxu0 0.0
    %3023 = vmatpush1.msra.mxu0 0.0
    %3024 = vmatprep.subr.mxu0 0.0
    %3025 = vmatpush1.msra.mxu0 0.0
    %3026 = vmatprep.subr.mxu0 0.0
    %3027 = vmatpush1.msra.mxu0 0.0
    %3028 = vmatprep.subr.mxu0 0.0
    %3029 = vmatpush1.msra.mxu0 0.0
    %3030 = vmatprep.subr.mxu0 0.0
    %3031 = vmatpush1.msra.mxu0 0.0
    %3032 = vmatprep.subr.mxu0 0.0
    %3033 = vmatpush1.msra.mxu0 0.0
    %3034 = vmatprep.subr.mxu0 0.0
    %3035 = vmatpush1.msra.mxu0 0.0
    %3036 = vmatprep.subr.mxu0 0.0
    %3037 = vmatpush1.msra.mxu0 0.0
    %3038 = vmatprep.subr.mxu0 0.0
    %3039 = vmatpush1.msra.mxu0 0.0
    %3040 = vmatprep.subr.mxu0 0.0
    %3041 = vmatpush1.msra.mxu0 0.0
    %3042 = vmatprep.subr.mxu0 0.0
    %3043 = vmatpush1.msra.mxu0 %v3017
    %3044 = vmatprep.subr.mxu0 0.0
    %3045 = vmatpush1.msra.mxu0 %v3016
    %3046 = vmatprep.subr.mxu0 0.0
    %3047 = vmatpush1.msra.mxu0 %v3015
    %3048 = vmatprep.subr.mxu0 0.0
    %3049 = vmatpush1.msra.mxu0 %v3014
    %3050 = vmatprep.subr.mxu0 0.0
    %3051 = vmatpush2.msra.mxu0 0.0
    %3052 = vmatprep.subr.mxu0 0.0
    %3053 = vmatpush2.msra.mxu0 0.0
    %3054 = vmatprep.subr.mxu0 0.0
    %3055 = vmatpush2.msra.mxu0 0.0
    %3056 = vmatprep.subr.mxu0 0.0
    %3057 = vmatpush2.msra.mxu0 0.0
    %3058 = vmatprep.subr.mxu0 0.0
    %3059 = vmatpush2.msra.mxu0 0.0
    %3060 = vmatprep.subr.mxu0 0.0
    %3061 = vmatpush2.msra.mxu0 0.0
    %3062 = vmatprep.subr.mxu0 0.0
    %3063 = vmatpush2.msra.mxu0 0.0
    %3064 = vmatprep.subr.mxu0 0.0
    %3065 = vmatpush2.msra.mxu0 0.0
    %3066 = vmatprep.subr.mxu0 0.0
    %3067 = vmatpush2.msra.mxu0 0.0
    %3068 = vmatprep.subr.mxu0 0.0
    %3069 = vmatpush2.msra.mxu0 0.0
    %3070 = vmatprep.subr.mxu0 0.0
    %3071 = vmatpush2.msra.mxu0 0.0
    %3072 = vmatprep.subr.mxu0 0.0
    %3073 = vmatpush2.msra.mxu0 0.0
    %3074 = vmatprep.subr.mxu0 0.0
    %3075 = vmatpush2.msra.mxu0 0.0
    %3076 = vmatprep.subr.mxu0 0.0
    %3077 = vmatpush2.msra.mxu0 0.0
    %3078 = vmatprep.subr.mxu0 0.0
    %3079 = vmatpush2.msra.mxu0 0.0
    %3080 = vmatprep.subr.mxu0 0.0
    %3081 = vmatpush2.msra.mxu0 0.0
    %3082 = vmatprep.mubr.f32.mxu0 0.0
    %3083 = vmatmul.mubr.f32.gmra.mxu0 %v1075
    %v3084 = vpop.f32.mrf.mxu0
    %v3085 = vadd.f32 0.0, %v3084
    %v3086 = vpop.f32.mrf.mxu0
    %3087 = vmatprep.mubr.f32.mxu0 0.0
    %3088 = vmatmul.mubr.f32.gmra.mxu0 %v1078
    %v3089 = vpop.f32.mrf.mxu0
    %v3090 = vadd.f32 0.0, %v3089
    %v3091 = vpop.f32.mrf.mxu0
    %3092 = vdwg.mxu0
    %v3093 = vadd.f32 %v3011, %v3085
    %v3094 = vadd.f32 %v3012, %v3090
    %vm3095 = vcmp.gt.f32.partialorder %v3093, 0.0
    %vm3096 = vcmp.gt.f32.partialorder %v3094, 0.0
    %v3097 = vmul.f32 %v3093, 0.01
    %v3098 = vmul.f32 %v3094, 0.01
    %v3099 = vsel %vm3095, %v3093, %v3097
    %v3100 = vsel %vm3096, %v3094, %v3098
    %v3101 = vld [vmem:[%s17] sm:$0xff]
    %v3102 = vld [vmem:[%s17 + $0x8] sm:$0xff]
    %v3103 = vld [vmem:[%s17 + $0x10] sm:$0xff]
    %v3104 = vld [vmem:[%s17 + $0x18] sm:$0xff]
    %v3105 = vld [vmem:[%s17 + $0x20] sm:$0xff]
    %v3106 = vld [vmem:[%s17 + $0x28] sm:$0xff]
    %v3107 = vld [vmem:[%s17 + $0x30] sm:$0xff]
    %v3108 = vld [vmem:[%s17 + $0x38] sm:$0xff]
    %v3109 = vld [vmem:[%s17 + $0x40] sm:$0xff]
    %v3110 = vld [vmem:[%s17 + $0x48] sm:$0xff]
    %v3111 = vld [vmem:[%s17 + $0x50] sm:$0xff]
    %v3112 = vld [vmem:[%s17 + $0x58] sm:$0xff]
    %v3113 = vld [vmem:[%s17 + $0x60] sm:$0xff]
    %v3114 = vld [vmem:[%s17 + $0x68] sm:$0xff]
    %v3115 = vld [vmem:[%s17 + $0x70] sm:$0xff]
    %v3116 = vld [vmem:[%s17 + $0x78] sm:$0xff]
    %v3117 = vld [vmem:[%s18] sm:$0x1]
    %v3119 = vlaneseq
    %v3120 = vshrl.u32 %v3119, 7
    %v3121 = vsub.s32 0, %v3120
    %v3122 = vrot.slane %v3117, %v3121
    %3124 = vmatprep.subr.mxu0 0.0
    %3125 = vmatpush1.msra.mxu0 %v3116
    %3126 = vmatprep.subr.mxu0 0.0
    %3127 = vmatpush1.msra.mxu0 %v3115
    %3128 = vmatprep.subr.mxu0 0.0
    %3129 = vmatpush1.msra.mxu0 %v3114
    %3130 = vmatprep.subr.mxu0 0.0
    %3131 = vmatpush1.msra.mxu0 %v3113
    %3132 = vmatprep.subr.mxu0 0.0
    %3133 = vmatpush1.msra.mxu0 %v3112
    %3134 = vmatprep.subr.mxu0 0.0
    %3135 = vmatpush1.msra.mxu0 %v3111
    %3136 = vmatprep.subr.mxu0 0.0
    %3137 = vmatpush1.msra.mxu0 %v3110
    %3138 = vmatprep.subr.mxu0 0.0
    %3139 = vmatpush1.msra.mxu0 %v3109
    %3140 = vmatprep.subr.mxu0 0.0
    %3141 = vmatpush1.msra.mxu0 %v3108
    %3142 = vmatprep.subr.mxu0 0.0
    %3143 = vmatpush1.msra.mxu0 %v3107
    %3144 = vmatprep.subr.mxu0 0.0
    %3145 = vmatpush1.msra.mxu0 %v3106
    %3146 = vmatprep.subr.mxu0 0.0
    %3147 = vmatpush1.msra.mxu0 %v3105
    %3148 = vmatprep.subr.mxu0 0.0
    %3149 = vmatpush1.msra.mxu0 %v3104
    %3150 = vmatprep.subr.mxu0 0.0
    %3151 = vmatpush1.msra.mxu0 %v3103
    %3152 = vmatprep.subr.mxu0 0.0
    %3153 = vmatpush1.msra.mxu0 %v3102
    %3154 = vmatprep.subr.mxu0 0.0
    %3155 = vmatpush1.msra.mxu0 %v3101
    %3156 = vmatprep.subr.mxu0 0.0
    %3157 = vmatpush2.msra.mxu0 0.0
    %3158 = vmatprep.subr.mxu0 0.0
    %3159 = vmatpush2.msra.mxu0 0.0
    %3160 = vmatprep.subr.mxu0 0.0
    %3161 = vmatpush2.msra.mxu0 0.0
    %3162 = vmatprep.subr.mxu0 0.0
    %3163 = vmatpush2.msra.mxu0 0.0
    %3164 = vmatprep.subr.mxu0 0.0
    %3165 = vmatpush2.msra.mxu0 0.0
    %3166 = vmatprep.subr.mxu0 0.0
    %3167 = vmatpush2.msra.mxu0 0.0
    %3168 = vmatprep.subr.mxu0 0.0
    %3169 = vmatpush2.msra.mxu0 0.0
    %3170 = vmatprep.subr.mxu0 0.0
    %3171 = vmatpush2.msra.mxu0 0.0
    %3172 = vmatprep.subr.mxu0 0.0
    %3173 = vmatpush2.msra.mxu0 0.0
    %3174 = vmatprep.subr.mxu0 0.0
    %3175 = vmatpush2.msra.mxu0 0.0
    %3176 = vmatprep.subr.mxu0 0.0
    %3177 = vmatpush2.msra.mxu0 0.0
    %3178 = vmatprep.subr.mxu0 0.0
    %3179 = vmatpush2.msra.mxu0 0.0
    %3180 = vmatprep.subr.mxu0 0.0
    %3181 = vmatpush2.msra.mxu0 0.0
    %3182 = vmatprep.subr.mxu0 0.0
    %3183 = vmatpush2.msra.mxu0 0.0
    %3184 = vmatprep.subr.mxu0 0.0
    %3185 = vmatpush2.msra.mxu0 0.0
    %3186 = vmatprep.subr.mxu0 0.0
    %3187 = vmatpush2.msra.mxu0 0.0
    %3188 = vmatprep.mubr.f32.mxu0 0.0
    %3189 = vmatmul.mubr.f32.gmra.mxu0 %v3099
    %v3190 = vpop.f32.mrf.mxu0
    %v3191 = vadd.f32 %v3122, %v3190
    %v3192 = vpop.f32.mrf.mxu0
    %3193 = vmatprep.mubr.f32.mxu0 0.0
    %3194 = vmatmul.mubr.f32.gmra.mxu0 %v3100
    %v3195 = vpop.f32.mrf.mxu0
    %v3196 = vadd.f32 %v3122, %v3195
    %v3197 = vpop.f32.mrf.mxu0
    %3198 = vdwg.mxu0
    %v3199 = vtanh.pop %v3191
    %v3200 = vtanh.pop %v3196
    %v3201 = vld [vmem:[%s19] sm:$0xff]
    %v3202 = vld [vmem:[%s19 + $0x8] sm:$0xff]
    %v3203 = vld [vmem:[%s19 + $0x10] sm:$0xff]
    %v3204 = vld [vmem:[%s19 + $0x18] sm:$0xff]
    %v3205 = vld [vmem:[%s19 + $0x20] sm:$0xff]
    %v3206 = vld [vmem:[%s19 + $0x28] sm:$0xff]
    %v3207 = vld [vmem:[%s19 + $0x30] sm:$0xff]
    %v3208 = vld [vmem:[%s19 + $0x38] sm:$0xff]
    %v3209 = vld [vmem:[%s19 + $0x40] sm:$0xff]
    %v3210 = vld [vmem:[%s19 + $0x48] sm:$0xff]
    %v3211 = vld [vmem:[%s19 + $0x50] sm:$0xff]
    %v3212 = vld [vmem:[%s19 + $0x58] sm:$0xff]
    %v3213 = vld [vmem:[%s19 + $0x60] sm:$0xff]
    %v3214 = vld [vmem:[%s19 + $0x68] sm:$0xff]
    %v3215 = vld [vmem:[%s19 + $0x70] sm:$0xff]
    %v3216 = vld [vmem:[%s19 + $0x78] sm:$0xff]
    %v3217 = vld [vmem:[%s20] sm:$0x1]
    %v3219 = vlaneseq
    %v3220 = vshrl.u32 %v3219, 7
    %v3221 = vsub.s32 0, %v3220
    %v3222 = vrot.slane %v3217, %v3221
    %3224 = vmatprep.subr.mxu0 0.0
    %3225 = vmatpush1.msra.mxu0 %v3216
    %3226 = vmatprep.subr.mxu0 0.0
    %3227 = vmatpush1.msra.mxu0 %v3215
    %3228 = vmatprep.subr.mxu0 0.0
    %3229 = vmatpush1.msra.mxu0 %v3214
    %3230 = vmatprep.subr.mxu0 0.0
    %3231 = vmatpush1.msra.mxu0 %v3213
    %3232 = vmatprep.subr.mxu0 0.0
    %3233 = vmatpush1.msra.mxu0 %v3212
    %3234 = vmatprep.subr.mxu0 0.0
    %3235 = vmatpush1.msra.mxu0 %v3211
    %3236 = vmatprep.subr.mxu0 0.0
    %3237 = vmatpush1.msra.mxu0 %v3210
    %3238 = vmatprep.subr.mxu0 0.0
    %3239 = vmatpush1.msra.mxu0 %v3209
    %3240 = vmatprep.subr.mxu0 0.0
    %3241 = vmatpush1.msra.mxu0 %v3208
    %3242 = vmatprep.subr.mxu0 0.0
    %3243 = vmatpush1.msra.mxu0 %v3207
    %3244 = vmatprep.subr.mxu0 0.0
    %3245 = vmatpush1.msra.mxu0 %v3206
    %3246 = vmatprep.subr.mxu0 0.0
    %3247 = vmatpush1.msra.mxu0 %v3205
    %3248 = vmatprep.subr.mxu0 0.0
    %3249 = vmatpush1.msra.mxu0 %v3204
    %3250 = vmatprep.subr.mxu0 0.0
    %3251 = vmatpush1.msra.mxu0 %v3203
    %3252 = vmatprep.subr.mxu0 0.0
    %3253 = vmatpush1.msra.mxu0 %v3202
    %3254 = vmatprep.subr.mxu0 0.0
    %3255 = vmatpush1.msra.mxu0 %v3201
    %3256 = vmatprep.subr.mxu0 0.0
    %3257 = vmatpush2.msra.mxu0 0.0
    %3258 = vmatprep.subr.mxu0 0.0
    %3259 = vmatpush2.msra.mxu0 0.0
    %3260 = vmatprep.subr.mxu0 0.0
    %3261 = vmatpush2.msra.mxu0 0.0
    %3262 = vmatprep.subr.mxu0 0.0
    %3263 = vmatpush2.msra.mxu0 0.0
    %3264 = vmatprep.subr.mxu0 0.0
    %3265 = vmatpush2.msra.mxu0 0.0
    %3266 = vmatprep.subr.mxu0 0.0
    %3267 = vmatpush2.msra.mxu0 0.0
    %3268 = vmatprep.subr.mxu0 0.0
    %3269 = vmatpush2.msra.mxu0 0.0
    %3270 = vmatprep.subr.mxu0 0.0
    %3271 = vmatpush2.msra.mxu0 0.0
    %3272 = vmatprep.subr.mxu0 0.0
    %3273 = vmatpush2.msra.mxu0 0.0
    %3274 = vmatprep.subr.mxu0 0.0
    %3275 = vmatpush2.msra.mxu0 0.0
    %3276 = vmatprep.subr.mxu0 0.0
    %3277 = vmatpush2.msra.mxu0 0.0
    %3278 = vmatprep.subr.mxu0 0.0
    %3279 = vmatpush2.msra.mxu0 0.0
    %3280 = vmatprep.subr.mxu0 0.0
    %3281 = vmatpush2.msra.mxu0 0.0
    %3282 = vmatprep.subr.mxu0 0.0
    %3283 = vmatpush2.msra.mxu0 0.0
    %3284 = vmatprep.subr.mxu0 0.0
    %3285 = vmatpush2.msra.mxu0 0.0
    %3286 = vmatprep.subr.mxu0 0.0
    %3287 = vmatpush2.msra.mxu0 0.0
    %3288 = vmatprep.mubr.f32.mxu0 0.0
    %3289 = vmatmul.mubr.f32.gmra.mxu0 %v3099
    %v3290 = vpop.f32.mrf.mxu0
    %v3291 = vadd.f32 %v3222, %v3290
    %v3292 = vpop.f32.mrf.mxu0
    %3293 = vmatprep.mubr.f32.mxu0 0.0
    %3294 = vmatmul.mubr.f32.gmra.mxu0 %v3100
    %v3295 = vpop.f32.mrf.mxu0
    %v3296 = vadd.f32 %v3222, %v3295
    %v3297 = vpop.f32.mrf.mxu0
    %3298 = vdwg.mxu0
    %v3299 = vxor.u32 %v3291, 2147483648
    %v3300 = vxor.u32 %v3296, 2147483648
    %v3301 = vmul.f32 %v3299, 1.442695
    %v3302 = vpow.pop %v3301
    %v3303 = vmul.f32 %v3300, 1.442695
    %v3304 = vpow.pop %v3303
    %v3305 = vadd.f32 %v3302, 1.0
    %v3306 = vadd.f32 %v3304, 1.0
    %v3307 = vrcp.pop %v3305
    %v3308 = vmul.f32 1.0, %v3307
    %v3309 = vrcp.pop %v3306
    %v3310 = vmul.f32 1.0, %v3309
    %v3311 = vmul.f32 %v3199, %v3308
    %v3312 = vmul.f32 %v3200, %v3310
    %v3313 = vld [vmem:[%s21] sm:$0x1]
    %v3314 = vld [vmem:[%s22] sm:$0x1]
    %3316 = vset.pattern.permute.xlu0 0
    %3317 = vperm.xlu0 %3316, %v3314
    %v3318 = vpop.permute.xlu0 %3317
    %v3320 = vlaneseq
    %v3321 = vshrl.u32 %v3320, 7
    %v3322 = vsub.s32 0, %v3321
    %v3323 = vrot.slane %v3318, %v3322
    %3324 = vmatprep.subr.mxu0 0.0
    %3325 = vmatpush1.xpose.msra.mxu0 0.0
    %3326 = vmatprep.subr.mxu0 0.0
    %3327 = vmatpush1.xpose.msra.mxu0 0.0
    %3328 = vmatprep.subr.mxu0 0.0
    %3329 = vmatpush1.xpose.msra.mxu0 0.0
    %3330 = vmatprep.subr.mxu0 0.0
    %3331 = vmatpush1.xpose.msra.mxu0 0.0
    %3332 = vmatprep.subr.mxu0 0.0
    %3333 = vmatpush1.xpose.msra.mxu0 0.0
    %3334 = vmatprep.subr.mxu0 0.0
    %3335 = vmatpush1.xpose.msra.mxu0 0.0
    %3336 = vmatprep.subr.mxu0 0.0
    %3337 = vmatpush1.xpose.msra.mxu0 0.0
    %3338 = vmatprep.subr.mxu0 0.0
    %3339 = vmatpush1.xpose.msra.mxu0 0.0
    %3340 = vmatprep.subr.mxu0 0.0
    %3341 = vmatpush1.xpose.msra.mxu0 0.0
    %3342 = vmatprep.subr.mxu0 0.0
    %3343 = vmatpush1.xpose.msra.mxu0 0.0
    %3344 = vmatprep.subr.mxu0 0.0
    %3345 = vmatpush1.xpose.msra.mxu0 0.0
    %3346 = vmatprep.subr.mxu0 0.0
    %3347 = vmatpush1.xpose.msra.mxu0 0.0
    %3348 = vmatprep.subr.mxu0 0.0
    %3349 = vmatpush1.xpose.msra.mxu0 0.0
    %3350 = vmatprep.subr.mxu0 0.0
    %3351 = vmatpush1.xpose.msra.mxu0 0.0
    %3352 = vmatprep.subr.mxu0 0.0
    %3353 = vmatpush1.xpose.msra.mxu0 %v3312
    %3354 = vmatprep.subr.mxu0 0.0
    %3355 = vmatpush1.xpose.msra.mxu0 %v3311
    %3356 = vmatprep.subr.mxu0 0.0
    %3357 = vmatpush2.xpose.msra.mxu0 0.0
    %3358 = vmatprep.subr.mxu0 0.0
    %3359 = vmatpush2.xpose.msra.mxu0 0.0
    %3360 = vmatprep.subr.mxu0 0.0
    %3361 = vmatpush2.xpose.msra.mxu0 0.0
    %3362 = vmatprep.subr.mxu0 0.0
    %3363 = vmatpush2.xpose.msra.mxu0 0.0
    %3364 = vmatprep.subr.mxu0 0.0
    %3365 = vmatpush2.xpose.msra.mxu0 0.0
    %3366 = vmatprep.subr.mxu0 0.0
    %3367 = vmatpush2.xpose.msra.mxu0 0.0
    %3368 = vmatprep.subr.mxu0 0.0
    %3369 = vmatpush2.xpose.msra.mxu0 0.0
    %3370 = vmatprep.subr.mxu0 0.0
    %3371 = vmatpush2.xpose.msra.mxu0 0.0
    %3372 = vmatprep.subr.mxu0 0.0
    %3373 = vmatpush2.xpose.msra.mxu0 0.0
    %3374 = vmatprep.subr.mxu0 0.0
    %3375 = vmatpush2.xpose.msra.mxu0 0.0
    %3376 = vmatprep.subr.mxu0 0.0
    %3377 = vmatpush2.xpose.msra.mxu0 0.0
    %3378 = vmatprep.subr.mxu0 0.0
    %3379 = vmatpush2.xpose.msra.mxu0 0.0
    %3380 = vmatprep.subr.mxu0 0.0
    %3381 = vmatpush2.xpose.msra.mxu0 0.0
    %3382 = vmatprep.subr.mxu0 0.0
    %3383 = vmatpush2.xpose.msra.mxu0 0.0
    %3384 = vmatprep.subr.mxu0 0.0
    %3385 = vmatpush2.xpose.msra.mxu0 0.0
    %3386 = vmatprep.subr.mxu0 0.0
    %3387 = vmatpush2.xpose.msra.mxu0 0.0
    %3388 = vmatprep.mubr.f32.mxu0 0.0
    %3389 = vmatmul.mubr.f32.gmra.mxu0 %v3313
    %v3390 = vpop.f32.mrf.mxu0
    %v3391 = vadd.f32 %v3323, %v3390
    %v3392 = vpop.f32.mrf.mxu0
    %3393 = vdwg.mxu0
    %vm3394 = vcmask 122880
    %v3395 = vsel %vm3394, %v3391, -inf
    %3396 = vmax.xlane.f32.xlu0 %v3395
    %v3397 = vpop.xlane.xlu0 %3396
    %v3398 = vsub.f32 %v3391, %v3397
    %v3399 = vmul.f32 %v3398, 1.442695
    %v3400 = vpow.pop %v3399
    %v3401 = vsel %vm3394, %v3400, 0.0
    %3402 = vadd.xlane.f32.xlu0 %v3401
    %v3403 = vpop.xlane.xlu0 %3402
    %v3404 = vrcp.pop %v3403
    %v3405 = vmul.f32 %v3400, %v3404
    %3406 = vst.msk [vmem:[#allocation4] sm:$0x1] %vm3394, %v3405
    %v3408 = vsel %vm256, %v3405, 0
    %3410 = vmatprep.subr.mxu0 0.0
    %3411 = vmatpush1.msra.mxu0 0.0
    %3412 = vmatprep.subr.mxu0 0.0
    %3413 = vmatpush1.msra.mxu0 0.0
    %3414 = vmatprep.subr.mxu0 0.0
    %3415 = vmatpush1.msra.mxu0 0.0
    %3416 = vmatprep.subr.mxu0 0.0
    %3417 = vmatpush1.msra.mxu0 0.0
    %3418 = vmatprep.subr.mxu0 0.0
    %3419 = vmatpush1.msra.mxu0 0.0
    %3420 = vmatprep.subr.mxu0 0.0
    %3421 = vmatpush1.msra.mxu0 0.0
    %3422 = vmatprep.subr.mxu0 0.0
    %3423 = vmatpush1.msra.mxu0 0.0
    %3424 = vmatprep.subr.mxu0 0.0
    %3425 = vmatpush1.msra.mxu0 0.0
    %3426 = vmatprep.subr.mxu0 0.0
    %3427 = vmatpush1.msra.mxu0 0.0
    %3428 = vmatprep.subr.mxu0 0.0
    %3429 = vmatpush1.msra.mxu0 0.0
    %3430 = vmatprep.subr.mxu0 0.0
    %3431 = vmatpush1.msra.mxu0 0.0
    %3432 = vmatprep.subr.mxu0 0.0
    %3433 = vmatpush1.msra.mxu0 0.0
    %3434 = vmatprep.subr.mxu0 0.0
    %3435 = vmatpush1.msra.mxu0 0.0
    %3436 = vmatprep.subr.mxu0 0.0
    %3437 = vmatpush1.msra.mxu0 0.0
    %3438 = vmatprep.subr.mxu0 0.0
    %3439 = vmatpush1.msra.mxu0 %v3100
    %3440 = vmatprep.subr.mxu0 0.0
    %3441 = vmatpush1.msra.mxu0 %v3099
    %3442 = vmatprep.subr.mxu0 0.0
    %3443 = vmatpush2.msra.mxu0 0.0
    %3444 = vmatprep.subr.mxu0 0.0
    %3445 = vmatpush2.msra.mxu0 0.0
    %3446 = vmatprep.subr.mxu0 0.0
    %3447 = vmatpush2.msra.mxu0 0.0
    %3448 = vmatprep.subr.mxu0 0.0
    %3449 = vmatpush2.msra.mxu0 0.0
    %3450 = vmatprep.subr.mxu0 0.0
    %3451 = vmatpush2.msra.mxu0 0.0
    %3452 = vmatprep.subr.mxu0 0.0
    %3453 = vmatpush2.msra.mxu0 0.0
    %3454 = vmatprep.subr.mxu0 0.0
    %3455 = vmatpush2.msra.mxu0 0.0
    %3456 = vmatprep.subr.mxu0 0.0
    %3457 = vmatpush2.msra.mxu0 0.0
    %3458 = vmatprep.subr.mxu0 0.0
    %3459 = vmatpush2.msra.mxu0 0.0
    %3460 = vmatprep.subr.mxu0 0.0
    %3461 = vmatpush2.msra.mxu0 0.0
    %3462 = vmatprep.subr.mxu0 0.0
    %3463 = vmatpush2.msra.mxu0 0.0
    %3464 = vmatprep.subr.mxu0 0.0
    %3465 = vmatpush2.msra.mxu0 0.0
    %3466 = vmatprep.subr.mxu0 0.0
    %3467 = vmatpush2.msra.mxu0 0.0
    %3468 = vmatprep.subr.mxu0 0.0
    %3469 = vmatpush2.msra.mxu0 0.0
    %3470 = vmatprep.subr.mxu0 0.0
    %3471 = vmatpush2.msra.mxu0 0.0
    %3472 = vmatprep.subr.mxu0 0.0
    %3473 = vmatpush2.msra.mxu0 0.0
    %3474 = vmatprep.mubr.f32.mxu0 0.0
    %3475 = vmatmul.mubr.f32.gmra.mxu0 %v3408
    %v3476 = vpop.f32.mrf.mxu0
    %v3477 = vadd.f32 0.0, %v3476
    %v3478 = vpop.f32.mrf.mxu0
    %3479 = vdwg.mxu0
    %v3480 = vld [vmem:[%s23] sm:$0xff]
    %v3481 = vld [vmem:[%s23 + $0x8] sm:$0xff]
    %v3482 = vld [vmem:[%s23 + $0x10] sm:$0xff]
    %v3483 = vld [vmem:[%s23 + $0x18] sm:$0xff]
    %v3484 = vld [vmem:[%s23 + $0x20] sm:$0xff]
    %v3485 = vld [vmem:[%s23 + $0x28] sm:$0xff]
    %v3486 = vld [vmem:[%s23 + $0x30] sm:$0xff]
    %v3487 = vld [vmem:[%s23 + $0x38] sm:$0xff]
    %v3488 = vld [vmem:[%s23 + $0x40] sm:$0xff]
    %v3489 = vld [vmem:[%s23 + $0x48] sm:$0xff]
    %v3490 = vld [vmem:[%s23 + $0x50] sm:$0xff]
    %v3491 = vld [vmem:[%s23 + $0x58] sm:$0xff]
    %v3492 = vld [vmem:[%s23 + $0x60] sm:$0xff]
    %v3493 = vld [vmem:[%s23 + $0x68] sm:$0xff]
    %v3494 = vld [vmem:[%s23 + $0x70] sm:$0xff]
    %v3495 = vld [vmem:[%s23 + $0x78] sm:$0xff]
    %v3496 = vld [vmem:[%s23 + $0x80] sm:$0xff]
    %v3497 = vld [vmem:[%s23 + $0x88] sm:$0xff]
    %v3498 = vld [vmem:[%s23 + $0x90] sm:$0xff]
    %v3499 = vld [vmem:[%s23 + $0x98] sm:$0xff]
    %v3500 = vld [vmem:[%s23 + $0xa0] sm:$0xff]
    %v3501 = vld [vmem:[%s23 + $0xa8] sm:$0xff]
    %v3502 = vld [vmem:[%s23 + $0xb0] sm:$0xff]
    %v3503 = vld [vmem:[%s23 + $0xb8] sm:$0xff]
    %v3504 = vld [vmem:[%s23 + $0xc0] sm:$0xff]
    %v3505 = vld [vmem:[%s23 + $0xc8] sm:$0xff]
    %v3506 = vld [vmem:[%s23 + $0xd0] sm:$0xff]
    %v3507 = vld [vmem:[%s23 + $0xd8] sm:$0xff]
    %v3508 = vld [vmem:[%s23 + $0xe0] sm:$0xff]
    %v3509 = vld [vmem:[%s23 + $0xe8] sm:$0xff]
    %v3510 = vld [vmem:[%s23 + $0xf0] sm:$0xff]
    %v3511 = vld [vmem:[%s23 + $0xf8] sm:$0xff]
    %v3512 = vld [vmem:[%s23 + $0x100] sm:$0xff]
    %v3513 = vld [vmem:[%s23 + $0x108] sm:$0xff]
    %v3514 = vld [vmem:[%s23 + $0x110] sm:$0xff]
    %v3515 = vld [vmem:[%s23 + $0x118] sm:$0xff]
    %v3516 = vld [vmem:[%s23 + $0x120] sm:$0xff]
    %v3517 = vld [vmem:[%s23 + $0x128] sm:$0xff]
    %v3518 = vld [vmem:[%s23 + $0x130] sm:$0xff]
    %v3519 = vld [vmem:[%s23 + $0x138] sm:$0xff]
    %v3520 = vld [vmem:[%s23 + $0x140] sm:$0xff]
    %v3521 = vld [vmem:[%s23 + $0x148] sm:$0xff]
    %v3522 = vld [vmem:[%s23 + $0x150] sm:$0xff]
    %v3523 = vld [vmem:[%s23 + $0x158] sm:$0xff]
    %v3524 = vld [vmem:[%s23 + $0x160] sm:$0xff]
    %v3525 = vld [vmem:[%s23 + $0x168] sm:$0xff]
    %v3526 = vld [vmem:[%s23 + $0x170] sm:$0xff]
    %v3527 = vld [vmem:[%s23 + $0x178] sm:$0xff]
    %s3528 = scalar_lea.vmem %s16, 1
    %v3529 = vld [vmem:[%s3528] sm:$0x1]
    %s3530 = scalar_lea.vmem %s15, 96
    %v3531 = vld [vmem:[%s3530] sm:$0xff]
    %v3532 = vld [vmem:[%s3530 + $0x8] sm:$0xff]
    %v3533 = vld [vmem:[%s3530 + $0x10] sm:$0xff]
    %v3534 = vld [vmem:[%s3530 + $0x18] sm:$0xff]
    %3535 = vmatprep.subr.mxu0 0.0
    %3536 = vmatpush1.msra.mxu0 0.0
    %3537 = vmatprep.subr.mxu0 0.0
    %3538 = vmatpush1.msra.mxu0 0.0
    %3539 = vmatprep.subr.mxu0 0.0
    %3540 = vmatpush1.msra.mxu0 0.0
    %3541 = vmatprep.subr.mxu0 0.0
    %3542 = vmatpush1.msra.mxu0 0.0
    %3543 = vmatprep.subr.mxu0 0.0
    %3544 = vmatpush1.msra.mxu0 0.0
    %3545 = vmatprep.subr.mxu0 0.0
    %3546 = vmatpush1.msra.mxu0 0.0
    %3547 = vmatprep.subr.mxu0 0.0
    %3548 = vmatpush1.msra.mxu0 0.0
    %3549 = vmatprep.subr.mxu0 0.0
    %3550 = vmatpush1.msra.mxu0 0.0
    %3551 = vmatprep.subr.mxu0 0.0
    %3552 = vmatpush1.msra.mxu0 0.0
    %3553 = vmatprep.subr.mxu0 0.0
    %3554 = vmatpush1.msra.mxu0 0.0
    %3555 = vmatprep.subr.mxu0 0.0
    %3556 = vmatpush1.msra.mxu0 0.0
    %3557 = vmatprep.subr.mxu0 0.0
    %3558 = vmatpush1.msra.mxu0 0.0
    %3559 = vmatprep.subr.mxu0 0.0
    %3560 = vmatpush1.msra.mxu0 %v3534
    %3561 = vmatprep.subr.mxu0 0.0
    %3562 = vmatpush1.msra.mxu0 %v3533
    %3563 = vmatprep.subr.mxu0 0.0
    %3564 = vmatpush1.msra.mxu0 %v3532
    %3565 = vmatprep.subr.mxu0 0.0
    %3566 = vmatpush1.msra.mxu0 %v3531
    %3567 = vmatprep.subr.mxu0 0.0
    %3568 = vmatpush2.msra.mxu0 0.0
    %3569 = vmatprep.subr.mxu0 0.0
    %3570 = vmatpush2.msra.mxu0 0.0
    %3571 = vmatprep.subr.mxu0 0.0
    %3572 = vmatpush2.msra.mxu0 0.0
    %3573 = vmatprep.subr.mxu0 0.0
    %3574 = vmatpush2.msra.mxu0 0.0
    %3575 = vmatprep.subr.mxu0 0.0
    %3576 = vmatpush2.msra.mxu0 0.0
    %3577 = vmatprep.subr.mxu0 0.0
    %3578 = vmatpush2.msra.mxu0 0.0
    %3579 = vmatprep.subr.mxu0 0.0
    %3580 = vmatpush2.msra.mxu0 0.0
    %3581 = vmatprep.subr.mxu0 0.0
    %3582 = vmatpush2.msra.mxu0 0.0
    %3583 = vmatprep.subr.mxu0 0.0
    %3584 = vmatpush2.msra.mxu0 0.0
    %3585 = vmatprep.subr.mxu0 0.0
    %3586 = vmatpush2.msra.mxu0 0.0
    %3587 = vmatprep.subr.mxu0 0.0
    %3588 = vmatpush2.msra.mxu0 0.0
    %3589 = vmatprep.subr.mxu0 0.0
    %3590 = vmatpush2.msra.mxu0 0.0
    %3591 = vmatprep.subr.mxu0 0.0
    %3592 = vmatpush2.msra.mxu0 0.0
    %3593 = vmatprep.subr.mxu0 0.0
    %3594 = vmatpush2.msra.mxu0 0.0
    %3595 = vmatprep.subr.mxu0 0.0
    %3596 = vmatpush2.msra.mxu0 0.0
    %3597 = vmatprep.subr.mxu0 0.0
    %3598 = vmatpush2.msra.mxu0 0.0
    %3599 = vmatprep.mubr.f32.mxu0 0.0
    %3600 = vmatmul.mubr.f32.gmra.mxu0 %v1407
    %v3601 = vpop.f32.mrf.mxu0
    %v3602 = vadd.f32 0.0, %v3601
    %v3603 = vpop.f32.mrf.mxu0
    %3604 = vmatprep.mubr.f32.mxu0 0.0
    %3605 = vmatmul.mubr.f32.gmra.mxu0 %v1410
    %v3606 = vpop.f32.mrf.mxu0
    %v3607 = vadd.f32 0.0, %v3606
    %v3608 = vpop.f32.mrf.mxu0
    %3609 = vdwg.mxu0
    %v3611 = vlaneseq
    %v3612 = vshrl.u32 %v3611, 7
    %v3613 = vsub.s32 0, %v3612
    %v3614 = vrot.slane %v3529, %v3613
    %v3616 = vadd.f32 %v3614, %v3602
    %v3617 = vadd.f32 %v3614, %v3607
    %s3618 = scalar_lea.vmem %s15, 128
    %v3619 = vld [vmem:[%s3618] sm:$0xff]
    %v3620 = vld [vmem:[%s3618 + $0x8] sm:$0xff]
    %v3621 = vld [vmem:[%s3618 + $0x10] sm:$0xff]
    %v3622 = vld [vmem:[%s3618 + $0x18] sm:$0xff]
    %3623 = vmatprep.subr.mxu0 0.0
    %3624 = vmatpush1.msra.mxu0 0.0
    %3625 = vmatprep.subr.mxu0 0.0
    %3626 = vmatpush1.msra.mxu0 0.0
    %3627 = vmatprep.subr.mxu0 0.0
    %3628 = vmatpush1.msra.mxu0 0.0
    %3629 = vmatprep.subr.mxu0 0.0
    %3630 = vmatpush1.msra.mxu0 0.0
    %3631 = vmatprep.subr.mxu0 0.0
    %3632 = vmatpush1.msra.mxu0 0.0
    %3633 = vmatprep.subr.mxu0 0.0
    %3634 = vmatpush1.msra.mxu0 0.0
    %3635 = vmatprep.subr.mxu0 0.0
    %3636 = vmatpush1.msra.mxu0 0.0
    %3637 = vmatprep.subr.mxu0 0.0
    %3638 = vmatpush1.msra.mxu0 0.0
    %3639 = vmatprep.subr.mxu0 0.0
    %3640 = vmatpush1.msra.mxu0 0.0
    %3641 = vmatprep.subr.mxu0 0.0
    %3642 = vmatpush1.msra.mxu0 0.0
    %3643 = vmatprep.subr.mxu0 0.0
    %3644 = vmatpush1.msra.mxu0 0.0
    %3645 = vmatprep.subr.mxu0 0.0
    %3646 = vmatpush1.msra.mxu0 0.0
    %3647 = vmatprep.subr.mxu0 0.0
    %3648 = vmatpush1.msra.mxu0 %v3622
    %3649 = vmatprep.subr.mxu0 0.0
    %3650 = vmatpush1.msra.mxu0 %v3621
    %3651 = vmatprep.subr.mxu0 0.0
    %3652 = vmatpush1.msra.mxu0 %v3620
    %3653 = vmatprep.subr.mxu0 0.0
    %3654 = vmatpush1.msra.mxu0 %v3619
    %3655 = vmatprep.subr.mxu0 0.0
    %3656 = vmatpush2.msra.mxu0 0.0
    %3657 = vmatprep.subr.mxu0 0.0
    %3658 = vmatpush2.msra.mxu0 0.0
    %3659 = vmatprep.subr.mxu0 0.0
    %3660 = vmatpush2.msra.mxu0 0.0
    %3661 = vmatprep.subr.mxu0 0.0
    %3662 = vmatpush2.msra.mxu0 0.0
    %3663 = vmatprep.subr.mxu0 0.0
    %3664 = vmatpush2.msra.mxu0 0.0
    %3665 = vmatprep.subr.mxu0 0.0
    %3666 = vmatpush2.msra.mxu0 0.0
    %3667 = vmatprep.subr.mxu0 0.0
    %3668 = vmatpush2.msra.mxu0 0.0
    %3669 = vmatprep.subr.mxu0 0.0
    %3670 = vmatpush2.msra.mxu0 0.0
    %3671 = vmatprep.subr.mxu0 0.0
    %3672 = vmatpush2.msra.mxu0 0.0
    %3673 = vmatprep.subr.mxu0 0.0
    %3674 = vmatpush2.msra.mxu0 0.0
    %3675 = vmatprep.subr.mxu0 0.0
    %3676 = vmatpush2.msra.mxu0 0.0
    %3677 = vmatprep.subr.mxu0 0.0
    %3678 = vmatpush2.msra.mxu0 0.0
    %3679 = vmatprep.subr.mxu0 0.0
    %3680 = vmatpush2.msra.mxu0 0.0
    %3681 = vmatprep.subr.mxu0 0.0
    %3682 = vmatpush2.msra.mxu0 0.0
    %3683 = vmatprep.subr.mxu0 0.0
    %3684 = vmatpush2.msra.mxu0 0.0
    %3685 = vmatprep.subr.mxu0 0.0
    %3686 = vmatpush2.msra.mxu0 0.0
    %3687 = vmatprep.mubr.f32.mxu0 0.0
    %3688 = vmatmul.mubr.f32.gmra.mxu0 %v1716
    %v3689 = vpop.f32.mrf.mxu0
    %v3690 = vadd.f32 0.0, %v3689
    %v3691 = vpop.f32.mrf.mxu0
    %3692 = vmatprep.mubr.f32.mxu0 0.0
    %3693 = vmatmul.mubr.f32.gmra.mxu0 %v1719
    %v3694 = vpop.f32.mrf.mxu0
    %v3695 = vadd.f32 0.0, %v3694
    %v3696 = vpop.f32.mrf.mxu0
    %3697 = vdwg.mxu0
    %v3698 = vadd.f32 %v3616, %v3690
    %v3699 = vadd.f32 %v3617, %v3695
    %s3700 = scalar_lea.vmem %s15, 160
    %v3701 = vld [vmem:[%s3700] sm:$0xff]
    %v3702 = vld [vmem:[%s3700 + $0x8] sm:$0xff]
    %v3703 = vld [vmem:[%s3700 + $0x10] sm:$0xff]
    %v3704 = vld [vmem:[%s3700 + $0x18] sm:$0xff]
    %3705 = vmatprep.subr.mxu0 0.0
    %3706 = vmatpush1.msra.mxu0 0.0
    %3707 = vmatprep.subr.mxu0 0.0
    %3708 = vmatpush1.msra.mxu0 0.0
    %3709 = vmatprep.subr.mxu0 0.0
    %3710 = vmatpush1.msra.mxu0 0.0
    %3711 = vmatprep.subr.mxu0 0.0
    %3712 = vmatpush1.msra.mxu0 0.0
    %3713 = vmatprep.subr.mxu0 0.0
    %3714 = vmatpush1.msra.mxu0 0.0
    %3715 = vmatprep.subr.mxu0 0.0
    %3716 = vmatpush1.msra.mxu0 0.0
    %3717 = vmatprep.subr.mxu0 0.0
    %3718 = vmatpush1.msra.mxu0 0.0
    %3719 = vmatprep.subr.mxu0 0.0
    %3720 = vmatpush1.msra.mxu0 0.0
    %3721 = vmatprep.subr.mxu0 0.0
    %3722 = vmatpush1.msra.mxu0 0.0
    %3723 = vmatprep.subr.mxu0 0.0
    %3724 = vmatpush1.msra.mxu0 0.0
    %3725 = vmatprep.subr.mxu0 0.0
    %3726 = vmatpush1.msra.mxu0 0.0
    %3727 = vmatprep.subr.mxu0 0.0
    %3728 = vmatpush1.msra.mxu0 0.0
    %3729 = vmatprep.subr.mxu0 0.0
    %3730 = vmatpush1.msra.mxu0 %v3704
    %3731 = vmatprep.subr.mxu0 0.0
    %3732 = vmatpush1.msra.mxu0 %v3703
    %3733 = vmatprep.subr.mxu0 0.0
    %3734 = vmatpush1.msra.mxu0 %v3702
    %3735 = vmatprep.subr.mxu0 0.0
    %3736 = vmatpush1.msra.mxu0 %v3701
    %3737 = vmatprep.subr.mxu0 0.0
    %3738 = vmatpush2.msra.mxu0 0.0
    %3739 = vmatprep.subr.mxu0 0.0
    %3740 = vmatpush2.msra.mxu0 0.0
    %3741 = vmatprep.subr.mxu0 0.0
    %3742 = vmatpush2.msra.mxu0 0.0
    %3743 = vmatprep.subr.mxu0 0.0
    %3744 = vmatpush2.msra.mxu0 0.0
    %3745 = vmatprep.subr.mxu0 0.0
    %3746 = vmatpush2.msra.mxu0 0.0
    %3747 = vmatprep.subr.mxu0 0.0
    %3748 = vmatpush2.msra.mxu0 0.0
    %3749 = vmatprep.subr.mxu0 0.0
    %3750 = vmatpush2.msra.mxu0 0.0
    %3751 = vmatprep.subr.mxu0 0.0
    %3752 = vmatpush2.msra.mxu0 0.0
    %3753 = vmatprep.subr.mxu0 0.0
    %3754 = vmatpush2.msra.mxu0 0.0
    %3755 = vmatprep.subr.mxu0 0.0
    %3756 = vmatpush2.msra.mxu0 0.0
    %3757 = vmatprep.subr.mxu0 0.0
    %3758 = vmatpush2.msra.mxu0 0.0
    %3759 = vmatprep.subr.mxu0 0.0
    %3760 = vmatpush2.msra.mxu0 0.0
    %3761 = vmatprep.subr.mxu0 0.0
    %3762 = vmatpush2.msra.mxu0 0.0
    %3763 = vmatprep.subr.mxu0 0.0
    %3764 = vmatpush2.msra.mxu0 0.0
    %3765 = vmatprep.subr.mxu0 0.0
    %3766 = vmatpush2.msra.mxu0 0.0
    %3767 = vmatprep.subr.mxu0 0.0
    %3768 = vmatpush2.msra.mxu0 0.0
    %3769 = vmatprep.mubr.f32.mxu0 0.0
    %3770 = vmatmul.mubr.f32.gmra.mxu0 %v2066
    %v3771 = vpop.f32.mrf.mxu0
    %v3772 = vadd.f32 0.0, %v3771
    %v3773 = vpop.f32.mrf.mxu0
    %3774 = vmatprep.mubr.f32.mxu0 0.0
    %3775 = vmatmul.mubr.f32.gmra.mxu0 %v2069
    %v3776 = vpop.f32.mrf.mxu0
    %v3777 = vadd.f32 0.0, %v3776
    %v3778 = vpop.f32.mrf.mxu0
    %3779 = vdwg.mxu0
    %v3780 = vadd.f32 %v3698, %v3772
    %v3781 = vadd.f32 %v3699, %v3777
    %vm3782 = vcmp.gt.f32.partialorder %v3780, 0.0
    %vm3783 = vcmp.gt.f32.partialorder %v3781, 0.0
    %v3784 = vmul.f32 %v3780, 0.01
    %v3785 = vmul.f32 %v3781, 0.01
    %v3786 = vsel %vm3782, %v3780, %v3784
    %v3787 = vsel %vm3783, %v3781, %v3785
    %s3788 = scalar_lea.vmem %s17, 128
    %v3789 = vld [vmem:[%s3788] sm:$0xff]
    %v3790 = vld [vmem:[%s3788 + $0x8] sm:$0xff]
    %v3791 = vld [vmem:[%s3788 + $0x10] sm:$0xff]
    %v3792 = vld [vmem:[%s3788 + $0x18] sm:$0xff]
    %v3793 = vld [vmem:[%s3788 + $0x20] sm:$0xff]
    %v3794 = vld [vmem:[%s3788 + $0x28] sm:$0xff]
    %v3795 = vld [vmem:[%s3788 + $0x30] sm:$0xff]
    %v3796 = vld [vmem:[%s3788 + $0x38] sm:$0xff]
    %v3797 = vld [vmem:[%s3788 + $0x40] sm:$0xff]
    %v3798 = vld [vmem:[%s3788 + $0x48] sm:$0xff]
    %v3799 = vld [vmem:[%s3788 + $0x50] sm:$0xff]
    %v3800 = vld [vmem:[%s3788 + $0x58] sm:$0xff]
    %v3801 = vld [vmem:[%s3788 + $0x60] sm:$0xff]
    %v3802 = vld [vmem:[%s3788 + $0x68] sm:$0xff]
    %v3803 = vld [vmem:[%s3788 + $0x70] sm:$0xff]
    %v3804 = vld [vmem:[%s3788 + $0x78] sm:$0xff]
    %s3805 = scalar_lea.vmem %s18, 1
    %v3806 = vld [vmem:[%s3805] sm:$0x1]
    %v3808 = vlaneseq
    %v3809 = vshrl.u32 %v3808, 7
    %v3810 = vsub.s32 0, %v3809
    %v3811 = vrot.slane %v3806, %v3810
    %3813 = vmatprep.subr.mxu0 0.0
    %3814 = vmatpush1.msra.mxu0 %v3804
    %3815 = vmatprep.subr.mxu0 0.0
    %3816 = vmatpush1.msra.mxu0 %v3803
    %3817 = vmatprep.subr.mxu0 0.0
    %3818 = vmatpush1.msra.mxu0 %v3802
    %3819 = vmatprep.subr.mxu0 0.0
    %3820 = vmatpush1.msra.mxu0 %v3801
    %3821 = vmatprep.subr.mxu0 0.0
    %3822 = vmatpush1.msra.mxu0 %v3800
    %3823 = vmatprep.subr.mxu0 0.0
    %3824 = vmatpush1.msra.mxu0 %v3799
    %3825 = vmatprep.subr.mxu0 0.0
    %3826 = vmatpush1.msra.mxu0 %v3798
    %3827 = vmatprep.subr.mxu0 0.0
    %3828 = vmatpush1.msra.mxu0 %v3797
    %3829 = vmatprep.subr.mxu0 0.0
    %3830 = vmatpush1.msra.mxu0 %v3796
    %3831 = vmatprep.subr.mxu0 0.0
    %3832 = vmatpush1.msra.mxu0 %v3795
    %3833 = vmatprep.subr.mxu0 0.0
    %3834 = vmatpush1.msra.mxu0 %v3794
    %3835 = vmatprep.subr.mxu0 0.0
    %3836 = vmatpush1.msra.mxu0 %v3793
    %3837 = vmatprep.subr.mxu0 0.0
    %3838 = vmatpush1.msra.mxu0 %v3792
    %3839 = vmatprep.subr.mxu0 0.0
    %3840 = vmatpush1.msra.mxu0 %v3791
    %3841 = vmatprep.subr.mxu0 0.0
    %3842 = vmatpush1.msra.mxu0 %v3790
    %3843 = vmatprep.subr.mxu0 0.0
    %3844 = vmatpush1.msra.mxu0 %v3789
    %3845 = vmatprep.subr.mxu0 0.0
    %3846 = vmatpush2.msra.mxu0 0.0
    %3847 = vmatprep.subr.mxu0 0.0
    %3848 = vmatpush2.msra.mxu0 0.0
    %3849 = vmatprep.subr.mxu0 0.0
    %3850 = vmatpush2.msra.mxu0 0.0
    %3851 = vmatprep.subr.mxu0 0.0
    %3852 = vmatpush2.msra.mxu0 0.0
    %3853 = vmatprep.subr.mxu0 0.0
    %3854 = vmatpush2.msra.mxu0 0.0
    %3855 = vmatprep.subr.mxu0 0.0
    %3856 = vmatpush2.msra.mxu0 0.0
    %3857 = vmatprep.subr.mxu0 0.0
    %3858 = vmatpush2.msra.mxu0 0.0
    %3859 = vmatprep.subr.mxu0 0.0
    %3860 = vmatpush2.msra.mxu0 0.0
    %3861 = vmatprep.subr.mxu0 0.0
    %3862 = vmatpush2.msra.mxu0 0.0
    %3863 = vmatprep.subr.mxu0 0.0
    %3864 = vmatpush2.msra.mxu0 0.0
    %3865 = vmatprep.subr.mxu0 0.0
    %3866 = vmatpush2.msra.mxu0 0.0
    %3867 = vmatprep.subr.mxu0 0.0
    %3868 = vmatpush2.msra.mxu0 0.0
    %3869 = vmatprep.subr.mxu0 0.0
    %3870 = vmatpush2.msra.mxu0 0.0
    %3871 = vmatprep.subr.mxu0 0.0
    %3872 = vmatpush2.msra.mxu0 0.0
    %3873 = vmatprep.subr.mxu0 0.0
    %3874 = vmatpush2.msra.mxu0 0.0
    %3875 = vmatprep.subr.mxu0 0.0
    %3876 = vmatpush2.msra.mxu0 0.0
    %3877 = vmatprep.mubr.f32.mxu0 0.0
    %3878 = vmatmul.mubr.f32.gmra.mxu0 %v3786
    %v3879 = vpop.f32.mrf.mxu0
    %v3880 = vadd.f32 %v3811, %v3879
    %v3881 = vpop.f32.mrf.mxu0
    %3882 = vmatprep.mubr.f32.mxu0 0.0
    %3883 = vmatmul.mubr.f32.gmra.mxu0 %v3787
    %v3884 = vpop.f32.mrf.mxu0
    %v3885 = vadd.f32 %v3811, %v3884
    %v3886 = vpop.f32.mrf.mxu0
    %3887 = vdwg.mxu0
    %v3888 = vtanh.pop %v3880
    %v3889 = vtanh.pop %v3885
    %s3890 = scalar_lea.vmem %s19, 128
    %v3891 = vld [vmem:[%s3890] sm:$0xff]
    %v3892 = vld [vmem:[%s3890 + $0x8] sm:$0xff]
    %v3893 = vld [vmem:[%s3890 + $0x10] sm:$0xff]
    %v3894 = vld [vmem:[%s3890 + $0x18] sm:$0xff]
    %v3895 = vld [vmem:[%s3890 + $0x20] sm:$0xff]
    %v3896 = vld [vmem:[%s3890 + $0x28] sm:$0xff]
    %v3897 = vld [vmem:[%s3890 + $0x30] sm:$0xff]
    %v3898 = vld [vmem:[%s3890 + $0x38] sm:$0xff]
    %v3899 = vld [vmem:[%s3890 + $0x40] sm:$0xff]
    %v3900 = vld [vmem:[%s3890 + $0x48] sm:$0xff]
    %v3901 = vld [vmem:[%s3890 + $0x50] sm:$0xff]
    %v3902 = vld [vmem:[%s3890 + $0x58] sm:$0xff]
    %v3903 = vld [vmem:[%s3890 + $0x60] sm:$0xff]
    %v3904 = vld [vmem:[%s3890 + $0x68] sm:$0xff]
    %v3905 = vld [vmem:[%s3890 + $0x70] sm:$0xff]
    %v3906 = vld [vmem:[%s3890 + $0x78] sm:$0xff]
    %s3907 = scalar_lea.vmem %s20, 1
    %v3908 = vld [vmem:[%s3907] sm:$0x1]
    %v3910 = vlaneseq
    %v3911 = vshrl.u32 %v3910, 7
    %v3912 = vsub.s32 0, %v3911
    %v3913 = vrot.slane %v3908, %v3912
    %3915 = vmatprep.subr.mxu0 0.0
    %3916 = vmatpush1.msra.mxu0 %v3906
    %3917 = vmatprep.subr.mxu0 0.0
    %3918 = vmatpush1.msra.mxu0 %v3905
    %3919 = vmatprep.subr.mxu0 0.0
    %3920 = vmatpush1.msra.mxu0 %v3904
    %3921 = vmatprep.subr.mxu0 0.0
    %3922 = vmatpush1.msra.mxu0 %v3903
    %3923 = vmatprep.subr.mxu0 0.0
    %3924 = vmatpush1.msra.mxu0 %v3902
    %3925 = vmatprep.subr.mxu0 0.0
    %3926 = vmatpush1.msra.mxu0 %v3901
    %3927 = vmatprep.subr.mxu0 0.0
    %3928 = vmatpush1.msra.mxu0 %v3900
    %3929 = vmatprep.subr.mxu0 0.0
    %3930 = vmatpush1.msra.mxu0 %v3899
    %3931 = vmatprep.subr.mxu0 0.0
    %3932 = vmatpush1.msra.mxu0 %v3898
    %3933 = vmatprep.subr.mxu0 0.0
    %3934 = vmatpush1.msra.mxu0 %v3897
    %3935 = vmatprep.subr.mxu0 0.0
    %3936 = vmatpush1.msra.mxu0 %v3896
    %3937 = vmatprep.subr.mxu0 0.0
    %3938 = vmatpush1.msra.mxu0 %v3895
    %3939 = vmatprep.subr.mxu0 0.0
    %3940 = vmatpush1.msra.mxu0 %v3894
    %3941 = vmatprep.subr.mxu0 0.0
    %3942 = vmatpush1.msra.mxu0 %v3893
    %3943 = vmatprep.subr.mxu0 0.0
    %3944 = vmatpush1.msra.mxu0 %v3892
    %3945 = vmatprep.subr.mxu0 0.0
    %3946 = vmatpush1.msra.mxu0 %v3891
    %3947 = vmatprep.subr.mxu0 0.0
    %3948 = vmatpush2.msra.mxu0 0.0
    %3949 = vmatprep.subr.mxu0 0.0
    %3950 = vmatpush2.msra.mxu0 0.0
    %3951 = vmatprep.subr.mxu0 0.0
    %3952 = vmatpush2.msra.mxu0 0.0
    %3953 = vmatprep.subr.mxu0 0.0
    %3954 = vmatpush2.msra.mxu0 0.0
    %3955 = vmatprep.subr.mxu0 0.0
    %3956 = vmatpush2.msra.mxu0 0.0
    %3957 = vmatprep.subr.mxu0 0.0
    %3958 = vmatpush2.msra.mxu0 0.0
    %3959 = vmatprep.subr.mxu0 0.0
    %3960 = vmatpush2.msra.mxu0 0.0
    %3961 = vmatprep.subr.mxu0 0.0
    %3962 = vmatpush2.msra.mxu0 0.0
    %3963 = vmatprep.subr.mxu0 0.0
    %3964 = vmatpush2.msra.mxu0 0.0
    %3965 = vmatprep.subr.mxu0 0.0
    %3966 = vmatpush2.msra.mxu0 0.0
    %3967 = vmatprep.subr.mxu0 0.0
    %3968 = vmatpush2.msra.mxu0 0.0
    %3969 = vmatprep.subr.mxu0 0.0
    %3970 = vmatpush2.msra.mxu0 0.0
    %3971 = vmatprep.subr.mxu0 0.0
    %3972 = vmatpush2.msra.mxu0 0.0
    %3973 = vmatprep.subr.mxu0 0.0
    %3974 = vmatpush2.msra.mxu0 0.0
    %3975 = vmatprep.subr.mxu0 0.0
    %3976 = vmatpush2.msra.mxu0 0.0
    %3977 = vmatprep.subr.mxu0 0.0
    %3978 = vmatpush2.msra.mxu0 0.0
    %3979 = vmatprep.mubr.f32.mxu0 0.0
    %3980 = vmatmul.mubr.f32.gmra.mxu0 %v3786
    %v3981 = vpop.f32.mrf.mxu0
    %v3982 = vadd.f32 %v3913, %v3981
    %v3983 = vpop.f32.mrf.mxu0
    %3984 = vmatprep.mubr.f32.mxu0 0.0
    %3985 = vmatmul.mubr.f32.gmra.mxu0 %v3787
    %v3986 = vpop.f32.mrf.mxu0
    %v3987 = vadd.f32 %v3913, %v3986
    %v3988 = vpop.f32.mrf.mxu0
    %3989 = vdwg.mxu0
    %v3990 = vxor.u32 %v3982, 2147483648
    %v3991 = vxor.u32 %v3987, 2147483648
    %v3992 = vmul.f32 %v3990, 1.442695
    %v3993 = vpow.pop %v3992
    %v3994 = vmul.f32 %v3991, 1.442695
    %v3995 = vpow.pop %v3994
    %v3996 = vadd.f32 %v3993, 1.0
    %v3997 = vadd.f32 %v3995, 1.0
    %v3998 = vrcp.pop %v3996
    %v3999 = vmul.f32 1.0, %v3998
    %v4000 = vrcp.pop %v3997
    %v4001 = vmul.f32 1.0, %v4000
    %v4002 = vmul.f32 %v3888, %v3999
    %v4003 = vmul.f32 %v3889, %v4001
    %s4004 = scalar_lea.vmem %s21, 1
    %v4005 = vld [vmem:[%s4004] sm:$0x1]
    %s4006 = scalar_lea.vmem %s22, 1
    %v4007 = vld [vmem:[%s4006] sm:$0x1]
    %4009 = vset.pattern.permute.xlu0 0
    %4010 = vperm.xlu0 %4009, %v4007
    %v4011 = vpop.permute.xlu0 %4010
    %v4013 = vlaneseq
    %v4014 = vshrl.u32 %v4013, 7
    %v4015 = vsub.s32 0, %v4014
    %v4016 = vrot.slane %v4011, %v4015
    %4017 = vmatprep.subr.mxu0 0.0
    %4018 = vmatpush1.xpose.msra.mxu0 0.0
    %4019 = vmatprep.subr.mxu0 0.0
    %4020 = vmatpush1.xpose.msra.mxu0 0.0
    %4021 = vmatprep.subr.mxu0 0.0
    %4022 = vmatpush1.xpose.msra.mxu0 0.0
    %4023 = vmatprep.subr.mxu0 0.0
    %4024 = vmatpush1.xpose.msra.mxu0 0.0
    %4025 = vmatprep.subr.mxu0 0.0
    %4026 = vmatpush1.xpose.msra.mxu0 0.0
    %4027 = vmatprep.subr.mxu0 0.0
    %4028 = vmatpush1.xpose.msra.mxu0 0.0
    %4029 = vmatprep.subr.mxu0 0.0
    %4030 = vmatpush1.xpose.msra.mxu0 0.0
    %4031 = vmatprep.subr.mxu0 0.0
    %4032 = vmatpush1.xpose.msra.mxu0 0.0
    %4033 = vmatprep.subr.mxu0 0.0
    %4034 = vmatpush1.xpose.msra.mxu0 0.0
    %4035 = vmatprep.subr.mxu0 0.0
    %4036 = vmatpush1.xpose.msra.mxu0 0.0
    %4037 = vmatprep.subr.mxu0 0.0
    %4038 = vmatpush1.xpose.msra.mxu0 0.0
    %4039 = vmatprep.subr.mxu0 0.0
    %4040 = vmatpush1.xpose.msra.mxu0 0.0
    %4041 = vmatprep.subr.mxu0 0.0
    %4042 = vmatpush1.xpose.msra.mxu0 0.0
    %4043 = vmatprep.subr.mxu0 0.0
    %4044 = vmatpush1.xpose.msra.mxu0 0.0
    %4045 = vmatprep.subr.mxu0 0.0
    %4046 = vmatpush1.xpose.msra.mxu0 %v4003
    %4047 = vmatprep.subr.mxu0 0.0
    %4048 = vmatpush1.xpose.msra.mxu0 %v4002
    %4049 = vmatprep.subr.mxu0 0.0
    %4050 = vmatpush2.xpose.msra.mxu0 0.0
    %4051 = vmatprep.subr.mxu0 0.0
    %4052 = vmatpush2.xpose.msra.mxu0 0.0
    %4053 = vmatprep.subr.mxu0 0.0
    %4054 = vmatpush2.xpose.msra.mxu0 0.0
    %4055 = vmatprep.subr.mxu0 0.0
    %4056 = vmatpush2.xpose.msra.mxu0 0.0
    %4057 = vmatprep.subr.mxu0 0.0
    %4058 = vmatpush2.xpose.msra.mxu0 0.0
    %4059 = vmatprep.subr.mxu0 0.0
    %4060 = vmatpush2.xpose.msra.mxu0 0.0
    %4061 = vmatprep.subr.mxu0 0.0
    %4062 = vmatpush2.xpose.msra.mxu0 0.0
    %4063 = vmatprep.subr.mxu0 0.0
    %4064 = vmatpush2.xpose.msra.mxu0 0.0
    %4065 = vmatprep.subr.mxu0 0.0
    %4066 = vmatpush2.xpose.msra.mxu0 0.0
    %4067 = vmatprep.subr.mxu0 0.0
    %4068 = vmatpush2.xpose.msra.mxu0 0.0
    %4069 = vmatprep.subr.mxu0 0.0
    %4070 = vmatpush2.xpose.msra.mxu0 0.0
    %4071 = vmatprep.subr.mxu0 0.0
    %4072 = vmatpush2.xpose.msra.mxu0 0.0
    %4073 = vmatprep.subr.mxu0 0.0
    %4074 = vmatpush2.xpose.msra.mxu0 0.0
    %4075 = vmatprep.subr.mxu0 0.0
    %4076 = vmatpush2.xpose.msra.mxu0 0.0
    %4077 = vmatprep.subr.mxu0 0.0
    %4078 = vmatpush2.xpose.msra.mxu0 0.0
    %4079 = vmatprep.subr.mxu0 0.0
    %4080 = vmatpush2.xpose.msra.mxu0 0.0
    %4081 = vmatprep.mubr.f32.mxu0 0.0
    %4082 = vmatmul.mubr.f32.gmra.mxu0 %v4005
    %v4083 = vpop.f32.mrf.mxu0
    %v4084 = vadd.f32 %v4016, %v4083
    %v4085 = vpop.f32.mrf.mxu0
    %4086 = vdwg.mxu0
    %v4087 = vsel %vm3394, %v4084, -inf
    %4088 = vmax.xlane.f32.xlu0 %v4087
    %v4089 = vpop.xlane.xlu0 %4088
    %v4090 = vsub.f32 %v4084, %v4089
    %v4091 = vmul.f32 %v4090, 1.442695
    %v4092 = vpow.pop %v4091
    %v4093 = vsel %vm3394, %v4092, 0.0
    %4094 = vadd.xlane.f32.xlu0 %v4093
    %v4095 = vpop.xlane.xlu0 %4094
    %v4096 = vrcp.pop %v4095
    %v4097 = vmul.f32 %v4092, %v4096
    %s4098 = scalar_lea.vmem [#allocation4], 1
    %4099 = vst.msk [vmem:[%s4098] sm:$0x1] %vm3394, %v4097
    %v4101 = vsel %vm256, %v4097, 0
    %4103 = vmatprep.subr.mxu0 0.0
    %4104 = vmatpush1.msra.mxu0 0.0
    %4105 = vmatprep.subr.mxu0 0.0
    %4106 = vmatpush1.msra.mxu0 0.0
    %4107 = vmatprep.subr.mxu0 0.0
    %4108 = vmatpush1.msra.mxu0 0.0
    %4109 = vmatprep.subr.mxu0 0.0
    %4110 = vmatpush1.msra.mxu0 0.0
    %4111 = vmatprep.subr.mxu0 0.0
    %4112 = vmatpush1.msra.mxu0 0.0
    %4113 = vmatprep.subr.mxu0 0.0
    %4114 = vmatpush1.msra.mxu0 0.0
    %4115 = vmatprep.subr.mxu0 0.0
    %4116 = vmatpush1.msra.mxu0 0.0
    %4117 = vmatprep.subr.mxu0 0.0
    %4118 = vmatpush1.msra.mxu0 0.0
    %4119 = vmatprep.subr.mxu0 0.0
    %4120 = vmatpush1.msra.mxu0 0.0
    %4121 = vmatprep.subr.mxu0 0.0
    %4122 = vmatpush1.msra.mxu0 0.0
    %4123 = vmatprep.subr.mxu0 0.0
    %4124 = vmatpush1.msra.mxu0 0.0
    %4125 = vmatprep.subr.mxu0 0.0
    %4126 = vmatpush1.msra.mxu0 0.0
    %4127 = vmatprep.subr.mxu0 0.0
    %4128 = vmatpush1.msra.mxu0 0.0
    %4129 = vmatprep.subr.mxu0 0.0
    %4130 = vmatpush1.msra.mxu0 0.0
    %4131 = vmatprep.subr.mxu0 0.0
    %4132 = vmatpush1.msra.mxu0 %v3787
    %4133 = vmatprep.subr.mxu0 0.0
    %4134 = vmatpush1.msra.mxu0 %v3786
    %4135 = vmatprep.subr.mxu0 0.0
    %4136 = vmatpush2.msra.mxu0 0.0
    %4137 = vmatprep.subr.mxu0 0.0
    %4138 = vmatpush2.msra.mxu0 0.0
    %4139 = vmatprep.subr.mxu0 0.0
    %4140 = vmatpush2.msra.mxu0 0.0
    %4141 = vmatprep.subr.mxu0 0.0
    %4142 = vmatpush2.msra.mxu0 0.0
    %4143 = vmatprep.subr.mxu0 0.0
    %4144 = vmatpush2.msra.mxu0 0.0
    %4145 = vmatprep.subr.mxu0 0.0
    %4146 = vmatpush2.msra.mxu0 0.0
    %4147 = vmatprep.subr.mxu0 0.0
    %4148 = vmatpush2.msra.mxu0 0.0
    %4149 = vmatprep.subr.mxu0 0.0
    %4150 = vmatpush2.msra.mxu0 0.0
    %4151 = vmatprep.subr.mxu0 0.0
    %4152 = vmatpush2.msra.mxu0 0.0
    %4153 = vmatprep.subr.mxu0 0.0
    %4154 = vmatpush2.msra.mxu0 0.0
    %4155 = vmatprep.subr.mxu0 0.0
    %4156 = vmatpush2.msra.mxu0 0.0
    %4157 = vmatprep.subr.mxu0 0.0
    %4158 = vmatpush2.msra.mxu0 0.0
    %4159 = vmatprep.subr.mxu0 0.0
    %4160 = vmatpush2.msra.mxu0 0.0
    %4161 = vmatprep.subr.mxu0 0.0
    %4162 = vmatpush2.msra.mxu0 0.0
    %4163 = vmatprep.subr.mxu0 0.0
    %4164 = vmatpush2.msra.mxu0 0.0
    %4165 = vmatprep.subr.mxu0 0.0
    %4166 = vmatpush2.msra.mxu0 0.0
    %4167 = vmatprep.mubr.f32.mxu0 0.0
    %4168 = vmatmul.mubr.f32.gmra.mxu0 %v4101
    %v4169 = vpop.f32.mrf.mxu0
    %v4170 = vadd.f32 0.0, %v4169
    %v4171 = vpop.f32.mrf.mxu0
    %4172 = vdwg.mxu0
    %s4173 = scalar_lea.vmem %s23, 384
    %v4174 = vld [vmem:[%s4173] sm:$0xff]
    %v4175 = vld [vmem:[%s4173 + $0x8] sm:$0xff]
    %v4176 = vld [vmem:[%s4173 + $0x10] sm:$0xff]
    %v4177 = vld [vmem:[%s4173 + $0x18] sm:$0xff]
    %v4178 = vld [vmem:[%s4173 + $0x20] sm:$0xff]
    %v4179 = vld [vmem:[%s4173 + $0x28] sm:$0xff]
    %v4180 = vld [vmem:[%s4173 + $0x30] sm:$0xff]
    %v4181 = vld [vmem:[%s4173 + $0x38] sm:$0xff]
    %v4182 = vld [vmem:[%s4173 + $0x40] sm:$0xff]
    %v4183 = vld [vmem:[%s4173 + $0x48] sm:$0xff]
    %v4184 = vld [vmem:[%s4173 + $0x50] sm:$0xff]
    %v4185 = vld [vmem:[%s4173 + $0x58] sm:$0xff]
    %v4186 = vld [vmem:[%s4173 + $0x60] sm:$0xff]
    %v4187 = vld [vmem:[%s4173 + $0x68] sm:$0xff]
    %v4188 = vld [vmem:[%s4173 + $0x70] sm:$0xff]
    %v4189 = vld [vmem:[%s4173 + $0x78] sm:$0xff]
    %v4190 = vld [vmem:[%s4173 + $0x80] sm:$0xff]
    %v4191 = vld [vmem:[%s4173 + $0x88] sm:$0xff]
    %v4192 = vld [vmem:[%s4173 + $0x90] sm:$0xff]
    %v4193 = vld [vmem:[%s4173 + $0x98] sm:$0xff]
    %v4194 = vld [vmem:[%s4173 + $0xa0] sm:$0xff]
    %v4195 = vld [vmem:[%s4173 + $0xa8] sm:$0xff]
    %v4196 = vld [vmem:[%s4173 + $0xb0] sm:$0xff]
    %v4197 = vld [vmem:[%s4173 + $0xb8] sm:$0xff]
    %v4198 = vld [vmem:[%s4173 + $0xc0] sm:$0xff]
    %v4199 = vld [vmem:[%s4173 + $0xc8] sm:$0xff]
    %v4200 = vld [vmem:[%s4173 + $0xd0] sm:$0xff]
    %v4201 = vld [vmem:[%s4173 + $0xd8] sm:$0xff]
    %v4202 = vld [vmem:[%s4173 + $0xe0] sm:$0xff]
    %v4203 = vld [vmem:[%s4173 + $0xe8] sm:$0xff]
    %v4204 = vld [vmem:[%s4173 + $0xf0] sm:$0xff]
    %v4205 = vld [vmem:[%s4173 + $0xf8] sm:$0xff]
    %v4206 = vld [vmem:[%s4173 + $0x100] sm:$0xff]
    %v4207 = vld [vmem:[%s4173 + $0x108] sm:$0xff]
    %v4208 = vld [vmem:[%s4173 + $0x110] sm:$0xff]
    %v4209 = vld [vmem:[%s4173 + $0x118] sm:$0xff]
    %v4210 = vld [vmem:[%s4173 + $0x120] sm:$0xff]
    %v4211 = vld [vmem:[%s4173 + $0x128] sm:$0xff]
    %v4212 = vld [vmem:[%s4173 + $0x130] sm:$0xff]
    %v4213 = vld [vmem:[%s4173 + $0x138] sm:$0xff]
    %v4214 = vld [vmem:[%s4173 + $0x140] sm:$0xff]
    %v4215 = vld [vmem:[%s4173 + $0x148] sm:$0xff]
    %v4216 = vld [vmem:[%s4173 + $0x150] sm:$0xff]
    %v4217 = vld [vmem:[%s4173 + $0x158] sm:$0xff]
    %v4218 = vld [vmem:[%s4173 + $0x160] sm:$0xff]
    %v4219 = vld [vmem:[%s4173 + $0x168] sm:$0xff]
    %v4220 = vld [vmem:[%s4173 + $0x170] sm:$0xff]
    %v4221 = vld [vmem:[%s4173 + $0x178] sm:$0xff]
    %4222 = vmatprep.subr.mxu0 %v4220
    %4223 = vmatpush1.msra.mxu0 %v4219
    %4224 = vmatprep.subr.mxu0 %v4217
    %4225 = vmatpush1.msra.mxu0 %v4216
    %4226 = vmatprep.subr.mxu0 %v4214
    %4227 = vmatpush1.msra.mxu0 %v4213
    %4228 = vmatprep.subr.mxu0 %v4211
    %4229 = vmatpush1.msra.mxu0 %v4210
    %4230 = vmatprep.subr.mxu0 %v4208
    %4231 = vmatpush1.msra.mxu0 %v4207
    %4232 = vmatprep.subr.mxu0 %v4205
    %4233 = vmatpush1.msra.mxu0 %v4204
    %4234 = vmatprep.subr.mxu0 %v4202
    %4235 = vmatpush1.msra.mxu0 %v4201
    %4236 = vmatprep.subr.mxu0 %v4199
    %4237 = vmatpush1.msra.mxu0 %v4198
    %4238 = vmatprep.subr.mxu0 %v4196
    %4239 = vmatpush1.msra.mxu0 %v4195
    %4240 = vmatprep.subr.mxu0 %v4193
    %4241 = vmatpush1.msra.mxu0 %v4192
    %4242 = vmatprep.subr.mxu0 %v4190
    %4243 = vmatpush1.msra.mxu0 %v4189
    %4244 = vmatprep.subr.mxu0 %v4187
    %4245 = vmatpush1.msra.mxu0 %v4186
    %4246 = vmatprep.subr.mxu0 %v4184
    %4247 = vmatpush1.msra.mxu0 %v4183
    %4248 = vmatprep.subr.mxu0 %v4181
    %4249 = vmatpush1.msra.mxu0 %v4180
    %4250 = vmatprep.subr.mxu0 %v4178
    %4251 = vmatpush1.msra.mxu0 %v4177
    %4252 = vmatprep.subr.mxu0 %v4175
    %4253 = vmatpush1.msra.mxu0 %v4174
    %4254 = vmatprep.subr.mxu0 0.0
    %4255 = vmatpush2.msra.mxu0 0.0
    %4256 = vmatprep.subr.mxu0 0.0
    %4257 = vmatpush2.msra.mxu0 0.0
    %4258 = vmatprep.subr.mxu0 0.0
    %4259 = vmatpush2.msra.mxu0 0.0
    %4260 = vmatprep.subr.mxu0 0.0
    %4261 = vmatpush2.msra.mxu0 0.0
    %4262 = vmatprep.subr.mxu0 0.0
    %4263 = vmatpush2.msra.mxu0 0.0
    %4264 = vmatprep.subr.mxu0 0.0
    %4265 = vmatpush2.msra.mxu0 0.0
    %4266 = vmatprep.subr.mxu0 0.0
    %4267 = vmatpush2.msra.mxu0 0.0
    %4268 = vmatprep.subr.mxu0 0.0
    %4269 = vmatpush2.msra.mxu0 0.0
    %4270 = vmatprep.subr.mxu0 0.0
    %4271 = vmatpush2.msra.mxu0 0.0
    %4272 = vmatprep.subr.mxu0 0.0
    %4273 = vmatpush2.msra.mxu0 0.0
    %4274 = vmatprep.subr.mxu0 0.0
    %4275 = vmatpush2.msra.mxu0 0.0
    %4276 = vmatprep.subr.mxu0 0.0
    %4277 = vmatpush2.msra.mxu0 0.0
    %4278 = vmatprep.subr.mxu0 0.0
    %4279 = vmatpush2.msra.mxu0 0.0
    %4280 = vmatprep.subr.mxu0 0.0
    %4281 = vmatpush2.msra.mxu0 0.0
    %4282 = vmatprep.subr.mxu0 0.0
    %4283 = vmatpush2.msra.mxu0 0.0
    %4284 = vmatprep.subr.mxu0 0.0
    %4285 = vmatpush2.msra.mxu0 0.0
    %4286 = vmatprep.mubr.f32.mxu0 0.0
    %4287 = vmatmul.mubr.f32.gmra.mxu0 %v4170
    %v4288 = vpop.f32.mrf.mxu0
    %v4289 = vadd.f32 0.0, %v4288
    %v4290 = vpop.f32.mrf.mxu0
    %v4291 = vadd.f32 0.0, %v4290
    %4292 = vdwg.mxu0
    %4293 = vmatprep.subr.mxu0 0.0
    %4294 = vmatpush1.msra.mxu0 %v4221
    %4295 = vmatprep.subr.mxu0 0.0
    %4296 = vmatpush1.msra.mxu0 %v4218
    %4297 = vmatprep.subr.mxu0 0.0
    %4298 = vmatpush1.msra.mxu0 %v4215
    %4299 = vmatprep.subr.mxu0 0.0
    %4300 = vmatpush1.msra.mxu0 %v4212
    %4301 = vmatprep.subr.mxu0 0.0
    %4302 = vmatpush1.msra.mxu0 %v4209
    %4303 = vmatprep.subr.mxu0 0.0
    %4304 = vmatpush1.msra.mxu0 %v4206
    %4305 = vmatprep.subr.mxu0 0.0
    %4306 = vmatpush1.msra.mxu0 %v4203
    %4307 = vmatprep.subr.mxu0 0.0
    %4308 = vmatpush1.msra.mxu0 %v4200
    %4309 = vmatprep.subr.mxu0 0.0
    %4310 = vmatpush1.msra.mxu0 %v4197
    %4311 = vmatprep.subr.mxu0 0.0
    %4312 = vmatpush1.msra.mxu0 %v4194
    %4313 = vmatprep.subr.mxu0 0.0
    %4314 = vmatpush1.msra.mxu0 %v4191
    %4315 = vmatprep.subr.mxu0 0.0
    %4316 = vmatpush1.msra.mxu0 %v4188
    %4317 = vmatprep.subr.mxu0 0.0
    %4318 = vmatpush1.msra.mxu0 %v4185
    %4319 = vmatprep.subr.mxu0 0.0
    %4320 = vmatpush1.msra.mxu0 %v4182
    %4321 = vmatprep.subr.mxu0 0.0
    %4322 = vmatpush1.msra.mxu0 %v4179
    %4323 = vmatprep.subr.mxu0 0.0
    %4324 = vmatpush1.msra.mxu0 %v4176
    %4325 = vmatprep.subr.mxu0 0.0
    %4326 = vmatpush2.msra.mxu0 0.0
    %4327 = vmatprep.subr.mxu0 0.0
    %4328 = vmatpush2.msra.mxu0 0.0
    %4329 = vmatprep.subr.mxu0 0.0
    %4330 = vmatpush2.msra.mxu0 0.0
    %4331 = vmatprep.subr.mxu0 0.0
    %4332 = vmatpush2.msra.mxu0 0.0
    %4333 = vmatprep.subr.mxu0 0.0
    %4334 = vmatpush2.msra.mxu0 0.0
    %4335 = vmatprep.subr.mxu0 0.0
    %4336 = vmatpush2.msra.mxu0 0.0
    %4337 = vmatprep.subr.mxu0 0.0
    %4338 = vmatpush2.msra.mxu0 0.0
    %4339 = vmatprep.subr.mxu0 0.0
    %4340 = vmatpush2.msra.mxu0 0.0
    %4341 = vmatprep.subr.mxu0 0.0
    %4342 = vmatpush2.msra.mxu0 0.0
    %4343 = vmatprep.subr.mxu0 0.0
    %4344 = vmatpush2.msra.mxu0 0.0
    %4345 = vmatprep.subr.mxu0 0.0
    %4346 = vmatpush2.msra.mxu0 0.0
    %4347 = vmatprep.subr.mxu0 0.0
    %4348 = vmatpush2.msra.mxu0 0.0
    %4349 = vmatprep.subr.mxu0 0.0
    %4350 = vmatpush2.msra.mxu0 0.0
    %4351 = vmatprep.subr.mxu0 0.0
    %4352 = vmatpush2.msra.mxu0 0.0
    %4353 = vmatprep.subr.mxu0 0.0
    %4354 = vmatpush2.msra.mxu0 0.0
    %4355 = vmatprep.subr.mxu0 0.0
    %4356 = vmatpush2.msra.mxu0 0.0
    %4357 = vmatprep.mubr.f32.mxu0 0.0
    %4358 = vmatmul.mubr.f32.gmra.mxu0 %v4170
    %v4359 = vpop.f32.mrf.mxu0
    %v4360 = vadd.f32 0.0, %v4359
    %v4361 = vpop.f32.mrf.mxu0
    %4362 = vdwg.mxu0
    %4363 = vmatprep.subr.mxu0 %v3526
    %4364 = vmatpush1.msra.mxu0 %v3525
    %4365 = vmatprep.subr.mxu0 %v3523
    %4366 = vmatpush1.msra.mxu0 %v3522
    %4367 = vmatprep.subr.mxu0 %v3520
    %4368 = vmatpush1.msra.mxu0 %v3519
    %4369 = vmatprep.subr.mxu0 %v3517
    %4370 = vmatpush1.msra.mxu0 %v3516
    %4371 = vmatprep.subr.mxu0 %v3514
    %4372 = vmatpush1.msra.mxu0 %v3513
    %4373 = vmatprep.subr.mxu0 %v3511
    %4374 = vmatpush1.msra.mxu0 %v3510
    %4375 = vmatprep.subr.mxu0 %v3508
    %4376 = vmatpush1.msra.mxu0 %v3507
    %4377 = vmatprep.subr.mxu0 %v3505
    %4378 = vmatpush1.msra.mxu0 %v3504
    %4379 = vmatprep.subr.mxu0 %v3502
    %4380 = vmatpush1.msra.mxu0 %v3501
    %4381 = vmatprep.subr.mxu0 %v3499
    %4382 = vmatpush1.msra.mxu0 %v3498
    %4383 = vmatprep.subr.mxu0 %v3496
    %4384 = vmatpush1.msra.mxu0 %v3495
    %4385 = vmatprep.subr.mxu0 %v3493
    %4386 = vmatpush1.msra.mxu0 %v3492
    %4387 = vmatprep.subr.mxu0 %v3490
    %4388 = vmatpush1.msra.mxu0 %v3489
    %4389 = vmatprep.subr.mxu0 %v3487
    %4390 = vmatpush1.msra.mxu0 %v3486
    %4391 = vmatprep.subr.mxu0 %v3484
    %4392 = vmatpush1.msra.mxu0 %v3483
    %4393 = vmatprep.subr.mxu0 %v3481
    %4394 = vmatpush1.msra.mxu0 %v3480
    %4395 = vmatprep.subr.mxu0 0.0
    %4396 = vmatpush2.msra.mxu0 0.0
    %4397 = vmatprep.subr.mxu0 0.0
    %4398 = vmatpush2.msra.mxu0 0.0
    %4399 = vmatprep.subr.mxu0 0.0
    %4400 = vmatpush2.msra.mxu0 0.0
    %4401 = vmatprep.subr.mxu0 0.0
    %4402 = vmatpush2.msra.mxu0 0.0
    %4403 = vmatprep.subr.mxu0 0.0
    %4404 = vmatpush2.msra.mxu0 0.0
    %4405 = vmatprep.subr.mxu0 0.0
    %4406 = vmatpush2.msra.mxu0 0.0
    %4407 = vmatprep.subr.mxu0 0.0
    %4408 = vmatpush2.msra.mxu0 0.0
    %4409 = vmatprep.subr.mxu0 0.0
    %4410 = vmatpush2.msra.mxu0 0.0
    %4411 = vmatprep.subr.mxu0 0.0
    %4412 = vmatpush2.msra.mxu0 0.0
    %4413 = vmatprep.subr.mxu0 0.0
    %4414 = vmatpush2.msra.mxu0 0.0
    %4415 = vmatprep.subr.mxu0 0.0
    %4416 = vmatpush2.msra.mxu0 0.0
    %4417 = vmatprep.subr.mxu0 0.0
    %4418 = vmatpush2.msra.mxu0 0.0
    %4419 = vmatprep.subr.mxu0 0.0
    %4420 = vmatpush2.msra.mxu0 0.0
    %4421 = vmatprep.subr.mxu0 0.0
    %4422 = vmatpush2.msra.mxu0 0.0
    %4423 = vmatprep.subr.mxu0 0.0
    %4424 = vmatpush2.msra.mxu0 0.0
    %4425 = vmatprep.subr.mxu0 0.0
    %4426 = vmatpush2.msra.mxu0 0.0
    %4427 = vmatprep.mubr.f32.mxu0 0.0
    %4428 = vmatmul.mubr.f32.gmra.mxu0 %v3477
    %v4429 = vpop.f32.mrf.mxu0
    %v4430 = vadd.f32 %v4289, %v4429
    %v4431 = vpop.f32.mrf.mxu0
    %v4432 = vadd.f32 %v4291, %v4431
    %4433 = vdwg.mxu0
    %4434 = vmatprep.subr.mxu0 0.0
    %4435 = vmatpush1.msra.mxu0 %v3527
    %4436 = vmatprep.subr.mxu0 0.0
    %4437 = vmatpush1.msra.mxu0 %v3524
    %4438 = vmatprep.subr.mxu0 0.0
    %4439 = vmatpush1.msra.mxu0 %v3521
    %4440 = vmatprep.subr.mxu0 0.0
    %4441 = vmatpush1.msra.mxu0 %v3518
    %4442 = vmatprep.subr.mxu0 0.0
    %4443 = vmatpush1.msra.mxu0 %v3515
    %4444 = vmatprep.subr.mxu0 0.0
    %4445 = vmatpush1.msra.mxu0 %v3512
    %4446 = vmatprep.subr.mxu0 0.0
    %4447 = vmatpush1.msra.mxu0 %v3509
    %4448 = vmatprep.subr.mxu0 0.0
    %4449 = vmatpush1.msra.mxu0 %v3506
    %4450 = vmatprep.subr.mxu0 0.0
    %4451 = vmatpush1.msra.mxu0 %v3503
    %4452 = vmatprep.subr.mxu0 0.0
    %4453 = vmatpush1.msra.mxu0 %v3500
    %4454 = vmatprep.subr.mxu0 0.0
    %4455 = vmatpush1.msra.mxu0 %v3497
    %4456 = vmatprep.subr.mxu0 0.0
    %4457 = vmatpush1.msra.mxu0 %v3494
    %4458 = vmatprep.subr.mxu0 0.0
    %4459 = vmatpush1.msra.mxu0 %v3491
    %4460 = vmatprep.subr.mxu0 0.0
    %4461 = vmatpush1.msra.mxu0 %v3488
    %4462 = vmatprep.subr.mxu0 0.0
    %4463 = vmatpush1.msra.mxu0 %v3485
    %4464 = vmatprep.subr.mxu0 0.0
    %4465 = vmatpush1.msra.mxu0 %v3482
    %4466 = vmatprep.subr.mxu0 0.0
    %4467 = vmatpush2.msra.mxu0 0.0
    %4468 = vmatprep.subr.mxu0 0.0
    %4469 = vmatpush2.msra.mxu0 0.0
    %4470 = vmatprep.subr.mxu0 0.0
    %4471 = vmatpush2.msra.mxu0 0.0
    %4472 = vmatprep.subr.mxu0 0.0
    %4473 = vmatpush2.msra.mxu0 0.0
    %4474 = vmatprep.subr.mxu0 0.0
    %4475 = vmatpush2.msra.mxu0 0.0
    %4476 = vmatprep.subr.mxu0 0.0
    %4477 = vmatpush2.msra.mxu0 0.0
    %4478 = vmatprep.subr.mxu0 0.0
    %4479 = vmatpush2.msra.mxu0 0.0
    %4480 = vmatprep.subr.mxu0 0.0
    %4481 = vmatpush2.msra.mxu0 0.0
    %4482 = vmatprep.subr.mxu0 0.0
    %4483 = vmatpush2.msra.mxu0 0.0
    %4484 = vmatprep.subr.mxu0 0.0
    %4485 = vmatpush2.msra.mxu0 0.0
    %4486 = vmatprep.subr.mxu0 0.0
    %4487 = vmatpush2.msra.mxu0 0.0
    %4488 = vmatprep.subr.mxu0 0.0
    %4489 = vmatpush2.msra.mxu0 0.0
    %4490 = vmatprep.subr.mxu0 0.0
    %4491 = vmatpush2.msra.mxu0 0.0
    %4492 = vmatprep.subr.mxu0 0.0
    %4493 = vmatpush2.msra.mxu0 0.0
    %4494 = vmatprep.subr.mxu0 0.0
    %4495 = vmatpush2.msra.mxu0 0.0
    %4496 = vmatprep.subr.mxu0 0.0
    %4497 = vmatpush2.msra.mxu0 0.0
    %4498 = vmatprep.mubr.f32.mxu0 0.0
    %4499 = vmatmul.mubr.f32.gmra.mxu0 %v3477
    %v4500 = vpop.f32.mrf.mxu0
    %v4501 = vadd.f32 %v4360, %v4500
    %v4502 = vpop.f32.mrf.mxu0
    %4503 = vdwg.mxu0
    %s4504 = scalar_lea.vmem %s16, 2
    %v4505 = vld [vmem:[%s4504] sm:$0x1]
    %s4506 = scalar_lea.vmem %s15, 192
    %v4507 = vld [vmem:[%s4506] sm:$0xff]
    %v4508 = vld [vmem:[%s4506 + $0x8] sm:$0xff]
    %v4509 = vld [vmem:[%s4506 + $0x10] sm:$0xff]
    %v4510 = vld [vmem:[%s4506 + $0x18] sm:$0xff]
    %4511 = vmatprep.subr.mxu0 0.0
    %4512 = vmatpush1.msra.mxu0 0.0
    %4513 = vmatprep.subr.mxu0 0.0
    %4514 = vmatpush1.msra.mxu0 0.0
    %4515 = vmatprep.subr.mxu0 0.0
    %4516 = vmatpush1.msra.mxu0 0.0
    %4517 = vmatprep.subr.mxu0 0.0
    %4518 = vmatpush1.msra.mxu0 0.0
    %4519 = vmatprep.subr.mxu0 0.0
    %4520 = vmatpush1.msra.mxu0 0.0
    %4521 = vmatprep.subr.mxu0 0.0
    %4522 = vmatpush1.msra.mxu0 0.0
    %4523 = vmatprep.subr.mxu0 0.0
    %4524 = vmatpush1.msra.mxu0 0.0
    %4525 = vmatprep.subr.mxu0 0.0
    %4526 = vmatpush1.msra.mxu0 0.0
    %4527 = vmatprep.subr.mxu0 0.0
    %4528 = vmatpush1.msra.mxu0 0.0
    %4529 = vmatprep.subr.mxu0 0.0
    %4530 = vmatpush1.msra.mxu0 0.0
    %4531 = vmatprep.subr.mxu0 0.0
    %4532 = vmatpush1.msra.mxu0 0.0
    %4533 = vmatprep.subr.mxu0 0.0
    %4534 = vmatpush1.msra.mxu0 0.0
    %4535 = vmatprep.subr.mxu0 0.0
    %4536 = vmatpush1.msra.mxu0 %v4510
    %4537 = vmatprep.subr.mxu0 0.0
    %4538 = vmatpush1.msra.mxu0 %v4509
    %4539 = vmatprep.subr.mxu0 0.0
    %4540 = vmatpush1.msra.mxu0 %v4508
    %4541 = vmatprep.subr.mxu0 0.0
    %4542 = vmatpush1.msra.mxu0 %v4507
    %4543 = vmatprep.subr.mxu0 0.0
    %4544 = vmatpush2.msra.mxu0 0.0
    %4545 = vmatprep.subr.mxu0 0.0
    %4546 = vmatpush2.msra.mxu0 0.0
    %4547 = vmatprep.subr.mxu0 0.0
    %4548 = vmatpush2.msra.mxu0 0.0
    %4549 = vmatprep.subr.mxu0 0.0
    %4550 = vmatpush2.msra.mxu0 0.0
    %4551 = vmatprep.subr.mxu0 0.0
    %4552 = vmatpush2.msra.mxu0 0.0
    %4553 = vmatprep.subr.mxu0 0.0
    %4554 = vmatpush2.msra.mxu0 0.0
    %4555 = vmatprep.subr.mxu0 0.0
    %4556 = vmatpush2.msra.mxu0 0.0
    %4557 = vmatprep.subr.mxu0 0.0
    %4558 = vmatpush2.msra.mxu0 0.0
    %4559 = vmatprep.subr.mxu0 0.0
    %4560 = vmatpush2.msra.mxu0 0.0
    %4561 = vmatprep.subr.mxu0 0.0
    %4562 = vmatpush2.msra.mxu0 0.0
    %4563 = vmatprep.subr.mxu0 0.0
    %4564 = vmatpush2.msra.mxu0 0.0
    %4565 = vmatprep.subr.mxu0 0.0
    %4566 = vmatpush2.msra.mxu0 0.0
    %4567 = vmatprep.subr.mxu0 0.0
    %4568 = vmatpush2.msra.mxu0 0.0
    %4569 = vmatprep.subr.mxu0 0.0
    %4570 = vmatpush2.msra.mxu0 0.0
    %4571 = vmatprep.subr.mxu0 0.0
    %4572 = vmatpush2.msra.mxu0 0.0
    %4573 = vmatprep.subr.mxu0 0.0
    %4574 = vmatpush2.msra.mxu0 0.0
    %4575 = vmatprep.mubr.f32.mxu0 0.0
    %4576 = vmatmul.mubr.f32.gmra.mxu0 %v2398
    %v4577 = vpop.f32.mrf.mxu0
    %v4578 = vadd.f32 0.0, %v4577
    %v4579 = vpop.f32.mrf.mxu0
    %4580 = vmatprep.mubr.f32.mxu0 0.0
    %4581 = vmatmul.mubr.f32.gmra.mxu0 %v2401
    %v4582 = vpop.f32.mrf.mxu0
    %v4583 = vadd.f32 0.0, %v4582
    %v4584 = vpop.f32.mrf.mxu0
    %4585 = vdwg.mxu0
    %v4587 = vlaneseq
    %v4588 = vshrl.u32 %v4587, 7
    %v4589 = vsub.s32 0, %v4588
    %v4590 = vrot.slane %v4505, %v4589
    %v4592 = vadd.f32 %v4590, %v4578
    %v4593 = vadd.f32 %v4590, %v4583
    %s4594 = scalar_lea.vmem %s15, 224
    %v4595 = vld [vmem:[%s4594] sm:$0xff]
    %v4596 = vld [vmem:[%s4594 + $0x8] sm:$0xff]
    %v4597 = vld [vmem:[%s4594 + $0x10] sm:$0xff]
    %v4598 = vld [vmem:[%s4594 + $0x18] sm:$0xff]
    %4599 = vmatprep.subr.mxu0 0.0
    %4600 = vmatpush1.msra.mxu0 0.0
    %4601 = vmatprep.subr.mxu0 0.0
    %4602 = vmatpush1.msra.mxu0 0.0
    %4603 = vmatprep.subr.mxu0 0.0
    %4604 = vmatpush1.msra.mxu0 0.0
    %4605 = vmatprep.subr.mxu0 0.0
    %4606 = vmatpush1.msra.mxu0 0.0
    %4607 = vmatprep.subr.mxu0 0.0
    %4608 = vmatpush1.msra.mxu0 0.0
    %4609 = vmatprep.subr.mxu0 0.0
    %4610 = vmatpush1.msra.mxu0 0.0
    %4611 = vmatprep.subr.mxu0 0.0
    %4612 = vmatpush1.msra.mxu0 0.0
    %4613 = vmatprep.subr.mxu0 0.0
    %4614 = vmatpush1.msra.mxu0 0.0
    %4615 = vmatprep.subr.mxu0 0.0
    %4616 = vmatpush1.msra.mxu0 0.0
    %4617 = vmatprep.subr.mxu0 0.0
    %4618 = vmatpush1.msra.mxu0 0.0
    %4619 = vmatprep.subr.mxu0 0.0
    %4620 = vmatpush1.msra.mxu0 0.0
    %4621 = vmatprep.subr.mxu0 0.0
    %4622 = vmatpush1.msra.mxu0 0.0
    %4623 = vmatprep.subr.mxu0 0.0
    %4624 = vmatpush1.msra.mxu0 %v4598
    %4625 = vmatprep.subr.mxu0 0.0
    %4626 = vmatpush1.msra.mxu0 %v4597
    %4627 = vmatprep.subr.mxu0 0.0
    %4628 = vmatpush1.msra.mxu0 %v4596
    %4629 = vmatprep.subr.mxu0 0.0
    %4630 = vmatpush1.msra.mxu0 %v4595
    %4631 = vmatprep.subr.mxu0 0.0
    %4632 = vmatpush2.msra.mxu0 0.0
    %4633 = vmatprep.subr.mxu0 0.0
    %4634 = vmatpush2.msra.mxu0 0.0
    %4635 = vmatprep.subr.mxu0 0.0
    %4636 = vmatpush2.msra.mxu0 0.0
    %4637 = vmatprep.subr.mxu0 0.0
    %4638 = vmatpush2.msra.mxu0 0.0
    %4639 = vmatprep.subr.mxu0 0.0
    %4640 = vmatpush2.msra.mxu0 0.0
    %4641 = vmatprep.subr.mxu0 0.0
    %4642 = vmatpush2.msra.mxu0 0.0
    %4643 = vmatprep.subr.mxu0 0.0
    %4644 = vmatpush2.msra.mxu0 0.0
    %4645 = vmatprep.subr.mxu0 0.0
    %4646 = vmatpush2.msra.mxu0 0.0
    %4647 = vmatprep.subr.mxu0 0.0
    %4648 = vmatpush2.msra.mxu0 0.0
    %4649 = vmatprep.subr.mxu0 0.0
    %4650 = vmatpush2.msra.mxu0 0.0
    %4651 = vmatprep.subr.mxu0 0.0
    %4652 = vmatpush2.msra.mxu0 0.0
    %4653 = vmatprep.subr.mxu0 0.0
    %4654 = vmatpush2.msra.mxu0 0.0
    %4655 = vmatprep.subr.mxu0 0.0
    %4656 = vmatpush2.msra.mxu0 0.0
    %4657 = vmatprep.subr.mxu0 0.0
    %4658 = vmatpush2.msra.mxu0 0.0
    %4659 = vmatprep.subr.mxu0 0.0
    %4660 = vmatpush2.msra.mxu0 0.0
    %4661 = vmatprep.subr.mxu0 0.0
    %4662 = vmatpush2.msra.mxu0 0.0
    %4663 = vmatprep.mubr.f32.mxu0 0.0
    %4664 = vmatmul.mubr.f32.gmra.mxu0 %v2707
    %v4665 = vpop.f32.mrf.mxu0
    %v4666 = vadd.f32 0.0, %v4665
    %v4667 = vpop.f32.mrf.mxu0
    %4668 = vmatprep.mubr.f32.mxu0 0.0
    %4669 = vmatmul.mubr.f32.gmra.mxu0 %v2710
    %v4670 = vpop.f32.mrf.mxu0
    %v4671 = vadd.f32 0.0, %v4670
    %v4672 = vpop.f32.mrf.mxu0
    %4673 = vdwg.mxu0
    %v4674 = vadd.f32 %v4592, %v4666
    %v4675 = vadd.f32 %v4593, %v4671
    %s4676 = scalar_lea.vmem %s15, 256
    %v4677 = vld [vmem:[%s4676] sm:$0xff]
    %v4678 = vld [vmem:[%s4676 + $0x8] sm:$0xff]
    %v4679 = vld [vmem:[%s4676 + $0x10] sm:$0xff]
    %v4680 = vld [vmem:[%s4676 + $0x18] sm:$0xff]
    %v4682 = vsel %vm338, %v2841, 0
    %v4685 = vsel %vm338, %v2842, 0
    %4687 = vmatprep.subr.mxu0 0.0
    %4688 = vmatpush1.msra.mxu0 0.0
    %4689 = vmatprep.subr.mxu0 0.0
    %4690 = vmatpush1.msra.mxu0 0.0
    %4691 = vmatprep.subr.mxu0 0.0
    %4692 = vmatpush1.msra.mxu0 0.0
    %4693 = vmatprep.subr.mxu0 0.0
    %4694 = vmatpush1.msra.mxu0 0.0
    %4695 = vmatprep.subr.mxu0 0.0
    %4696 = vmatpush1.msra.mxu0 0.0
    %4697 = vmatprep.subr.mxu0 0.0
    %4698 = vmatpush1.msra.mxu0 0.0
    %4699 = vmatprep.subr.mxu0 0.0
    %4700 = vmatpush1.msra.mxu0 0.0
    %4701 = vmatprep.subr.mxu0 0.0
    %4702 = vmatpush1.msra.mxu0 0.0
    %4703 = vmatprep.subr.mxu0 0.0
    %4704 = vmatpush1.msra.mxu0 0.0
    %4705 = vmatprep.subr.mxu0 0.0
    %4706 = vmatpush1.msra.mxu0 0.0
    %4707 = vmatprep.subr.mxu0 0.0
    %4708 = vmatpush1.msra.mxu0 0.0
    %4709 = vmatprep.subr.mxu0 0.0
    %4710 = vmatpush1.msra.mxu0 0.0
    %4711 = vmatprep.subr.mxu0 0.0
    %4712 = vmatpush1.msra.mxu0 %v4680
    %4713 = vmatprep.subr.mxu0 0.0
    %4714 = vmatpush1.msra.mxu0 %v4679
    %4715 = vmatprep.subr.mxu0 0.0
    %4716 = vmatpush1.msra.mxu0 %v4678
    %4717 = vmatprep.subr.mxu0 0.0
    %4718 = vmatpush1.msra.mxu0 %v4677
    %4719 = vmatprep.subr.mxu0 0.0
    %4720 = vmatpush2.msra.mxu0 0.0
    %4721 = vmatprep.subr.mxu0 0.0
    %4722 = vmatpush2.msra.mxu0 0.0
    %4723 = vmatprep.subr.mxu0 0.0
    %4724 = vmatpush2.msra.mxu0 0.0
    %4725 = vmatprep.subr.mxu0 0.0
    %4726 = vmatpush2.msra.mxu0 0.0
    %4727 = vmatprep.subr.mxu0 0.0
    %4728 = vmatpush2.msra.mxu0 0.0
    %4729 = vmatprep.subr.mxu0 0.0
    %4730 = vmatpush2.msra.mxu0 0.0
    %4731 = vmatprep.subr.mxu0 0.0
    %4732 = vmatpush2.msra.mxu0 0.0
    %4733 = vmatprep.subr.mxu0 0.0
    %4734 = vmatpush2.msra.mxu0 0.0
    %4735 = vmatprep.subr.mxu0 0.0
    %4736 = vmatpush2.msra.mxu0 0.0
    %4737 = vmatprep.subr.mxu0 0.0
    %4738 = vmatpush2.msra.mxu0 0.0
    %4739 = vmatprep.subr.mxu0 0.0
    %4740 = vmatpush2.msra.mxu0 0.0
    %4741 = vmatprep.subr.mxu0 0.0
    %4742 = vmatpush2.msra.mxu0 0.0
    %4743 = vmatprep.subr.mxu0 0.0
    %4744 = vmatpush2.msra.mxu0 0.0
    %4745 = vmatprep.subr.mxu0 0.0
    %4746 = vmatpush2.msra.mxu0 0.0
    %4747 = vmatprep.subr.mxu0 0.0
    %4748 = vmatpush2.msra.mxu0 0.0
    %4749 = vmatprep.subr.mxu0 0.0
    %4750 = vmatpush2.msra.mxu0 0.0
    %4751 = vmatprep.mubr.f32.mxu0 0.0
    %4752 = vmatmul.mubr.f32.gmra.mxu0 %v4682
    %v4753 = vpop.f32.mrf.mxu0
    %v4754 = vadd.f32 0.0, %v4753
    %v4755 = vpop.f32.mrf.mxu0
    %4756 = vmatprep.mubr.f32.mxu0 0.0
    %4757 = vmatmul.mubr.f32.gmra.mxu0 %v4685
    %v4758 = vpop.f32.mrf.mxu0
    %v4759 = vadd.f32 0.0, %v4758
    %v4760 = vpop.f32.mrf.mxu0
    %4761 = vdwg.mxu0
    %v4762 = vadd.f32 %v4674, %v4754
    %v4763 = vadd.f32 %v4675, %v4759
    %vm4764 = vcmp.gt.f32.partialorder %v4762, 0.0
    %vm4765 = vcmp.gt.f32.partialorder %v4763, 0.0
    %v4766 = vmul.f32 %v4762, 0.01
    %v4767 = vmul.f32 %v4763, 0.01
    %v4768 = vsel %vm4764, %v4762, %v4766
    %v4769 = vsel %vm4765, %v4763, %v4767
    %s4770 = scalar_lea.vmem %s17, 256
    %v4771 = vld [vmem:[%s4770] sm:$0xff]
    %v4772 = vld [vmem:[%s4770 + $0x8] sm:$0xff]
    %v4773 = vld [vmem:[%s4770 + $0x10] sm:$0xff]
    %v4774 = vld [vmem:[%s4770 + $0x18] sm:$0xff]
    %v4775 = vld [vmem:[%s4770 + $0x20] sm:$0xff]
    %v4776 = vld [vmem:[%s4770 + $0x28] sm:$0xff]
    %v4777 = vld [vmem:[%s4770 + $0x30] sm:$0xff]
    %v4778 = vld [vmem:[%s4770 + $0x38] sm:$0xff]
    %v4779 = vld [vmem:[%s4770 + $0x40] sm:$0xff]
    %v4780 = vld [vmem:[%s4770 + $0x48] sm:$0xff]
    %v4781 = vld [vmem:[%s4770 + $0x50] sm:$0xff]
    %v4782 = vld [vmem:[%s4770 + $0x58] sm:$0xff]
    %v4783 = vld [vmem:[%s4770 + $0x60] sm:$0xff]
    %v4784 = vld [vmem:[%s4770 + $0x68] sm:$0xff]
    %v4785 = vld [vmem:[%s4770 + $0x70] sm:$0xff]
    %v4786 = vld [vmem:[%s4770 + $0x78] sm:$0xff]
    %s4787 = scalar_lea.vmem %s18, 2
    %v4788 = vld [vmem:[%s4787] sm:$0x1]
    %v4790 = vlaneseq
    %v4791 = vshrl.u32 %v4790, 7
    %v4792 = vsub.s32 0, %v4791
    %v4793 = vrot.slane %v4788, %v4792
    %4795 = vmatprep.subr.mxu0 0.0
    %4796 = vmatpush1.msra.mxu0 %v4786
    %4797 = vmatprep.subr.mxu0 0.0
    %4798 = vmatpush1.msra.mxu0 %v4785
    %4799 = vmatprep.subr.mxu0 0.0
    %4800 = vmatpush1.msra.mxu0 %v4784
    %4801 = vmatprep.subr.mxu0 0.0
    %4802 = vmatpush1.msra.mxu0 %v4783
    %4803 = vmatprep.subr.mxu0 0.0
    %4804 = vmatpush1.msra.mxu0 %v4782
    %4805 = vmatprep.subr.mxu0 0.0
    %4806 = vmatpush1.msra.mxu0 %v4781
    %4807 = vmatprep.subr.mxu0 0.0
    %4808 = vmatpush1.msra.mxu0 %v4780
    %4809 = vmatprep.subr.mxu0 0.0
    %4810 = vmatpush1.msra.mxu0 %v4779
    %4811 = vmatprep.subr.mxu0 0.0
    %4812 = vmatpush1.msra.mxu0 %v4778
    %4813 = vmatprep.subr.mxu0 0.0
    %4814 = vmatpush1.msra.mxu0 %v4777
    %4815 = vmatprep.subr.mxu0 0.0
    %4816 = vmatpush1.msra.mxu0 %v4776
    %4817 = vmatprep.subr.mxu0 0.0
    %4818 = vmatpush1.msra.mxu0 %v4775
    %4819 = vmatprep.subr.mxu0 0.0
    %4820 = vmatpush1.msra.mxu0 %v4774
    %4821 = vmatprep.subr.mxu0 0.0
    %4822 = vmatpush1.msra.mxu0 %v4773
    %4823 = vmatprep.subr.mxu0 0.0
    %4824 = vmatpush1.msra.mxu0 %v4772
    %4825 = vmatprep.subr.mxu0 0.0
    %4826 = vmatpush1.msra.mxu0 %v4771
    %4827 = vmatprep.subr.mxu0 0.0
    %4828 = vmatpush2.msra.mxu0 0.0
    %4829 = vmatprep.subr.mxu0 0.0
    %4830 = vmatpush2.msra.mxu0 0.0
    %4831 = vmatprep.subr.mxu0 0.0
    %4832 = vmatpush2.msra.mxu0 0.0
    %4833 = vmatprep.subr.mxu0 0.0
    %4834 = vmatpush2.msra.mxu0 0.0
    %4835 = vmatprep.subr.mxu0 0.0
    %4836 = vmatpush2.msra.mxu0 0.0
    %4837 = vmatprep.subr.mxu0 0.0
    %4838 = vmatpush2.msra.mxu0 0.0
    %4839 = vmatprep.subr.mxu0 0.0
    %4840 = vmatpush2.msra.mxu0 0.0
    %4841 = vmatprep.subr.mxu0 0.0
    %4842 = vmatpush2.msra.mxu0 0.0
    %4843 = vmatprep.subr.mxu0 0.0
    %4844 = vmatpush2.msra.mxu0 0.0
    %4845 = vmatprep.subr.mxu0 0.0
    %4846 = vmatpush2.msra.mxu0 0.0
    %4847 = vmatprep.subr.mxu0 0.0
    %4848 = vmatpush2.msra.mxu0 0.0
    %4849 = vmatprep.subr.mxu0 0.0
    %4850 = vmatpush2.msra.mxu0 0.0
    %4851 = vmatprep.subr.mxu0 0.0
    %4852 = vmatpush2.msra.mxu0 0.0
    %4853 = vmatprep.subr.mxu0 0.0
    %4854 = vmatpush2.msra.mxu0 0.0
    %4855 = vmatprep.subr.mxu0 0.0
    %4856 = vmatpush2.msra.mxu0 0.0
    %4857 = vmatprep.subr.mxu0 0.0
    %4858 = vmatpush2.msra.mxu0 0.0
    %4859 = vmatprep.mubr.f32.mxu0 0.0
    %4860 = vmatmul.mubr.f32.gmra.mxu0 %v4768
    %v4861 = vpop.f32.mrf.mxu0
    %v4862 = vadd.f32 %v4793, %v4861
    %v4863 = vpop.f32.mrf.mxu0
    %4864 = vmatprep.mubr.f32.mxu0 0.0
    %4865 = vmatmul.mubr.f32.gmra.mxu0 %v4769
    %v4866 = vpop.f32.mrf.mxu0
    %v4867 = vadd.f32 %v4793, %v4866
    %v4868 = vpop.f32.mrf.mxu0
    %4869 = vdwg.mxu0
    %v4870 = vtanh.pop %v4862
    %v4871 = vtanh.pop %v4867
    %s4872 = scalar_lea.vmem %s19, 256
    %v4873 = vld [vmem:[%s4872] sm:$0xff]
    %v4874 = vld [vmem:[%s4872 + $0x8] sm:$0xff]
    %v4875 = vld [vmem:[%s4872 + $0x10] sm:$0xff]
    %v4876 = vld [vmem:[%s4872 + $0x18] sm:$0xff]
    %v4877 = vld [vmem:[%s4872 + $0x20] sm:$0xff]
    %v4878 = vld [vmem:[%s4872 + $0x28] sm:$0xff]
    %v4879 = vld [vmem:[%s4872 + $0x30] sm:$0xff]
    %v4880 = vld [vmem:[%s4872 + $0x38] sm:$0xff]
    %v4881 = vld [vmem:[%s4872 + $0x40] sm:$0xff]
    %v4882 = vld [vmem:[%s4872 + $0x48] sm:$0xff]
    %v4883 = vld [vmem:[%s4872 + $0x50] sm:$0xff]
    %v4884 = vld [vmem:[%s4872 + $0x58] sm:$0xff]
    %v4885 = vld [vmem:[%s4872 + $0x60] sm:$0xff]
    %v4886 = vld [vmem:[%s4872 + $0x68] sm:$0xff]
    %v4887 = vld [vmem:[%s4872 + $0x70] sm:$0xff]
    %v4888 = vld [vmem:[%s4872 + $0x78] sm:$0xff]
    %s4889 = scalar_lea.vmem %s20, 2
    %v4890 = vld [vmem:[%s4889] sm:$0x1]
    %v4892 = vlaneseq
    %v4893 = vshrl.u32 %v4892, 7
    %v4894 = vsub.s32 0, %v4893
    %v4895 = vrot.slane %v4890, %v4894
    %4897 = vmatprep.subr.mxu0 0.0
    %4898 = vmatpush1.msra.mxu0 %v4888
    %4899 = vmatprep.subr.mxu0 0.0
    %4900 = vmatpush1.msra.mxu0 %v4887
    %4901 = vmatprep.subr.mxu0 0.0
    %4902 = vmatpush1.msra.mxu0 %v4886
    %4903 = vmatprep.subr.mxu0 0.0
    %4904 = vmatpush1.msra.mxu0 %v4885
    %4905 = vmatprep.subr.mxu0 0.0
    %4906 = vmatpush1.msra.mxu0 %v4884
    %4907 = vmatprep.subr.mxu0 0.0
    %4908 = vmatpush1.msra.mxu0 %v4883
    %4909 = vmatprep.subr.mxu0 0.0
    %4910 = vmatpush1.msra.mxu0 %v4882
    %4911 = vmatprep.subr.mxu0 0.0
    %4912 = vmatpush1.msra.mxu0 %v4881
    %4913 = vmatprep.subr.mxu0 0.0
    %4914 = vmatpush1.msra.mxu0 %v4880
    %4915 = vmatprep.subr.mxu0 0.0
    %4916 = vmatpush1.msra.mxu0 %v4879
    %4917 = vmatprep.subr.mxu0 0.0
    %4918 = vmatpush1.msra.mxu0 %v4878
    %4919 = vmatprep.subr.mxu0 0.0
    %4920 = vmatpush1.msra.mxu0 %v4877
    %4921 = vmatprep.subr.mxu0 0.0
    %4922 = vmatpush1.msra.mxu0 %v4876
    %4923 = vmatprep.subr.mxu0 0.0
    %4924 = vmatpush1.msra.mxu0 %v4875
    %4925 = vmatprep.subr.mxu0 0.0
    %4926 = vmatpush1.msra.mxu0 %v4874
    %4927 = vmatprep.subr.mxu0 0.0
    %4928 = vmatpush1.msra.mxu0 %v4873
    %4929 = vmatprep.subr.mxu0 0.0
    %4930 = vmatpush2.msra.mxu0 0.0
    %4931 = vmatprep.subr.mxu0 0.0
    %4932 = vmatpush2.msra.mxu0 0.0
    %4933 = vmatprep.subr.mxu0 0.0
    %4934 = vmatpush2.msra.mxu0 0.0
    %4935 = vmatprep.subr.mxu0 0.0
    %4936 = vmatpush2.msra.mxu0 0.0
    %4937 = vmatprep.subr.mxu0 0.0
    %4938 = vmatpush2.msra.mxu0 0.0
    %4939 = vmatprep.subr.mxu0 0.0
    %4940 = vmatpush2.msra.mxu0 0.0
    %4941 = vmatprep.subr.mxu0 0.0
    %4942 = vmatpush2.msra.mxu0 0.0
    %4943 = vmatprep.subr.mxu0 0.0
    %4944 = vmatpush2.msra.mxu0 0.0
    %4945 = vmatprep.subr.mxu0 0.0
    %4946 = vmatpush2.msra.mxu0 0.0
    %4947 = vmatprep.subr.mxu0 0.0
    %4948 = vmatpush2.msra.mxu0 0.0
    %4949 = vmatprep.subr.mxu0 0.0
    %4950 = vmatpush2.msra.mxu0 0.0
    %4951 = vmatprep.subr.mxu0 0.0
    %4952 = vmatpush2.msra.mxu0 0.0
    %4953 = vmatprep.subr.mxu0 0.0
    %4954 = vmatpush2.msra.mxu0 0.0
    %4955 = vmatprep.subr.mxu0 0.0
    %4956 = vmatpush2.msra.mxu0 0.0
    %4957 = vmatprep.subr.mxu0 0.0
    %4958 = vmatpush2.msra.mxu0 0.0
    %4959 = vmatprep.subr.mxu0 0.0
    %4960 = vmatpush2.msra.mxu0 0.0
    %4961 = vmatprep.mubr.f32.mxu0 0.0
    %4962 = vmatmul.mubr.f32.gmra.mxu0 %v4768
    %v4963 = vpop.f32.mrf.mxu0
    %v4964 = vadd.f32 %v4895, %v4963
    %v4965 = vpop.f32.mrf.mxu0
    %4966 = vmatprep.mubr.f32.mxu0 0.0
    %4967 = vmatmul.mubr.f32.gmra.mxu0 %v4769
    %v4968 = vpop.f32.mrf.mxu0
    %v4969 = vadd.f32 %v4895, %v4968
    %v4970 = vpop.f32.mrf.mxu0
    %4971 = vdwg.mxu0
    %v4972 = vxor.u32 %v4964, 2147483648
    %v4973 = vxor.u32 %v4969, 2147483648
    %v4974 = vmul.f32 %v4972, 1.442695
    %v4975 = vpow.pop %v4974
    %v4976 = vmul.f32 %v4973, 1.442695
    %v4977 = vpow.pop %v4976
    %v4978 = vadd.f32 %v4975, 1.0
    %v4979 = vadd.f32 %v4977, 1.0
    %v4980 = vrcp.pop %v4978
    %v4981 = vmul.f32 1.0, %v4980
    %v4982 = vrcp.pop %v4979
    %v4983 = vmul.f32 1.0, %v4982
    %v4984 = vmul.f32 %v4870, %v4981
    %v4985 = vmul.f32 %v4871, %v4983
    %s4986 = scalar_lea.vmem %s21, 2
    %v4987 = vld [vmem:[%s4986] sm:$0x1]
    %s4988 = scalar_lea.vmem %s22, 2
    %v4989 = vld [vmem:[%s4988] sm:$0x1]
    %4991 = vset.pattern.permute.xlu0 0
    %4992 = vperm.xlu0 %4991, %v4989
    %v4993 = vpop.permute.xlu0 %4992
    %v4995 = vlaneseq
    %v4996 = vshrl.u32 %v4995, 7
    %v4997 = vsub.s32 0, %v4996
    %v4998 = vrot.slane %v4993, %v4997
    %4999 = vmatprep.subr.mxu0 0.0
    %5000 = vmatpush1.xpose.msra.mxu0 0.0
    %5001 = vmatprep.subr.mxu0 0.0
    %5002 = vmatpush1.xpose.msra.mxu0 0.0
    %5003 = vmatprep.subr.mxu0 0.0
    %5004 = vmatpush1.xpose.msra.mxu0 0.0
    %5005 = vmatprep.subr.mxu0 0.0
    %5006 = vmatpush1.xpose.msra.mxu0 0.0
    %5007 = vmatprep.subr.mxu0 0.0
    %5008 = vmatpush1.xpose.msra.mxu0 0.0
    %5009 = vmatprep.subr.mxu0 0.0
    %5010 = vmatpush1.xpose.msra.mxu0 0.0
    %5011 = vmatprep.subr.mxu0 0.0
    %5012 = vmatpush1.xpose.msra.mxu0 0.0
    %5013 = vmatprep.subr.mxu0 0.0
    %5014 = vmatpush1.xpose.msra.mxu0 0.0
    %5015 = vmatprep.subr.mxu0 0.0
    %5016 = vmatpush1.xpose.msra.mxu0 0.0
    %5017 = vmatprep.subr.mxu0 0.0
    %5018 = vmatpush1.xpose.msra.mxu0 0.0
    %5019 = vmatprep.subr.mxu0 0.0
    %5020 = vmatpush1.xpose.msra.mxu0 0.0
    %5021 = vmatprep.subr.mxu0 0.0
    %5022 = vmatpush1.xpose.msra.mxu0 0.0
    %5023 = vmatprep.subr.mxu0 0.0
    %5024 = vmatpush1.xpose.msra.mxu0 0.0
    %5025 = vmatprep.subr.mxu0 0.0
    %5026 = vmatpush1.xpose.msra.mxu0 0.0
    %5027 = vmatprep.subr.mxu0 0.0
    %5028 = vmatpush1.xpose.msra.mxu0 %v4985
    %5029 = vmatprep.subr.mxu0 0.0
    %5030 = vmatpush1.xpose.msra.mxu0 %v4984
    %5031 = vmatprep.subr.mxu0 0.0
    %5032 = vmatpush2.xpose.msra.mxu0 0.0
    %5033 = vmatprep.subr.mxu0 0.0
    %5034 = vmatpush2.xpose.msra.mxu0 0.0
    %5035 = vmatprep.subr.mxu0 0.0
    %5036 = vmatpush2.xpose.msra.mxu0 0.0
    %5037 = vmatprep.subr.mxu0 0.0
    %5038 = vmatpush2.xpose.msra.mxu0 0.0
    %5039 = vmatprep.subr.mxu0 0.0
    %5040 = vmatpush2.xpose.msra.mxu0 0.0
    %5041 = vmatprep.subr.mxu0 0.0
    %5042 = vmatpush2.xpose.msra.mxu0 0.0
    %5043 = vmatprep.subr.mxu0 0.0
    %5044 = vmatpush2.xpose.msra.mxu0 0.0
    %5045 = vmatprep.subr.mxu0 0.0
    %5046 = vmatpush2.xpose.msra.mxu0 0.0
    %5047 = vmatprep.subr.mxu0 0.0
    %5048 = vmatpush2.xpose.msra.mxu0 0.0
    %5049 = vmatprep.subr.mxu0 0.0
    %5050 = vmatpush2.xpose.msra.mxu0 0.0
    %5051 = vmatprep.subr.mxu0 0.0
    %5052 = vmatpush2.xpose.msra.mxu0 0.0
    %5053 = vmatprep.subr.mxu0 0.0
    %5054 = vmatpush2.xpose.msra.mxu0 0.0
    %5055 = vmatprep.subr.mxu0 0.0
    %5056 = vmatpush2.xpose.msra.mxu0 0.0
    %5057 = vmatprep.subr.mxu0 0.0
    %5058 = vmatpush2.xpose.msra.mxu0 0.0
    %5059 = vmatprep.subr.mxu0 0.0
    %5060 = vmatpush2.xpose.msra.mxu0 0.0
    %5061 = vmatprep.subr.mxu0 0.0
    %5062 = vmatpush2.xpose.msra.mxu0 0.0
    %5063 = vmatprep.mubr.f32.mxu0 0.0
    %5064 = vmatmul.mubr.f32.gmra.mxu0 %v4987
    %v5065 = vpop.f32.mrf.mxu0
    %v5066 = vadd.f32 %v4998, %v5065
    %v5067 = vpop.f32.mrf.mxu0
    %5068 = vdwg.mxu0
    %v5069 = vsel %vm3394, %v5066, -inf
    %5070 = vmax.xlane.f32.xlu0 %v5069
    %v5071 = vpop.xlane.xlu0 %5070
    %v5072 = vsub.f32 %v5066, %v5071
    %v5073 = vmul.f32 %v5072, 1.442695
    %v5074 = vpow.pop %v5073
    %v5075 = vsel %vm3394, %v5074, 0.0
    %5076 = vadd.xlane.f32.xlu0 %v5075
    %v5077 = vpop.xlane.xlu0 %5076
    %v5078 = vrcp.pop %v5077
    %v5079 = vmul.f32 %v5074, %v5078
    %s5080 = scalar_lea.vmem [#allocation4], 2
    %5081 = vst.msk [vmem:[%s5080] sm:$0x1] %vm3394, %v5079
    %v5083 = vsel %vm256, %v5079, 0
    %5085 = vmatprep.subr.mxu0 0.0
    %5086 = vmatpush1.msra.mxu0 0.0
    %5087 = vmatprep.subr.mxu0 0.0
    %5088 = vmatpush1.msra.mxu0 0.0
    %5089 = vmatprep.subr.mxu0 0.0
    %5090 = vmatpush1.msra.mxu0 0.0
    %5091 = vmatprep.subr.mxu0 0.0
    %5092 = vmatpush1.msra.mxu0 0.0
    %5093 = vmatprep.subr.mxu0 0.0
    %5094 = vmatpush1.msra.mxu0 0.0
    %5095 = vmatprep.subr.mxu0 0.0
    %5096 = vmatpush1.msra.mxu0 0.0
    %5097 = vmatprep.subr.mxu0 0.0
    %5098 = vmatpush1.msra.mxu0 0.0
    %5099 = vmatprep.subr.mxu0 0.0
    %5100 = vmatpush1.msra.mxu0 0.0
    %5101 = vmatprep.subr.mxu0 0.0
    %5102 = vmatpush1.msra.mxu0 0.0
    %5103 = vmatprep.subr.mxu0 0.0
    %5104 = vmatpush1.msra.mxu0 0.0
    %5105 = vmatprep.subr.mxu0 0.0
    %5106 = vmatpush1.msra.mxu0 0.0
    %5107 = vmatprep.subr.mxu0 0.0
    %5108 = vmatpush1.msra.mxu0 0.0
    %5109 = vmatprep.subr.mxu0 0.0
    %5110 = vmatpush1.msra.mxu0 0.0
    %5111 = vmatprep.subr.mxu0 0.0
    %5112 = vmatpush1.msra.mxu0 0.0
    %5113 = vmatprep.subr.mxu0 0.0
    %5114 = vmatpush1.msra.mxu0 %v4769
    %5115 = vmatprep.subr.mxu0 0.0
    %5116 = vmatpush1.msra.mxu0 %v4768
    %5117 = vmatprep.subr.mxu0 0.0
    %5118 = vmatpush2.msra.mxu0 0.0
    %5119 = vmatprep.subr.mxu0 0.0
    %5120 = vmatpush2.msra.mxu0 0.0
    %5121 = vmatprep.subr.mxu0 0.0
    %5122 = vmatpush2.msra.mxu0 0.0
    %5123 = vmatprep.subr.mxu0 0.0
    %5124 = vmatpush2.msra.mxu0 0.0
    %5125 = vmatprep.subr.mxu0 0.0
    %5126 = vmatpush2.msra.mxu0 0.0
    %5127 = vmatprep.subr.mxu0 0.0
    %5128 = vmatpush2.msra.mxu0 0.0
    %5129 = vmatprep.subr.mxu0 0.0
    %5130 = vmatpush2.msra.mxu0 0.0
    %5131 = vmatprep.subr.mxu0 0.0
    %5132 = vmatpush2.msra.mxu0 0.0
    %5133 = vmatprep.subr.mxu0 0.0
    %5134 = vmatpush2.msra.mxu0 0.0
    %5135 = vmatprep.subr.mxu0 0.0
    %5136 = vmatpush2.msra.mxu0 0.0
    %5137 = vmatprep.subr.mxu0 0.0
    %5138 = vmatpush2.msra.mxu0 0.0
    %5139 = vmatprep.subr.mxu0 0.0
    %5140 = vmatpush2.msra.mxu0 0.0
    %5141 = vmatprep.subr.mxu0 0.0
    %5142 = vmatpush2.msra.mxu0 0.0
    %5143 = vmatprep.subr.mxu0 0.0
    %5144 = vmatpush2.msra.mxu0 0.0
    %5145 = vmatprep.subr.mxu0 0.0
    %5146 = vmatpush2.msra.mxu0 0.0
    %5147 = vmatprep.subr.mxu0 0.0
    %5148 = vmatpush2.msra.mxu0 0.0
    %5149 = vmatprep.mubr.f32.mxu0 0.0
    %5150 = vmatmul.mubr.f32.gmra.mxu0 %v5083
    %v5151 = vpop.f32.mrf.mxu0
    %v5152 = vadd.f32 0.0, %v5151
    %v5153 = vpop.f32.mrf.mxu0
    %5154 = vdwg.mxu0
    %s5155 = scalar_lea.vmem %s23, 768
    %v5156 = vld [vmem:[%s5155] sm:$0xff]
    %v5157 = vld [vmem:[%s5155 + $0x8] sm:$0xff]
    %v5158 = vld [vmem:[%s5155 + $0x10] sm:$0xff]
    %v5159 = vld [vmem:[%s5155 + $0x18] sm:$0xff]
    %v5160 = vld [vmem:[%s5155 + $0x20] sm:$0xff]
    %v5161 = vld [vmem:[%s5155 + $0x28] sm:$0xff]
    %v5162 = vld [vmem:[%s5155 + $0x30] sm:$0xff]
    %v5163 = vld [vmem:[%s5155 + $0x38] sm:$0xff]
    %v5164 = vld [vmem:[%s5155 + $0x40] sm:$0xff]
    %v5165 = vld [vmem:[%s5155 + $0x48] sm:$0xff]
    %v5166 = vld [vmem:[%s5155 + $0x50] sm:$0xff]
    %v5167 = vld [vmem:[%s5155 + $0x58] sm:$0xff]
    %v5168 = vld [vmem:[%s5155 + $0x60] sm:$0xff]
    %v5169 = vld [vmem:[%s5155 + $0x68] sm:$0xff]
    %v5170 = vld [vmem:[%s5155 + $0x70] sm:$0xff]
    %v5171 = vld [vmem:[%s5155 + $0x78] sm:$0xff]
    %v5172 = vld [vmem:[%s5155 + $0x80] sm:$0xff]
    %v5173 = vld [vmem:[%s5155 + $0x88] sm:$0xff]
    %v5174 = vld [vmem:[%s5155 + $0x90] sm:$0xff]
    %v5175 = vld [vmem:[%s5155 + $0x98] sm:$0xff]
    %v5176 = vld [vmem:[%s5155 + $0xa0] sm:$0xff]
    %v5177 = vld [vmem:[%s5155 + $0xa8] sm:$0xff]
    %v5178 = vld [vmem:[%s5155 + $0xb0] sm:$0xff]
    %v5179 = vld [vmem:[%s5155 + $0xb8] sm:$0xff]
    %v5180 = vld [vmem:[%s5155 + $0xc0] sm:$0xff]
    %v5181 = vld [vmem:[%s5155 + $0xc8] sm:$0xff]
    %v5182 = vld [vmem:[%s5155 + $0xd0] sm:$0xff]
    %v5183 = vld [vmem:[%s5155 + $0xd8] sm:$0xff]
    %v5184 = vld [vmem:[%s5155 + $0xe0] sm:$0xff]
    %v5185 = vld [vmem:[%s5155 + $0xe8] sm:$0xff]
    %v5186 = vld [vmem:[%s5155 + $0xf0] sm:$0xff]
    %v5187 = vld [vmem:[%s5155 + $0xf8] sm:$0xff]
    %v5188 = vld [vmem:[%s5155 + $0x100] sm:$0xff]
    %v5189 = vld [vmem:[%s5155 + $0x108] sm:$0xff]
    %v5190 = vld [vmem:[%s5155 + $0x110] sm:$0xff]
    %v5191 = vld [vmem:[%s5155 + $0x118] sm:$0xff]
    %v5192 = vld [vmem:[%s5155 + $0x120] sm:$0xff]
    %v5193 = vld [vmem:[%s5155 + $0x128] sm:$0xff]
    %v5194 = vld [vmem:[%s5155 + $0x130] sm:$0xff]
    %v5195 = vld [vmem:[%s5155 + $0x138] sm:$0xff]
    %v5196 = vld [vmem:[%s5155 + $0x140] sm:$0xff]
    %v5197 = vld [vmem:[%s5155 + $0x148] sm:$0xff]
    %v5198 = vld [vmem:[%s5155 + $0x150] sm:$0xff]
    %v5199 = vld [vmem:[%s5155 + $0x158] sm:$0xff]
    %v5200 = vld [vmem:[%s5155 + $0x160] sm:$0xff]
    %v5201 = vld [vmem:[%s5155 + $0x168] sm:$0xff]
    %v5202 = vld [vmem:[%s5155 + $0x170] sm:$0xff]
    %v5203 = vld [vmem:[%s5155 + $0x178] sm:$0xff]
    %5204 = vmatprep.subr.mxu0 %v5202
    %5205 = vmatpush1.msra.mxu0 %v5201
    %5206 = vmatprep.subr.mxu0 %v5199
    %5207 = vmatpush1.msra.mxu0 %v5198
    %5208 = vmatprep.subr.mxu0 %v5196
    %5209 = vmatpush1.msra.mxu0 %v5195
    %5210 = vmatprep.subr.mxu0 %v5193
    %5211 = vmatpush1.msra.mxu0 %v5192
    %5212 = vmatprep.subr.mxu0 %v5190
    %5213 = vmatpush1.msra.mxu0 %v5189
    %5214 = vmatprep.subr.mxu0 %v5187
    %5215 = vmatpush1.msra.mxu0 %v5186
    %5216 = vmatprep.subr.mxu0 %v5184
    %5217 = vmatpush1.msra.mxu0 %v5183
    %5218 = vmatprep.subr.mxu0 %v5181
    %5219 = vmatpush1.msra.mxu0 %v5180
    %5220 = vmatprep.subr.mxu0 %v5178
    %5221 = vmatpush1.msra.mxu0 %v5177
    %5222 = vmatprep.subr.mxu0 %v5175
    %5223 = vmatpush1.msra.mxu0 %v5174
    %5224 = vmatprep.subr.mxu0 %v5172
    %5225 = vmatpush1.msra.mxu0 %v5171
    %5226 = vmatprep.subr.mxu0 %v5169
    %5227 = vmatpush1.msra.mxu0 %v5168
    %5228 = vmatprep.subr.mxu0 %v5166
    %5229 = vmatpush1.msra.mxu0 %v5165
    %5230 = vmatprep.subr.mxu0 %v5163
    %5231 = vmatpush1.msra.mxu0 %v5162
    %5232 = vmatprep.subr.mxu0 %v5160
    %5233 = vmatpush1.msra.mxu0 %v5159
    %5234 = vmatprep.subr.mxu0 %v5157
    %5235 = vmatpush1.msra.mxu0 %v5156
    %5236 = vmatprep.subr.mxu0 0.0
    %5237 = vmatpush2.msra.mxu0 0.0
    %5238 = vmatprep.subr.mxu0 0.0
    %5239 = vmatpush2.msra.mxu0 0.0
    %5240 = vmatprep.subr.mxu0 0.0
    %5241 = vmatpush2.msra.mxu0 0.0
    %5242 = vmatprep.subr.mxu0 0.0
    %5243 = vmatpush2.msra.mxu0 0.0
    %5244 = vmatprep.subr.mxu0 0.0
    %5245 = vmatpush2.msra.mxu0 0.0
    %5246 = vmatprep.subr.mxu0 0.0
    %5247 = vmatpush2.msra.mxu0 0.0
    %5248 = vmatprep.subr.mxu0 0.0
    %5249 = vmatpush2.msra.mxu0 0.0
    %5250 = vmatprep.subr.mxu0 0.0
    %5251 = vmatpush2.msra.mxu0 0.0
    %5252 = vmatprep.subr.mxu0 0.0
    %5253 = vmatpush2.msra.mxu0 0.0
    %5254 = vmatprep.subr.mxu0 0.0
    %5255 = vmatpush2.msra.mxu0 0.0
    %5256 = vmatprep.subr.mxu0 0.0
    %5257 = vmatpush2.msra.mxu0 0.0
    %5258 = vmatprep.subr.mxu0 0.0
    %5259 = vmatpush2.msra.mxu0 0.0
    %5260 = vmatprep.subr.mxu0 0.0
    %5261 = vmatpush2.msra.mxu0 0.0
    %5262 = vmatprep.subr.mxu0 0.0
    %5263 = vmatpush2.msra.mxu0 0.0
    %5264 = vmatprep.subr.mxu0 0.0
    %5265 = vmatpush2.msra.mxu0 0.0
    %5266 = vmatprep.subr.mxu0 0.0
    %5267 = vmatpush2.msra.mxu0 0.0
    %5268 = vmatprep.mubr.f32.mxu0 0.0
    %5269 = vmatmul.mubr.f32.gmra.mxu0 %v5152
    %v5270 = vpop.f32.mrf.mxu0
    %v5271 = vadd.f32 0.0, %v5270
    %v5272 = vpop.f32.mrf.mxu0
    %v5273 = vadd.f32 0.0, %v5272
    %5274 = vdwg.mxu0
    %5275 = vmatprep.subr.mxu0 0.0
    %5276 = vmatpush1.msra.mxu0 %v5203
    %5277 = vmatprep.subr.mxu0 0.0
    %5278 = vmatpush1.msra.mxu0 %v5200
    %5279 = vmatprep.subr.mxu0 0.0
    %5280 = vmatpush1.msra.mxu0 %v5197
    %5281 = vmatprep.subr.mxu0 0.0
    %5282 = vmatpush1.msra.mxu0 %v5194
    %5283 = vmatprep.subr.mxu0 0.0
    %5284 = vmatpush1.msra.mxu0 %v5191
    %5285 = vmatprep.subr.mxu0 0.0
    %5286 = vmatpush1.msra.mxu0 %v5188
    %5287 = vmatprep.subr.mxu0 0.0
    %5288 = vmatpush1.msra.mxu0 %v5185
    %5289 = vmatprep.subr.mxu0 0.0
    %5290 = vmatpush1.msra.mxu0 %v5182
    %5291 = vmatprep.subr.mxu0 0.0
    %5292 = vmatpush1.msra.mxu0 %v5179
    %5293 = vmatprep.subr.mxu0 0.0
    %5294 = vmatpush1.msra.mxu0 %v5176
    %5295 = vmatprep.subr.mxu0 0.0
    %5296 = vmatpush1.msra.mxu0 %v5173
    %5297 = vmatprep.subr.mxu0 0.0
    %5298 = vmatpush1.msra.mxu0 %v5170
    %5299 = vmatprep.subr.mxu0 0.0
    %5300 = vmatpush1.msra.mxu0 %v5167
    %5301 = vmatprep.subr.mxu0 0.0
    %5302 = vmatpush1.msra.mxu0 %v5164
    %5303 = vmatprep.subr.mxu0 0.0
    %5304 = vmatpush1.msra.mxu0 %v5161
    %5305 = vmatprep.subr.mxu0 0.0
    %5306 = vmatpush1.msra.mxu0 %v5158
    %5307 = vmatprep.subr.mxu0 0.0
    %5308 = vmatpush2.msra.mxu0 0.0
    %5309 = vmatprep.subr.mxu0 0.0
    %5310 = vmatpush2.msra.mxu0 0.0
    %5311 = vmatprep.subr.mxu0 0.0
    %5312 = vmatpush2.msra.mxu0 0.0
    %5313 = vmatprep.subr.mxu0 0.0
    %5314 = vmatpush2.msra.mxu0 0.0
    %5315 = vmatprep.subr.mxu0 0.0
    %5316 = vmatpush2.msra.mxu0 0.0
    %5317 = vmatprep.subr.mxu0 0.0
    %5318 = vmatpush2.msra.mxu0 0.0
    %5319 = vmatprep.subr.mxu0 0.0
    %5320 = vmatpush2.msra.mxu0 0.0
    %5321 = vmatprep.subr.mxu0 0.0
    %5322 = vmatpush2.msra.mxu0 0.0
    %5323 = vmatprep.subr.mxu0 0.0
    %5324 = vmatpush2.msra.mxu0 0.0
    %5325 = vmatprep.subr.mxu0 0.0
    %5326 = vmatpush2.msra.mxu0 0.0
    %5327 = vmatprep.subr.mxu0 0.0
    %5328 = vmatpush2.msra.mxu0 0.0
    %5329 = vmatprep.subr.mxu0 0.0
    %5330 = vmatpush2.msra.mxu0 0.0
    %5331 = vmatprep.subr.mxu0 0.0
    %5332 = vmatpush2.msra.mxu0 0.0
    %5333 = vmatprep.subr.mxu0 0.0
    %5334 = vmatpush2.msra.mxu0 0.0
    %5335 = vmatprep.subr.mxu0 0.0
    %5336 = vmatpush2.msra.mxu0 0.0
    %5337 = vmatprep.subr.mxu0 0.0
    %5338 = vmatpush2.msra.mxu0 0.0
    %5339 = vmatprep.mubr.f32.mxu0 0.0
    %5340 = vmatmul.mubr.f32.gmra.mxu0 %v5152
    %v5341 = vpop.f32.mrf.mxu0
    %v5342 = vadd.f32 0.0, %v5341
    %v5343 = vpop.f32.mrf.mxu0
    %5344 = vdwg.mxu0
    %v5345 = vadd.f32 %v4430, %v5271
    %v5346 = vadd.f32 %v4432, %v5273
    %v5347 = vadd.f32 %v4501, %v5342
    %v5348 = vld [vmem:[%s24] sm:$0x7]
    %v5350 = vlaneseq
    %v5351 = vshrl.u32 %v5350, 7
    %v5352 = vsub.s32 0, %v5351
    %v5353 = vrot.slane %v5348, %v5352
    %v5354 = vlaneseq
    %v5355 = vshrl.u32 %v5354, 7
    %v5356 = vsub.s32 1, %v5355
    %v5357 = vrot.slane %v5348, %v5356
    %v5358 = vlaneseq
    %v5359 = vshrl.u32 %v5358, 7
    %v5360 = vsub.s32 2, %v5359
    %v5361 = vrot.slane %v5348, %v5360
    %v5365 = vadd.f32 %v5345, %v5353
    %v5366 = vadd.f32 %v5346, %v5357
    %v5367 = vadd.f32 %v5347, %v5361
    %vm5368 = vcmp.gt.f32.partialorder %v5365, 0.0
    %vm5369 = vcmp.gt.f32.partialorder %v5366, 0.0
    %vm5370 = vcmp.gt.f32.partialorder %v5367, 0.0
    %v5371 = vmul.f32 %v5365, 0.01
    %v5372 = vmul.f32 %v5366, 0.01
    %v5373 = vmul.f32 %v5367, 0.01
    %v5374 = vsel %vm5368, %v5365, %v5371
    %v5375 = vsel %vm5369, %v5366, %v5372
    %v5376 = vsel %vm5370, %v5367, %v5373
    %v5377 = vld [vmem:[%s25] sm:$0xff]
    %v5378 = vld [vmem:[%s25 + $0x8] sm:$0xff]
    %v5379 = vld [vmem:[%s25 + $0x10] sm:$0xff]
    %v5380 = vld [vmem:[%s25 + $0x18] sm:$0xff]
    %v5381 = vld [vmem:[%s25 + $0x20] sm:$0xff]
    %v5382 = vld [vmem:[%s25 + $0x28] sm:$0xff]
    %v5383 = vld [vmem:[%s25 + $0x30] sm:$0xff]
    %v5384 = vld [vmem:[%s25 + $0x38] sm:$0xff]
    %v5385 = vld [vmem:[%s25 + $0x40] sm:$0xff]
    %v5386 = vld [vmem:[%s25 + $0x48] sm:$0xff]
    %v5387 = vld [vmem:[%s25 + $0x50] sm:$0xff]
    %v5388 = vld [vmem:[%s25 + $0x58] sm:$0xff]
    %v5389 = vld [vmem:[%s25 + $0x60] sm:$0xff]
    %v5390 = vld [vmem:[%s25 + $0x68] sm:$0xff]
    %v5391 = vld [vmem:[%s25 + $0x70] sm:$0xff]
    %v5392 = vld [vmem:[%s25 + $0x78] sm:$0xff]
    %v5393 = vld [vmem:[%s25 + $0x80] sm:$0xff]
    %v5394 = vld [vmem:[%s25 + $0x88] sm:$0xff]
    %v5395 = vld [vmem:[%s25 + $0x90] sm:$0xff]
    %v5396 = vld [vmem:[%s25 + $0x98] sm:$0xff]
    %v5397 = vld [vmem:[%s25 + $0xa0] sm:$0xff]
    %v5398 = vld [vmem:[%s25 + $0xa8] sm:$0xff]
    %v5399 = vld [vmem:[%s25 + $0xb0] sm:$0xff]
    %v5400 = vld [vmem:[%s25 + $0xb8] sm:$0xff]
    %v5401 = vld [vmem:[%s25 + $0xc0] sm:$0xff]
    %v5402 = vld [vmem:[%s25 + $0xc8] sm:$0xff]
    %v5403 = vld [vmem:[%s25 + $0xd0] sm:$0xff]
    %v5404 = vld [vmem:[%s25 + $0xd8] sm:$0xff]
    %v5405 = vld [vmem:[%s25 + $0xe0] sm:$0xff]
    %v5406 = vld [vmem:[%s25 + $0xe8] sm:$0xff]
    %v5407 = vld [vmem:[%s25 + $0xf0] sm:$0xff]
    %v5408 = vld [vmem:[%s25 + $0xf8] sm:$0xff]
    %v5409 = vld [vmem:[%s25 + $0x100] sm:$0xff]
    %v5410 = vld [vmem:[%s25 + $0x108] sm:$0xff]
    %v5411 = vld [vmem:[%s25 + $0x110] sm:$0xff]
    %v5412 = vld [vmem:[%s25 + $0x118] sm:$0xff]
    %v5413 = vld [vmem:[%s26] sm:$0x1]
    %v5415 = vsel %vm338, %v5376, 0
    %5417 = vmatprep.subr.mxu0 0.0
    %5418 = vmatpush1.msra.mxu0 %v5392
    %5419 = vmatprep.subr.mxu0 0.0
    %5420 = vmatpush1.msra.mxu0 %v5391
    %5421 = vmatprep.subr.mxu0 0.0
    %5422 = vmatpush1.msra.mxu0 %v5390
    %5423 = vmatprep.subr.mxu0 0.0
    %5424 = vmatpush1.msra.mxu0 %v5389
    %5425 = vmatprep.subr.mxu0 0.0
    %5426 = vmatpush1.msra.mxu0 %v5388
    %5427 = vmatprep.subr.mxu0 0.0
    %5428 = vmatpush1.msra.mxu0 %v5387
    %5429 = vmatprep.subr.mxu0 0.0
    %5430 = vmatpush1.msra.mxu0 %v5386
    %5431 = vmatprep.subr.mxu0 0.0
    %5432 = vmatpush1.msra.mxu0 %v5385
    %5433 = vmatprep.subr.mxu0 0.0
    %5434 = vmatpush1.msra.mxu0 %v5384
    %5435 = vmatprep.subr.mxu0 0.0
    %5436 = vmatpush1.msra.mxu0 %v5383
    %5437 = vmatprep.subr.mxu0 0.0
    %5438 = vmatpush1.msra.mxu0 %v5382
    %5439 = vmatprep.subr.mxu0 0.0
    %5440 = vmatpush1.msra.mxu0 %v5381
    %5441 = vmatprep.subr.mxu0 0.0
    %5442 = vmatpush1.msra.mxu0 %v5380
    %5443 = vmatprep.subr.mxu0 0.0
    %5444 = vmatpush1.msra.mxu0 %v5379
    %5445 = vmatprep.subr.mxu0 0.0
    %5446 = vmatpush1.msra.mxu0 %v5378
    %5447 = vmatprep.subr.mxu0 0.0
    %5448 = vmatpush1.msra.mxu0 %v5377
    %5449 = vmatprep.subr.mxu0 0.0
    %5450 = vmatpush2.msra.mxu0 %v5408
    %5451 = vmatprep.subr.mxu0 0.0
    %5452 = vmatpush2.msra.mxu0 %v5407
    %5453 = vmatprep.subr.mxu0 0.0
    %5454 = vmatpush2.msra.mxu0 %v5406
    %5455 = vmatprep.subr.mxu0 0.0
    %5456 = vmatpush2.msra.mxu0 %v5405
    %5457 = vmatprep.subr.mxu0 0.0
    %5458 = vmatpush2.msra.mxu0 %v5404
    %5459 = vmatprep.subr.mxu0 0.0
    %5460 = vmatpush2.msra.mxu0 %v5403
    %5461 = vmatprep.subr.mxu0 0.0
    %5462 = vmatpush2.msra.mxu0 %v5402
    %5463 = vmatprep.subr.mxu0 0.0
    %5464 = vmatpush2.msra.mxu0 %v5401
    %5465 = vmatprep.subr.mxu0 0.0
    %5466 = vmatpush2.msra.mxu0 %v5400
    %5467 = vmatprep.subr.mxu0 0.0
    %5468 = vmatpush2.msra.mxu0 %v5399
    %5469 = vmatprep.subr.mxu0 0.0
    %5470 = vmatpush2.msra.mxu0 %v5398
    %5471 = vmatprep.subr.mxu0 0.0
    %5472 = vmatpush2.msra.mxu0 %v5397
    %5473 = vmatprep.subr.mxu0 0.0
    %5474 = vmatpush2.msra.mxu0 %v5396
    %5475 = vmatprep.subr.mxu0 0.0
    %5476 = vmatpush2.msra.mxu0 %v5395
    %5477 = vmatprep.subr.mxu0 0.0
    %5478 = vmatpush2.msra.mxu0 %v5394
    %5479 = vmatprep.subr.mxu0 0.0
    %5480 = vmatpush2.msra.mxu0 %v5393
    %5481 = vmatprep.mubr.f32.mxu0 %v5375
    %5482 = vmatmul.mubr.f32.gmra.mxu0 %v5374
    %v5483 = vpop.f32.mrf.mxu0
    %v5484 = vadd.f32 %v5413, %v5483
    %v5485 = vpop.f32.mrf.mxu0
    %5486 = vdwg.mxu0
    %5487 = vmatprep.subr.mxu0 0.0
    %5488 = vmatpush1.msra.mxu0 0.0
    %5489 = vmatprep.subr.mxu0 0.0
    %5490 = vmatpush1.msra.mxu0 0.0
    %5491 = vmatprep.subr.mxu0 0.0
    %5492 = vmatpush1.msra.mxu0 0.0
    %5493 = vmatprep.subr.mxu0 0.0
    %5494 = vmatpush1.msra.mxu0 0.0
    %5495 = vmatprep.subr.mxu0 0.0
    %5496 = vmatpush1.msra.mxu0 0.0
    %5497 = vmatprep.subr.mxu0 0.0
    %5498 = vmatpush1.msra.mxu0 0.0
    %5499 = vmatprep.subr.mxu0 0.0
    %5500 = vmatpush1.msra.mxu0 0.0
    %5501 = vmatprep.subr.mxu0 0.0
    %5502 = vmatpush1.msra.mxu0 0.0
    %5503 = vmatprep.subr.mxu0 0.0
    %5504 = vmatpush1.msra.mxu0 0.0
    %5505 = vmatprep.subr.mxu0 0.0
    %5506 = vmatpush1.msra.mxu0 0.0
    %5507 = vmatprep.subr.mxu0 0.0
    %5508 = vmatpush1.msra.mxu0 0.0
    %5509 = vmatprep.subr.mxu0 0.0
    %5510 = vmatpush1.msra.mxu0 0.0
    %5511 = vmatprep.subr.mxu0 0.0
    %5512 = vmatpush1.msra.mxu0 %v5412
    %5513 = vmatprep.subr.mxu0 0.0
    %5514 = vmatpush1.msra.mxu0 %v5411
    %5515 = vmatprep.subr.mxu0 0.0
    %5516 = vmatpush1.msra.mxu0 %v5410
    %5517 = vmatprep.subr.mxu0 0.0
    %5518 = vmatpush1.msra.mxu0 %v5409
    %5519 = vmatprep.subr.mxu0 0.0
    %5520 = vmatpush2.msra.mxu0 0.0
    %5521 = vmatprep.subr.mxu0 0.0
    %5522 = vmatpush2.msra.mxu0 0.0
    %5523 = vmatprep.subr.mxu0 0.0
    %5524 = vmatpush2.msra.mxu0 0.0
    %5525 = vmatprep.subr.mxu0 0.0
    %5526 = vmatpush2.msra.mxu0 0.0
    %5527 = vmatprep.subr.mxu0 0.0
    %5528 = vmatpush2.msra.mxu0 0.0
    %5529 = vmatprep.subr.mxu0 0.0
    %5530 = vmatpush2.msra.mxu0 0.0
    %5531 = vmatprep.subr.mxu0 0.0
    %5532 = vmatpush2.msra.mxu0 0.0
    %5533 = vmatprep.subr.mxu0 0.0
    %5534 = vmatpush2.msra.mxu0 0.0
    %5535 = vmatprep.subr.mxu0 0.0
    %5536 = vmatpush2.msra.mxu0 0.0
    %5537 = vmatprep.subr.mxu0 0.0
    %5538 = vmatpush2.msra.mxu0 0.0
    %5539 = vmatprep.subr.mxu0 0.0
    %5540 = vmatpush2.msra.mxu0 0.0
    %5541 = vmatprep.subr.mxu0 0.0
    %5542 = vmatpush2.msra.mxu0 0.0
    %5543 = vmatprep.subr.mxu0 0.0
    %5544 = vmatpush2.msra.mxu0 0.0
    %5545 = vmatprep.subr.mxu0 0.0
    %5546 = vmatpush2.msra.mxu0 0.0
    %5547 = vmatprep.subr.mxu0 0.0
    %5548 = vmatpush2.msra.mxu0 0.0
    %5549 = vmatprep.subr.mxu0 0.0
    %5550 = vmatpush2.msra.mxu0 0.0
    %5551 = vmatprep.mubr.f32.mxu0 0.0
    %5552 = vmatmul.mubr.f32.gmra.mxu0 %v5415
    %v5553 = vpop.f32.mrf.mxu0
    %v5554 = vadd.f32 %v5484, %v5553
    %v5555 = vpop.f32.mrf.mxu0
    %5556 = vdwg.mxu0
    %v5557 = vxor.u32 %v5554, 2147483648
    %v5558 = vmul.f32 %v5557, 1.442695
    %v5559 = vpow.pop %v5558
    %v5560 = vadd.f32 %v5559, 1.0
    %v5561 = vrcp.pop %v5560
    %v5562 = vmul.f32 1.0, %v5561
    %vm5563 = vcmask 24576
    %5564 = vst.msk [vmem:[#allocation2] sm:$0x1] %vm5563, %v5562
    // Predicated region
    $region110: #{tpu_custom_call.1} parent=1 // pred_check
      _
    $region111: #{tpu_custom_call.1} parent=1 // pred_check_branch
      %5566 = sbr.rel (0) target = $region113
    $region112: #{tpu_custom_call.1} parent=1 // pred_region
      %s5568 = ssub.s32 16, 16
      %5569 = vsyncadd [#allocation3], %s5568
      %s5571 = sshll.u32 [#allocation2], 4
      %s5572 = int_to_ptr.vmem [resolvable:$true] %s5571
      %5574 = dma.vmem_to_hbm [thread:$0]  %s5572, 16, %s27, [#allocation3]
    $region113: #{tpu_custom_call.1} parent=1 // pred_fallthru
      _
    // Predicated region
    $region114: #{tpu_custom_call.1} parent=1 // pred_check
      _
    $region115: #{tpu_custom_call.1} parent=1 // pred_check_branch
      %5576 = sbr.rel (0) target = $region117
    $region116: #{tpu_custom_call.1} parent=1 // pred_region
      %s5578 = ssub.s32 48, 48
      %5579 = vsyncadd [#allocation5], %s5578
      %s5580 = sshll.u32 [#allocation4], 4
      %s5581 = int_to_ptr.vmem [resolvable:$true] %s5580
      %5586 = dma.vmem_to_hbm [thread:$0]  %s5581, 48, %s28, [#allocation5], 16, 16, 1
    $region117: #{tpu_custom_call.1} parent=1 // pred_fallthru
      _
    // Predicated region
    $region118: #{tpu_custom_call.1} parent=1 // pred_check
      _
    $region119: #{tpu_custom_call.1} parent=1 // pred_check_branch
      %5588 = sbr.rel (0) target = $region121
    $region120: #{tpu_custom_call.1} parent=1 // pred_region
      %5589 = dma.done [#allocation3], 16
    $region121: #{tpu_custom_call.1} parent=1 // pred_fallthru
      _
    // Predicated region
    $region122: #{tpu_custom_call.1} parent=1 // pred_check
      _
    $region123: #{tpu_custom_call.1} parent=1 // pred_check_branch
      %5591 = sbr.rel (0) target = $region125
    $region124: #{tpu_custom_call.1} parent=1 // pred_region
      %5592 = dma.done [#allocation5], 48
    $region125: #{tpu_custom_call.1} parent=1 // pred_fallthru
      _
    %5593 = vsyncpa [#allocation3], 1
    %5594 = vsyncpa [#allocation5], 1

</llo_original>
